<compile_context>
chip_gen: v6e
topology: v6e:2x2x1
jax: 0.10.0
libtpu: 0.0.40
codegen_flags: <defaults>
</compile_context>

<pallas_src>
import jax
import jax.numpy as jnp
from jax.experimental import pallas as pl
from jax.experimental.pallas import tpu as pltpu


def residual_block_kernel(x_ref, w1_ref, b1_ref, w2_ref, b2_ref, out_ref,
                          xp_ref, yp_ref):
    """One grid step = `nb` images x one row tile of `th` output rows.

    x_ref  : (nb, H, W, C)        whole images (re-fetched only when n changes)
    w1_ref : (9*C, C)             conv1 weights, rows ordered (ky, kx, ci)
    b1_ref : (1, C)
    w2_ref : (9*C, C)             conv2 weights
    b2_ref : (1, C)
    out_ref: (nb, th, W, C)       output row tile
    xp_ref : (nb, th+4, W+2, C)   VMEM scratch: zero-padded x window
    yp_ref : (nb, th+2, W+2, C)   VMEM scratch: zero-padded relu(conv1) window
    """
    nb, H, W, C = x_ref.shape
    th = out_ref.shape[1]
    dt = x_ref.dtype

    r = pl.program_id(1)
    n_r = pl.num_programs(1)
    r0 = pl.multiple_of(r * th, th)

    # ---- stage x rows [r0-2, r0+th+2) into the padded scratch ----
    zc = jnp.zeros((nb, th + 4, 1, C), dt)
    xp_ref[:, :, 0:1, :] = zc                         # left pad column
    xp_ref[:, :, W + 1:W + 2, :] = zc                 # right pad column
    xp_ref[:, 2:th + 2, 1:W + 1, :] = x_ref[:, pl.ds(r0, th), :, :]

    @pl.when(r > 0)                                   # top 2-row halo from image
    def _():
        xp_ref[:, 0:2, 1:W + 1, :] = x_ref[:, pl.ds(jnp.maximum(r0 - 2, 0), 2), :, :]

    @pl.when(r == 0)                                  # top of image: zero pad rows
    def _():
        xp_ref[:, 0:2, :, :] = jnp.zeros((nb, 2, W + 2, C), dt)

    @pl.when(r < n_r - 1)                             # bottom 2-row halo from image
    def _():
        xp_ref[:, th + 2:th + 4, 1:W + 1, :] = (
            x_ref[:, pl.ds(jnp.minimum(r0 + th, H - 2), 2), :, :])

    @pl.when(r == n_r - 1)                            # bottom of image: zero pad rows
    def _():
        xp_ref[:, th + 2:th + 4, :, :] = jnp.zeros((nb, 2, W + 2, C), dt)

    def conv3x3(ap_ref, h, w_ref, b_ref):
        # ky-split im2col: three (nb*h*W, 3C) x (3C, C) accumulating MXU matmuls
        # instead of one (., 9C) slab -> 3x smaller dominant temporary.
        m = nb * h * W
        acc = jnp.zeros((m, C), jnp.float32)
        for ky in range(3):
            slab = jnp.concatenate(
                [ap_ref[:, ky:ky + h, kx:kx + W, :] for kx in range(3)],
                axis=-1).reshape(m, 3 * C)
            acc = acc + jnp.dot(slab, w_ref[ky * 3 * C:(ky + 1) * 3 * C, :],
                                preferred_element_type=jnp.float32)
        return acc + b_ref[...].astype(jnp.float32)   # (m, C) f32

    # ---- conv1 + relu on rows [r0-1, r0+th+1) ----
    # Intermediate kept in x.dtype (bf16 stays on the bf16 MXU path; exact for f32).
    y = jnp.maximum(conv3x3(xp_ref, th + 2, w1_ref, b1_ref), 0.0)
    yzc = jnp.zeros((nb, th + 2, 1, C), dt)
    yp_ref[:, :, 0:1, :] = yzc
    yp_ref[:, :, W + 1:W + 2, :] = yzc
    yp_ref[:, :, 1:W + 1, :] = y.reshape(nb, th + 2, W, C).astype(dt)

    @pl.when(r == 0)          # y row -1 is conv2 zero padding, not relu(bias)
    def _():
        yp_ref[:, 0:1, :, :] = jnp.zeros((nb, 1, W + 2, C), dt)

    @pl.when(r == n_r - 1)    # y row H is conv2 zero padding
    def _():
        yp_ref[:, th + 1:th + 2, :, :] = jnp.zeros((nb, 1, W + 2, C), dt)

    # ---- conv2 + residual + relu on output rows [r0, r0+th) ----
    z = conv3x3(yp_ref, th, w2_ref, b2_ref)                        # (nb*th*W, C) f32
    x_res = xp_ref[:, 2:th + 2, 1:W + 1, :].astype(jnp.float32).reshape(nb * th * W, C)
    out = jnp.maximum(x_res + z, 0.0)
    out_ref[...] = out.reshape(nb, th, W, C).astype(out_ref.dtype)


def residual_block(x_nchw, w1_oihw, b1, w2_oihw, b2,
                   *, images_per_step=None, row_tile=None):
    """PyTorch-convention wrapper: x is NCHW, weights are OIHW."""
    x = jnp.transpose(x_nchw, (0, 2, 3, 1))                        # NHWC
    N, H, W, C = x.shape
    dt = x.dtype
    isz = dt.itemsize

    # Cast parameters to x.dtype so bf16 inputs use the bf16 MXU path and the
    # im2col slab is not silently promoted to f32.
    w1 = jnp.transpose(w1_oihw, (2, 3, 1, 0)).reshape(9 * C, C).astype(dt)
    w2 = jnp.transpose(w2_oihw, (2, 3, 1, 0)).reshape(9 * C, C).astype(dt)
    b1r = b1.reshape(1, C).astype(dt)
    b2r = b2.reshape(1, C).astype(dt)

    # Generation-aware VMEM budget (~80% of per-core VMEM: ~51 MiB on v7x,
    # ~102 MiB on v5e/v6e). Shrink the tile to fit rather than clamping.
    try:
        vmem_cap = int(pltpu.get_tpu_info().vmem_capacity_bytes)
    except Exception:
        vmem_cap = 64 * 1024 * 1024
    budget = (vmem_cap * 4) // 5

    def vmem_estimate(nb, th):
        m1 = nb * (th + 2) * W                       # conv1 output rows
        m2 = nb * th * W                             # conv2 / output rows
        return (2 * nb * H * W * C * isz             # x block (double buffered)
                + 2 * nb * th * W * C * isz          # out block (double buffered)
                + 4 * (9 * C * C + C) * isz          # weights + biases (2 bufs)
                + nb * (th + 4) * (W + 2) * C * isz  # xp scratch
                + nb * (th + 2) * (W + 2) * C * isz  # yp scratch
                + m1 * 3 * C * isz + m1 * C * 4      # conv1 slab + f32 acc
                + m2 * 3 * C * isz + m2 * C * 4      # conv2 slab + f32 acc
                + m1 * C * 4)                        # relu / cast temporary

    def divisors_desc(v):
        return [d for d in range(v, 0, -1) if v % d == 0]

    if images_per_step is not None:
        assert N % images_per_step == 0, "images_per_step must divide N"
    if row_tile is not None:
        assert H % row_tile == 0 and (row_tile == H or row_tile >= 2), \
            "row_tile must divide H and be >= 2 (halo needs 2 rows)"

    nb_cands = ([images_per_step] if images_per_step is not None
                else divisors_desc(N))
    th_cands = ([row_tile] if row_tile is not None
                else [d for d in divisors_desc(H) if d == H or d >= 2])

    nb = th = None
    for nb_c in nb_cands:
        for th_c in th_cands:
            if vmem_estimate(nb_c, th_c) <= budget:
                nb, th = nb_c, th_c
                break
        if nb is not None:
            break
    if nb is None:
        # Even the smallest tile exceeds the budget (huge H*W*C): take it anyway.
        # TODO(synk): manual-DMA halo path (x in pl.ANY) so only the row tile
        #             + halo is resident instead of the whole image.
        nb, th = nb_cands[-1], th_cands[-1]

    vmem_limit = int(min(max((vmem_estimate(nb, th) * 5) // 4,
                             32 * 1024 * 1024), budget))

    cost = pl.CostEstimate(
        flops=2 * (2 * N * H * W * 9 * C * C),                 # two 3x3 convs
        transcendentals=0,
        bytes_accessed=(2 * N * H * W * C + 2 * (9 * C * C + C)) * isz,
    )

    grid = (N // nb, H // th)     # batch outer (x fetched once per image), rows inner
    out = pl.pallas_call(
        residual_block_kernel,
        grid=grid,
        in_specs=[
            pl.BlockSpec((nb, H, W, C), lambda n, r: (n, 0, 0, 0)),   # x (whole images)
            pl.BlockSpec((9 * C, C), lambda n, r: (0, 0)),            # w1 (resident)
            pl.BlockSpec((1, C), lambda n, r: (0, 0)),                # b1
            pl.BlockSpec((9 * C, C), lambda n, r: (0, 0)),            # w2
            pl.BlockSpec((1, C), lambda n, r: (0, 0)),                # b2
        ],
        out_specs=pl.BlockSpec((nb, th, W, C), lambda n, r: (n, r, 0, 0)),
        out_shape=jax.ShapeDtypeStruct((N, H, W, C), dt),
        scratch_shapes=[
            pltpu.VMEM((nb, th + 4, W + 2, C), dt),    # padded x window
            pltpu.VMEM((nb, th + 2, W + 2, C), dt),    # padded relu(conv1) window
        ],
        compiler_params=pltpu.CompilerParams(
            dimension_semantics=("parallel", "parallel"),
            vmem_limit_bytes=vmem_limit,
        ),
        cost_estimate=cost,
    )(x, w1, b1r, w2, b2r)

    return jnp.transpose(out, (0, 3, 1, 2))                    # back to NCHW


def _reference(x, w1, b1, w2, b2):
    dn = ('NCHW', 'OIHW', 'NCHW')
    y = jax.lax.conv_general_dilated(x, w1, (1, 1), 'SAME', dimension_numbers=dn)
    y = jax.nn.relu(y + b1[None, :, None, None])
    y = jax.lax.conv_general_dilated(y, w2, (1, 1), 'SAME', dimension_numbers=dn)
    y = y + b2[None, :, None, None]
    return jax.nn.relu(x + y)


if __name__ == "__main__":
    key = jax.random.PRNGKey(0)
    k_x, k_w1, k_b1, k_w2, k_b2 = jax.random.split(key, 5)

    N, C, H, W = 2, 4, 16, 16
    x = jax.random.normal(k_x, (N, C, H, W), jnp.float32)

    # PyTorch Conv2d default init: U(-k, k), k = 1/sqrt(fan_in), fan_in = C*3*3
    k = 1.0 / (C * 3 * 3) ** 0.5
    w1 = jax.random.uniform(k_w1, (C, C, 3, 3), jnp.float32, -k, k)
    b1 = jax.random.uniform(k_b1, (C,), jnp.float32, -k, k)
    w2 = jax.random.uniform(k_w2, (C, C, 3, 3), jnp.float32, -k, k)
    b2 = jax.random.uniform(k_b2, (C,), jnp.float32, -k, k)

    ref = jax.block_until_ready(_reference(x, w1, b1, w2, b2))

    # Auto-tiled path (tiny shape -> all images in one step, single row tile).
    out = jax.block_until_ready(residual_block(x, w1, b1, w2, b2))
    assert out.shape == (N, C, H, W)
    assert jnp.allclose(out, ref, atol=1e-4, rtol=1e-4), "mismatch (auto tile)"

    # Explicitly exercise the H row-tiling + halo path (4 row tiles of 4 rows).
    out_t = jax.block_until_ready(
        residual_block(x, w1, b1, w2, b2, images_per_step=1, row_tile=4))
    assert jnp.allclose(out_t, ref, atol=1e-4, rtol=1e-4), "mismatch (row tiled)"

    print("KERNEL_OK")
</pallas_src>

<mosaic_0001>
module attributes {stable_mosaic.version = 11 : i64} {
  func.func @residual_block_kernel(%arg0: i32, %arg1: i32, %arg2: memref<2x16x16x4xf32, #tpu.memory_space<vmem>>, %arg3: memref<36x4xf32, #tpu.memory_space<vmem>>, %arg4: memref<1x4xf32, #tpu.memory_space<vmem>>, %arg5: memref<36x4xf32, #tpu.memory_space<vmem>>, %arg6: memref<1x4xf32, #tpu.memory_space<vmem>>, %arg7: memref<2x16x16x4xf32, #tpu.memory_space<vmem>>, %arg8: memref<2x20x18x4xf32, #tpu.memory_space<vmem>>, %arg9: memref<2x18x18x4xf32, #tpu.memory_space<vmem>>) attributes {dimension_semantics = [#tpu.dimension_semantics<parallel>, #tpu.dimension_semantics<parallel>], iteration_bounds = array<i64: 1, 1>, scalar_prefetch = 0 : i64, scratch_operands = 2 : i64, tpu.core_type = #tpu.core_type<tc>, window_params = [{transform_indices = @transform_0, window_bounds = array<i64: 2, 16, 16, 4>}, {pipeline_mode = #tpu.pipeline_mode<synchronous>, transform_indices = @transform_1, window_bounds = array<i64: 36, 4>}, {pipeline_mode = #tpu.pipeline_mode<synchronous>, transform_indices = @transform_2, window_bounds = array<i64: 1, 4>}, {pipeline_mode = #tpu.pipeline_mode<synchronous>, transform_indices = @transform_3, window_bounds = array<i64: 36, 4>}, {pipeline_mode = #tpu.pipeline_mode<synchronous>, transform_indices = @transform_4, window_bounds = array<i64: 1, 4>}, {transform_indices = @transform_5, window_bounds = array<i64: 2, 16, 16, 4>}]} {
    %c16_i32 = arith.constant 16 : i32
    %0 = arith.muli %arg1, %c16_i32 : i32
    %1 = tpu.assume_multiple %0, 16 : i32
    %cst = arith.constant 0.000000e+00 : f32
    %2 = vector.broadcast %cst : f32 to vector<2x20x1x4xf32>
    %c0 = arith.constant 0 : index
    %c0_0 = arith.constant 0 : index
    %c0_1 = arith.constant 0 : index
    %c0_2 = arith.constant 0 : index
    %3 = vector.load %arg8[%c0, %c0_0, %c0_1, %c0_2] : memref<2x20x18x4xf32, #tpu.memory_space<vmem>>, vector<2x20x1x4xf32>
    tpu.vector_store %arg8[%c0, %c0_0, %c0_1, %c0_2], %2 {strides = array<i32>} : memref<2x20x18x4xf32, #tpu.memory_space<vmem>>, vector<2x20x1x4xf32>,
    %c0_3 = arith.constant 0 : index
    %c0_4 = arith.constant 0 : index
    %c17 = arith.constant 17 : index
    %c0_5 = arith.constant 0 : index
    %4 = vector.load %arg8[%c0_3, %c0_4, %c17, %c0_5] : memref<2x20x18x4xf32, #tpu.memory_space<vmem>>, vector<2x20x1x4xf32>
    tpu.vector_store %arg8[%c0_3, %c0_4, %c17, %c0_5], %2 {strides = array<i32>} : memref<2x20x18x4xf32, #tpu.memory_space<vmem>>, vector<2x20x1x4xf32>,
    %c0_6 = arith.constant 0 : index
    %5 = arith.index_cast %1 : i32 to index
    %c0_7 = arith.constant 0 : index
    %c0_8 = arith.constant 0 : index
    %6 = vector.load %arg2[%c0_6, %5, %c0_7, %c0_8] : memref<2x16x16x4xf32, #tpu.memory_space<vmem>>, vector<2x16x16x4xf32>
    %c0_9 = arith.constant 0 : index
    %c2 = arith.constant 2 : index
    %c1 = arith.constant 1 : index
    %c0_10 = arith.constant 0 : index
    %7 = vector.load %arg8[%c0_9, %c2, %c1, %c0_10] : memref<2x20x18x4xf32, #tpu.memory_space<vmem>>, vector<2x16x16x4xf32>
    tpu.vector_store %arg8[%c0_9, %c2, %c1, %c0_10], %6 {strides = array<i32>} : memref<2x20x18x4xf32, #tpu.memory_space<vmem>>, vector<2x16x16x4xf32>,
    %c0_i32 = arith.constant 0 : i32
    %8 = arith.cmpi sgt, %arg1, %c0_i32 : i32
    %9 = arith.extui %8 : i1 to i32
    %c0_i32_11 = arith.constant 0 : i32
    %10 = arith.cmpi ne, %9, %c0_i32_11 : i32
    scf.if %10 {
      %c2_i32 = arith.constant 2 : i32
      %96 = arith.subi %1, %c2_i32 : i32
      %c0_i32_139 = arith.constant 0 : i32
      %97 = arith.maxsi %96, %c0_i32_139 : i32
      %c0_140 = arith.constant 0 : index
      %98 = arith.index_cast %97 : i32 to index
      %c0_141 = arith.constant 0 : index
      %c0_142 = arith.constant 0 : index
      %99 = vector.load %arg2[%c0_140, %98, %c0_141, %c0_142] : memref<2x16x16x4xf32, #tpu.memory_space<vmem>>, vector<2x2x16x4xf32>
      %c0_143 = arith.constant 0 : index
      %c0_144 = arith.constant 0 : index
      %c1_145 = arith.constant 1 : index
      %c0_146 = arith.constant 0 : index
      %100 = vector.load %arg8[%c0_143, %c0_144, %c1_145, %c0_146] : memref<2x20x18x4xf32, #tpu.memory_space<vmem>>, vector<2x2x16x4xf32>
      tpu.vector_store %arg8[%c0_143, %c0_144, %c1_145, %c0_146], %99 {strides = array<i32>} : memref<2x20x18x4xf32, #tpu.memory_space<vmem>>, vector<2x2x16x4xf32>,
    } else {
    }
    %c0_i32_12 = arith.constant 0 : i32
    %11 = arith.cmpi eq, %arg1, %c0_i32_12 : i32
    %12 = arith.extui %11 : i1 to i32
    %c0_i32_13 = arith.constant 0 : i32
    %13 = arith.cmpi ne, %12, %c0_i32_13 : i32
    scf.if %13 {
      %cst_139 = arith.constant 0.000000e+00 : f32
      %96 = vector.broadcast %cst_139 : f32 to vector<2x2x18x4xf32>
      %c0_140 = arith.constant 0 : index
      %c0_141 = arith.constant 0 : index
      %c0_142 = arith.constant 0 : index
      %c0_143 = arith.constant 0 : index
      %97 = vector.load %arg8[%c0_140, %c0_141, %c0_142, %c0_143] : memref<2x20x18x4xf32, #tpu.memory_space<vmem>>, vector<2x2x18x4xf32>
      tpu.vector_store %arg8[%c0_140, %c0_141, %c0_142, %c0_143], %96 {strides = array<i32>} : memref<2x20x18x4xf32, #tpu.memory_space<vmem>>, vector<2x2x18x4xf32>,
    } else {
    }
    %c0_i32_14 = arith.constant 0 : i32
    %14 = arith.cmpi slt, %arg1, %c0_i32_14 : i32
    %15 = arith.extui %14 : i1 to i32
    %c0_i32_15 = arith.constant 0 : i32
    %16 = arith.cmpi ne, %15, %c0_i32_15 : i32
    scf.if %16 {
      %c16_i32_139 = arith.constant 16 : i32
      %96 = arith.addi %1, %c16_i32_139 : i32
      %c14_i32 = arith.constant 14 : i32
      %97 = arith.minsi %96, %c14_i32 : i32
      %c0_140 = arith.constant 0 : index
      %98 = arith.index_cast %97 : i32 to index
      %c0_141 = arith.constant 0 : index
      %c0_142 = arith.constant 0 : index
      %99 = vector.load %arg2[%c0_140, %98, %c0_141, %c0_142] : memref<2x16x16x4xf32, #tpu.memory_space<vmem>>, vector<2x2x16x4xf32>
      %c0_143 = arith.constant 0 : index
      %c18 = arith.constant 18 : index
      %c1_144 = arith.constant 1 : index
      %c0_145 = arith.constant 0 : index
      %100 = vector.load %arg8[%c0_143, %c18, %c1_144, %c0_145] : memref<2x20x18x4xf32, #tpu.memory_space<vmem>>, vector<2x2x16x4xf32>
      tpu.vector_store %arg8[%c0_143, %c18, %c1_144, %c0_145], %99 {strides = array<i32>} : memref<2x20x18x4xf32, #tpu.memory_space<vmem>>, vector<2x2x16x4xf32>,
    } else {
    }
    %c0_i32_16 = arith.constant 0 : i32
    %17 = arith.cmpi eq, %arg1, %c0_i32_16 : i32
    %18 = arith.extui %17 : i1 to i32
    %c0_i32_17 = arith.constant 0 : i32
    %19 = arith.cmpi ne, %18, %c0_i32_17 : i32
    scf.if %19 {
      %cst_139 = arith.constant 0.000000e+00 : f32
      %96 = vector.broadcast %cst_139 : f32 to vector<2x2x18x4xf32>
      %c0_140 = arith.constant 0 : index
      %c18 = arith.constant 18 : index
      %c0_141 = arith.constant 0 : index
      %c0_142 = arith.constant 0 : index
      %97 = vector.load %arg8[%c0_140, %c18, %c0_141, %c0_142] : memref<2x20x18x4xf32, #tpu.memory_space<vmem>>, vector<2x2x18x4xf32>
      tpu.vector_store %arg8[%c0_140, %c18, %c0_141, %c0_142], %96 {strides = array<i32>} : memref<2x20x18x4xf32, #tpu.memory_space<vmem>>, vector<2x2x18x4xf32>,
    } else {
    }
    %cst_18 = arith.constant 0.000000e+00 : f32
    %20 = vector.broadcast %cst_18 : f32 to vector<576x4xf32>
    %c0_19 = arith.constant 0 : index
    %c0_20 = arith.constant 0 : index
    %c0_21 = arith.constant 0 : index
    %c0_22 = arith.constant 0 : index
    %21 = vector.load %arg8[%c0_19, %c0_20, %c0_21, %c0_22] : memref<2x20x18x4xf32, #tpu.memory_space<vmem>>, vector<2x18x16x4xf32>
    %c0_23 = arith.constant 0 : index
    %c0_24 = arith.constant 0 : index
    %c1_25 = arith.constant 1 : index
    %c0_26 = arith.constant 0 : index
    %22 = vector.load %arg8[%c0_23, %c0_24, %c1_25, %c0_26] : memref<2x20x18x4xf32, #tpu.memory_space<vmem>>, vector<2x18x16x4xf32>
    %c0_27 = arith.constant 0 : index
    %c0_28 = arith.constant 0 : index
    %c2_29 = arith.constant 2 : index
    %c0_30 = arith.constant 0 : index
    %23 = vector.load %arg8[%c0_27, %c0_28, %c2_29, %c0_30] : memref<2x20x18x4xf32, #tpu.memory_space<vmem>>, vector<2x18x16x4xf32>
    %24 = tpu.concatenate %21, %22, %23 in 3 : vector<2x18x16x4xf32>, vector<2x18x16x4xf32>, vector<2x18x16x4xf32> -> vector<2x18x16x12xf32>
    %25 = vector.shape_cast %24 : vector<2x18x16x12xf32> to vector<576x12xf32>
    %c0_31 = arith.constant 0 : index
    %c0_32 = arith.constant 0 : index
    %26 = vector.load %arg3[%c0_31, %c0_32] : memref<36x4xf32, #tpu.memory_space<vmem>>, vector<12x4xf32>
    %cst_33 = arith.constant dense<0.000000e+00> : vector<576x4xf32>
    %27 = tpu.matmul %25, %26, %cst_33 {dimension_numbers = #tpu.dot_dimension_numbers<[1], [0], [0], [1], [0, 0, 1, 1], [], []>} : vector<576x12xf32>, vector<12x4xf32>, vector<576x4xf32> -> vector<576x4xf32>
    %28 = arith.addf %20, %27 : vector<576x4xf32>
    %c0_34 = arith.constant 0 : index
    %c1_35 = arith.constant 1 : index
    %c0_36 = arith.constant 0 : index
    %c0_37 = arith.constant 0 : index
    %29 = vector.load %arg8[%c0_34, %c1_35, %c0_36, %c0_37] : memref<2x20x18x4xf32, #tpu.memory_space<vmem>>, vector<2x18x16x4xf32>
    %c0_38 = arith.constant 0 : index
    %c1_39 = arith.constant 1 : index
    %c1_40 = arith.constant 1 : index
    %c0_41 = arith.constant 0 : index
    %30 = vector.load %arg8[%c0_38, %c1_39, %c1_40, %c0_41] : memref<2x20x18x4xf32, #tpu.memory_space<vmem>>, vector<2x18x16x4xf32>
    %c0_42 = arith.constant 0 : index
    %c1_43 = arith.constant 1 : index
    %c2_44 = arith.constant 2 : index
    %c0_45 = arith.constant 0 : index
    %31 = vector.load %arg8[%c0_42, %c1_43, %c2_44, %c0_45] : memref<2x20x18x4xf32, #tpu.memory_space<vmem>>, vector<2x18x16x4xf32>
    %32 = tpu.concatenate %29, %30, %31 in 3 : vector<2x18x16x4xf32>, vector<2x18x16x4xf32>, vector<2x18x16x4xf32> -> vector<2x18x16x12xf32>
    %33 = vector.shape_cast %32 : vector<2x18x16x12xf32> to vector<576x12xf32>
    %c12 = arith.constant 12 : index
    %c0_46 = arith.constant 0 : index
    %34 = vector.load %arg3[%c12, %c0_46] : memref<36x4xf32, #tpu.memory_space<vmem>>, vector<12x4xf32>
    %cst_47 = arith.constant dense<0.000000e+00> : vector<576x4xf32>
    %35 = tpu.matmul %33, %34, %cst_47 {dimension_numbers = #tpu.dot_dimension_numbers<[1], [0], [0], [1], [0, 0, 1, 1], [], []>} : vector<576x12xf32>, vector<12x4xf32>, vector<576x4xf32> -> vector<576x4xf32>
    %36 = arith.addf %28, %35 : vector<576x4xf32>
    %c0_48 = arith.constant 0 : index
    %c2_49 = arith.constant 2 : index
    %c0_50 = arith.constant 0 : index
    %c0_51 = arith.constant 0 : index
    %37 = vector.load %arg8[%c0_48, %c2_49, %c0_50, %c0_51] : memref<2x20x18x4xf32, #tpu.memory_space<vmem>>, vector<2x18x16x4xf32>
    %c0_52 = arith.constant 0 : index
    %c2_53 = arith.constant 2 : index
    %c1_54 = arith.constant 1 : index
    %c0_55 = arith.constant 0 : index
    %38 = vector.load %arg8[%c0_52, %c2_53, %c1_54, %c0_55] : memref<2x20x18x4xf32, #tpu.memory_space<vmem>>, vector<2x18x16x4xf32>
    %c0_56 = arith.constant 0 : index
    %c2_57 = arith.constant 2 : index
    %c2_58 = arith.constant 2 : index
    %c0_59 = arith.constant 0 : index
    %39 = vector.load %arg8[%c0_56, %c2_57, %c2_58, %c0_59] : memref<2x20x18x4xf32, #tpu.memory_space<vmem>>, vector<2x18x16x4xf32>
    %40 = tpu.concatenate %37, %38, %39 in 3 : vector<2x18x16x4xf32>, vector<2x18x16x4xf32>, vector<2x18x16x4xf32> -> vector<2x18x16x12xf32>
    %41 = vector.shape_cast %40 : vector<2x18x16x12xf32> to vector<576x12xf32>
    %c24 = arith.constant 24 : index
    %c0_60 = arith.constant 0 : index
    %42 = vector.load %arg3[%c24, %c0_60] : memref<36x4xf32, #tpu.memory_space<vmem>>, vector<12x4xf32>
    %cst_61 = arith.constant dense<0.000000e+00> : vector<576x4xf32>
    %43 = tpu.matmul %41, %42, %cst_61 {dimension_numbers = #tpu.dot_dimension_numbers<[1], [0], [0], [1], [0, 0, 1, 1], [], []>} : vector<576x12xf32>, vector<12x4xf32>, vector<576x4xf32> -> vector<576x4xf32>
    %44 = arith.addf %36, %43 : vector<576x4xf32>
    %c0_62 = arith.constant 0 : index
    %c0_63 = arith.constant 0 : index
    %45 = vector.load %arg4[%c0_62, %c0_63] : memref<1x4xf32, #tpu.memory_space<vmem>>, vector<1x4xf32>
    %46 = vector.broadcast %45 : vector<1x4xf32> to vector<576x4xf32>
    %47 = arith.addf %44, %46 : vector<576x4xf32>
    %cst_64 = arith.constant 0.000000e+00 : f32
    %48 = vector.broadcast %cst_64 : f32 to vector<576x4xf32>
    %49 = arith.maximumf %47, %48 : vector<576x4xf32>
    %cst_65 = arith.constant 0.000000e+00 : f32
    %50 = vector.broadcast %cst_65 : f32 to vector<2x18x1x4xf32>
    %c0_66 = arith.constant 0 : index
    %c0_67 = arith.constant 0 : index
    %c0_68 = arith.constant 0 : index
    %c0_69 = arith.constant 0 : index
    %51 = vector.load %arg9[%c0_66, %c0_67, %c0_68, %c0_69] : memref<2x18x18x4xf32, #tpu.memory_space<vmem>>, vector<2x18x1x4xf32>
    tpu.vector_store %arg9[%c0_66, %c0_67, %c0_68, %c0_69], %50 {strides = array<i32>} : memref<2x18x18x4xf32, #tpu.memory_space<vmem>>, vector<2x18x1x4xf32>,
    %c0_70 = arith.constant 0 : index
    %c0_71 = arith.constant 0 : index
    %c17_72 = arith.constant 17 : index
    %c0_73 = arith.constant 0 : index
    %52 = vector.load %arg9[%c0_70, %c0_71, %c17_72, %c0_73] : memref<2x18x18x4xf32, #tpu.memory_space<vmem>>, vector<2x18x1x4xf32>
    tpu.vector_store %arg9[%c0_70, %c0_71, %c17_72, %c0_73], %50 {strides = array<i32>} : memref<2x18x18x4xf32, #tpu.memory_space<vmem>>, vector<2x18x1x4xf32>,
    %53 = vector.shape_cast %49 : vector<576x4xf32> to vector<2x18x16x4xf32>
    %c0_74 = arith.constant 0 : index
    %c0_75 = arith.constant 0 : index
    %c1_76 = arith.constant 1 : index
    %c0_77 = arith.constant 0 : index
    %54 = vector.load %arg9[%c0_74, %c0_75, %c1_76, %c0_77] : memref<2x18x18x4xf32, #tpu.memory_space<vmem>>, vector<2x18x16x4xf32>
    tpu.vector_store %arg9[%c0_74, %c0_75, %c1_76, %c0_77], %53 {strides = array<i32>} : memref<2x18x18x4xf32, #tpu.memory_space<vmem>>, vector<2x18x16x4xf32>,
    %c0_i32_78 = arith.constant 0 : i32
    %55 = arith.cmpi eq, %arg1, %c0_i32_78 : i32
    %56 = arith.extui %55 : i1 to i32
    %c0_i32_79 = arith.constant 0 : i32
    %57 = arith.cmpi ne, %56, %c0_i32_79 : i32
    scf.if %57 {
      %cst_139 = arith.constant 0.000000e+00 : f32
      %96 = vector.broadcast %cst_139 : f32 to vector<2x1x18x4xf32>
      %c0_140 = arith.constant 0 : index
      %c0_141 = arith.constant 0 : index
      %c0_142 = arith.constant 0 : index
      %c0_143 = arith.constant 0 : index
      %97 = vector.load %arg9[%c0_140, %c0_141, %c0_142, %c0_143] : memref<2x18x18x4xf32, #tpu.memory_space<vmem>>, vector<2x1x18x4xf32>
      tpu.vector_store %arg9[%c0_140, %c0_141, %c0_142, %c0_143], %96 {strides = array<i32>} : memref<2x18x18x4xf32, #tpu.memory_space<vmem>>, vector<2x1x18x4xf32>,
    } else {
    }
    %c0_i32_80 = arith.constant 0 : i32
    %58 = arith.cmpi eq, %arg1, %c0_i32_80 : i32
    %59 = arith.extui %58 : i1 to i32
    %c0_i32_81 = arith.constant 0 : i32
    %60 = arith.cmpi ne, %59, %c0_i32_81 : i32
    scf.if %60 {
      %cst_139 = arith.constant 0.000000e+00 : f32
      %96 = vector.broadcast %cst_139 : f32 to vector<2x1x18x4xf32>
      %c0_140 = arith.constant 0 : index
      %c17_141 = arith.constant 17 : index
      %c0_142 = arith.constant 0 : index
      %c0_143 = arith.constant 0 : index
      %97 = vector.load %arg9[%c0_140, %c17_141, %c0_142, %c0_143] : memref<2x18x18x4xf32, #tpu.memory_space<vmem>>, vector<2x1x18x4xf32>
      tpu.vector_store %arg9[%c0_140, %c17_141, %c0_142, %c0_143], %96 {strides = array<i32>} : memref<2x18x18x4xf32, #tpu.memory_space<vmem>>, vector<2x1x18x4xf32>,
    } else {
    }
    %cst_82 = arith.constant 0.000000e+00 : f32
    %61 = vector.broadcast %cst_82 : f32 to vector<512x4xf32>
    %c0_83 = arith.constant 0 : index
    %c0_84 = arith.constant 0 : index
    %c0_85 = arith.constant 0 : index
    %c0_86 = arith.constant 0 : index
    %62 = vector.load %arg9[%c0_83, %c0_84, %c0_85, %c0_86] : memref<2x18x18x4xf32, #tpu.memory_space<vmem>>, vector<2x16x16x4xf32>
    %c0_87 = arith.constant 0 : index
    %c0_88 = arith.constant 0 : index
    %c1_89 = arith.constant 1 : index
    %c0_90 = arith.constant 0 : index
    %63 = vector.load %arg9[%c0_87, %c0_88, %c1_89, %c0_90] : memref<2x18x18x4xf32, #tpu.memory_space<vmem>>, vector<2x16x16x4xf32>
    %c0_91 = arith.constant 0 : index
    %c0_92 = arith.constant 0 : index
    %c2_93 = arith.constant 2 : index
    %c0_94 = arith.constant 0 : index
    %64 = vector.load %arg9[%c0_91, %c0_92, %c2_93, %c0_94] : memref<2x18x18x4xf32, #tpu.memory_space<vmem>>, vector<2x16x16x4xf32>
    %65 = tpu.concatenate %62, %63, %64 in 3 : vector<2x16x16x4xf32>, vector<2x16x16x4xf32>, vector<2x16x16x4xf32> -> vector<2x16x16x12xf32>
    %66 = vector.shape_cast %65 : vector<2x16x16x12xf32> to vector<512x12xf32>
    %c0_95 = arith.constant 0 : index
    %c0_96 = arith.constant 0 : index
    %67 = vector.load %arg5[%c0_95, %c0_96] : memref<36x4xf32, #tpu.memory_space<vmem>>, vector<12x4xf32>
    %cst_97 = arith.constant dense<0.000000e+00> : vector<512x4xf32>
    %68 = tpu.matmul %66, %67, %cst_97 {dimension_numbers = #tpu.dot_dimension_numbers<[1], [0], [0], [1], [0, 0, 1, 1], [], []>} : vector<512x12xf32>, vector<12x4xf32>, vector<512x4xf32> -> vector<512x4xf32>
    %69 = arith.addf %61, %68 : vector<512x4xf32>
    %c0_98 = arith.constant 0 : index
    %c1_99 = arith.constant 1 : index
    %c0_100 = arith.constant 0 : index
    %c0_101 = arith.constant 0 : index
    %70 = vector.load %arg9[%c0_98, %c1_99, %c0_100, %c0_101] : memref<2x18x18x4xf32, #tpu.memory_space<vmem>>, vector<2x16x16x4xf32>
    %c0_102 = arith.constant 0 : index
    %c1_103 = arith.constant 1 : index
    %c1_104 = arith.constant 1 : index
    %c0_105 = arith.constant 0 : index
    %71 = vector.load %arg9[%c0_102, %c1_103, %c1_104, %c0_105] : memref<2x18x18x4xf32, #tpu.memory_space<vmem>>, vector<2x16x16x4xf32>
    %c0_106 = arith.constant 0 : index
    %c1_107 = arith.constant 1 : index
    %c2_108 = arith.constant 2 : index
    %c0_109 = arith.constant 0 : index
    %72 = vector.load %arg9[%c0_106, %c1_107, %c2_108, %c0_109] : memref<2x18x18x4xf32, #tpu.memory_space<vmem>>, vector<2x16x16x4xf32>
    %73 = tpu.concatenate %70, %71, %72 in 3 : vector<2x16x16x4xf32>, vector<2x16x16x4xf32>, vector<2x16x16x4xf32> -> vector<2x16x16x12xf32>
    %74 = vector.shape_cast %73 : vector<2x16x16x12xf32> to vector<512x12xf32>
    %c12_110 = arith.constant 12 : index
    %c0_111 = arith.constant 0 : index
    %75 = vector.load %arg5[%c12_110, %c0_111] : memref<36x4xf32, #tpu.memory_space<vmem>>, vector<12x4xf32>
    %cst_112 = arith.constant dense<0.000000e+00> : vector<512x4xf32>
    %76 = tpu.matmul %74, %75, %cst_112 {dimension_numbers = #tpu.dot_dimension_numbers<[1], [0], [0], [1], [0, 0, 1, 1], [], []>} : vector<512x12xf32>, vector<12x4xf32>, vector<512x4xf32> -> vector<512x4xf32>
    %77 = arith.addf %69, %76 : vector<512x4xf32>
    %c0_113 = arith.constant 0 : index
    %c2_114 = arith.constant 2 : index
    %c0_115 = arith.constant 0 : index
    %c0_116 = arith.constant 0 : index
    %78 = vector.load %arg9[%c0_113, %c2_114, %c0_115, %c0_116] : memref<2x18x18x4xf32, #tpu.memory_space<vmem>>, vector<2x16x16x4xf32>
    %c0_117 = arith.constant 0 : index
    %c2_118 = arith.constant 2 : index
    %c1_119 = arith.constant 1 : index
    %c0_120 = arith.constant 0 : index
    %79 = vector.load %arg9[%c0_117, %c2_118, %c1_119, %c0_120] : memref<2x18x18x4xf32, #tpu.memory_space<vmem>>, vector<2x16x16x4xf32>
    %c0_121 = arith.constant 0 : index
    %c2_122 = arith.constant 2 : index
    %c2_123 = arith.constant 2 : index
    %c0_124 = arith.constant 0 : index
    %80 = vector.load %arg9[%c0_121, %c2_122, %c2_123, %c0_124] : memref<2x18x18x4xf32, #tpu.memory_space<vmem>>, vector<2x16x16x4xf32>
    %81 = tpu.concatenate %78, %79, %80 in 3 : vector<2x16x16x4xf32>, vector<2x16x16x4xf32>, vector<2x16x16x4xf32> -> vector<2x16x16x12xf32>
    %82 = vector.shape_cast %81 : vector<2x16x16x12xf32> to vector<512x12xf32>
    %c24_125 = arith.constant 24 : index
    %c0_126 = arith.constant 0 : index
    %83 = vector.load %arg5[%c24_125, %c0_126] : memref<36x4xf32, #tpu.memory_space<vmem>>, vector<12x4xf32>
    %cst_127 = arith.constant dense<0.000000e+00> : vector<512x4xf32>
    %84 = tpu.matmul %82, %83, %cst_127 {dimension_numbers = #tpu.dot_dimension_numbers<[1], [0], [0], [1], [0, 0, 1, 1], [], []>} : vector<512x12xf32>, vector<12x4xf32>, vector<512x4xf32> -> vector<512x4xf32>
    %85 = arith.addf %77, %84 : vector<512x4xf32>
    %c0_128 = arith.constant 0 : index
    %c0_129 = arith.constant 0 : index
    %86 = vector.load %arg6[%c0_128, %c0_129] : memref<1x4xf32, #tpu.memory_space<vmem>>, vector<1x4xf32>
    %87 = vector.broadcast %86 : vector<1x4xf32> to vector<512x4xf32>
    %88 = arith.addf %85, %87 : vector<512x4xf32>
    %c0_130 = arith.constant 0 : index
    %c2_131 = arith.constant 2 : index
    %c1_132 = arith.constant 1 : index
    %c0_133 = arith.constant 0 : index
    %89 = vector.load %arg8[%c0_130, %c2_131, %c1_132, %c0_133] : memref<2x20x18x4xf32, #tpu.memory_space<vmem>>, vector<2x16x16x4xf32>
    %90 = vector.shape_cast %89 : vector<2x16x16x4xf32> to vector<512x4xf32>
    %91 = arith.addf %90, %88 : vector<512x4xf32>
    %cst_134 = arith.constant 0.000000e+00 : f32
    %92 = vector.broadcast %cst_134 : f32 to vector<512x4xf32>
    %93 = arith.maximumf %91, %92 : vector<512x4xf32>
    %94 = vector.shape_cast %93 : vector<512x4xf32> to vector<2x16x16x4xf32>
    %c0_135 = arith.constant 0 : index
    %c0_136 = arith.constant 0 : index
    %c0_137 = arith.constant 0 : index
    %c0_138 = arith.constant 0 : index
    %95 = vector.load %arg7[%c0_135, %c0_136, %c0_137, %c0_138] : memref<2x16x16x4xf32, #tpu.memory_space<vmem>>, vector<2x16x16x4xf32>
    tpu.vector_store %arg7[%c0_135, %c0_136, %c0_137, %c0_138], %94 {strides = array<i32>} : memref<2x16x16x4xf32, #tpu.memory_space<vmem>>, vector<2x16x16x4xf32>,
    return
  }
  func.func @transform_0(%arg0: i32, %arg1: i32) -> (i32, i32, i32, i32) {
    %c0_i32 = arith.constant 0 : i32
    %c0_i32_0 = arith.constant 0 : i32
    %c0_i32_1 = arith.constant 0 : i32
    %c0_i32_2 = arith.constant 0 : i32
    return %arg0, %c0_i32, %c0_i32_0, %c0_i32_1 : i32, i32, i32, i32
  }
  func.func @transform_1(%arg0: i32, %arg1: i32) -> (i32, i32) {
    %c0_i32 = arith.constant 0 : i32
    %c0_i32_0 = arith.constant 0 : i32
    %c0_i32_1 = arith.constant 0 : i32
    return %c0_i32, %c0_i32_0 : i32, i32
  }
  func.func @transform_2(%arg0: i32, %arg1: i32) -> (i32, i32) {
    %c0_i32 = arith.constant 0 : i32
    %c0_i32_0 = arith.constant 0 : i32
    %c0_i32_1 = arith.constant 0 : i32
    return %c0_i32, %c0_i32_0 : i32, i32
  }
  func.func @transform_3(%arg0: i32, %arg1: i32) -> (i32, i32) {
    %c0_i32 = arith.constant 0 : i32
    %c0_i32_0 = arith.constant 0 : i32
    %c0_i32_1 = arith.constant 0 : i32
    return %c0_i32, %c0_i32_0 : i32, i32
  }
  func.func @transform_4(%arg0: i32, %arg1: i32) -> (i32, i32) {
    %c0_i32 = arith.constant 0 : i32
    %c0_i32_0 = arith.constant 0 : i32
    %c0_i32_1 = arith.constant 0 : i32
    return %c0_i32, %c0_i32_0 : i32, i32
  }
  func.func @transform_5(%arg0: i32, %arg1: i32) -> (i32, i32, i32, i32) {
    %c0_i32 = arith.constant 0 : i32
    %c0_i32_0 = arith.constant 0 : i32
    %c0_i32_1 = arith.constant 0 : i32
    return %arg0, %arg1, %c0_i32, %c0_i32_0 : i32, i32, i32, i32
  }
}

</mosaic_0001>

<llo_original>
// kernel: tpu_custom_call.1
$region0: #{tpu_custom_call.1}
  #allocation0 [shape = 'u32[]', space=smem, size = 0x4, offset = 0x4, fixed_abs, tag = 'smem constant byte address 0x4 - core index']
  #allocation1 [shape = 'u32[144,128]{1,0:T(1,128)}', space=vmem, size = 0x12000, scoped, tag = 'internal scratch']
  #allocation2 [shape = 'f32[2,20,18,4]{3,2,1,0:T(8,128)}', space=vmem, size = 0x78000, scoped, tag = 'scratch operand']
  #allocation3 [shape = 'f32[2,18,18,4]{3,2,1,0:T(8,128)}', space=vmem, size = 0x6c000, scoped, tag = 'scratch operand']
  %s0 = inlined_call_operand.vmem [shape: f32[2,16,16,4], index: 0, kind: input, shape index: {}]
  %s1 = inlined_call_operand.vmem [shape: f32[36,4], index: 1, kind: input, shape index: {}]
  %s2 = inlined_call_operand.vmem [shape: f32[1,4], index: 2, kind: input, shape index: {}]
  %s3 = inlined_call_operand.vmem [shape: f32[36,4], index: 3, kind: input, shape index: {}]
  %s4 = inlined_call_operand.vmem [shape: f32[1,4], index: 4, kind: input, shape index: {}]
  %s5 = inlined_call_operand.vmem [shape: f32[2,16,16,4], index: 5, kind: output, shape index: {}]
  %s6 = sld [smem:[#allocation0]]
  $region50: #{tpu_custom_call.1} parent=0
    _
  %s8 = ssub.s32 1, %s6
  %s9 = scalar_select 0, %s8, %s6
  // Predicated region
  $region2: #{tpu_custom_call.1} parent=0 // pred_check
    _
  $region3: #{tpu_custom_call.1} parent=0 // pred_check_branch
    %11 = sbr.rel (0) target = $region5
  $region4: #{tpu_custom_call.1} parent=0 // pred_region
    _
  $region5: #{tpu_custom_call.1} parent=0 // pred_fallthru
    _
  // Predicated region
  $region6: #{tpu_custom_call.1} parent=0 // pred_check
    _
  $region7: #{tpu_custom_call.1} parent=0 // pred_check_branch
    %13 = sbr.rel (0) target = $region9
  $region8: #{tpu_custom_call.1} parent=0 // pred_region
    _
  $region9: #{tpu_custom_call.1} parent=0 // pred_fallthru
    _
  // Predicated region
  $region10: #{tpu_custom_call.1} parent=0 // pred_check
    _
  $region11: #{tpu_custom_call.1} parent=0 // pred_check_branch
    %15 = sbr.rel (0) target = $region13
  $region12: #{tpu_custom_call.1} parent=0 // pred_region
    _
  $region13: #{tpu_custom_call.1} parent=0 // pred_fallthru
    _
  // Predicated region
  $region14: #{tpu_custom_call.1} parent=0 // pred_check
    _
  $region15: #{tpu_custom_call.1} parent=0 // pred_check_branch
    %17 = sbr.rel (0) target = $region17
  $region16: #{tpu_custom_call.1} parent=0 // pred_region
    _
  $region17: #{tpu_custom_call.1} parent=0 // pred_fallthru
    _
  // Predicated region
  $region18: #{tpu_custom_call.1} parent=0 // pred_check
    _
  $region19: #{tpu_custom_call.1} parent=0 // pred_check_branch
    %19 = sbr.rel (0) target = $region21
  $region20: #{tpu_custom_call.1} parent=0 // pred_region
    _
  $region21: #{tpu_custom_call.1} parent=0 // pred_fallthru
    _
  %s20 = smul.u32 0, 16
  %vm21 = vcmask 24576
  %22 = vst.msk [vmem:[#allocation2] sm:$0x1] %vm21, 0.0
  %23 = vst.msk [vmem:[#allocation2 + $0x18] sm:$0x1] %vm21, 0.0
  %24 = vst.msk [vmem:[#allocation2 + $0x30] sm:$0x1] %vm21, 0.0
  %25 = vst.msk [vmem:[#allocation2 + $0x48] sm:$0x1] %vm21, 0.0
  %26 = vst.msk [vmem:[#allocation2 + $0x60] sm:$0x1] %vm21, 0.0
  %27 = vst.msk [vmem:[#allocation2 + $0x78] sm:$0x1] %vm21, 0.0
  %28 = vst.msk [vmem:[#allocation2 + $0x90] sm:$0x1] %vm21, 0.0
  %29 = vst.msk [vmem:[#allocation2 + $0xa8] sm:$0x1] %vm21, 0.0
  %30 = vst.msk [vmem:[#allocation2 + $0xc0] sm:$0x1] %vm21, 0.0
  %31 = vst.msk [vmem:[#allocation2 + $0xd8] sm:$0x1] %vm21, 0.0
  %32 = vst.msk [vmem:[#allocation2 + $0xf0] sm:$0x1] %vm21, 0.0
  %33 = vst.msk [vmem:[#allocation2 + $0x108] sm:$0x1] %vm21, 0.0
  %34 = vst.msk [vmem:[#allocation2 + $0x120] sm:$0x1] %vm21, 0.0
  %35 = vst.msk [vmem:[#allocation2 + $0x138] sm:$0x1] %vm21, 0.0
  %36 = vst.msk [vmem:[#allocation2 + $0x150] sm:$0x1] %vm21, 0.0
  %37 = vst.msk [vmem:[#allocation2 + $0x168] sm:$0x1] %vm21, 0.0
  %38 = vst.msk [vmem:[#allocation2 + $0x180] sm:$0x1] %vm21, 0.0
  %39 = vst.msk [vmem:[#allocation2 + $0x198] sm:$0x1] %vm21, 0.0
  %40 = vst.msk [vmem:[#allocation2 + $0x1b0] sm:$0x1] %vm21, 0.0
  %41 = vst.msk [vmem:[#allocation2 + $0x1c8] sm:$0x1] %vm21, 0.0
  %42 = vst.msk [vmem:[#allocation2 + $0x1e0] sm:$0x1] %vm21, 0.0
  %43 = vst.msk [vmem:[#allocation2 + $0x1f8] sm:$0x1] %vm21, 0.0
  %44 = vst.msk [vmem:[#allocation2 + $0x210] sm:$0x1] %vm21, 0.0
  %45 = vst.msk [vmem:[#allocation2 + $0x228] sm:$0x1] %vm21, 0.0
  %46 = vst.msk [vmem:[#allocation2 + $0x240] sm:$0x1] %vm21, 0.0
  %47 = vst.msk [vmem:[#allocation2 + $0x258] sm:$0x1] %vm21, 0.0
  %48 = vst.msk [vmem:[#allocation2 + $0x270] sm:$0x1] %vm21, 0.0
  %49 = vst.msk [vmem:[#allocation2 + $0x288] sm:$0x1] %vm21, 0.0
  %50 = vst.msk [vmem:[#allocation2 + $0x2a0] sm:$0x1] %vm21, 0.0
  %51 = vst.msk [vmem:[#allocation2 + $0x2b8] sm:$0x1] %vm21, 0.0
  %52 = vst.msk [vmem:[#allocation2 + $0x2d0] sm:$0x1] %vm21, 0.0
  %53 = vst.msk [vmem:[#allocation2 + $0x2e8] sm:$0x1] %vm21, 0.0
  %54 = vst.msk [vmem:[#allocation2 + $0x300] sm:$0x1] %vm21, 0.0
  %55 = vst.msk [vmem:[#allocation2 + $0x318] sm:$0x1] %vm21, 0.0
  %56 = vst.msk [vmem:[#allocation2 + $0x330] sm:$0x1] %vm21, 0.0
  %57 = vst.msk [vmem:[#allocation2 + $0x348] sm:$0x1] %vm21, 0.0
  %58 = vst.msk [vmem:[#allocation2 + $0x360] sm:$0x1] %vm21, 0.0
  %59 = vst.msk [vmem:[#allocation2 + $0x378] sm:$0x1] %vm21, 0.0
  %60 = vst.msk [vmem:[#allocation2 + $0x390] sm:$0x1] %vm21, 0.0
  %61 = vst.msk [vmem:[#allocation2 + $0x3a8] sm:$0x1] %vm21, 0.0
  %62 = vst.msk [vmem:[#allocation2 + $0x11] sm:$0x1] %vm21, 0.0
  %63 = vst.msk [vmem:[#allocation2 + $0x29] sm:$0x1] %vm21, 0.0
  %64 = vst.msk [vmem:[#allocation2 + $0x41] sm:$0x1] %vm21, 0.0
  %65 = vst.msk [vmem:[#allocation2 + $0x59] sm:$0x1] %vm21, 0.0
  %66 = vst.msk [vmem:[#allocation2 + $0x71] sm:$0x1] %vm21, 0.0
  %67 = vst.msk [vmem:[#allocation2 + $0x89] sm:$0x1] %vm21, 0.0
  %68 = vst.msk [vmem:[#allocation2 + $0xa1] sm:$0x1] %vm21, 0.0
  %69 = vst.msk [vmem:[#allocation2 + $0xb9] sm:$0x1] %vm21, 0.0
  %70 = vst.msk [vmem:[#allocation2 + $0xd1] sm:$0x1] %vm21, 0.0
  %71 = vst.msk [vmem:[#allocation2 + $0xe9] sm:$0x1] %vm21, 0.0
  %72 = vst.msk [vmem:[#allocation2 + $0x101] sm:$0x1] %vm21, 0.0
  %73 = vst.msk [vmem:[#allocation2 + $0x119] sm:$0x1] %vm21, 0.0
  %74 = vst.msk [vmem:[#allocation2 + $0x131] sm:$0x1] %vm21, 0.0
  %75 = vst.msk [vmem:[#allocation2 + $0x149] sm:$0x1] %vm21, 0.0
  %76 = vst.msk [vmem:[#allocation2 + $0x161] sm:$0x1] %vm21, 0.0
  %77 = vst.msk [vmem:[#allocation2 + $0x179] sm:$0x1] %vm21, 0.0
  %78 = vst.msk [vmem:[#allocation2 + $0x191] sm:$0x1] %vm21, 0.0
  %79 = vst.msk [vmem:[#allocation2 + $0x1a9] sm:$0x1] %vm21, 0.0
  %80 = vst.msk [vmem:[#allocation2 + $0x1c1] sm:$0x1] %vm21, 0.0
  %81 = vst.msk [vmem:[#allocation2 + $0x1d9] sm:$0x1] %vm21, 0.0
  %82 = vst.msk [vmem:[#allocation2 + $0x1f1] sm:$0x1] %vm21, 0.0
  %83 = vst.msk [vmem:[#allocation2 + $0x209] sm:$0x1] %vm21, 0.0
  %84 = vst.msk [vmem:[#allocation2 + $0x221] sm:$0x1] %vm21, 0.0
  %85 = vst.msk [vmem:[#allocation2 + $0x239] sm:$0x1] %vm21, 0.0
  %86 = vst.msk [vmem:[#allocation2 + $0x251] sm:$0x1] %vm21, 0.0
  %87 = vst.msk [vmem:[#allocation2 + $0x269] sm:$0x1] %vm21, 0.0
  %88 = vst.msk [vmem:[#allocation2 + $0x281] sm:$0x1] %vm21, 0.0
  %89 = vst.msk [vmem:[#allocation2 + $0x299] sm:$0x1] %vm21, 0.0
  %90 = vst.msk [vmem:[#allocation2 + $0x2b1] sm:$0x1] %vm21, 0.0
  %91 = vst.msk [vmem:[#allocation2 + $0x2c9] sm:$0x1] %vm21, 0.0
  %92 = vst.msk [vmem:[#allocation2 + $0x2e1] sm:$0x1] %vm21, 0.0
  %93 = vst.msk [vmem:[#allocation2 + $0x2f9] sm:$0x1] %vm21, 0.0
  %94 = vst.msk [vmem:[#allocation2 + $0x311] sm:$0x1] %vm21, 0.0
  %95 = vst.msk [vmem:[#allocation2 + $0x329] sm:$0x1] %vm21, 0.0
  %96 = vst.msk [vmem:[#allocation2 + $0x341] sm:$0x1] %vm21, 0.0
  %97 = vst.msk [vmem:[#allocation2 + $0x359] sm:$0x1] %vm21, 0.0
  %98 = vst.msk [vmem:[#allocation2 + $0x371] sm:$0x1] %vm21, 0.0
  %99 = vst.msk [vmem:[#allocation2 + $0x389] sm:$0x1] %vm21, 0.0
  %100 = vst.msk [vmem:[#allocation2 + $0x3a1] sm:$0x1] %vm21, 0.0
  %101 = vst.msk [vmem:[#allocation2 + $0x3b9] sm:$0x1] %vm21, 0.0
  %s102 = smul.u32 %s20, 16
  %s103 = scalar_lea.vmem %s0, %s102
  %v104 = vld [vmem:[%s103] sm:$0xff]
  %v105 = vld [vmem:[%s103 + $0x8] sm:$0xff]
  %v106 = vld [vmem:[%s103 + $0x10] sm:$0xff]
  %v107 = vld [vmem:[%s103 + $0x18] sm:$0xff]
  %v108 = vld [vmem:[%s103 + $0x20] sm:$0xff]
  %v109 = vld [vmem:[%s103 + $0x28] sm:$0xff]
  %v110 = vld [vmem:[%s103 + $0x30] sm:$0xff]
  %v111 = vld [vmem:[%s103 + $0x38] sm:$0xff]
  %v112 = vld [vmem:[%s103 + $0x40] sm:$0xff]
  %v113 = vld [vmem:[%s103 + $0x48] sm:$0xff]
  %v114 = vld [vmem:[%s103 + $0x50] sm:$0xff]
  %v115 = vld [vmem:[%s103 + $0x58] sm:$0xff]
  %v116 = vld [vmem:[%s103 + $0x60] sm:$0xff]
  %v117 = vld [vmem:[%s103 + $0x68] sm:$0xff]
  %v118 = vld [vmem:[%s103 + $0x70] sm:$0xff]
  %v119 = vld [vmem:[%s103 + $0x78] sm:$0xff]
  %v120 = vld [vmem:[%s103 + $0x80] sm:$0xff]
  %v121 = vld [vmem:[%s103 + $0x88] sm:$0xff]
  %v122 = vld [vmem:[%s103 + $0x90] sm:$0xff]
  %v123 = vld [vmem:[%s103 + $0x98] sm:$0xff]
  %v124 = vld [vmem:[%s103 + $0xa0] sm:$0xff]
  %v125 = vld [vmem:[%s103 + $0xa8] sm:$0xff]
  %v126 = vld [vmem:[%s103 + $0xb0] sm:$0xff]
  %v127 = vld [vmem:[%s103 + $0xb8] sm:$0xff]
  %v128 = vld [vmem:[%s103 + $0xc0] sm:$0xff]
  %v129 = vld [vmem:[%s103 + $0xc8] sm:$0xff]
  %v130 = vld [vmem:[%s103 + $0xd0] sm:$0xff]
  %v131 = vld [vmem:[%s103 + $0xd8] sm:$0xff]
  %v132 = vld [vmem:[%s103 + $0xe0] sm:$0xff]
  %v133 = vld [vmem:[%s103 + $0xe8] sm:$0xff]
  %v134 = vld [vmem:[%s103 + $0xf0] sm:$0xff]
  %v135 = vld [vmem:[%s103 + $0xf8] sm:$0xff]
  %v136 = vld [vmem:[%s103 + $0x100] sm:$0xff]
  %v137 = vld [vmem:[%s103 + $0x108] sm:$0xff]
  %v138 = vld [vmem:[%s103 + $0x110] sm:$0xff]
  %v139 = vld [vmem:[%s103 + $0x118] sm:$0xff]
  %v140 = vld [vmem:[%s103 + $0x120] sm:$0xff]
  %v141 = vld [vmem:[%s103 + $0x128] sm:$0xff]
  %v142 = vld [vmem:[%s103 + $0x130] sm:$0xff]
  %v143 = vld [vmem:[%s103 + $0x138] sm:$0xff]
  %v144 = vld [vmem:[%s103 + $0x140] sm:$0xff]
  %v145 = vld [vmem:[%s103 + $0x148] sm:$0xff]
  %v146 = vld [vmem:[%s103 + $0x150] sm:$0xff]
  %v147 = vld [vmem:[%s103 + $0x158] sm:$0xff]
  %v148 = vld [vmem:[%s103 + $0x160] sm:$0xff]
  %v149 = vld [vmem:[%s103 + $0x168] sm:$0xff]
  %v150 = vld [vmem:[%s103 + $0x170] sm:$0xff]
  %v151 = vld [vmem:[%s103 + $0x178] sm:$0xff]
  %v152 = vld [vmem:[%s103 + $0x180] sm:$0xff]
  %v153 = vld [vmem:[%s103 + $0x188] sm:$0xff]
  %v154 = vld [vmem:[%s103 + $0x190] sm:$0xff]
  %v155 = vld [vmem:[%s103 + $0x198] sm:$0xff]
  %v156 = vld [vmem:[%s103 + $0x1a0] sm:$0xff]
  %v157 = vld [vmem:[%s103 + $0x1a8] sm:$0xff]
  %v158 = vld [vmem:[%s103 + $0x1b0] sm:$0xff]
  %v159 = vld [vmem:[%s103 + $0x1b8] sm:$0xff]
  %v160 = vld [vmem:[%s103 + $0x1c0] sm:$0xff]
  %v161 = vld [vmem:[%s103 + $0x1c8] sm:$0xff]
  %v162 = vld [vmem:[%s103 + $0x1d0] sm:$0xff]
  %v163 = vld [vmem:[%s103 + $0x1d8] sm:$0xff]
  %v164 = vld [vmem:[%s103 + $0x1e0] sm:$0xff]
  %v165 = vld [vmem:[%s103 + $0x1e8] sm:$0xff]
  %v166 = vld [vmem:[%s103 + $0x1f0] sm:$0xff]
  %v167 = vld [vmem:[%s103 + $0x1f8] sm:$0xff]
  %s168 = scalar_lea.vmem [#allocation2], 48
  %vm169 = vcmask 31744
  %170 = vst.msk [vmem:[%s168 + $0x1] sm:$0xff] %vm169, %v104
  %171 = vst.msk [vmem:[%s168 + $0x9] sm:$0xff] %vm169, %v105
  %172 = vst.msk [vmem:[%s168 + $0x19] sm:$0xff] %vm169, %v106
  %173 = vst.msk [vmem:[%s168 + $0x21] sm:$0xff] %vm169, %v107
  %174 = vst.msk [vmem:[%s168 + $0x31] sm:$0xff] %vm169, %v108
  %175 = vst.msk [vmem:[%s168 + $0x39] sm:$0xff] %vm169, %v109
  %176 = vst.msk [vmem:[%s168 + $0x49] sm:$0xff] %vm169, %v110
  %177 = vst.msk [vmem:[%s168 + $0x51] sm:$0xff] %vm169, %v111
  %178 = vst.msk [vmem:[%s168 + $0x61] sm:$0xff] %vm169, %v112
  %179 = vst.msk [vmem:[%s168 + $0x69] sm:$0xff] %vm169, %v113
  %180 = vst.msk [vmem:[%s168 + $0x79] sm:$0xff] %vm169, %v114
  %181 = vst.msk [vmem:[%s168 + $0x81] sm:$0xff] %vm169, %v115
  %182 = vst.msk [vmem:[%s168 + $0x91] sm:$0xff] %vm169, %v116
  %183 = vst.msk [vmem:[%s168 + $0x99] sm:$0xff] %vm169, %v117
  %184 = vst.msk [vmem:[%s168 + $0xa9] sm:$0xff] %vm169, %v118
  %185 = vst.msk [vmem:[%s168 + $0xb1] sm:$0xff] %vm169, %v119
  %186 = vst.msk [vmem:[%s168 + $0xc1] sm:$0xff] %vm169, %v120
  %187 = vst.msk [vmem:[%s168 + $0xc9] sm:$0xff] %vm169, %v121
  %188 = vst.msk [vmem:[%s168 + $0xd9] sm:$0xff] %vm169, %v122
  %189 = vst.msk [vmem:[%s168 + $0xe1] sm:$0xff] %vm169, %v123
  %190 = vst.msk [vmem:[%s168 + $0xf1] sm:$0xff] %vm169, %v124
  %191 = vst.msk [vmem:[%s168 + $0xf9] sm:$0xff] %vm169, %v125
  %192 = vst.msk [vmem:[%s168 + $0x109] sm:$0xff] %vm169, %v126
  %193 = vst.msk [vmem:[%s168 + $0x111] sm:$0xff] %vm169, %v127
  %194 = vst.msk [vmem:[%s168 + $0x121] sm:$0xff] %vm169, %v128
  %195 = vst.msk [vmem:[%s168 + $0x129] sm:$0xff] %vm169, %v129
  %196 = vst.msk [vmem:[%s168 + $0x139] sm:$0xff] %vm169, %v130
  %197 = vst.msk [vmem:[%s168 + $0x141] sm:$0xff] %vm169, %v131
  %198 = vst.msk [vmem:[%s168 + $0x151] sm:$0xff] %vm169, %v132
  %199 = vst.msk [vmem:[%s168 + $0x159] sm:$0xff] %vm169, %v133
  %200 = vst.msk [vmem:[%s168 + $0x169] sm:$0xff] %vm169, %v134
  %201 = vst.msk [vmem:[%s168 + $0x171] sm:$0xff] %vm169, %v135
  %202 = vst.msk [vmem:[%s168 + $0x1e1] sm:$0xff] %vm169, %v136
  %203 = vst.msk [vmem:[%s168 + $0x1e9] sm:$0xff] %vm169, %v137
  %204 = vst.msk [vmem:[%s168 + $0x1f9] sm:$0xff] %vm169, %v138
  %205 = vst.msk [vmem:[%s168 + $0x201] sm:$0xff] %vm169, %v139
  %206 = vst.msk [vmem:[%s168 + $0x211] sm:$0xff] %vm169, %v140
  %207 = vst.msk [vmem:[%s168 + $0x219] sm:$0xff] %vm169, %v141
  %208 = vst.msk [vmem:[%s168 + $0x229] sm:$0xff] %vm169, %v142
  %209 = vst.msk [vmem:[%s168 + $0x231] sm:$0xff] %vm169, %v143
  %210 = vst.msk [vmem:[%s168 + $0x241] sm:$0xff] %vm169, %v144
  %211 = vst.msk [vmem:[%s168 + $0x249] sm:$0xff] %vm169, %v145
  %212 = vst.msk [vmem:[%s168 + $0x259] sm:$0xff] %vm169, %v146
  %213 = vst.msk [vmem:[%s168 + $0x261] sm:$0xff] %vm169, %v147
  %214 = vst.msk [vmem:[%s168 + $0x271] sm:$0xff] %vm169, %v148
  %215 = vst.msk [vmem:[%s168 + $0x279] sm:$0xff] %vm169, %v149
  %216 = vst.msk [vmem:[%s168 + $0x289] sm:$0xff] %vm169, %v150
  %217 = vst.msk [vmem:[%s168 + $0x291] sm:$0xff] %vm169, %v151
  %218 = vst.msk [vmem:[%s168 + $0x2a1] sm:$0xff] %vm169, %v152
  %219 = vst.msk [vmem:[%s168 + $0x2a9] sm:$0xff] %vm169, %v153
  %220 = vst.msk [vmem:[%s168 + $0x2b9] sm:$0xff] %vm169, %v154
  %221 = vst.msk [vmem:[%s168 + $0x2c1] sm:$0xff] %vm169, %v155
  %222 = vst.msk [vmem:[%s168 + $0x2d1] sm:$0xff] %vm169, %v156
  %223 = vst.msk [vmem:[%s168 + $0x2d9] sm:$0xff] %vm169, %v157
  %224 = vst.msk [vmem:[%s168 + $0x2e9] sm:$0xff] %vm169, %v158
  %225 = vst.msk [vmem:[%s168 + $0x2f1] sm:$0xff] %vm169, %v159
  %226 = vst.msk [vmem:[%s168 + $0x301] sm:$0xff] %vm169, %v160
  %227 = vst.msk [vmem:[%s168 + $0x309] sm:$0xff] %vm169, %v161
  %228 = vst.msk [vmem:[%s168 + $0x319] sm:$0xff] %vm169, %v162
  %229 = vst.msk [vmem:[%s168 + $0x321] sm:$0xff] %vm169, %v163
  %230 = vst.msk [vmem:[%s168 + $0x331] sm:$0xff] %vm169, %v164
  %231 = vst.msk [vmem:[%s168 + $0x339] sm:$0xff] %vm169, %v165
  %232 = vst.msk [vmem:[%s168 + $0x349] sm:$0xff] %vm169, %v166
  %233 = vst.msk [vmem:[%s168 + $0x351] sm:$0xff] %vm169, %v167
  %p234 = scmp.gt.s32.totalorder 0, 0
  // Predicated region
  $region22: #{tpu_custom_call.1} parent=0 // pred_check
    %p235 = pneg %p234
  $region23: #{tpu_custom_call.1} parent=0 // pred_check_branch
    %237 = sbr.rel (%p235) target = $region25
  $region24: #{tpu_custom_call.1} parent=0 // pred_region
    %s238 = ssub.s32 %s20, 2
    %p239 = scmp.gt.s32.totalorder %s238, 0
    %s240 = scalar_select %p239, %s238, 0
    %s241 = smul.u32 %s240, 16
    %s242 = scalar_lea.vmem %s0, %s241
    %v243 = vld [vmem:[%s242] sm:$0xff]
    %v244 = vld [vmem:[%s242 + $0x8] sm:$0xff]
    %v245 = vld [vmem:[%s242 + $0x10] sm:$0xff]
    %v246 = vld [vmem:[%s242 + $0x18] sm:$0xff]
    %v247 = vld [vmem:[%s242 + $0x100] sm:$0xff]
    %v248 = vld [vmem:[%s242 + $0x108] sm:$0xff]
    %v249 = vld [vmem:[%s242 + $0x110] sm:$0xff]
    %v250 = vld [vmem:[%s242 + $0x118] sm:$0xff]
    %251 = vst.msk [vmem:[#allocation2 + $0x1] sm:$0xff] %vm169, %v243
    %252 = vst.msk [vmem:[#allocation2 + $0x9] sm:$0xff] %vm169, %v244
    %253 = vst.msk [vmem:[#allocation2 + $0x19] sm:$0xff] %vm169, %v245
    %254 = vst.msk [vmem:[#allocation2 + $0x21] sm:$0xff] %vm169, %v246
    %255 = vst.msk [vmem:[#allocation2 + $0x1e1] sm:$0xff] %vm169, %v247
    %256 = vst.msk [vmem:[#allocation2 + $0x1e9] sm:$0xff] %vm169, %v248
    %257 = vst.msk [vmem:[#allocation2 + $0x1f9] sm:$0xff] %vm169, %v249
    %258 = vst.msk [vmem:[#allocation2 + $0x201] sm:$0xff] %vm169, %v250
  $region25: #{tpu_custom_call.1} parent=0 // pred_fallthru
    _
  %p259 = scmp.eq.s32.totalorder 0, 0
  // Predicated region
  $region26: #{tpu_custom_call.1} parent=0 // pred_check
    %p260 = pneg %p259
  $region27: #{tpu_custom_call.1} parent=0 // pred_check_branch
    %262 = sbr.rel (%p260) target = $region29
  $region28: #{tpu_custom_call.1} parent=0 // pred_region
    %263 = vst.msk [vmem:[#allocation2] sm:$0xff] %vm169, 0.0
    %264 = vst.msk [vmem:[#allocation2 + $0x8] sm:$0xff] %vm169, 0.0
    %vm265 = vcmask 25600
    %266 = vst.msk [vmem:[#allocation2 + $0x10] sm:$0x3] %vm265, 0.0
    %267 = vst.msk [vmem:[#allocation2 + $0x18] sm:$0xff] %vm169, 0.0
    %268 = vst.msk [vmem:[#allocation2 + $0x20] sm:$0xff] %vm169, 0.0
    %269 = vst.msk [vmem:[#allocation2 + $0x28] sm:$0x3] %vm265, 0.0
    %270 = vst.msk [vmem:[#allocation2 + $0x1e0] sm:$0xff] %vm169, 0.0
    %271 = vst.msk [vmem:[#allocation2 + $0x1e8] sm:$0xff] %vm169, 0.0
    %272 = vst.msk [vmem:[#allocation2 + $0x1f0] sm:$0x3] %vm265, 0.0
    %273 = vst.msk [vmem:[#allocation2 + $0x1f8] sm:$0xff] %vm169, 0.0
    %274 = vst.msk [vmem:[#allocation2 + $0x200] sm:$0xff] %vm169, 0.0
    %275 = vst.msk [vmem:[#allocation2 + $0x208] sm:$0x3] %vm265, 0.0
  $region29: #{tpu_custom_call.1} parent=0 // pred_fallthru
    _
  %p276 = scmp.lt.s32.totalorder 0, 0
  // Predicated region
  $region30: #{tpu_custom_call.1} parent=0 // pred_check
    %p277 = pneg %p276
  $region31: #{tpu_custom_call.1} parent=0 // pred_check_branch
    %279 = sbr.rel (%p277) target = $region33
  $region32: #{tpu_custom_call.1} parent=0 // pred_region
    %s280 = sadd.s32 %s20, 16
    %p281 = scmp.lt.s32.totalorder %s280, 14
    %s282 = scalar_select %p281, %s280, 14
    %s283 = smul.u32 %s282, 16
    %s284 = scalar_lea.vmem %s0, %s283
    %v285 = vld [vmem:[%s284] sm:$0xff]
    %v286 = vld [vmem:[%s284 + $0x8] sm:$0xff]
    %v287 = vld [vmem:[%s284 + $0x10] sm:$0xff]
    %v288 = vld [vmem:[%s284 + $0x18] sm:$0xff]
    %v289 = vld [vmem:[%s284 + $0x100] sm:$0xff]
    %v290 = vld [vmem:[%s284 + $0x108] sm:$0xff]
    %v291 = vld [vmem:[%s284 + $0x110] sm:$0xff]
    %v292 = vld [vmem:[%s284 + $0x118] sm:$0xff]
    %s293 = scalar_lea.vmem [#allocation2], 432
    %294 = vst.msk [vmem:[%s293 + $0x1] sm:$0xff] %vm169, %v285
    %295 = vst.msk [vmem:[%s293 + $0x9] sm:$0xff] %vm169, %v286
    %296 = vst.msk [vmem:[%s293 + $0x19] sm:$0xff] %vm169, %v287
    %297 = vst.msk [vmem:[%s293 + $0x21] sm:$0xff] %vm169, %v288
    %298 = vst.msk [vmem:[%s293 + $0x1e1] sm:$0xff] %vm169, %v289
    %299 = vst.msk [vmem:[%s293 + $0x1e9] sm:$0xff] %vm169, %v290
    %300 = vst.msk [vmem:[%s293 + $0x1f9] sm:$0xff] %vm169, %v291
    %301 = vst.msk [vmem:[%s293 + $0x201] sm:$0xff] %vm169, %v292
  $region33: #{tpu_custom_call.1} parent=0 // pred_fallthru
    _
  // Predicated region
  $region34: #{tpu_custom_call.1} parent=0 // pred_check
    %p302 = pneg %p259
  $region35: #{tpu_custom_call.1} parent=0 // pred_check_branch
    %304 = sbr.rel (%p302) target = $region37
  $region36: #{tpu_custom_call.1} parent=0 // pred_region
    %s305 = scalar_lea.vmem [#allocation2], 432
    %306 = vst.msk [vmem:[%s305] sm:$0xff] %vm169, 0.0
    %307 = vst.msk [vmem:[%s305 + $0x8] sm:$0xff] %vm169, 0.0
    %vm308 = vcmask 25600
    %309 = vst.msk [vmem:[%s305 + $0x10] sm:$0x3] %vm308, 0.0
    %310 = vst.msk [vmem:[%s305 + $0x18] sm:$0xff] %vm169, 0.0
    %311 = vst.msk [vmem:[%s305 + $0x20] sm:$0xff] %vm169, 0.0
    %312 = vst.msk [vmem:[%s305 + $0x28] sm:$0x3] %vm308, 0.0
    %313 = vst.msk [vmem:[%s305 + $0x1e0] sm:$0xff] %vm169, 0.0
    %314 = vst.msk [vmem:[%s305 + $0x1e8] sm:$0xff] %vm169, 0.0
    %315 = vst.msk [vmem:[%s305 + $0x1f0] sm:$0x3] %vm308, 0.0
    %316 = vst.msk [vmem:[%s305 + $0x1f8] sm:$0xff] %vm169, 0.0
    %317 = vst.msk [vmem:[%s305 + $0x200] sm:$0xff] %vm169, 0.0
    %318 = vst.msk [vmem:[%s305 + $0x208] sm:$0x3] %vm308, 0.0
  $region37: #{tpu_custom_call.1} parent=0 // pred_fallthru
    _
  %v319 = vld [vmem:[#allocation2] sm:$0xff]
  %v320 = vld [vmem:[#allocation2 + $0x8] sm:$0xff]
  %v321 = vld [vmem:[#allocation2 + $0x18] sm:$0xff]
  %v322 = vld [vmem:[#allocation2 + $0x20] sm:$0xff]
  %v323 = vld [vmem:[#allocation2 + $0x30] sm:$0xff]
  %v324 = vld [vmem:[#allocation2 + $0x38] sm:$0xff]
  %v325 = vld [vmem:[#allocation2 + $0x48] sm:$0xff]
  %v326 = vld [vmem:[#allocation2 + $0x50] sm:$0xff]
  %v327 = vld [vmem:[#allocation2 + $0x60] sm:$0xff]
  %v328 = vld [vmem:[#allocation2 + $0x68] sm:$0xff]
  %v329 = vld [vmem:[#allocation2 + $0x78] sm:$0xff]
  %v330 = vld [vmem:[#allocation2 + $0x80] sm:$0xff]
  %v331 = vld [vmem:[#allocation2 + $0x90] sm:$0xff]
  %v332 = vld [vmem:[#allocation2 + $0x98] sm:$0xff]
  %v333 = vld [vmem:[#allocation2 + $0xa8] sm:$0xff]
  %v334 = vld [vmem:[#allocation2 + $0xb0] sm:$0xff]
  %v335 = vld [vmem:[#allocation2 + $0xc0] sm:$0xff]
  %v336 = vld [vmem:[#allocation2 + $0xc8] sm:$0xff]
  %v337 = vld [vmem:[#allocation2 + $0xd8] sm:$0xff]
  %v338 = vld [vmem:[#allocation2 + $0xe0] sm:$0xff]
  %v339 = vld [vmem:[#allocation2 + $0xf0] sm:$0xff]
  %v340 = vld [vmem:[#allocation2 + $0xf8] sm:$0xff]
  %v341 = vld [vmem:[#allocation2 + $0x108] sm:$0xff]
  %v342 = vld [vmem:[#allocation2 + $0x110] sm:$0xff]
  %v343 = vld [vmem:[#allocation2 + $0x120] sm:$0xff]
  %v344 = vld [vmem:[#allocation2 + $0x128] sm:$0xff]
  %v345 = vld [vmem:[#allocation2 + $0x138] sm:$0xff]
  %v346 = vld [vmem:[#allocation2 + $0x140] sm:$0xff]
  %v347 = vld [vmem:[#allocation2 + $0x150] sm:$0xff]
  %v348 = vld [vmem:[#allocation2 + $0x158] sm:$0xff]
  %v349 = vld [vmem:[#allocation2 + $0x168] sm:$0xff]
  %v350 = vld [vmem:[#allocation2 + $0x170] sm:$0xff]
  %v351 = vld [vmem:[#allocation2 + $0x180] sm:$0xff]
  %v352 = vld [vmem:[#allocation2 + $0x188] sm:$0xff]
  %v353 = vld [vmem:[#allocation2 + $0x198] sm:$0xff]
  %v354 = vld [vmem:[#allocation2 + $0x1a0] sm:$0xff]
  %v355 = vld [vmem:[#allocation2 + $0x1e0] sm:$0xff]
  %v356 = vld [vmem:[#allocation2 + $0x1e8] sm:$0xff]
  %v357 = vld [vmem:[#allocation2 + $0x1f8] sm:$0xff]
  %v358 = vld [vmem:[#allocation2 + $0x200] sm:$0xff]
  %v359 = vld [vmem:[#allocation2 + $0x210] sm:$0xff]
  %v360 = vld [vmem:[#allocation2 + $0x218] sm:$0xff]
  %v361 = vld [vmem:[#allocation2 + $0x228] sm:$0xff]
  %v362 = vld [vmem:[#allocation2 + $0x230] sm:$0xff]
  %v363 = vld [vmem:[#allocation2 + $0x240] sm:$0xff]
  %v364 = vld [vmem:[#allocation2 + $0x248] sm:$0xff]
  %v365 = vld [vmem:[#allocation2 + $0x258] sm:$0xff]
  %v366 = vld [vmem:[#allocation2 + $0x260] sm:$0xff]
  %v367 = vld [vmem:[#allocation2 + $0x270] sm:$0xff]
  %v368 = vld [vmem:[#allocation2 + $0x278] sm:$0xff]
  %v369 = vld [vmem:[#allocation2 + $0x288] sm:$0xff]
  %v370 = vld [vmem:[#allocation2 + $0x290] sm:$0xff]
  %v371 = vld [vmem:[#allocation2 + $0x2a0] sm:$0xff]
  %v372 = vld [vmem:[#allocation2 + $0x2a8] sm:$0xff]
  %v373 = vld [vmem:[#allocation2 + $0x2b8] sm:$0xff]
  %v374 = vld [vmem:[#allocation2 + $0x2c0] sm:$0xff]
  %v375 = vld [vmem:[#allocation2 + $0x2d0] sm:$0xff]
  %v376 = vld [vmem:[#allocation2 + $0x2d8] sm:$0xff]
  %v377 = vld [vmem:[#allocation2 + $0x2e8] sm:$0xff]
  %v378 = vld [vmem:[#allocation2 + $0x2f0] sm:$0xff]
  %v379 = vld [vmem:[#allocation2 + $0x300] sm:$0xff]
  %v380 = vld [vmem:[#allocation2 + $0x308] sm:$0xff]
  %v381 = vld [vmem:[#allocation2 + $0x318] sm:$0xff]
  %v382 = vld [vmem:[#allocation2 + $0x320] sm:$0xff]
  %v383 = vld [vmem:[#allocation2 + $0x330] sm:$0xff]
  %v384 = vld [vmem:[#allocation2 + $0x338] sm:$0xff]
  %v385 = vld [vmem:[#allocation2 + $0x348] sm:$0xff]
  %v386 = vld [vmem:[#allocation2 + $0x350] sm:$0xff]
  %v387 = vld [vmem:[#allocation2 + $0x360] sm:$0xff]
  %v388 = vld [vmem:[#allocation2 + $0x368] sm:$0xff]
  %v389 = vld [vmem:[#allocation2 + $0x378] sm:$0xff]
  %v390 = vld [vmem:[#allocation2 + $0x380] sm:$0xff]
  %v391 = vld [vmem:[#allocation2 + $0x1] sm:$0xff]
  %v392 = vld [vmem:[#allocation2 + $0x9] sm:$0xff]
  %v393 = vld [vmem:[#allocation2 + $0x19] sm:$0xff]
  %v394 = vld [vmem:[#allocation2 + $0x21] sm:$0xff]
  %v395 = vld [vmem:[#allocation2 + $0x31] sm:$0xff]
  %v396 = vld [vmem:[#allocation2 + $0x39] sm:$0xff]
  %v397 = vld [vmem:[#allocation2 + $0x49] sm:$0xff]
  %v398 = vld [vmem:[#allocation2 + $0x51] sm:$0xff]
  %v399 = vld [vmem:[#allocation2 + $0x61] sm:$0xff]
  %v400 = vld [vmem:[#allocation2 + $0x69] sm:$0xff]
  %v401 = vld [vmem:[#allocation2 + $0x79] sm:$0xff]
  %v402 = vld [vmem:[#allocation2 + $0x81] sm:$0xff]
  %v403 = vld [vmem:[#allocation2 + $0x91] sm:$0xff]
  %v404 = vld [vmem:[#allocation2 + $0x99] sm:$0xff]
  %v405 = vld [vmem:[#allocation2 + $0xa9] sm:$0xff]
  %v406 = vld [vmem:[#allocation2 + $0xb1] sm:$0xff]
  %v407 = vld [vmem:[#allocation2 + $0xc1] sm:$0xff]
  %v408 = vld [vmem:[#allocation2 + $0xc9] sm:$0xff]
  %v409 = vld [vmem:[#allocation2 + $0xd9] sm:$0xff]
  %v410 = vld [vmem:[#allocation2 + $0xe1] sm:$0xff]
  %v411 = vld [vmem:[#allocation2 + $0xf1] sm:$0xff]
  %v412 = vld [vmem:[#allocation2 + $0xf9] sm:$0xff]
  %v413 = vld [vmem:[#allocation2 + $0x109] sm:$0xff]
  %v414 = vld [vmem:[#allocation2 + $0x111] sm:$0xff]
  %v415 = vld [vmem:[#allocation2 + $0x121] sm:$0xff]
  %v416 = vld [vmem:[#allocation2 + $0x129] sm:$0xff]
  %v417 = vld [vmem:[#allocation2 + $0x139] sm:$0xff]
  %v418 = vld [vmem:[#allocation2 + $0x141] sm:$0xff]
  %v419 = vld [vmem:[#allocation2 + $0x151] sm:$0xff]
  %v420 = vld [vmem:[#allocation2 + $0x159] sm:$0xff]
  %v421 = vld [vmem:[#allocation2 + $0x169] sm:$0xff]
  %v422 = vld [vmem:[#allocation2 + $0x171] sm:$0xff]
  %v423 = vld [vmem:[#allocation2 + $0x181] sm:$0xff]
  %v424 = vld [vmem:[#allocation2 + $0x189] sm:$0xff]
  %v425 = vld [vmem:[#allocation2 + $0x199] sm:$0xff]
  %v426 = vld [vmem:[#allocation2 + $0x1a1] sm:$0xff]
  %v427 = vld [vmem:[#allocation2 + $0x1e1] sm:$0xff]
  %v428 = vld [vmem:[#allocation2 + $0x1e9] sm:$0xff]
  %v429 = vld [vmem:[#allocation2 + $0x1f9] sm:$0xff]
  %v430 = vld [vmem:[#allocation2 + $0x201] sm:$0xff]
  %v431 = vld [vmem:[#allocation2 + $0x211] sm:$0xff]
  %v432 = vld [vmem:[#allocation2 + $0x219] sm:$0xff]
  %v433 = vld [vmem:[#allocation2 + $0x229] sm:$0xff]
  %v434 = vld [vmem:[#allocation2 + $0x231] sm:$0xff]
  %v435 = vld [vmem:[#allocation2 + $0x241] sm:$0xff]
  %v436 = vld [vmem:[#allocation2 + $0x249] sm:$0xff]
  %v437 = vld [vmem:[#allocation2 + $0x259] sm:$0xff]
  %v438 = vld [vmem:[#allocation2 + $0x261] sm:$0xff]
  %v439 = vld [vmem:[#allocation2 + $0x271] sm:$0xff]
  %v440 = vld [vmem:[#allocation2 + $0x279] sm:$0xff]
  %v441 = vld [vmem:[#allocation2 + $0x289] sm:$0xff]
  %v442 = vld [vmem:[#allocation2 + $0x291] sm:$0xff]
  %v443 = vld [vmem:[#allocation2 + $0x2a1] sm:$0xff]
  %v444 = vld [vmem:[#allocation2 + $0x2a9] sm:$0xff]
  %v445 = vld [vmem:[#allocation2 + $0x2b9] sm:$0xff]
  %v446 = vld [vmem:[#allocation2 + $0x2c1] sm:$0xff]
  %v447 = vld [vmem:[#allocation2 + $0x2d1] sm:$0xff]
  %v448 = vld [vmem:[#allocation2 + $0x2d9] sm:$0xff]
  %v449 = vld [vmem:[#allocation2 + $0x2e9] sm:$0xff]
  %v450 = vld [vmem:[#allocation2 + $0x2f1] sm:$0xff]
  %v451 = vld [vmem:[#allocation2 + $0x301] sm:$0xff]
  %v452 = vld [vmem:[#allocation2 + $0x309] sm:$0xff]
  %v453 = vld [vmem:[#allocation2 + $0x319] sm:$0xff]
  %v454 = vld [vmem:[#allocation2 + $0x321] sm:$0xff]
  %v455 = vld [vmem:[#allocation2 + $0x331] sm:$0xff]
  %v456 = vld [vmem:[#allocation2 + $0x339] sm:$0xff]
  %v457 = vld [vmem:[#allocation2 + $0x349] sm:$0xff]
  %v458 = vld [vmem:[#allocation2 + $0x351] sm:$0xff]
  %v459 = vld [vmem:[#allocation2 + $0x361] sm:$0xff]
  %v460 = vld [vmem:[#allocation2 + $0x369] sm:$0xff]
  %v461 = vld [vmem:[#allocation2 + $0x379] sm:$0xff]
  %v462 = vld [vmem:[#allocation2 + $0x381] sm:$0xff]
  %v463 = vld [vmem:[#allocation2 + $0x2] sm:$0xff]
  %v464 = vld [vmem:[#allocation2 + $0xa] sm:$0xff]
  %v465 = vld [vmem:[#allocation2 + $0x1a] sm:$0xff]
  %v466 = vld [vmem:[#allocation2 + $0x22] sm:$0xff]
  %v467 = vld [vmem:[#allocation2 + $0x32] sm:$0xff]
  %v468 = vld [vmem:[#allocation2 + $0x3a] sm:$0xff]
  %v469 = vld [vmem:[#allocation2 + $0x4a] sm:$0xff]
  %v470 = vld [vmem:[#allocation2 + $0x52] sm:$0xff]
  %v471 = vld [vmem:[#allocation2 + $0x62] sm:$0xff]
  %v472 = vld [vmem:[#allocation2 + $0x6a] sm:$0xff]
  %v473 = vld [vmem:[#allocation2 + $0x7a] sm:$0xff]
  %v474 = vld [vmem:[#allocation2 + $0x82] sm:$0xff]
  %v475 = vld [vmem:[#allocation2 + $0x92] sm:$0xff]
  %v476 = vld [vmem:[#allocation2 + $0x9a] sm:$0xff]
  %v477 = vld [vmem:[#allocation2 + $0xaa] sm:$0xff]
  %v478 = vld [vmem:[#allocation2 + $0xb2] sm:$0xff]
  %v479 = vld [vmem:[#allocation2 + $0xc2] sm:$0xff]
  %v480 = vld [vmem:[#allocation2 + $0xca] sm:$0xff]
  %v481 = vld [vmem:[#allocation2 + $0xda] sm:$0xff]
  %v482 = vld [vmem:[#allocation2 + $0xe2] sm:$0xff]
  %v483 = vld [vmem:[#allocation2 + $0xf2] sm:$0xff]
  %v484 = vld [vmem:[#allocation2 + $0xfa] sm:$0xff]
  %v485 = vld [vmem:[#allocation2 + $0x10a] sm:$0xff]
  %v486 = vld [vmem:[#allocation2 + $0x112] sm:$0xff]
  %v487 = vld [vmem:[#allocation2 + $0x122] sm:$0xff]
  %v488 = vld [vmem:[#allocation2 + $0x12a] sm:$0xff]
  %v489 = vld [vmem:[#allocation2 + $0x13a] sm:$0xff]
  %v490 = vld [vmem:[#allocation2 + $0x142] sm:$0xff]
  %v491 = vld [vmem:[#allocation2 + $0x152] sm:$0xff]
  %v492 = vld [vmem:[#allocation2 + $0x15a] sm:$0xff]
  %v493 = vld [vmem:[#allocation2 + $0x16a] sm:$0xff]
  %v494 = vld [vmem:[#allocation2 + $0x172] sm:$0xff]
  %v495 = vld [vmem:[#allocation2 + $0x182] sm:$0xff]
  %v496 = vld [vmem:[#allocation2 + $0x18a] sm:$0xff]
  %v497 = vld [vmem:[#allocation2 + $0x19a] sm:$0xff]
  %v498 = vld [vmem:[#allocation2 + $0x1a2] sm:$0xff]
  %v499 = vld [vmem:[#allocation2 + $0x1e2] sm:$0xff]
  %v500 = vld [vmem:[#allocation2 + $0x1ea] sm:$0xff]
  %v501 = vld [vmem:[#allocation2 + $0x1fa] sm:$0xff]
  %v502 = vld [vmem:[#allocation2 + $0x202] sm:$0xff]
  %v503 = vld [vmem:[#allocation2 + $0x212] sm:$0xff]
  %v504 = vld [vmem:[#allocation2 + $0x21a] sm:$0xff]
  %v505 = vld [vmem:[#allocation2 + $0x22a] sm:$0xff]
  %v506 = vld [vmem:[#allocation2 + $0x232] sm:$0xff]
  %v507 = vld [vmem:[#allocation2 + $0x242] sm:$0xff]
  %v508 = vld [vmem:[#allocation2 + $0x24a] sm:$0xff]
  %v509 = vld [vmem:[#allocation2 + $0x25a] sm:$0xff]
  %v510 = vld [vmem:[#allocation2 + $0x262] sm:$0xff]
  %v511 = vld [vmem:[#allocation2 + $0x272] sm:$0xff]
  %v512 = vld [vmem:[#allocation2 + $0x27a] sm:$0xff]
  %v513 = vld [vmem:[#allocation2 + $0x28a] sm:$0xff]
  %v514 = vld [vmem:[#allocation2 + $0x292] sm:$0xff]
  %v515 = vld [vmem:[#allocation2 + $0x2a2] sm:$0xff]
  %v516 = vld [vmem:[#allocation2 + $0x2aa] sm:$0xff]
  %v517 = vld [vmem:[#allocation2 + $0x2ba] sm:$0xff]
  %v518 = vld [vmem:[#allocation2 + $0x2c2] sm:$0xff]
  %v519 = vld [vmem:[#allocation2 + $0x2d2] sm:$0xff]
  %v520 = vld [vmem:[#allocation2 + $0x2da] sm:$0xff]
  %v521 = vld [vmem:[#allocation2 + $0x2ea] sm:$0xff]
  %v522 = vld [vmem:[#allocation2 + $0x2f2] sm:$0xff]
  %v523 = vld [vmem:[#allocation2 + $0x302] sm:$0xff]
  %v524 = vld [vmem:[#allocation2 + $0x30a] sm:$0xff]
  %v525 = vld [vmem:[#allocation2 + $0x31a] sm:$0xff]
  %v526 = vld [vmem:[#allocation2 + $0x322] sm:$0xff]
  %v527 = vld [vmem:[#allocation2 + $0x332] sm:$0xff]
  %v528 = vld [vmem:[#allocation2 + $0x33a] sm:$0xff]
  %v529 = vld [vmem:[#allocation2 + $0x34a] sm:$0xff]
  %v530 = vld [vmem:[#allocation2 + $0x352] sm:$0xff]
  %v531 = vld [vmem:[#allocation2 + $0x362] sm:$0xff]
  %v532 = vld [vmem:[#allocation2 + $0x36a] sm:$0xff]
  %v533 = vld [vmem:[#allocation2 + $0x37a] sm:$0xff]
  %v534 = vld [vmem:[#allocation2 + $0x382] sm:$0xff]
  %607 = vrot.lane.b32.xlu0 %v391, 4
  %v608 = vpop.permute.xlu0 %607
  %609 = vrot.lane.b32.xlu0 %v392, 4
  %v610 = vpop.permute.xlu0 %609
  %611 = vrot.lane.b32.xlu0 %v393, 4
  %v612 = vpop.permute.xlu0 %611
  %613 = vrot.lane.b32.xlu0 %v394, 4
  %v614 = vpop.permute.xlu0 %613
  %615 = vrot.lane.b32.xlu0 %v395, 4
  %v616 = vpop.permute.xlu0 %615
  %617 = vrot.lane.b32.xlu0 %v396, 4
  %v618 = vpop.permute.xlu0 %617
  %619 = vrot.lane.b32.xlu0 %v397, 4
  %v620 = vpop.permute.xlu0 %619
  %621 = vrot.lane.b32.xlu0 %v398, 4
  %v622 = vpop.permute.xlu0 %621
  %623 = vrot.lane.b32.xlu0 %v399, 4
  %v624 = vpop.permute.xlu0 %623
  %625 = vrot.lane.b32.xlu0 %v400, 4
  %v626 = vpop.permute.xlu0 %625
  %627 = vrot.lane.b32.xlu0 %v401, 4
  %v628 = vpop.permute.xlu0 %627
  %629 = vrot.lane.b32.xlu0 %v402, 4
  %v630 = vpop.permute.xlu0 %629
  %631 = vrot.lane.b32.xlu0 %v403, 4
  %v632 = vpop.permute.xlu0 %631
  %633 = vrot.lane.b32.xlu0 %v404, 4
  %v634 = vpop.permute.xlu0 %633
  %635 = vrot.lane.b32.xlu0 %v405, 4
  %v636 = vpop.permute.xlu0 %635
  %637 = vrot.lane.b32.xlu0 %v406, 4
  %v638 = vpop.permute.xlu0 %637
  %639 = vrot.lane.b32.xlu0 %v407, 4
  %v640 = vpop.permute.xlu0 %639
  %641 = vrot.lane.b32.xlu0 %v408, 4
  %v642 = vpop.permute.xlu0 %641
  %643 = vrot.lane.b32.xlu0 %v409, 4
  %v644 = vpop.permute.xlu0 %643
  %645 = vrot.lane.b32.xlu0 %v410, 4
  %v646 = vpop.permute.xlu0 %645
  %647 = vrot.lane.b32.xlu0 %v411, 4
  %v648 = vpop.permute.xlu0 %647
  %649 = vrot.lane.b32.xlu0 %v412, 4
  %v650 = vpop.permute.xlu0 %649
  %651 = vrot.lane.b32.xlu0 %v413, 4
  %v652 = vpop.permute.xlu0 %651
  %653 = vrot.lane.b32.xlu0 %v414, 4
  %v654 = vpop.permute.xlu0 %653
  %655 = vrot.lane.b32.xlu0 %v415, 4
  %v656 = vpop.permute.xlu0 %655
  %657 = vrot.lane.b32.xlu0 %v416, 4
  %v658 = vpop.permute.xlu0 %657
  %659 = vrot.lane.b32.xlu0 %v417, 4
  %v660 = vpop.permute.xlu0 %659
  %661 = vrot.lane.b32.xlu0 %v418, 4
  %v662 = vpop.permute.xlu0 %661
  %663 = vrot.lane.b32.xlu0 %v419, 4
  %v664 = vpop.permute.xlu0 %663
  %665 = vrot.lane.b32.xlu0 %v420, 4
  %v666 = vpop.permute.xlu0 %665
  %667 = vrot.lane.b32.xlu0 %v421, 4
  %v668 = vpop.permute.xlu0 %667
  %669 = vrot.lane.b32.xlu0 %v422, 4
  %v670 = vpop.permute.xlu0 %669
  %671 = vrot.lane.b32.xlu0 %v423, 4
  %v672 = vpop.permute.xlu0 %671
  %673 = vrot.lane.b32.xlu0 %v424, 4
  %v674 = vpop.permute.xlu0 %673
  %675 = vrot.lane.b32.xlu0 %v425, 4
  %v676 = vpop.permute.xlu0 %675
  %677 = vrot.lane.b32.xlu0 %v426, 4
  %v678 = vpop.permute.xlu0 %677
  %679 = vrot.lane.b32.xlu0 %v427, 4
  %v680 = vpop.permute.xlu0 %679
  %681 = vrot.lane.b32.xlu0 %v428, 4
  %v682 = vpop.permute.xlu0 %681
  %683 = vrot.lane.b32.xlu0 %v429, 4
  %v684 = vpop.permute.xlu0 %683
  %685 = vrot.lane.b32.xlu0 %v430, 4
  %v686 = vpop.permute.xlu0 %685
  %687 = vrot.lane.b32.xlu0 %v431, 4
  %v688 = vpop.permute.xlu0 %687
  %689 = vrot.lane.b32.xlu0 %v432, 4
  %v690 = vpop.permute.xlu0 %689
  %691 = vrot.lane.b32.xlu0 %v433, 4
  %v692 = vpop.permute.xlu0 %691
  %693 = vrot.lane.b32.xlu0 %v434, 4
  %v694 = vpop.permute.xlu0 %693
  %695 = vrot.lane.b32.xlu0 %v435, 4
  %v696 = vpop.permute.xlu0 %695
  %697 = vrot.lane.b32.xlu0 %v436, 4
  %v698 = vpop.permute.xlu0 %697
  %699 = vrot.lane.b32.xlu0 %v437, 4
  %v700 = vpop.permute.xlu0 %699
  %701 = vrot.lane.b32.xlu0 %v438, 4
  %v702 = vpop.permute.xlu0 %701
  %703 = vrot.lane.b32.xlu0 %v439, 4
  %v704 = vpop.permute.xlu0 %703
  %705 = vrot.lane.b32.xlu0 %v440, 4
  %v706 = vpop.permute.xlu0 %705
  %707 = vrot.lane.b32.xlu0 %v441, 4
  %v708 = vpop.permute.xlu0 %707
  %709 = vrot.lane.b32.xlu0 %v442, 4
  %v710 = vpop.permute.xlu0 %709
  %711 = vrot.lane.b32.xlu0 %v443, 4
  %v712 = vpop.permute.xlu0 %711
  %713 = vrot.lane.b32.xlu0 %v444, 4
  %v714 = vpop.permute.xlu0 %713
  %715 = vrot.lane.b32.xlu0 %v445, 4
  %v716 = vpop.permute.xlu0 %715
  %717 = vrot.lane.b32.xlu0 %v446, 4
  %v718 = vpop.permute.xlu0 %717
  %719 = vrot.lane.b32.xlu0 %v447, 4
  %v720 = vpop.permute.xlu0 %719
  %721 = vrot.lane.b32.xlu0 %v448, 4
  %v722 = vpop.permute.xlu0 %721
  %723 = vrot.lane.b32.xlu0 %v449, 4
  %v724 = vpop.permute.xlu0 %723
  %725 = vrot.lane.b32.xlu0 %v450, 4
  %v726 = vpop.permute.xlu0 %725
  %727 = vrot.lane.b32.xlu0 %v451, 4
  %v728 = vpop.permute.xlu0 %727
  %729 = vrot.lane.b32.xlu0 %v452, 4
  %v730 = vpop.permute.xlu0 %729
  %731 = vrot.lane.b32.xlu0 %v453, 4
  %v732 = vpop.permute.xlu0 %731
  %733 = vrot.lane.b32.xlu0 %v454, 4
  %v734 = vpop.permute.xlu0 %733
  %735 = vrot.lane.b32.xlu0 %v455, 4
  %v736 = vpop.permute.xlu0 %735
  %737 = vrot.lane.b32.xlu0 %v456, 4
  %v738 = vpop.permute.xlu0 %737
  %739 = vrot.lane.b32.xlu0 %v457, 4
  %v740 = vpop.permute.xlu0 %739
  %741 = vrot.lane.b32.xlu0 %v458, 4
  %v742 = vpop.permute.xlu0 %741
  %743 = vrot.lane.b32.xlu0 %v459, 4
  %v744 = vpop.permute.xlu0 %743
  %745 = vrot.lane.b32.xlu0 %v460, 4
  %v746 = vpop.permute.xlu0 %745
  %747 = vrot.lane.b32.xlu0 %v461, 4
  %v748 = vpop.permute.xlu0 %747
  %749 = vrot.lane.b32.xlu0 %v462, 4
  %v750 = vpop.permute.xlu0 %749
  %895 = vrot.lane.b32.xlu0 %v463, 8
  %v896 = vpop.permute.xlu0 %895
  %897 = vrot.lane.b32.xlu0 %v464, 8
  %v898 = vpop.permute.xlu0 %897
  %899 = vrot.lane.b32.xlu0 %v465, 8
  %v900 = vpop.permute.xlu0 %899
  %901 = vrot.lane.b32.xlu0 %v466, 8
  %v902 = vpop.permute.xlu0 %901
  %903 = vrot.lane.b32.xlu0 %v467, 8
  %v904 = vpop.permute.xlu0 %903
  %905 = vrot.lane.b32.xlu0 %v468, 8
  %v906 = vpop.permute.xlu0 %905
  %907 = vrot.lane.b32.xlu0 %v469, 8
  %v908 = vpop.permute.xlu0 %907
  %909 = vrot.lane.b32.xlu0 %v470, 8
  %v910 = vpop.permute.xlu0 %909
  %911 = vrot.lane.b32.xlu0 %v471, 8
  %v912 = vpop.permute.xlu0 %911
  %913 = vrot.lane.b32.xlu0 %v472, 8
  %v914 = vpop.permute.xlu0 %913
  %915 = vrot.lane.b32.xlu0 %v473, 8
  %v916 = vpop.permute.xlu0 %915
  %917 = vrot.lane.b32.xlu0 %v474, 8
  %v918 = vpop.permute.xlu0 %917
  %919 = vrot.lane.b32.xlu0 %v475, 8
  %v920 = vpop.permute.xlu0 %919
  %921 = vrot.lane.b32.xlu0 %v476, 8
  %v922 = vpop.permute.xlu0 %921
  %923 = vrot.lane.b32.xlu0 %v477, 8
  %v924 = vpop.permute.xlu0 %923
  %925 = vrot.lane.b32.xlu0 %v478, 8
  %v926 = vpop.permute.xlu0 %925
  %927 = vrot.lane.b32.xlu0 %v479, 8
  %v928 = vpop.permute.xlu0 %927
  %929 = vrot.lane.b32.xlu0 %v480, 8
  %v930 = vpop.permute.xlu0 %929
  %931 = vrot.lane.b32.xlu0 %v481, 8
  %v932 = vpop.permute.xlu0 %931
  %933 = vrot.lane.b32.xlu0 %v482, 8
  %v934 = vpop.permute.xlu0 %933
  %935 = vrot.lane.b32.xlu0 %v483, 8
  %v936 = vpop.permute.xlu0 %935
  %937 = vrot.lane.b32.xlu0 %v484, 8
  %v938 = vpop.permute.xlu0 %937
  %939 = vrot.lane.b32.xlu0 %v485, 8
  %v940 = vpop.permute.xlu0 %939
  %941 = vrot.lane.b32.xlu0 %v486, 8
  %v942 = vpop.permute.xlu0 %941
  %943 = vrot.lane.b32.xlu0 %v487, 8
  %v944 = vpop.permute.xlu0 %943
  %945 = vrot.lane.b32.xlu0 %v488, 8
  %v946 = vpop.permute.xlu0 %945
  %947 = vrot.lane.b32.xlu0 %v489, 8
  %v948 = vpop.permute.xlu0 %947
  %949 = vrot.lane.b32.xlu0 %v490, 8
  %v950 = vpop.permute.xlu0 %949
  %951 = vrot.lane.b32.xlu0 %v491, 8
  %v952 = vpop.permute.xlu0 %951
  %953 = vrot.lane.b32.xlu0 %v492, 8
  %v954 = vpop.permute.xlu0 %953
  %955 = vrot.lane.b32.xlu0 %v493, 8
  %v956 = vpop.permute.xlu0 %955
  %957 = vrot.lane.b32.xlu0 %v494, 8
  %v958 = vpop.permute.xlu0 %957
  %959 = vrot.lane.b32.xlu0 %v495, 8
  %v960 = vpop.permute.xlu0 %959
  %961 = vrot.lane.b32.xlu0 %v496, 8
  %v962 = vpop.permute.xlu0 %961
  %963 = vrot.lane.b32.xlu0 %v497, 8
  %v964 = vpop.permute.xlu0 %963
  %965 = vrot.lane.b32.xlu0 %v498, 8
  %v966 = vpop.permute.xlu0 %965
  %967 = vrot.lane.b32.xlu0 %v499, 8
  %v968 = vpop.permute.xlu0 %967
  %969 = vrot.lane.b32.xlu0 %v500, 8
  %v970 = vpop.permute.xlu0 %969
  %971 = vrot.lane.b32.xlu0 %v501, 8
  %v972 = vpop.permute.xlu0 %971
  %973 = vrot.lane.b32.xlu0 %v502, 8
  %v974 = vpop.permute.xlu0 %973
  %975 = vrot.lane.b32.xlu0 %v503, 8
  %v976 = vpop.permute.xlu0 %975
  %977 = vrot.lane.b32.xlu0 %v504, 8
  %v978 = vpop.permute.xlu0 %977
  %979 = vrot.lane.b32.xlu0 %v505, 8
  %v980 = vpop.permute.xlu0 %979
  %981 = vrot.lane.b32.xlu0 %v506, 8
  %v982 = vpop.permute.xlu0 %981
  %983 = vrot.lane.b32.xlu0 %v507, 8
  %v984 = vpop.permute.xlu0 %983
  %985 = vrot.lane.b32.xlu0 %v508, 8
  %v986 = vpop.permute.xlu0 %985
  %987 = vrot.lane.b32.xlu0 %v509, 8
  %v988 = vpop.permute.xlu0 %987
  %989 = vrot.lane.b32.xlu0 %v510, 8
  %v990 = vpop.permute.xlu0 %989
  %991 = vrot.lane.b32.xlu0 %v511, 8
  %v992 = vpop.permute.xlu0 %991
  %993 = vrot.lane.b32.xlu0 %v512, 8
  %v994 = vpop.permute.xlu0 %993
  %995 = vrot.lane.b32.xlu0 %v513, 8
  %v996 = vpop.permute.xlu0 %995
  %997 = vrot.lane.b32.xlu0 %v514, 8
  %v998 = vpop.permute.xlu0 %997
  %999 = vrot.lane.b32.xlu0 %v515, 8
  %v1000 = vpop.permute.xlu0 %999
  %1001 = vrot.lane.b32.xlu0 %v516, 8
  %v1002 = vpop.permute.xlu0 %1001
  %1003 = vrot.lane.b32.xlu0 %v517, 8
  %v1004 = vpop.permute.xlu0 %1003
  %1005 = vrot.lane.b32.xlu0 %v518, 8
  %v1006 = vpop.permute.xlu0 %1005
  %1007 = vrot.lane.b32.xlu0 %v519, 8
  %v1008 = vpop.permute.xlu0 %1007
  %1009 = vrot.lane.b32.xlu0 %v520, 8
  %v1010 = vpop.permute.xlu0 %1009
  %1011 = vrot.lane.b32.xlu0 %v521, 8
  %v1012 = vpop.permute.xlu0 %1011
  %1013 = vrot.lane.b32.xlu0 %v522, 8
  %v1014 = vpop.permute.xlu0 %1013
  %1015 = vrot.lane.b32.xlu0 %v523, 8
  %v1016 = vpop.permute.xlu0 %1015
  %1017 = vrot.lane.b32.xlu0 %v524, 8
  %v1018 = vpop.permute.xlu0 %1017
  %1019 = vrot.lane.b32.xlu0 %v525, 8
  %v1020 = vpop.permute.xlu0 %1019
  %1021 = vrot.lane.b32.xlu0 %v526, 8
  %v1022 = vpop.permute.xlu0 %1021
  %1023 = vrot.lane.b32.xlu0 %v527, 8
  %v1024 = vpop.permute.xlu0 %1023
  %1025 = vrot.lane.b32.xlu0 %v528, 8
  %v1026 = vpop.permute.xlu0 %1025
  %1027 = vrot.lane.b32.xlu0 %v529, 8
  %v1028 = vpop.permute.xlu0 %1027
  %1029 = vrot.lane.b32.xlu0 %v530, 8
  %v1030 = vpop.permute.xlu0 %1029
  %1031 = vrot.lane.b32.xlu0 %v531, 8
  %v1032 = vpop.permute.xlu0 %1031
  %1033 = vrot.lane.b32.xlu0 %v532, 8
  %v1034 = vpop.permute.xlu0 %1033
  %1035 = vrot.lane.b32.xlu0 %v533, 8
  %v1036 = vpop.permute.xlu0 %1035
  %1037 = vrot.lane.b32.xlu0 %v534, 8
  %v1038 = vpop.permute.xlu0 %1037
  %v1111 = vsel %vm169, %v319, %v608
  %v1112 = vsel %vm169, %v320, %v610
  %v1113 = vsel %vm169, %v321, %v612
  %v1114 = vsel %vm169, %v322, %v614
  %v1115 = vsel %vm169, %v323, %v616
  %v1116 = vsel %vm169, %v324, %v618
  %v1117 = vsel %vm169, %v325, %v620
  %v1118 = vsel %vm169, %v326, %v622
  %v1119 = vsel %vm169, %v327, %v624
  %v1120 = vsel %vm169, %v328, %v626
  %v1121 = vsel %vm169, %v329, %v628
  %v1122 = vsel %vm169, %v330, %v630
  %v1123 = vsel %vm169, %v331, %v632
  %v1124 = vsel %vm169, %v332, %v634
  %v1125 = vsel %vm169, %v333, %v636
  %v1126 = vsel %vm169, %v334, %v638
  %v1127 = vsel %vm169, %v335, %v640
  %v1128 = vsel %vm169, %v336, %v642
  %v1129 = vsel %vm169, %v337, %v644
  %v1130 = vsel %vm169, %v338, %v646
  %v1131 = vsel %vm169, %v339, %v648
  %v1132 = vsel %vm169, %v340, %v650
  %v1133 = vsel %vm169, %v341, %v652
  %v1134 = vsel %vm169, %v342, %v654
  %v1135 = vsel %vm169, %v343, %v656
  %v1136 = vsel %vm169, %v344, %v658
  %v1137 = vsel %vm169, %v345, %v660
  %v1138 = vsel %vm169, %v346, %v662
  %v1139 = vsel %vm169, %v347, %v664
  %v1140 = vsel %vm169, %v348, %v666
  %v1141 = vsel %vm169, %v349, %v668
  %v1142 = vsel %vm169, %v350, %v670
  %v1143 = vsel %vm169, %v351, %v672
  %v1144 = vsel %vm169, %v352, %v674
  %v1145 = vsel %vm169, %v353, %v676
  %v1146 = vsel %vm169, %v354, %v678
  %v1147 = vsel %vm169, %v355, %v680
  %v1148 = vsel %vm169, %v356, %v682
  %v1149 = vsel %vm169, %v357, %v684
  %v1150 = vsel %vm169, %v358, %v686
  %v1151 = vsel %vm169, %v359, %v688
  %v1152 = vsel %vm169, %v360, %v690
  %v1153 = vsel %vm169, %v361, %v692
  %v1154 = vsel %vm169, %v362, %v694
  %v1155 = vsel %vm169, %v363, %v696
  %v1156 = vsel %vm169, %v364, %v698
  %v1157 = vsel %vm169, %v365, %v700
  %v1158 = vsel %vm169, %v366, %v702
  %v1159 = vsel %vm169, %v367, %v704
  %v1160 = vsel %vm169, %v368, %v706
  %v1161 = vsel %vm169, %v369, %v708
  %v1162 = vsel %vm169, %v370, %v710
  %v1163 = vsel %vm169, %v371, %v712
  %v1164 = vsel %vm169, %v372, %v714
  %v1165 = vsel %vm169, %v373, %v716
  %v1166 = vsel %vm169, %v374, %v718
  %v1167 = vsel %vm169, %v375, %v720
  %v1168 = vsel %vm169, %v376, %v722
  %v1169 = vsel %vm169, %v377, %v724
  %v1170 = vsel %vm169, %v378, %v726
  %v1171 = vsel %vm169, %v379, %v728
  %v1172 = vsel %vm169, %v380, %v730
  %v1173 = vsel %vm169, %v381, %v732
  %v1174 = vsel %vm169, %v382, %v734
  %v1175 = vsel %vm169, %v383, %v736
  %v1176 = vsel %vm169, %v384, %v738
  %v1177 = vsel %vm169, %v385, %v740
  %v1178 = vsel %vm169, %v386, %v742
  %v1179 = vsel %vm169, %v387, %v744
  %v1180 = vsel %vm169, %v388, %v746
  %v1181 = vsel %vm169, %v389, %v748
  %v1182 = vsel %vm169, %v390, %v750
  %vm1183 = vcmask 64512
  %v1184 = vsel %vm1183, %v1111, %v896
  %v1185 = vsel %vm1183, %v1112, %v898
  %v1186 = vsel %vm1183, %v1113, %v900
  %v1187 = vsel %vm1183, %v1114, %v902
  %v1188 = vsel %vm1183, %v1115, %v904
  %v1189 = vsel %vm1183, %v1116, %v906
  %v1190 = vsel %vm1183, %v1117, %v908
  %v1191 = vsel %vm1183, %v1118, %v910
  %v1192 = vsel %vm1183, %v1119, %v912
  %v1193 = vsel %vm1183, %v1120, %v914
  %v1194 = vsel %vm1183, %v1121, %v916
  %v1195 = vsel %vm1183, %v1122, %v918
  %v1196 = vsel %vm1183, %v1123, %v920
  %v1197 = vsel %vm1183, %v1124, %v922
  %v1198 = vsel %vm1183, %v1125, %v924
  %v1199 = vsel %vm1183, %v1126, %v926
  %v1200 = vsel %vm1183, %v1127, %v928
  %v1201 = vsel %vm1183, %v1128, %v930
  %v1202 = vsel %vm1183, %v1129, %v932
  %v1203 = vsel %vm1183, %v1130, %v934
  %v1204 = vsel %vm1183, %v1131, %v936
  %v1205 = vsel %vm1183, %v1132, %v938
  %v1206 = vsel %vm1183, %v1133, %v940
  %v1207 = vsel %vm1183, %v1134, %v942
  %v1208 = vsel %vm1183, %v1135, %v944
  %v1209 = vsel %vm1183, %v1136, %v946
  %v1210 = vsel %vm1183, %v1137, %v948
  %v1211 = vsel %vm1183, %v1138, %v950
  %v1212 = vsel %vm1183, %v1139, %v952
  %v1213 = vsel %vm1183, %v1140, %v954
  %v1214 = vsel %vm1183, %v1141, %v956
  %v1215 = vsel %vm1183, %v1142, %v958
  %v1216 = vsel %vm1183, %v1143, %v960
  %v1217 = vsel %vm1183, %v1144, %v962
  %v1218 = vsel %vm1183, %v1145, %v964
  %v1219 = vsel %vm1183, %v1146, %v966
  %v1220 = vsel %vm1183, %v1147, %v968
  %v1221 = vsel %vm1183, %v1148, %v970
  %v1222 = vsel %vm1183, %v1149, %v972
  %v1223 = vsel %vm1183, %v1150, %v974
  %v1224 = vsel %vm1183, %v1151, %v976
  %v1225 = vsel %vm1183, %v1152, %v978
  %v1226 = vsel %vm1183, %v1153, %v980
  %v1227 = vsel %vm1183, %v1154, %v982
  %v1228 = vsel %vm1183, %v1155, %v984
  %v1229 = vsel %vm1183, %v1156, %v986
  %v1230 = vsel %vm1183, %v1157, %v988
  %v1231 = vsel %vm1183, %v1158, %v990
  %v1232 = vsel %vm1183, %v1159, %v992
  %v1233 = vsel %vm1183, %v1160, %v994
  %v1234 = vsel %vm1183, %v1161, %v996
  %v1235 = vsel %vm1183, %v1162, %v998
  %v1236 = vsel %vm1183, %v1163, %v1000
  %v1237 = vsel %vm1183, %v1164, %v1002
  %v1238 = vsel %vm1183, %v1165, %v1004
  %v1239 = vsel %vm1183, %v1166, %v1006
  %v1240 = vsel %vm1183, %v1167, %v1008
  %v1241 = vsel %vm1183, %v1168, %v1010
  %v1242 = vsel %vm1183, %v1169, %v1012
  %v1243 = vsel %vm1183, %v1170, %v1014
  %v1244 = vsel %vm1183, %v1171, %v1016
  %v1245 = vsel %vm1183, %v1172, %v1018
  %v1246 = vsel %vm1183, %v1173, %v1020
  %v1247 = vsel %vm1183, %v1174, %v1022
  %v1248 = vsel %vm1183, %v1175, %v1024
  %v1249 = vsel %vm1183, %v1176, %v1026
  %v1250 = vsel %vm1183, %v1177, %v1028
  %v1251 = vsel %vm1183, %v1178, %v1030
  %v1252 = vsel %vm1183, %v1179, %v1032
  %v1253 = vsel %vm1183, %v1180, %v1034
  %v1254 = vsel %vm1183, %v1181, %v1036
  %v1255 = vsel %vm1183, %v1182, %v1038
  %v1256 = vld [vmem:[%s1] sm:$0xff]
  %v1257 = vld [vmem:[%s1 + $0x8] sm:$0xf]
  %s1258 = scalar_lea.vmem [#allocation2], 24
  %v1259 = vld [vmem:[%s1258] sm:$0xff]
  %v1260 = vld [vmem:[%s1258 + $0x8] sm:$0xff]
  %v1261 = vld [vmem:[%s1258 + $0x18] sm:$0xff]
  %v1262 = vld [vmem:[%s1258 + $0x20] sm:$0xff]
  %v1263 = vld [vmem:[%s1258 + $0x30] sm:$0xff]
  %v1264 = vld [vmem:[%s1258 + $0x38] sm:$0xff]
  %v1265 = vld [vmem:[%s1258 + $0x48] sm:$0xff]
  %v1266 = vld [vmem:[%s1258 + $0x50] sm:$0xff]
  %v1267 = vld [vmem:[%s1258 + $0x60] sm:$0xff]
  %v1268 = vld [vmem:[%s1258 + $0x68] sm:$0xff]
  %v1269 = vld [vmem:[%s1258 + $0x78] sm:$0xff]
  %v1270 = vld [vmem:[%s1258 + $0x80] sm:$0xff]
  %v1271 = vld [vmem:[%s1258 + $0x90] sm:$0xff]
  %v1272 = vld [vmem:[%s1258 + $0x98] sm:$0xff]
  %v1273 = vld [vmem:[%s1258 + $0xa8] sm:$0xff]
  %v1274 = vld [vmem:[%s1258 + $0xb0] sm:$0xff]
  %v1275 = vld [vmem:[%s1258 + $0xc0] sm:$0xff]
  %v1276 = vld [vmem:[%s1258 + $0xc8] sm:$0xff]
  %v1277 = vld [vmem:[%s1258 + $0xd8] sm:$0xff]
  %v1278 = vld [vmem:[%s1258 + $0xe0] sm:$0xff]
  %v1279 = vld [vmem:[%s1258 + $0xf0] sm:$0xff]
  %v1280 = vld [vmem:[%s1258 + $0xf8] sm:$0xff]
  %v1281 = vld [vmem:[%s1258 + $0x108] sm:$0xff]
  %v1282 = vld [vmem:[%s1258 + $0x110] sm:$0xff]
  %v1283 = vld [vmem:[%s1258 + $0x120] sm:$0xff]
  %v1284 = vld [vmem:[%s1258 + $0x128] sm:$0xff]
  %v1285 = vld [vmem:[%s1258 + $0x138] sm:$0xff]
  %v1286 = vld [vmem:[%s1258 + $0x140] sm:$0xff]
  %v1287 = vld [vmem:[%s1258 + $0x150] sm:$0xff]
  %v1288 = vld [vmem:[%s1258 + $0x158] sm:$0xff]
  %v1289 = vld [vmem:[%s1258 + $0x168] sm:$0xff]
  %v1290 = vld [vmem:[%s1258 + $0x170] sm:$0xff]
  %v1291 = vld [vmem:[%s1258 + $0x180] sm:$0xff]
  %v1292 = vld [vmem:[%s1258 + $0x188] sm:$0xff]
  %v1293 = vld [vmem:[%s1258 + $0x198] sm:$0xff]
  %v1294 = vld [vmem:[%s1258 + $0x1a0] sm:$0xff]
  %v1295 = vld [vmem:[%s1258 + $0x1e0] sm:$0xff]
  %v1296 = vld [vmem:[%s1258 + $0x1e8] sm:$0xff]
  %v1297 = vld [vmem:[%s1258 + $0x1f8] sm:$0xff]
  %v1298 = vld [vmem:[%s1258 + $0x200] sm:$0xff]
  %v1299 = vld [vmem:[%s1258 + $0x210] sm:$0xff]
  %v1300 = vld [vmem:[%s1258 + $0x218] sm:$0xff]
  %v1301 = vld [vmem:[%s1258 + $0x228] sm:$0xff]
  %v1302 = vld [vmem:[%s1258 + $0x230] sm:$0xff]
  %v1303 = vld [vmem:[%s1258 + $0x240] sm:$0xff]
  %v1304 = vld [vmem:[%s1258 + $0x248] sm:$0xff]
  %v1305 = vld [vmem:[%s1258 + $0x258] sm:$0xff]
  %v1306 = vld [vmem:[%s1258 + $0x260] sm:$0xff]
  %v1307 = vld [vmem:[%s1258 + $0x270] sm:$0xff]
  %v1308 = vld [vmem:[%s1258 + $0x278] sm:$0xff]
  %v1309 = vld [vmem:[%s1258 + $0x288] sm:$0xff]
  %v1310 = vld [vmem:[%s1258 + $0x290] sm:$0xff]
  %v1311 = vld [vmem:[%s1258 + $0x2a0] sm:$0xff]
  %v1312 = vld [vmem:[%s1258 + $0x2a8] sm:$0xff]
  %v1313 = vld [vmem:[%s1258 + $0x2b8] sm:$0xff]
  %v1314 = vld [vmem:[%s1258 + $0x2c0] sm:$0xff]
  %v1315 = vld [vmem:[%s1258 + $0x2d0] sm:$0xff]
  %v1316 = vld [vmem:[%s1258 + $0x2d8] sm:$0xff]
  %v1317 = vld [vmem:[%s1258 + $0x2e8] sm:$0xff]
  %v1318 = vld [vmem:[%s1258 + $0x2f0] sm:$0xff]
  %v1319 = vld [vmem:[%s1258 + $0x300] sm:$0xff]
  %v1320 = vld [vmem:[%s1258 + $0x308] sm:$0xff]
  %v1321 = vld [vmem:[%s1258 + $0x318] sm:$0xff]
  %v1322 = vld [vmem:[%s1258 + $0x320] sm:$0xff]
  %v1323 = vld [vmem:[%s1258 + $0x330] sm:$0xff]
  %v1324 = vld [vmem:[%s1258 + $0x338] sm:$0xff]
  %v1325 = vld [vmem:[%s1258 + $0x348] sm:$0xff]
  %v1326 = vld [vmem:[%s1258 + $0x350] sm:$0xff]
  %v1327 = vld [vmem:[%s1258 + $0x360] sm:$0xff]
  %v1328 = vld [vmem:[%s1258 + $0x368] sm:$0xff]
  %v1329 = vld [vmem:[%s1258 + $0x378] sm:$0xff]
  %v1330 = vld [vmem:[%s1258 + $0x380] sm:$0xff]
  %v1331 = vld [vmem:[%s1258 + $0x1] sm:$0xff]
  %v1332 = vld [vmem:[%s1258 + $0x9] sm:$0xff]
  %v1333 = vld [vmem:[%s1258 + $0x19] sm:$0xff]
  %v1334 = vld [vmem:[%s1258 + $0x21] sm:$0xff]
  %v1335 = vld [vmem:[%s1258 + $0x31] sm:$0xff]
  %v1336 = vld [vmem:[%s1258 + $0x39] sm:$0xff]
  %v1337 = vld [vmem:[%s1258 + $0x49] sm:$0xff]
  %v1338 = vld [vmem:[%s1258 + $0x51] sm:$0xff]
  %v1339 = vld [vmem:[%s1258 + $0x61] sm:$0xff]
  %v1340 = vld [vmem:[%s1258 + $0x69] sm:$0xff]
  %v1341 = vld [vmem:[%s1258 + $0x79] sm:$0xff]
  %v1342 = vld [vmem:[%s1258 + $0x81] sm:$0xff]
  %v1343 = vld [vmem:[%s1258 + $0x91] sm:$0xff]
  %v1344 = vld [vmem:[%s1258 + $0x99] sm:$0xff]
  %v1345 = vld [vmem:[%s1258 + $0xa9] sm:$0xff]
  %v1346 = vld [vmem:[%s1258 + $0xb1] sm:$0xff]
  %v1347 = vld [vmem:[%s1258 + $0xc1] sm:$0xff]
  %v1348 = vld [vmem:[%s1258 + $0xc9] sm:$0xff]
  %v1349 = vld [vmem:[%s1258 + $0xd9] sm:$0xff]
  %v1350 = vld [vmem:[%s1258 + $0xe1] sm:$0xff]
  %v1351 = vld [vmem:[%s1258 + $0xf1] sm:$0xff]
  %v1352 = vld [vmem:[%s1258 + $0xf9] sm:$0xff]
  %v1353 = vld [vmem:[%s1258 + $0x109] sm:$0xff]
  %v1354 = vld [vmem:[%s1258 + $0x111] sm:$0xff]
  %v1355 = vld [vmem:[%s1258 + $0x121] sm:$0xff]
  %v1356 = vld [vmem:[%s1258 + $0x129] sm:$0xff]
  %v1357 = vld [vmem:[%s1258 + $0x139] sm:$0xff]
  %v1358 = vld [vmem:[%s1258 + $0x141] sm:$0xff]
  %v1359 = vld [vmem:[%s1258 + $0x151] sm:$0xff]
  %v1360 = vld [vmem:[%s1258 + $0x159] sm:$0xff]
  %v1361 = vld [vmem:[%s1258 + $0x169] sm:$0xff]
  %v1362 = vld [vmem:[%s1258 + $0x171] sm:$0xff]
  %v1363 = vld [vmem:[%s1258 + $0x181] sm:$0xff]
  %v1364 = vld [vmem:[%s1258 + $0x189] sm:$0xff]
  %v1365 = vld [vmem:[%s1258 + $0x199] sm:$0xff]
  %v1366 = vld [vmem:[%s1258 + $0x1a1] sm:$0xff]
  %v1367 = vld [vmem:[%s1258 + $0x1e1] sm:$0xff]
  %v1368 = vld [vmem:[%s1258 + $0x1e9] sm:$0xff]
  %v1369 = vld [vmem:[%s1258 + $0x1f9] sm:$0xff]
  %v1370 = vld [vmem:[%s1258 + $0x201] sm:$0xff]
  %v1371 = vld [vmem:[%s1258 + $0x211] sm:$0xff]
  %v1372 = vld [vmem:[%s1258 + $0x219] sm:$0xff]
  %v1373 = vld [vmem:[%s1258 + $0x229] sm:$0xff]
  %v1374 = vld [vmem:[%s1258 + $0x231] sm:$0xff]
  %v1375 = vld [vmem:[%s1258 + $0x241] sm:$0xff]
  %v1376 = vld [vmem:[%s1258 + $0x249] sm:$0xff]
  %v1377 = vld [vmem:[%s1258 + $0x259] sm:$0xff]
  %v1378 = vld [vmem:[%s1258 + $0x261] sm:$0xff]
  %v1379 = vld [vmem:[%s1258 + $0x271] sm:$0xff]
  %v1380 = vld [vmem:[%s1258 + $0x279] sm:$0xff]
  %v1381 = vld [vmem:[%s1258 + $0x289] sm:$0xff]
  %v1382 = vld [vmem:[%s1258 + $0x291] sm:$0xff]
  %v1383 = vld [vmem:[%s1258 + $0x2a1] sm:$0xff]
  %v1384 = vld [vmem:[%s1258 + $0x2a9] sm:$0xff]
  %v1385 = vld [vmem:[%s1258 + $0x2b9] sm:$0xff]
  %v1386 = vld [vmem:[%s1258 + $0x2c1] sm:$0xff]
  %v1387 = vld [vmem:[%s1258 + $0x2d1] sm:$0xff]
  %v1388 = vld [vmem:[%s1258 + $0x2d9] sm:$0xff]
  %v1389 = vld [vmem:[%s1258 + $0x2e9] sm:$0xff]
  %v1390 = vld [vmem:[%s1258 + $0x2f1] sm:$0xff]
  %v1391 = vld [vmem:[%s1258 + $0x301] sm:$0xff]
  %v1392 = vld [vmem:[%s1258 + $0x309] sm:$0xff]
  %v1393 = vld [vmem:[%s1258 + $0x319] sm:$0xff]
  %v1394 = vld [vmem:[%s1258 + $0x321] sm:$0xff]
  %v1395 = vld [vmem:[%s1258 + $0x331] sm:$0xff]
  %v1396 = vld [vmem:[%s1258 + $0x339] sm:$0xff]
  %v1397 = vld [vmem:[%s1258 + $0x349] sm:$0xff]
  %v1398 = vld [vmem:[%s1258 + $0x351] sm:$0xff]
  %v1399 = vld [vmem:[%s1258 + $0x361] sm:$0xff]
  %v1400 = vld [vmem:[%s1258 + $0x369] sm:$0xff]
  %v1401 = vld [vmem:[%s1258 + $0x379] sm:$0xff]
  %v1402 = vld [vmem:[%s1258 + $0x381] sm:$0xff]
  %v1403 = vld [vmem:[%s1258 + $0x2] sm:$0xff]
  %v1404 = vld [vmem:[%s1258 + $0xa] sm:$0xff]
  %v1405 = vld [vmem:[%s1258 + $0x1a] sm:$0xff]
  %v1406 = vld [vmem:[%s1258 + $0x22] sm:$0xff]
  %v1407 = vld [vmem:[%s1258 + $0x32] sm:$0xff]
  %v1408 = vld [vmem:[%s1258 + $0x3a] sm:$0xff]
  %v1409 = vld [vmem:[%s1258 + $0x4a] sm:$0xff]
  %v1410 = vld [vmem:[%s1258 + $0x52] sm:$0xff]
  %v1411 = vld [vmem:[%s1258 + $0x62] sm:$0xff]
  %v1412 = vld [vmem:[%s1258 + $0x6a] sm:$0xff]
  %v1413 = vld [vmem:[%s1258 + $0x7a] sm:$0xff]
  %v1414 = vld [vmem:[%s1258 + $0x82] sm:$0xff]
  %v1415 = vld [vmem:[%s1258 + $0x92] sm:$0xff]
  %v1416 = vld [vmem:[%s1258 + $0x9a] sm:$0xff]
  %v1417 = vld [vmem:[%s1258 + $0xaa] sm:$0xff]
  %v1418 = vld [vmem:[%s1258 + $0xb2] sm:$0xff]
  %v1419 = vld [vmem:[%s1258 + $0xc2] sm:$0xff]
  %v1420 = vld [vmem:[%s1258 + $0xca] sm:$0xff]
  %v1421 = vld [vmem:[%s1258 + $0xda] sm:$0xff]
  %v1422 = vld [vmem:[%s1258 + $0xe2] sm:$0xff]
  %v1423 = vld [vmem:[%s1258 + $0xf2] sm:$0xff]
  %v1424 = vld [vmem:[%s1258 + $0xfa] sm:$0xff]
  %v1425 = vld [vmem:[%s1258 + $0x10a] sm:$0xff]
  %v1426 = vld [vmem:[%s1258 + $0x112] sm:$0xff]
  %v1427 = vld [vmem:[%s1258 + $0x122] sm:$0xff]
  %v1428 = vld [vmem:[%s1258 + $0x12a] sm:$0xff]
  %v1429 = vld [vmem:[%s1258 + $0x13a] sm:$0xff]
  %v1430 = vld [vmem:[%s1258 + $0x142] sm:$0xff]
  %v1431 = vld [vmem:[%s1258 + $0x152] sm:$0xff]
  %v1432 = vld [vmem:[%s1258 + $0x15a] sm:$0xff]
  %v1433 = vld [vmem:[%s1258 + $0x16a] sm:$0xff]
  %v1434 = vld [vmem:[%s1258 + $0x172] sm:$0xff]
  %v1435 = vld [vmem:[%s1258 + $0x182] sm:$0xff]
  %v1436 = vld [vmem:[%s1258 + $0x18a] sm:$0xff]
  %v1437 = vld [vmem:[%s1258 + $0x19a] sm:$0xff]
  %v1438 = vld [vmem:[%s1258 + $0x1a2] sm:$0xff]
  %v1439 = vld [vmem:[%s1258 + $0x1e2] sm:$0xff]
  %v1440 = vld [vmem:[%s1258 + $0x1ea] sm:$0xff]
  %v1441 = vld [vmem:[%s1258 + $0x1fa] sm:$0xff]
  %v1442 = vld [vmem:[%s1258 + $0x202] sm:$0xff]
  %v1443 = vld [vmem:[%s1258 + $0x212] sm:$0xff]
  %v1444 = vld [vmem:[%s1258 + $0x21a] sm:$0xff]
  %v1445 = vld [vmem:[%s1258 + $0x22a] sm:$0xff]
  %v1446 = vld [vmem:[%s1258 + $0x232] sm:$0xff]
  %v1447 = vld [vmem:[%s1258 + $0x242] sm:$0xff]
  %v1448 = vld [vmem:[%s1258 + $0x24a] sm:$0xff]
  %v1449 = vld [vmem:[%s1258 + $0x25a] sm:$0xff]
  %v1450 = vld [vmem:[%s1258 + $0x262] sm:$0xff]
  %v1451 = vld [vmem:[%s1258 + $0x272] sm:$0xff]
  %v1452 = vld [vmem:[%s1258 + $0x27a] sm:$0xff]
  %v1453 = vld [vmem:[%s1258 + $0x28a] sm:$0xff]
  %v1454 = vld [vmem:[%s1258 + $0x292] sm:$0xff]
  %v1455 = vld [vmem:[%s1258 + $0x2a2] sm:$0xff]
  %v1456 = vld [vmem:[%s1258 + $0x2aa] sm:$0xff]
  %v1457 = vld [vmem:[%s1258 + $0x2ba] sm:$0xff]
  %v1458 = vld [vmem:[%s1258 + $0x2c2] sm:$0xff]
  %v1459 = vld [vmem:[%s1258 + $0x2d2] sm:$0xff]
  %v1460 = vld [vmem:[%s1258 + $0x2da] sm:$0xff]
  %v1461 = vld [vmem:[%s1258 + $0x2ea] sm:$0xff]
  %v1462 = vld [vmem:[%s1258 + $0x2f2] sm:$0xff]
  %v1463 = vld [vmem:[%s1258 + $0x302] sm:$0xff]
  %v1464 = vld [vmem:[%s1258 + $0x30a] sm:$0xff]
  %v1465 = vld [vmem:[%s1258 + $0x31a] sm:$0xff]
  %v1466 = vld [vmem:[%s1258 + $0x322] sm:$0xff]
  %v1467 = vld [vmem:[%s1258 + $0x332] sm:$0xff]
  %v1468 = vld [vmem:[%s1258 + $0x33a] sm:$0xff]
  %v1469 = vld [vmem:[%s1258 + $0x34a] sm:$0xff]
  %v1470 = vld [vmem:[%s1258 + $0x352] sm:$0xff]
  %v1471 = vld [vmem:[%s1258 + $0x362] sm:$0xff]
  %v1472 = vld [vmem:[%s1258 + $0x36a] sm:$0xff]
  %v1473 = vld [vmem:[%s1258 + $0x37a] sm:$0xff]
  %v1474 = vld [vmem:[%s1258 + $0x382] sm:$0xff]
  %1547 = vrot.lane.b32.xlu0 %v1331, 4
  %v1548 = vpop.permute.xlu0 %1547
  %1549 = vrot.lane.b32.xlu0 %v1332, 4
  %v1550 = vpop.permute.xlu0 %1549
  %1551 = vrot.lane.b32.xlu0 %v1333, 4
  %v1552 = vpop.permute.xlu0 %1551
  %1553 = vrot.lane.b32.xlu0 %v1334, 4
  %v1554 = vpop.permute.xlu0 %1553
  %1555 = vrot.lane.b32.xlu0 %v1335, 4
  %v1556 = vpop.permute.xlu0 %1555
  %1557 = vrot.lane.b32.xlu0 %v1336, 4
  %v1558 = vpop.permute.xlu0 %1557
  %1559 = vrot.lane.b32.xlu0 %v1337, 4
  %v1560 = vpop.permute.xlu0 %1559
  %1561 = vrot.lane.b32.xlu0 %v1338, 4
  %v1562 = vpop.permute.xlu0 %1561
  %1563 = vrot.lane.b32.xlu0 %v1339, 4
  %v1564 = vpop.permute.xlu0 %1563
  %1565 = vrot.lane.b32.xlu0 %v1340, 4
  %v1566 = vpop.permute.xlu0 %1565
  %1567 = vrot.lane.b32.xlu0 %v1341, 4
  %v1568 = vpop.permute.xlu0 %1567
  %1569 = vrot.lane.b32.xlu0 %v1342, 4
  %v1570 = vpop.permute.xlu0 %1569
  %1571 = vrot.lane.b32.xlu0 %v1343, 4
  %v1572 = vpop.permute.xlu0 %1571
  %1573 = vrot.lane.b32.xlu0 %v1344, 4
  %v1574 = vpop.permute.xlu0 %1573
  %1575 = vrot.lane.b32.xlu0 %v1345, 4
  %v1576 = vpop.permute.xlu0 %1575
  %1577 = vrot.lane.b32.xlu0 %v1346, 4
  %v1578 = vpop.permute.xlu0 %1577
  %1579 = vrot.lane.b32.xlu0 %v1347, 4
  %v1580 = vpop.permute.xlu0 %1579
  %1581 = vrot.lane.b32.xlu0 %v1348, 4
  %v1582 = vpop.permute.xlu0 %1581
  %1583 = vrot.lane.b32.xlu0 %v1349, 4
  %v1584 = vpop.permute.xlu0 %1583
  %1585 = vrot.lane.b32.xlu0 %v1350, 4
  %v1586 = vpop.permute.xlu0 %1585
  %1587 = vrot.lane.b32.xlu0 %v1351, 4
  %v1588 = vpop.permute.xlu0 %1587
  %1589 = vrot.lane.b32.xlu0 %v1352, 4
  %v1590 = vpop.permute.xlu0 %1589
  %1591 = vrot.lane.b32.xlu0 %v1353, 4
  %v1592 = vpop.permute.xlu0 %1591
  %1593 = vrot.lane.b32.xlu0 %v1354, 4
  %v1594 = vpop.permute.xlu0 %1593
  %1595 = vrot.lane.b32.xlu0 %v1355, 4
  %v1596 = vpop.permute.xlu0 %1595
  %1597 = vrot.lane.b32.xlu0 %v1356, 4
  %v1598 = vpop.permute.xlu0 %1597
  %1599 = vrot.lane.b32.xlu0 %v1357, 4
  %v1600 = vpop.permute.xlu0 %1599
  %1601 = vrot.lane.b32.xlu0 %v1358, 4
  %v1602 = vpop.permute.xlu0 %1601
  %1603 = vrot.lane.b32.xlu0 %v1359, 4
  %v1604 = vpop.permute.xlu0 %1603
  %1605 = vrot.lane.b32.xlu0 %v1360, 4
  %v1606 = vpop.permute.xlu0 %1605
  %1607 = vrot.lane.b32.xlu0 %v1361, 4
  %v1608 = vpop.permute.xlu0 %1607
  %1609 = vrot.lane.b32.xlu0 %v1362, 4
  %v1610 = vpop.permute.xlu0 %1609
  %1611 = vrot.lane.b32.xlu0 %v1363, 4
  %v1612 = vpop.permute.xlu0 %1611
  %1613 = vrot.lane.b32.xlu0 %v1364, 4
  %v1614 = vpop.permute.xlu0 %1613
  %1615 = vrot.lane.b32.xlu0 %v1365, 4
  %v1616 = vpop.permute.xlu0 %1615
  %1617 = vrot.lane.b32.xlu0 %v1366, 4
  %v1618 = vpop.permute.xlu0 %1617
  %1619 = vrot.lane.b32.xlu0 %v1367, 4
  %v1620 = vpop.permute.xlu0 %1619
  %1621 = vrot.lane.b32.xlu0 %v1368, 4
  %v1622 = vpop.permute.xlu0 %1621
  %1623 = vrot.lane.b32.xlu0 %v1369, 4
  %v1624 = vpop.permute.xlu0 %1623
  %1625 = vrot.lane.b32.xlu0 %v1370, 4
  %v1626 = vpop.permute.xlu0 %1625
  %1627 = vrot.lane.b32.xlu0 %v1371, 4
  %v1628 = vpop.permute.xlu0 %1627
  %1629 = vrot.lane.b32.xlu0 %v1372, 4
  %v1630 = vpop.permute.xlu0 %1629
  %1631 = vrot.lane.b32.xlu0 %v1373, 4
  %v1632 = vpop.permute.xlu0 %1631
  %1633 = vrot.lane.b32.xlu0 %v1374, 4
  %v1634 = vpop.permute.xlu0 %1633
  %1635 = vrot.lane.b32.xlu0 %v1375, 4
  %v1636 = vpop.permute.xlu0 %1635
  %1637 = vrot.lane.b32.xlu0 %v1376, 4
  %v1638 = vpop.permute.xlu0 %1637
  %1639 = vrot.lane.b32.xlu0 %v1377, 4
  %v1640 = vpop.permute.xlu0 %1639
  %1641 = vrot.lane.b32.xlu0 %v1378, 4
  %v1642 = vpop.permute.xlu0 %1641
  %1643 = vrot.lane.b32.xlu0 %v1379, 4
  %v1644 = vpop.permute.xlu0 %1643
  %1645 = vrot.lane.b32.xlu0 %v1380, 4
  %v1646 = vpop.permute.xlu0 %1645
  %1647 = vrot.lane.b32.xlu0 %v1381, 4
  %v1648 = vpop.permute.xlu0 %1647
  %1649 = vrot.lane.b32.xlu0 %v1382, 4
  %v1650 = vpop.permute.xlu0 %1649
  %1651 = vrot.lane.b32.xlu0 %v1383, 4
  %v1652 = vpop.permute.xlu0 %1651
  %1653 = vrot.lane.b32.xlu0 %v1384, 4
  %v1654 = vpop.permute.xlu0 %1653
  %1655 = vrot.lane.b32.xlu0 %v1385, 4
  %v1656 = vpop.permute.xlu0 %1655
  %1657 = vrot.lane.b32.xlu0 %v1386, 4
  %v1658 = vpop.permute.xlu0 %1657
  %1659 = vrot.lane.b32.xlu0 %v1387, 4
  %v1660 = vpop.permute.xlu0 %1659
  %1661 = vrot.lane.b32.xlu0 %v1388, 4
  %v1662 = vpop.permute.xlu0 %1661
  %1663 = vrot.lane.b32.xlu0 %v1389, 4
  %v1664 = vpop.permute.xlu0 %1663
  %1665 = vrot.lane.b32.xlu0 %v1390, 4
  %v1666 = vpop.permute.xlu0 %1665
  %1667 = vrot.lane.b32.xlu0 %v1391, 4
  %v1668 = vpop.permute.xlu0 %1667
  %1669 = vrot.lane.b32.xlu0 %v1392, 4
  %v1670 = vpop.permute.xlu0 %1669
  %1671 = vrot.lane.b32.xlu0 %v1393, 4
  %v1672 = vpop.permute.xlu0 %1671
  %1673 = vrot.lane.b32.xlu0 %v1394, 4
  %v1674 = vpop.permute.xlu0 %1673
  %1675 = vrot.lane.b32.xlu0 %v1395, 4
  %v1676 = vpop.permute.xlu0 %1675
  %1677 = vrot.lane.b32.xlu0 %v1396, 4
  %v1678 = vpop.permute.xlu0 %1677
  %1679 = vrot.lane.b32.xlu0 %v1397, 4
  %v1680 = vpop.permute.xlu0 %1679
  %1681 = vrot.lane.b32.xlu0 %v1398, 4
  %v1682 = vpop.permute.xlu0 %1681
  %1683 = vrot.lane.b32.xlu0 %v1399, 4
  %v1684 = vpop.permute.xlu0 %1683
  %1685 = vrot.lane.b32.xlu0 %v1400, 4
  %v1686 = vpop.permute.xlu0 %1685
  %1687 = vrot.lane.b32.xlu0 %v1401, 4
  %v1688 = vpop.permute.xlu0 %1687
  %1689 = vrot.lane.b32.xlu0 %v1402, 4
  %v1690 = vpop.permute.xlu0 %1689
  %1835 = vrot.lane.b32.xlu0 %v1403, 8
  %v1836 = vpop.permute.xlu0 %1835
  %1837 = vrot.lane.b32.xlu0 %v1404, 8
  %v1838 = vpop.permute.xlu0 %1837
  %1839 = vrot.lane.b32.xlu0 %v1405, 8
  %v1840 = vpop.permute.xlu0 %1839
  %1841 = vrot.lane.b32.xlu0 %v1406, 8
  %v1842 = vpop.permute.xlu0 %1841
  %1843 = vrot.lane.b32.xlu0 %v1407, 8
  %v1844 = vpop.permute.xlu0 %1843
  %1845 = vrot.lane.b32.xlu0 %v1408, 8
  %v1846 = vpop.permute.xlu0 %1845
  %1847 = vrot.lane.b32.xlu0 %v1409, 8
  %v1848 = vpop.permute.xlu0 %1847
  %1849 = vrot.lane.b32.xlu0 %v1410, 8
  %v1850 = vpop.permute.xlu0 %1849
  %1851 = vrot.lane.b32.xlu0 %v1411, 8
  %v1852 = vpop.permute.xlu0 %1851
  %1853 = vrot.lane.b32.xlu0 %v1412, 8
  %v1854 = vpop.permute.xlu0 %1853
  %1855 = vrot.lane.b32.xlu0 %v1413, 8
  %v1856 = vpop.permute.xlu0 %1855
  %1857 = vrot.lane.b32.xlu0 %v1414, 8
  %v1858 = vpop.permute.xlu0 %1857
  %1859 = vrot.lane.b32.xlu0 %v1415, 8
  %v1860 = vpop.permute.xlu0 %1859
  %1861 = vrot.lane.b32.xlu0 %v1416, 8
  %v1862 = vpop.permute.xlu0 %1861
  %1863 = vrot.lane.b32.xlu0 %v1417, 8
  %v1864 = vpop.permute.xlu0 %1863
  %1865 = vrot.lane.b32.xlu0 %v1418, 8
  %v1866 = vpop.permute.xlu0 %1865
  %1867 = vrot.lane.b32.xlu0 %v1419, 8
  %v1868 = vpop.permute.xlu0 %1867
  %1869 = vrot.lane.b32.xlu0 %v1420, 8
  %v1870 = vpop.permute.xlu0 %1869
  %1871 = vrot.lane.b32.xlu0 %v1421, 8
  %v1872 = vpop.permute.xlu0 %1871
  %1873 = vrot.lane.b32.xlu0 %v1422, 8
  %v1874 = vpop.permute.xlu0 %1873
  %1875 = vrot.lane.b32.xlu0 %v1423, 8
  %v1876 = vpop.permute.xlu0 %1875
  %1877 = vrot.lane.b32.xlu0 %v1424, 8
  %v1878 = vpop.permute.xlu0 %1877
  %1879 = vrot.lane.b32.xlu0 %v1425, 8
  %v1880 = vpop.permute.xlu0 %1879
  %1881 = vrot.lane.b32.xlu0 %v1426, 8
  %v1882 = vpop.permute.xlu0 %1881
  %1883 = vrot.lane.b32.xlu0 %v1427, 8
  %v1884 = vpop.permute.xlu0 %1883
  %1885 = vrot.lane.b32.xlu0 %v1428, 8
  %v1886 = vpop.permute.xlu0 %1885
  %1887 = vrot.lane.b32.xlu0 %v1429, 8
  %v1888 = vpop.permute.xlu0 %1887
  %1889 = vrot.lane.b32.xlu0 %v1430, 8
  %v1890 = vpop.permute.xlu0 %1889
  %1891 = vrot.lane.b32.xlu0 %v1431, 8
  %v1892 = vpop.permute.xlu0 %1891
  %1893 = vrot.lane.b32.xlu0 %v1432, 8
  %v1894 = vpop.permute.xlu0 %1893
  %1895 = vrot.lane.b32.xlu0 %v1433, 8
  %v1896 = vpop.permute.xlu0 %1895
  %1897 = vrot.lane.b32.xlu0 %v1434, 8
  %v1898 = vpop.permute.xlu0 %1897
  %1899 = vrot.lane.b32.xlu0 %v1435, 8
  %v1900 = vpop.permute.xlu0 %1899
  %1901 = vrot.lane.b32.xlu0 %v1436, 8
  %v1902 = vpop.permute.xlu0 %1901
  %1903 = vrot.lane.b32.xlu0 %v1437, 8
  %v1904 = vpop.permute.xlu0 %1903
  %1905 = vrot.lane.b32.xlu0 %v1438, 8
  %v1906 = vpop.permute.xlu0 %1905
  %1907 = vrot.lane.b32.xlu0 %v1439, 8
  %v1908 = vpop.permute.xlu0 %1907
  %1909 = vrot.lane.b32.xlu0 %v1440, 8
  %v1910 = vpop.permute.xlu0 %1909
  %1911 = vrot.lane.b32.xlu0 %v1441, 8
  %v1912 = vpop.permute.xlu0 %1911
  %1913 = vrot.lane.b32.xlu0 %v1442, 8
  %v1914 = vpop.permute.xlu0 %1913
  %1915 = vrot.lane.b32.xlu0 %v1443, 8
  %v1916 = vpop.permute.xlu0 %1915
  %1917 = vrot.lane.b32.xlu0 %v1444, 8
  %v1918 = vpop.permute.xlu0 %1917
  %1919 = vrot.lane.b32.xlu0 %v1445, 8
  %v1920 = vpop.permute.xlu0 %1919
  %1921 = vrot.lane.b32.xlu0 %v1446, 8
  %v1922 = vpop.permute.xlu0 %1921
  %1923 = vrot.lane.b32.xlu0 %v1447, 8
  %v1924 = vpop.permute.xlu0 %1923
  %1925 = vrot.lane.b32.xlu0 %v1448, 8
  %v1926 = vpop.permute.xlu0 %1925
  %1927 = vrot.lane.b32.xlu0 %v1449, 8
  %v1928 = vpop.permute.xlu0 %1927
  %1929 = vrot.lane.b32.xlu0 %v1450, 8
  %v1930 = vpop.permute.xlu0 %1929
  %1931 = vrot.lane.b32.xlu0 %v1451, 8
  %v1932 = vpop.permute.xlu0 %1931
  %1933 = vrot.lane.b32.xlu0 %v1452, 8
  %v1934 = vpop.permute.xlu0 %1933
  %1935 = vrot.lane.b32.xlu0 %v1453, 8
  %v1936 = vpop.permute.xlu0 %1935
  %1937 = vrot.lane.b32.xlu0 %v1454, 8
  %v1938 = vpop.permute.xlu0 %1937
  %1939 = vrot.lane.b32.xlu0 %v1455, 8
  %v1940 = vpop.permute.xlu0 %1939
  %1941 = vrot.lane.b32.xlu0 %v1456, 8
  %v1942 = vpop.permute.xlu0 %1941
  %1943 = vrot.lane.b32.xlu0 %v1457, 8
  %v1944 = vpop.permute.xlu0 %1943
  %1945 = vrot.lane.b32.xlu0 %v1458, 8
  %v1946 = vpop.permute.xlu0 %1945
  %1947 = vrot.lane.b32.xlu0 %v1459, 8
  %v1948 = vpop.permute.xlu0 %1947
  %1949 = vrot.lane.b32.xlu0 %v1460, 8
  %v1950 = vpop.permute.xlu0 %1949
  %1951 = vrot.lane.b32.xlu0 %v1461, 8
  %v1952 = vpop.permute.xlu0 %1951
  %1953 = vrot.lane.b32.xlu0 %v1462, 8
  %v1954 = vpop.permute.xlu0 %1953
  %1955 = vrot.lane.b32.xlu0 %v1463, 8
  %v1956 = vpop.permute.xlu0 %1955
  %1957 = vrot.lane.b32.xlu0 %v1464, 8
  %v1958 = vpop.permute.xlu0 %1957
  %1959 = vrot.lane.b32.xlu0 %v1465, 8
  %v1960 = vpop.permute.xlu0 %1959
  %1961 = vrot.lane.b32.xlu0 %v1466, 8
  %v1962 = vpop.permute.xlu0 %1961
  %1963 = vrot.lane.b32.xlu0 %v1467, 8
  %v1964 = vpop.permute.xlu0 %1963
  %1965 = vrot.lane.b32.xlu0 %v1468, 8
  %v1966 = vpop.permute.xlu0 %1965
  %1967 = vrot.lane.b32.xlu0 %v1469, 8
  %v1968 = vpop.permute.xlu0 %1967
  %1969 = vrot.lane.b32.xlu0 %v1470, 8
  %v1970 = vpop.permute.xlu0 %1969
  %1971 = vrot.lane.b32.xlu0 %v1471, 8
  %v1972 = vpop.permute.xlu0 %1971
  %1973 = vrot.lane.b32.xlu0 %v1472, 8
  %v1974 = vpop.permute.xlu0 %1973
  %1975 = vrot.lane.b32.xlu0 %v1473, 8
  %v1976 = vpop.permute.xlu0 %1975
  %1977 = vrot.lane.b32.xlu0 %v1474, 8
  %v1978 = vpop.permute.xlu0 %1977
  %v2051 = vsel %vm169, %v1259, %v1548
  %v2052 = vsel %vm169, %v1260, %v1550
  %v2053 = vsel %vm169, %v1261, %v1552
  %v2054 = vsel %vm169, %v1262, %v1554
  %v2055 = vsel %vm169, %v1263, %v1556
  %v2056 = vsel %vm169, %v1264, %v1558
  %v2057 = vsel %vm169, %v1265, %v1560
  %v2058 = vsel %vm169, %v1266, %v1562
  %v2059 = vsel %vm169, %v1267, %v1564
  %v2060 = vsel %vm169, %v1268, %v1566
  %v2061 = vsel %vm169, %v1269, %v1568
  %v2062 = vsel %vm169, %v1270, %v1570
  %v2063 = vsel %vm169, %v1271, %v1572
  %v2064 = vsel %vm169, %v1272, %v1574
  %v2065 = vsel %vm169, %v1273, %v1576
  %v2066 = vsel %vm169, %v1274, %v1578
  %v2067 = vsel %vm169, %v1275, %v1580
  %v2068 = vsel %vm169, %v1276, %v1582
  %v2069 = vsel %vm169, %v1277, %v1584
  %v2070 = vsel %vm169, %v1278, %v1586
  %v2071 = vsel %vm169, %v1279, %v1588
  %v2072 = vsel %vm169, %v1280, %v1590
  %v2073 = vsel %vm169, %v1281, %v1592
  %v2074 = vsel %vm169, %v1282, %v1594
  %v2075 = vsel %vm169, %v1283, %v1596
  %v2076 = vsel %vm169, %v1284, %v1598
  %v2077 = vsel %vm169, %v1285, %v1600
  %v2078 = vsel %vm169, %v1286, %v1602
  %v2079 = vsel %vm169, %v1287, %v1604
  %v2080 = vsel %vm169, %v1288, %v1606
  %v2081 = vsel %vm169, %v1289, %v1608
  %v2082 = vsel %vm169, %v1290, %v1610
  %v2083 = vsel %vm169, %v1291, %v1612
  %v2084 = vsel %vm169, %v1292, %v1614
  %v2085 = vsel %vm169, %v1293, %v1616
  %v2086 = vsel %vm169, %v1294, %v1618
  %v2087 = vsel %vm169, %v1295, %v1620
  %v2088 = vsel %vm169, %v1296, %v1622
  %v2089 = vsel %vm169, %v1297, %v1624
  %v2090 = vsel %vm169, %v1298, %v1626
  %v2091 = vsel %vm169, %v1299, %v1628
  %v2092 = vsel %vm169, %v1300, %v1630
  %v2093 = vsel %vm169, %v1301, %v1632
  %v2094 = vsel %vm169, %v1302, %v1634
  %v2095 = vsel %vm169, %v1303, %v1636
  %v2096 = vsel %vm169, %v1304, %v1638
  %v2097 = vsel %vm169, %v1305, %v1640
  %v2098 = vsel %vm169, %v1306, %v1642
  %v2099 = vsel %vm169, %v1307, %v1644
  %v2100 = vsel %vm169, %v1308, %v1646
  %v2101 = vsel %vm169, %v1309, %v1648
  %v2102 = vsel %vm169, %v1310, %v1650
  %v2103 = vsel %vm169, %v1311, %v1652
  %v2104 = vsel %vm169, %v1312, %v1654
  %v2105 = vsel %vm169, %v1313, %v1656
  %v2106 = vsel %vm169, %v1314, %v1658
  %v2107 = vsel %vm169, %v1315, %v1660
  %v2108 = vsel %vm169, %v1316, %v1662
  %v2109 = vsel %vm169, %v1317, %v1664
  %v2110 = vsel %vm169, %v1318, %v1666
  %v2111 = vsel %vm169, %v1319, %v1668
  %v2112 = vsel %vm169, %v1320, %v1670
  %v2113 = vsel %vm169, %v1321, %v1672
  %v2114 = vsel %vm169, %v1322, %v1674
  %v2115 = vsel %vm169, %v1323, %v1676
  %v2116 = vsel %vm169, %v1324, %v1678
  %v2117 = vsel %vm169, %v1325, %v1680
  %v2118 = vsel %vm169, %v1326, %v1682
  %v2119 = vsel %vm169, %v1327, %v1684
  %v2120 = vsel %vm169, %v1328, %v1686
  %v2121 = vsel %vm169, %v1329, %v1688
  %v2122 = vsel %vm169, %v1330, %v1690
  %v2123 = vsel %vm1183, %v2051, %v1836
  %v2124 = vsel %vm1183, %v2052, %v1838
  %v2125 = vsel %vm1183, %v2053, %v1840
  %v2126 = vsel %vm1183, %v2054, %v1842
  %v2127 = vsel %vm1183, %v2055, %v1844
  %v2128 = vsel %vm1183, %v2056, %v1846
  %v2129 = vsel %vm1183, %v2057, %v1848
  %v2130 = vsel %vm1183, %v2058, %v1850
  %v2131 = vsel %vm1183, %v2059, %v1852
  %v2132 = vsel %vm1183, %v2060, %v1854
  %v2133 = vsel %vm1183, %v2061, %v1856
  %v2134 = vsel %vm1183, %v2062, %v1858
  %v2135 = vsel %vm1183, %v2063, %v1860
  %v2136 = vsel %vm1183, %v2064, %v1862
  %v2137 = vsel %vm1183, %v2065, %v1864
  %v2138 = vsel %vm1183, %v2066, %v1866
  %v2139 = vsel %vm1183, %v2067, %v1868
  %v2140 = vsel %vm1183, %v2068, %v1870
  %v2141 = vsel %vm1183, %v2069, %v1872
  %v2142 = vsel %vm1183, %v2070, %v1874
  %v2143 = vsel %vm1183, %v2071, %v1876
  %v2144 = vsel %vm1183, %v2072, %v1878
  %v2145 = vsel %vm1183, %v2073, %v1880
  %v2146 = vsel %vm1183, %v2074, %v1882
  %v2147 = vsel %vm1183, %v2075, %v1884
  %v2148 = vsel %vm1183, %v2076, %v1886
  %v2149 = vsel %vm1183, %v2077, %v1888
  %v2150 = vsel %vm1183, %v2078, %v1890
  %v2151 = vsel %vm1183, %v2079, %v1892
  %v2152 = vsel %vm1183, %v2080, %v1894
  %v2153 = vsel %vm1183, %v2081, %v1896
  %v2154 = vsel %vm1183, %v2082, %v1898
  %v2155 = vsel %vm1183, %v2083, %v1900
  %v2156 = vsel %vm1183, %v2084, %v1902
  %v2157 = vsel %vm1183, %v2085, %v1904
  %v2158 = vsel %vm1183, %v2086, %v1906
  %v2159 = vsel %vm1183, %v2087, %v1908
  %v2160 = vsel %vm1183, %v2088, %v1910
  %v2161 = vsel %vm1183, %v2089, %v1912
  %v2162 = vsel %vm1183, %v2090, %v1914
  %v2163 = vsel %vm1183, %v2091, %v1916
  %v2164 = vsel %vm1183, %v2092, %v1918
  %v2165 = vsel %vm1183, %v2093, %v1920
  %v2166 = vsel %vm1183, %v2094, %v1922
  %v2167 = vsel %vm1183, %v2095, %v1924
  %v2168 = vsel %vm1183, %v2096, %v1926
  %v2169 = vsel %vm1183, %v2097, %v1928
  %v2170 = vsel %vm1183, %v2098, %v1930
  %v2171 = vsel %vm1183, %v2099, %v1932
  %v2172 = vsel %vm1183, %v2100, %v1934
  %v2173 = vsel %vm1183, %v2101, %v1936
  %v2174 = vsel %vm1183, %v2102, %v1938
  %v2175 = vsel %vm1183, %v2103, %v1940
  %v2176 = vsel %vm1183, %v2104, %v1942
  %v2177 = vsel %vm1183, %v2105, %v1944
  %v2178 = vsel %vm1183, %v2106, %v1946
  %v2179 = vsel %vm1183, %v2107, %v1948
  %v2180 = vsel %vm1183, %v2108, %v1950
  %v2181 = vsel %vm1183, %v2109, %v1952
  %v2182 = vsel %vm1183, %v2110, %v1954
  %v2183 = vsel %vm1183, %v2111, %v1956
  %v2184 = vsel %vm1183, %v2112, %v1958
  %v2185 = vsel %vm1183, %v2113, %v1960
  %v2186 = vsel %vm1183, %v2114, %v1962
  %v2187 = vsel %vm1183, %v2115, %v1964
  %v2188 = vsel %vm1183, %v2116, %v1966
  %v2189 = vsel %vm1183, %v2117, %v1968
  %v2190 = vsel %vm1183, %v2118, %v1970
  %v2191 = vsel %vm1183, %v2119, %v1972
  %v2192 = vsel %vm1183, %v2120, %v1974
  %v2193 = vsel %vm1183, %v2121, %v1976
  %v2194 = vsel %vm1183, %v2122, %v1978
  %v2195 = vld [vmem:[%s1 + $0xc] sm:$0xff]
  %v2196 = vld [vmem:[%s1 + $0x14] sm:$0xf]
  %vm2197 = vcmask 97280
  %v2199 = vsel %vm2197, %v2123, 0
  %v2202 = vsel %vm2197, %v2124, 0
  %v2205 = vsel %vm2197, %v2125, 0
  %v2208 = vsel %vm2197, %v2126, 0
  %v2211 = vsel %vm2197, %v2127, 0
  %v2214 = vsel %vm2197, %v2128, 0
  %v2217 = vsel %vm2197, %v2129, 0
  %v2220 = vsel %vm2197, %v2130, 0
  %v2223 = vsel %vm2197, %v2131, 0
  %v2226 = vsel %vm2197, %v2132, 0
  %v2229 = vsel %vm2197, %v2133, 0
  %v2232 = vsel %vm2197, %v2134, 0
  %v2235 = vsel %vm2197, %v2135, 0
  %v2238 = vsel %vm2197, %v2136, 0
  %v2241 = vsel %vm2197, %v2137, 0
  %v2244 = vsel %vm2197, %v2138, 0
  %v2247 = vsel %vm2197, %v2139, 0
  %v2250 = vsel %vm2197, %v2140, 0
  %v2253 = vsel %vm2197, %v2141, 0
  %v2256 = vsel %vm2197, %v2142, 0
  %v2259 = vsel %vm2197, %v2143, 0
  %v2262 = vsel %vm2197, %v2144, 0
  %v2265 = vsel %vm2197, %v2145, 0
  %v2268 = vsel %vm2197, %v2146, 0
  %v2271 = vsel %vm2197, %v2147, 0
  %v2274 = vsel %vm2197, %v2148, 0
  %v2277 = vsel %vm2197, %v2149, 0
  %v2280 = vsel %vm2197, %v2150, 0
  %v2283 = vsel %vm2197, %v2151, 0
  %v2286 = vsel %vm2197, %v2152, 0
  %v2289 = vsel %vm2197, %v2153, 0
  %v2292 = vsel %vm2197, %v2154, 0
  %v2295 = vsel %vm2197, %v2155, 0
  %v2298 = vsel %vm2197, %v2156, 0
  %v2301 = vsel %vm2197, %v2157, 0
  %v2304 = vsel %vm2197, %v2158, 0
  %v2307 = vsel %vm2197, %v2159, 0
  %v2310 = vsel %vm2197, %v2160, 0
  %v2313 = vsel %vm2197, %v2161, 0
  %v2316 = vsel %vm2197, %v2162, 0
  %v2319 = vsel %vm2197, %v2163, 0
  %v2322 = vsel %vm2197, %v2164, 0
  %v2325 = vsel %vm2197, %v2165, 0
  %v2328 = vsel %vm2197, %v2166, 0
  %v2331 = vsel %vm2197, %v2167, 0
  %v2334 = vsel %vm2197, %v2168, 0
  %v2337 = vsel %vm2197, %v2169, 0
  %v2340 = vsel %vm2197, %v2170, 0
  %v2343 = vsel %vm2197, %v2171, 0
  %v2346 = vsel %vm2197, %v2172, 0
  %v2349 = vsel %vm2197, %v2173, 0
  %v2352 = vsel %vm2197, %v2174, 0
  %v2355 = vsel %vm2197, %v2175, 0
  %v2358 = vsel %vm2197, %v2176, 0
  %v2361 = vsel %vm2197, %v2177, 0
  %v2364 = vsel %vm2197, %v2178, 0
  %v2367 = vsel %vm2197, %v2179, 0
  %v2370 = vsel %vm2197, %v2180, 0
  %v2373 = vsel %vm2197, %v2181, 0
  %v2376 = vsel %vm2197, %v2182, 0
  %v2379 = vsel %vm2197, %v2183, 0
  %v2382 = vsel %vm2197, %v2184, 0
  %v2385 = vsel %vm2197, %v2185, 0
  %v2388 = vsel %vm2197, %v2186, 0
  %v2391 = vsel %vm2197, %v2187, 0
  %v2394 = vsel %vm2197, %v2188, 0
  %v2397 = vsel %vm2197, %v2189, 0
  %v2400 = vsel %vm2197, %v2190, 0
  %v2403 = vsel %vm2197, %v2191, 0
  %v2406 = vsel %vm2197, %v2192, 0
  %v2409 = vsel %vm2197, %v2193, 0
  %v2412 = vsel %vm2197, %v2194, 0
  %vm2414 = vcmask 1043456
  %v2416 = vsel %vm2414, %v2196, 0
  %2418 = vmatprep.subr.mxu0 0.0
  %2419 = vmatpush1.msra.mxu0 0.0
  %2420 = vmatprep.subr.mxu0 0.0
  %2421 = vmatpush1.msra.mxu0 0.0
  %2422 = vmatprep.subr.mxu0 0.0
  %2423 = vmatpush1.msra.mxu0 0.0
  %2424 = vmatprep.subr.mxu0 0.0
  %2425 = vmatpush1.msra.mxu0 0.0
  %2426 = vmatprep.subr.mxu0 0.0
  %2427 = vmatpush1.msra.mxu0 0.0
  %2428 = vmatprep.subr.mxu0 0.0
  %2429 = vmatpush1.msra.mxu0 0.0
  %2430 = vmatprep.subr.mxu0 0.0
  %2431 = vmatpush1.msra.mxu0 0.0
  %2432 = vmatprep.subr.mxu0 0.0
  %2433 = vmatpush1.msra.mxu0 0.0
  %2434 = vmatprep.subr.mxu0 0.0
  %2435 = vmatpush1.msra.mxu0 0.0
  %2436 = vmatprep.subr.mxu0 0.0
  %2437 = vmatpush1.msra.mxu0 0.0
  %2438 = vmatprep.subr.mxu0 0.0
  %2439 = vmatpush1.msra.mxu0 0.0
  %2440 = vmatprep.subr.mxu0 0.0
  %2441 = vmatpush1.msra.mxu0 0.0
  %2442 = vmatprep.subr.mxu0 0.0
  %2443 = vmatpush1.msra.mxu0 0.0
  %2444 = vmatprep.subr.mxu0 0.0
  %2445 = vmatpush1.msra.mxu0 0.0
  %2446 = vmatprep.subr.mxu0 0.0
  %2447 = vmatpush1.msra.mxu0 %v2416
  %2448 = vmatprep.subr.mxu0 0.0
  %2449 = vmatpush1.msra.mxu0 %v2195
  %2450 = vmatprep.subr.mxu0 0.0
  %2451 = vmatpush2.msra.mxu0 0.0
  %2452 = vmatprep.subr.mxu0 0.0
  %2453 = vmatpush2.msra.mxu0 0.0
  %2454 = vmatprep.subr.mxu0 0.0
  %2455 = vmatpush2.msra.mxu0 0.0
  %2456 = vmatprep.subr.mxu0 0.0
  %2457 = vmatpush2.msra.mxu0 0.0
  %2458 = vmatprep.subr.mxu0 0.0
  %2459 = vmatpush2.msra.mxu0 0.0
  %2460 = vmatprep.subr.mxu0 0.0
  %2461 = vmatpush2.msra.mxu0 0.0
  %2462 = vmatprep.subr.mxu0 0.0
  %2463 = vmatpush2.msra.mxu0 0.0
  %2464 = vmatprep.subr.mxu0 0.0
  %2465 = vmatpush2.msra.mxu0 0.0
  %2466 = vmatprep.subr.mxu0 0.0
  %2467 = vmatpush2.msra.mxu0 0.0
  %2468 = vmatprep.subr.mxu0 0.0
  %2469 = vmatpush2.msra.mxu0 0.0
  %2470 = vmatprep.subr.mxu0 0.0
  %2471 = vmatpush2.msra.mxu0 0.0
  %2472 = vmatprep.subr.mxu0 0.0
  %2473 = vmatpush2.msra.mxu0 0.0
  %2474 = vmatprep.subr.mxu0 0.0
  %2475 = vmatpush2.msra.mxu0 0.0
  %2476 = vmatprep.subr.mxu0 0.0
  %2477 = vmatpush2.msra.mxu0 0.0
  %2478 = vmatprep.subr.mxu0 0.0
  %2479 = vmatpush2.msra.mxu0 0.0
  %2480 = vmatprep.subr.mxu0 0.0
  %2481 = vmatpush2.msra.mxu0 0.0
  %2482 = vmatprep.mubr.f32.mxu0 0.0
  %2483 = vmatmul.mubr.f32.gmra.mxu0 %v2199
  %v2484 = vpop.f32.mrf.mxu0
  %v2485 = vadd.f32 0.0, %v2484
  %v2486 = vpop.f32.mrf.mxu0
  %2487 = vmatprep.mubr.f32.mxu0 0.0
  %2488 = vmatmul.mubr.f32.gmra.mxu0 %v2202
  %v2489 = vpop.f32.mrf.mxu0
  %v2490 = vadd.f32 0.0, %v2489
  %v2491 = vpop.f32.mrf.mxu0
  %2492 = vmatprep.mubr.f32.mxu0 0.0
  %2493 = vmatmul.mubr.f32.gmra.mxu0 %v2205
  %v2494 = vpop.f32.mrf.mxu0
  %v2495 = vadd.f32 0.0, %v2494
  %v2496 = vpop.f32.mrf.mxu0
  %2497 = vmatprep.mubr.f32.mxu0 0.0
  %2498 = vmatmul.mubr.f32.gmra.mxu0 %v2208
  %v2499 = vpop.f32.mrf.mxu0
  %v2500 = vadd.f32 0.0, %v2499
  %v2501 = vpop.f32.mrf.mxu0
  %2502 = vmatprep.mubr.f32.mxu0 0.0
  %2503 = vmatmul.mubr.f32.gmra.mxu0 %v2211
  %v2504 = vpop.f32.mrf.mxu0
  %v2505 = vadd.f32 0.0, %v2504
  %v2506 = vpop.f32.mrf.mxu0
  %2507 = vmatprep.mubr.f32.mxu0 0.0
  %2508 = vmatmul.mubr.f32.gmra.mxu0 %v2214
  %v2509 = vpop.f32.mrf.mxu0
  %v2510 = vadd.f32 0.0, %v2509
  %v2511 = vpop.f32.mrf.mxu0
  %2512 = vmatprep.mubr.f32.mxu0 0.0
  %2513 = vmatmul.mubr.f32.gmra.mxu0 %v2217
  %v2514 = vpop.f32.mrf.mxu0
  %v2515 = vadd.f32 0.0, %v2514
  %v2516 = vpop.f32.mrf.mxu0
  %2517 = vmatprep.mubr.f32.mxu0 0.0
  %2518 = vmatmul.mubr.f32.gmra.mxu0 %v2220
  %v2519 = vpop.f32.mrf.mxu0
  %v2520 = vadd.f32 0.0, %v2519
  %v2521 = vpop.f32.mrf.mxu0
  %2522 = vmatprep.mubr.f32.mxu0 0.0
  %2523 = vmatmul.mubr.f32.gmra.mxu0 %v2223
  %v2524 = vpop.f32.mrf.mxu0
  %v2525 = vadd.f32 0.0, %v2524
  %v2526 = vpop.f32.mrf.mxu0
  %2527 = vmatprep.mubr.f32.mxu0 0.0
  %2528 = vmatmul.mubr.f32.gmra.mxu0 %v2226
  %v2529 = vpop.f32.mrf.mxu0
  %v2530 = vadd.f32 0.0, %v2529
  %v2531 = vpop.f32.mrf.mxu0
  %2532 = vmatprep.mubr.f32.mxu0 0.0
  %2533 = vmatmul.mubr.f32.gmra.mxu0 %v2229
  %v2534 = vpop.f32.mrf.mxu0
  %v2535 = vadd.f32 0.0, %v2534
  %v2536 = vpop.f32.mrf.mxu0
  %2537 = vmatprep.mubr.f32.mxu0 0.0
  %2538 = vmatmul.mubr.f32.gmra.mxu0 %v2232
  %v2539 = vpop.f32.mrf.mxu0
  %v2540 = vadd.f32 0.0, %v2539
  %v2541 = vpop.f32.mrf.mxu0
  %2542 = vmatprep.mubr.f32.mxu0 0.0
  %2543 = vmatmul.mubr.f32.gmra.mxu0 %v2235
  %v2544 = vpop.f32.mrf.mxu0
  %v2545 = vadd.f32 0.0, %v2544
  %v2546 = vpop.f32.mrf.mxu0
  %2547 = vmatprep.mubr.f32.mxu0 0.0
  %2548 = vmatmul.mubr.f32.gmra.mxu0 %v2238
  %v2549 = vpop.f32.mrf.mxu0
  %v2550 = vadd.f32 0.0, %v2549
  %v2551 = vpop.f32.mrf.mxu0
  %2552 = vmatprep.mubr.f32.mxu0 0.0
  %2553 = vmatmul.mubr.f32.gmra.mxu0 %v2241
  %v2554 = vpop.f32.mrf.mxu0
  %v2555 = vadd.f32 0.0, %v2554
  %v2556 = vpop.f32.mrf.mxu0
  %2557 = vmatprep.mubr.f32.mxu0 0.0
  %2558 = vmatmul.mubr.f32.gmra.mxu0 %v2244
  %v2559 = vpop.f32.mrf.mxu0
  %v2560 = vadd.f32 0.0, %v2559
  %v2561 = vpop.f32.mrf.mxu0
  %2562 = vmatprep.mubr.f32.mxu0 0.0
  %2563 = vmatmul.mubr.f32.gmra.mxu0 %v2247
  %v2564 = vpop.f32.mrf.mxu0
  %v2565 = vadd.f32 0.0, %v2564
  %v2566 = vpop.f32.mrf.mxu0
  %2567 = vmatprep.mubr.f32.mxu0 0.0
  %2568 = vmatmul.mubr.f32.gmra.mxu0 %v2250
  %v2569 = vpop.f32.mrf.mxu0
  %v2570 = vadd.f32 0.0, %v2569
  %v2571 = vpop.f32.mrf.mxu0
  %2572 = vmatprep.mubr.f32.mxu0 0.0
  %2573 = vmatmul.mubr.f32.gmra.mxu0 %v2253
  %v2574 = vpop.f32.mrf.mxu0
  %v2575 = vadd.f32 0.0, %v2574
  %v2576 = vpop.f32.mrf.mxu0
  %2577 = vmatprep.mubr.f32.mxu0 0.0
  %2578 = vmatmul.mubr.f32.gmra.mxu0 %v2256
  %v2579 = vpop.f32.mrf.mxu0
  %v2580 = vadd.f32 0.0, %v2579
  %v2581 = vpop.f32.mrf.mxu0
  %2582 = vmatprep.mubr.f32.mxu0 0.0
  %2583 = vmatmul.mubr.f32.gmra.mxu0 %v2259
  %v2584 = vpop.f32.mrf.mxu0
  %v2585 = vadd.f32 0.0, %v2584
  %v2586 = vpop.f32.mrf.mxu0
  %2587 = vmatprep.mubr.f32.mxu0 0.0
  %2588 = vmatmul.mubr.f32.gmra.mxu0 %v2262
  %v2589 = vpop.f32.mrf.mxu0
  %v2590 = vadd.f32 0.0, %v2589
  %v2591 = vpop.f32.mrf.mxu0
  %2592 = vmatprep.mubr.f32.mxu0 0.0
  %2593 = vmatmul.mubr.f32.gmra.mxu0 %v2265
  %v2594 = vpop.f32.mrf.mxu0
  %v2595 = vadd.f32 0.0, %v2594
  %v2596 = vpop.f32.mrf.mxu0
  %2597 = vmatprep.mubr.f32.mxu0 0.0
  %2598 = vmatmul.mubr.f32.gmra.mxu0 %v2268
  %v2599 = vpop.f32.mrf.mxu0
  %v2600 = vadd.f32 0.0, %v2599
  %v2601 = vpop.f32.mrf.mxu0
  %2602 = vmatprep.mubr.f32.mxu0 0.0
  %2603 = vmatmul.mubr.f32.gmra.mxu0 %v2271
  %v2604 = vpop.f32.mrf.mxu0
  %v2605 = vadd.f32 0.0, %v2604
  %v2606 = vpop.f32.mrf.mxu0
  %2607 = vmatprep.mubr.f32.mxu0 0.0
  %2608 = vmatmul.mubr.f32.gmra.mxu0 %v2274
  %v2609 = vpop.f32.mrf.mxu0
  %v2610 = vadd.f32 0.0, %v2609
  %v2611 = vpop.f32.mrf.mxu0
  %2612 = vmatprep.mubr.f32.mxu0 0.0
  %2613 = vmatmul.mubr.f32.gmra.mxu0 %v2277
  %v2614 = vpop.f32.mrf.mxu0
  %v2615 = vadd.f32 0.0, %v2614
  %v2616 = vpop.f32.mrf.mxu0
  %2617 = vmatprep.mubr.f32.mxu0 0.0
  %2618 = vmatmul.mubr.f32.gmra.mxu0 %v2280
  %v2619 = vpop.f32.mrf.mxu0
  %v2620 = vadd.f32 0.0, %v2619
  %v2621 = vpop.f32.mrf.mxu0
  %2622 = vmatprep.mubr.f32.mxu0 0.0
  %2623 = vmatmul.mubr.f32.gmra.mxu0 %v2283
  %v2624 = vpop.f32.mrf.mxu0
  %v2625 = vadd.f32 0.0, %v2624
  %v2626 = vpop.f32.mrf.mxu0
  %2627 = vmatprep.mubr.f32.mxu0 0.0
  %2628 = vmatmul.mubr.f32.gmra.mxu0 %v2286
  %v2629 = vpop.f32.mrf.mxu0
  %v2630 = vadd.f32 0.0, %v2629
  %v2631 = vpop.f32.mrf.mxu0
  %2632 = vmatprep.mubr.f32.mxu0 0.0
  %2633 = vmatmul.mubr.f32.gmra.mxu0 %v2289
  %v2634 = vpop.f32.mrf.mxu0
  %v2635 = vadd.f32 0.0, %v2634
  %v2636 = vpop.f32.mrf.mxu0
  %2637 = vmatprep.mubr.f32.mxu0 0.0
  %2638 = vmatmul.mubr.f32.gmra.mxu0 %v2292
  %v2639 = vpop.f32.mrf.mxu0
  %v2640 = vadd.f32 0.0, %v2639
  %v2641 = vpop.f32.mrf.mxu0
  %2642 = vmatprep.mubr.f32.mxu0 0.0
  %2643 = vmatmul.mubr.f32.gmra.mxu0 %v2295
  %v2644 = vpop.f32.mrf.mxu0
  %v2645 = vadd.f32 0.0, %v2644
  %v2646 = vpop.f32.mrf.mxu0
  %2647 = vmatprep.mubr.f32.mxu0 0.0
  %2648 = vmatmul.mubr.f32.gmra.mxu0 %v2298
  %v2649 = vpop.f32.mrf.mxu0
  %v2650 = vadd.f32 0.0, %v2649
  %v2651 = vpop.f32.mrf.mxu0
  %2652 = vmatprep.mubr.f32.mxu0 0.0
  %2653 = vmatmul.mubr.f32.gmra.mxu0 %v2301
  %v2654 = vpop.f32.mrf.mxu0
  %v2655 = vadd.f32 0.0, %v2654
  %v2656 = vpop.f32.mrf.mxu0
  %2657 = vmatprep.mubr.f32.mxu0 0.0
  %2658 = vmatmul.mubr.f32.gmra.mxu0 %v2304
  %v2659 = vpop.f32.mrf.mxu0
  %v2660 = vadd.f32 0.0, %v2659
  %v2661 = vpop.f32.mrf.mxu0
  %2662 = vmatprep.mubr.f32.mxu0 0.0
  %2663 = vmatmul.mubr.f32.gmra.mxu0 %v2307
  %v2664 = vpop.f32.mrf.mxu0
  %v2665 = vadd.f32 0.0, %v2664
  %v2666 = vpop.f32.mrf.mxu0
  %2667 = vmatprep.mubr.f32.mxu0 0.0
  %2668 = vmatmul.mubr.f32.gmra.mxu0 %v2310
  %v2669 = vpop.f32.mrf.mxu0
  %v2670 = vadd.f32 0.0, %v2669
  %v2671 = vpop.f32.mrf.mxu0
  %2672 = vmatprep.mubr.f32.mxu0 0.0
  %2673 = vmatmul.mubr.f32.gmra.mxu0 %v2313
  %v2674 = vpop.f32.mrf.mxu0
  %v2675 = vadd.f32 0.0, %v2674
  %v2676 = vpop.f32.mrf.mxu0
  %2677 = vmatprep.mubr.f32.mxu0 0.0
  %2678 = vmatmul.mubr.f32.gmra.mxu0 %v2316
  %v2679 = vpop.f32.mrf.mxu0
  %v2680 = vadd.f32 0.0, %v2679
  %v2681 = vpop.f32.mrf.mxu0
  %2682 = vmatprep.mubr.f32.mxu0 0.0
  %2683 = vmatmul.mubr.f32.gmra.mxu0 %v2319
  %v2684 = vpop.f32.mrf.mxu0
  %v2685 = vadd.f32 0.0, %v2684
  %v2686 = vpop.f32.mrf.mxu0
  %2687 = vmatprep.mubr.f32.mxu0 0.0
  %2688 = vmatmul.mubr.f32.gmra.mxu0 %v2322
  %v2689 = vpop.f32.mrf.mxu0
  %v2690 = vadd.f32 0.0, %v2689
  %v2691 = vpop.f32.mrf.mxu0
  %2692 = vmatprep.mubr.f32.mxu0 0.0
  %2693 = vmatmul.mubr.f32.gmra.mxu0 %v2325
  %v2694 = vpop.f32.mrf.mxu0
  %v2695 = vadd.f32 0.0, %v2694
  %v2696 = vpop.f32.mrf.mxu0
  %2697 = vmatprep.mubr.f32.mxu0 0.0
  %2698 = vmatmul.mubr.f32.gmra.mxu0 %v2328
  %v2699 = vpop.f32.mrf.mxu0
  %v2700 = vadd.f32 0.0, %v2699
  %v2701 = vpop.f32.mrf.mxu0
  %2702 = vmatprep.mubr.f32.mxu0 0.0
  %2703 = vmatmul.mubr.f32.gmra.mxu0 %v2331
  %v2704 = vpop.f32.mrf.mxu0
  %v2705 = vadd.f32 0.0, %v2704
  %v2706 = vpop.f32.mrf.mxu0
  %2707 = vmatprep.mubr.f32.mxu0 0.0
  %2708 = vmatmul.mubr.f32.gmra.mxu0 %v2334
  %v2709 = vpop.f32.mrf.mxu0
  %v2710 = vadd.f32 0.0, %v2709
  %v2711 = vpop.f32.mrf.mxu0
  %2712 = vmatprep.mubr.f32.mxu0 0.0
  %2713 = vmatmul.mubr.f32.gmra.mxu0 %v2337
  %v2714 = vpop.f32.mrf.mxu0
  %v2715 = vadd.f32 0.0, %v2714
  %v2716 = vpop.f32.mrf.mxu0
  %2717 = vmatprep.mubr.f32.mxu0 0.0
  %2718 = vmatmul.mubr.f32.gmra.mxu0 %v2340
  %v2719 = vpop.f32.mrf.mxu0
  %v2720 = vadd.f32 0.0, %v2719
  %v2721 = vpop.f32.mrf.mxu0
  %2722 = vmatprep.mubr.f32.mxu0 0.0
  %2723 = vmatmul.mubr.f32.gmra.mxu0 %v2343
  %v2724 = vpop.f32.mrf.mxu0
  %v2725 = vadd.f32 0.0, %v2724
  %v2726 = vpop.f32.mrf.mxu0
  %2727 = vmatprep.mubr.f32.mxu0 0.0
  %2728 = vmatmul.mubr.f32.gmra.mxu0 %v2346
  %v2729 = vpop.f32.mrf.mxu0
  %v2730 = vadd.f32 0.0, %v2729
  %v2731 = vpop.f32.mrf.mxu0
  %2732 = vmatprep.mubr.f32.mxu0 0.0
  %2733 = vmatmul.mubr.f32.gmra.mxu0 %v2349
  %v2734 = vpop.f32.mrf.mxu0
  %v2735 = vadd.f32 0.0, %v2734
  %v2736 = vpop.f32.mrf.mxu0
  %2737 = vmatprep.mubr.f32.mxu0 0.0
  %2738 = vmatmul.mubr.f32.gmra.mxu0 %v2352
  %v2739 = vpop.f32.mrf.mxu0
  %v2740 = vadd.f32 0.0, %v2739
  %v2741 = vpop.f32.mrf.mxu0
  %2742 = vmatprep.mubr.f32.mxu0 0.0
  %2743 = vmatmul.mubr.f32.gmra.mxu0 %v2355
  %v2744 = vpop.f32.mrf.mxu0
  %v2745 = vadd.f32 0.0, %v2744
  %v2746 = vpop.f32.mrf.mxu0
  %2747 = vmatprep.mubr.f32.mxu0 0.0
  %2748 = vmatmul.mubr.f32.gmra.mxu0 %v2358
  %v2749 = vpop.f32.mrf.mxu0
  %v2750 = vadd.f32 0.0, %v2749
  %v2751 = vpop.f32.mrf.mxu0
  %2752 = vmatprep.mubr.f32.mxu0 0.0
  %2753 = vmatmul.mubr.f32.gmra.mxu0 %v2361
  %v2754 = vpop.f32.mrf.mxu0
  %v2755 = vadd.f32 0.0, %v2754
  %v2756 = vpop.f32.mrf.mxu0
  %2757 = vmatprep.mubr.f32.mxu0 0.0
  %2758 = vmatmul.mubr.f32.gmra.mxu0 %v2364
  %v2759 = vpop.f32.mrf.mxu0
  %v2760 = vadd.f32 0.0, %v2759
  %v2761 = vpop.f32.mrf.mxu0
  %2762 = vmatprep.mubr.f32.mxu0 0.0
  %2763 = vmatmul.mubr.f32.gmra.mxu0 %v2367
  %v2764 = vpop.f32.mrf.mxu0
  %v2765 = vadd.f32 0.0, %v2764
  %v2766 = vpop.f32.mrf.mxu0
  %2767 = vmatprep.mubr.f32.mxu0 0.0
  %2768 = vmatmul.mubr.f32.gmra.mxu0 %v2370
  %v2769 = vpop.f32.mrf.mxu0
  %v2770 = vadd.f32 0.0, %v2769
  %v2771 = vpop.f32.mrf.mxu0
  %2772 = vmatprep.mubr.f32.mxu0 0.0
  %2773 = vmatmul.mubr.f32.gmra.mxu0 %v2373
  %v2774 = vpop.f32.mrf.mxu0
  %v2775 = vadd.f32 0.0, %v2774
  %v2776 = vpop.f32.mrf.mxu0
  %2777 = vmatprep.mubr.f32.mxu0 0.0
  %2778 = vmatmul.mubr.f32.gmra.mxu0 %v2376
  %v2779 = vpop.f32.mrf.mxu0
  %v2780 = vadd.f32 0.0, %v2779
  %v2781 = vpop.f32.mrf.mxu0
  %2782 = vmatprep.mubr.f32.mxu0 0.0
  %2783 = vmatmul.mubr.f32.gmra.mxu0 %v2379
  %v2784 = vpop.f32.mrf.mxu0
  %v2785 = vadd.f32 0.0, %v2784
  %v2786 = vpop.f32.mrf.mxu0
  %2787 = vmatprep.mubr.f32.mxu0 0.0
  %2788 = vmatmul.mubr.f32.gmra.mxu0 %v2382
  %v2789 = vpop.f32.mrf.mxu0
  %v2790 = vadd.f32 0.0, %v2789
  %v2791 = vpop.f32.mrf.mxu0
  %2792 = vmatprep.mubr.f32.mxu0 0.0
  %2793 = vmatmul.mubr.f32.gmra.mxu0 %v2385
  %v2794 = vpop.f32.mrf.mxu0
  %v2795 = vadd.f32 0.0, %v2794
  %v2796 = vpop.f32.mrf.mxu0
  %2797 = vmatprep.mubr.f32.mxu0 0.0
  %2798 = vmatmul.mubr.f32.gmra.mxu0 %v2388
  %v2799 = vpop.f32.mrf.mxu0
  %v2800 = vadd.f32 0.0, %v2799
  %v2801 = vpop.f32.mrf.mxu0
  %2802 = vmatprep.mubr.f32.mxu0 0.0
  %2803 = vmatmul.mubr.f32.gmra.mxu0 %v2391
  %v2804 = vpop.f32.mrf.mxu0
  %v2805 = vadd.f32 0.0, %v2804
  %v2806 = vpop.f32.mrf.mxu0
  %2807 = vmatprep.mubr.f32.mxu0 0.0
  %2808 = vmatmul.mubr.f32.gmra.mxu0 %v2394
  %v2809 = vpop.f32.mrf.mxu0
  %v2810 = vadd.f32 0.0, %v2809
  %v2811 = vpop.f32.mrf.mxu0
  %2812 = vmatprep.mubr.f32.mxu0 0.0
  %2813 = vmatmul.mubr.f32.gmra.mxu0 %v2397
  %v2814 = vpop.f32.mrf.mxu0
  %v2815 = vadd.f32 0.0, %v2814
  %v2816 = vpop.f32.mrf.mxu0
  %2817 = vmatprep.mubr.f32.mxu0 0.0
  %2818 = vmatmul.mubr.f32.gmra.mxu0 %v2400
  %v2819 = vpop.f32.mrf.mxu0
  %v2820 = vadd.f32 0.0, %v2819
  %v2821 = vpop.f32.mrf.mxu0
  %2822 = vmatprep.mubr.f32.mxu0 0.0
  %2823 = vmatmul.mubr.f32.gmra.mxu0 %v2403
  %v2824 = vpop.f32.mrf.mxu0
  %v2825 = vadd.f32 0.0, %v2824
  %v2826 = vpop.f32.mrf.mxu0
  %2827 = vmatprep.mubr.f32.mxu0 0.0
  %2828 = vmatmul.mubr.f32.gmra.mxu0 %v2406
  %v2829 = vpop.f32.mrf.mxu0
  %v2830 = vadd.f32 0.0, %v2829
  %v2831 = vpop.f32.mrf.mxu0
  %2832 = vmatprep.mubr.f32.mxu0 0.0
  %2833 = vmatmul.mubr.f32.gmra.mxu0 %v2409
  %v2834 = vpop.f32.mrf.mxu0
  %v2835 = vadd.f32 0.0, %v2834
  %v2836 = vpop.f32.mrf.mxu0
  %2837 = vmatprep.mubr.f32.mxu0 0.0
  %2838 = vmatmul.mubr.f32.gmra.mxu0 %v2412
  %v2839 = vpop.f32.mrf.mxu0
  %v2840 = vadd.f32 0.0, %v2839
  %v2841 = vpop.f32.mrf.mxu0
  %2842 = vdwg.mxu0
  %v2844 = vsel %vm2197, %v1184, 0
  %v2847 = vsel %vm2197, %v1185, 0
  %v2850 = vsel %vm2197, %v1186, 0
  %v2853 = vsel %vm2197, %v1187, 0
  %v2856 = vsel %vm2197, %v1188, 0
  %v2859 = vsel %vm2197, %v1189, 0
  %v2862 = vsel %vm2197, %v1190, 0
  %v2865 = vsel %vm2197, %v1191, 0
  %v2868 = vsel %vm2197, %v1192, 0
  %v2871 = vsel %vm2197, %v1193, 0
  %v2874 = vsel %vm2197, %v1194, 0
  %v2877 = vsel %vm2197, %v1195, 0
  %v2880 = vsel %vm2197, %v1196, 0
  %v2883 = vsel %vm2197, %v1197, 0
  %v2886 = vsel %vm2197, %v1198, 0
  %v2889 = vsel %vm2197, %v1199, 0
  %v2892 = vsel %vm2197, %v1200, 0
  %v2895 = vsel %vm2197, %v1201, 0
  %v2898 = vsel %vm2197, %v1202, 0
  %v2901 = vsel %vm2197, %v1203, 0
  %v2904 = vsel %vm2197, %v1204, 0
  %v2907 = vsel %vm2197, %v1205, 0
  %v2910 = vsel %vm2197, %v1206, 0
  %v2913 = vsel %vm2197, %v1207, 0
  %v2916 = vsel %vm2197, %v1208, 0
  %v2919 = vsel %vm2197, %v1209, 0
  %v2922 = vsel %vm2197, %v1210, 0
  %v2925 = vsel %vm2197, %v1211, 0
  %v2928 = vsel %vm2197, %v1212, 0
  %v2931 = vsel %vm2197, %v1213, 0
  %v2934 = vsel %vm2197, %v1214, 0
  %v2937 = vsel %vm2197, %v1215, 0
  %v2940 = vsel %vm2197, %v1216, 0
  %v2943 = vsel %vm2197, %v1217, 0
  %v2946 = vsel %vm2197, %v1218, 0
  %v2949 = vsel %vm2197, %v1219, 0
  %v2952 = vsel %vm2197, %v1220, 0
  %v2955 = vsel %vm2197, %v1221, 0
  %v2958 = vsel %vm2197, %v1222, 0
  %v2961 = vsel %vm2197, %v1223, 0
  %v2964 = vsel %vm2197, %v1224, 0
  %v2967 = vsel %vm2197, %v1225, 0
  %v2970 = vsel %vm2197, %v1226, 0
  %v2973 = vsel %vm2197, %v1227, 0
  %v2976 = vsel %vm2197, %v1228, 0
  %v2979 = vsel %vm2197, %v1229, 0
  %v2982 = vsel %vm2197, %v1230, 0
  %v2985 = vsel %vm2197, %v1231, 0
  %v2988 = vsel %vm2197, %v1232, 0
  %v2991 = vsel %vm2197, %v1233, 0
  %v2994 = vsel %vm2197, %v1234, 0
  %v2997 = vsel %vm2197, %v1235, 0
  %v3000 = vsel %vm2197, %v1236, 0
  %v3003 = vsel %vm2197, %v1237, 0
  %v3006 = vsel %vm2197, %v1238, 0
  %v3009 = vsel %vm2197, %v1239, 0
  %v3012 = vsel %vm2197, %v1240, 0
  %v3015 = vsel %vm2197, %v1241, 0
  %v3018 = vsel %vm2197, %v1242, 0
  %v3021 = vsel %vm2197, %v1243, 0
  %v3024 = vsel %vm2197, %v1244, 0
  %v3027 = vsel %vm2197, %v1245, 0
  %v3030 = vsel %vm2197, %v1246, 0
  %v3033 = vsel %vm2197, %v1247, 0
  %v3036 = vsel %vm2197, %v1248, 0
  %v3039 = vsel %vm2197, %v1249, 0
  %v3042 = vsel %vm2197, %v1250, 0
  %v3045 = vsel %vm2197, %v1251, 0
  %v3048 = vsel %vm2197, %v1252, 0
  %v3051 = vsel %vm2197, %v1253, 0
  %v3054 = vsel %vm2197, %v1254, 0
  %v3057 = vsel %vm2197, %v1255, 0
  %v3060 = vsel %vm2414, %v1257, 0
  %3062 = vmatprep.subr.mxu0 0.0
  %3063 = vmatpush1.msra.mxu0 0.0
  %3064 = vmatprep.subr.mxu0 0.0
  %3065 = vmatpush1.msra.mxu0 0.0
  %3066 = vmatprep.subr.mxu0 0.0
  %3067 = vmatpush1.msra.mxu0 0.0
  %3068 = vmatprep.subr.mxu0 0.0
  %3069 = vmatpush1.msra.mxu0 0.0
  %3070 = vmatprep.subr.mxu0 0.0
  %3071 = vmatpush1.msra.mxu0 0.0
  %3072 = vmatprep.subr.mxu0 0.0
  %3073 = vmatpush1.msra.mxu0 0.0
  %3074 = vmatprep.subr.mxu0 0.0
  %3075 = vmatpush1.msra.mxu0 0.0
  %3076 = vmatprep.subr.mxu0 0.0
  %3077 = vmatpush1.msra.mxu0 0.0
  %3078 = vmatprep.subr.mxu0 0.0
  %3079 = vmatpush1.msra.mxu0 0.0
  %3080 = vmatprep.subr.mxu0 0.0
  %3081 = vmatpush1.msra.mxu0 0.0
  %3082 = vmatprep.subr.mxu0 0.0
  %3083 = vmatpush1.msra.mxu0 0.0
  %3084 = vmatprep.subr.mxu0 0.0
  %3085 = vmatpush1.msra.mxu0 0.0
  %3086 = vmatprep.subr.mxu0 0.0
  %3087 = vmatpush1.msra.mxu0 0.0
  %3088 = vmatprep.subr.mxu0 0.0
  %3089 = vmatpush1.msra.mxu0 0.0
  %3090 = vmatprep.subr.mxu0 0.0
  %3091 = vmatpush1.msra.mxu0 %v3060
  %3092 = vmatprep.subr.mxu0 0.0
  %3093 = vmatpush1.msra.mxu0 %v1256
  %3094 = vmatprep.subr.mxu0 0.0
  %3095 = vmatpush2.msra.mxu0 0.0
  %3096 = vmatprep.subr.mxu0 0.0
  %3097 = vmatpush2.msra.mxu0 0.0
  %3098 = vmatprep.subr.mxu0 0.0
  %3099 = vmatpush2.msra.mxu0 0.0
  %3100 = vmatprep.subr.mxu0 0.0
  %3101 = vmatpush2.msra.mxu0 0.0
  %3102 = vmatprep.subr.mxu0 0.0
  %3103 = vmatpush2.msra.mxu0 0.0
  %3104 = vmatprep.subr.mxu0 0.0
  %3105 = vmatpush2.msra.mxu0 0.0
  %3106 = vmatprep.subr.mxu0 0.0
  %3107 = vmatpush2.msra.mxu0 0.0
  %3108 = vmatprep.subr.mxu0 0.0
  %3109 = vmatpush2.msra.mxu0 0.0
  %3110 = vmatprep.subr.mxu0 0.0
  %3111 = vmatpush2.msra.mxu0 0.0
  %3112 = vmatprep.subr.mxu0 0.0
  %3113 = vmatpush2.msra.mxu0 0.0
  %3114 = vmatprep.subr.mxu0 0.0
  %3115 = vmatpush2.msra.mxu0 0.0
  %3116 = vmatprep.subr.mxu0 0.0
  %3117 = vmatpush2.msra.mxu0 0.0
  %3118 = vmatprep.subr.mxu0 0.0
  %3119 = vmatpush2.msra.mxu0 0.0
  %3120 = vmatprep.subr.mxu0 0.0
  %3121 = vmatpush2.msra.mxu0 0.0
  %3122 = vmatprep.subr.mxu0 0.0
  %3123 = vmatpush2.msra.mxu0 0.0
  %3124 = vmatprep.subr.mxu0 0.0
  %3125 = vmatpush2.msra.mxu0 0.0
  %3126 = vmatprep.mubr.f32.mxu0 0.0
  %3127 = vmatmul.mubr.f32.gmra.mxu0 %v2844
  %v3128 = vpop.f32.mrf.mxu0
  %v3129 = vadd.f32 %v2485, %v3128
  %v3130 = vpop.f32.mrf.mxu0
  %3131 = vmatprep.mubr.f32.mxu0 0.0
  %3132 = vmatmul.mubr.f32.gmra.mxu0 %v2847
  %v3133 = vpop.f32.mrf.mxu0
  %v3134 = vadd.f32 %v2490, %v3133
  %v3135 = vpop.f32.mrf.mxu0
  %3136 = vmatprep.mubr.f32.mxu0 0.0
  %3137 = vmatmul.mubr.f32.gmra.mxu0 %v2850
  %v3138 = vpop.f32.mrf.mxu0
  %v3139 = vadd.f32 %v2495, %v3138
  %v3140 = vpop.f32.mrf.mxu0
  %3141 = vmatprep.mubr.f32.mxu0 0.0
  %3142 = vmatmul.mubr.f32.gmra.mxu0 %v2853
  %v3143 = vpop.f32.mrf.mxu0
  %v3144 = vadd.f32 %v2500, %v3143
  %v3145 = vpop.f32.mrf.mxu0
  %3146 = vmatprep.mubr.f32.mxu0 0.0
  %3147 = vmatmul.mubr.f32.gmra.mxu0 %v2856
  %v3148 = vpop.f32.mrf.mxu0
  %v3149 = vadd.f32 %v2505, %v3148
  %v3150 = vpop.f32.mrf.mxu0
  %3151 = vmatprep.mubr.f32.mxu0 0.0
  %3152 = vmatmul.mubr.f32.gmra.mxu0 %v2859
  %v3153 = vpop.f32.mrf.mxu0
  %v3154 = vadd.f32 %v2510, %v3153
  %v3155 = vpop.f32.mrf.mxu0
  %3156 = vmatprep.mubr.f32.mxu0 0.0
  %3157 = vmatmul.mubr.f32.gmra.mxu0 %v2862
  %v3158 = vpop.f32.mrf.mxu0
  %v3159 = vadd.f32 %v2515, %v3158
  %v3160 = vpop.f32.mrf.mxu0
  %3161 = vmatprep.mubr.f32.mxu0 0.0
  %3162 = vmatmul.mubr.f32.gmra.mxu0 %v2865
  %v3163 = vpop.f32.mrf.mxu0
  %v3164 = vadd.f32 %v2520, %v3163
  %v3165 = vpop.f32.mrf.mxu0
  %3166 = vmatprep.mubr.f32.mxu0 0.0
  %3167 = vmatmul.mubr.f32.gmra.mxu0 %v2868
  %v3168 = vpop.f32.mrf.mxu0
  %v3169 = vadd.f32 %v2525, %v3168
  %v3170 = vpop.f32.mrf.mxu0
  %3171 = vmatprep.mubr.f32.mxu0 0.0
  %3172 = vmatmul.mubr.f32.gmra.mxu0 %v2871
  %v3173 = vpop.f32.mrf.mxu0
  %v3174 = vadd.f32 %v2530, %v3173
  %v3175 = vpop.f32.mrf.mxu0
  %3176 = vmatprep.mubr.f32.mxu0 0.0
  %3177 = vmatmul.mubr.f32.gmra.mxu0 %v2874
  %v3178 = vpop.f32.mrf.mxu0
  %v3179 = vadd.f32 %v2535, %v3178
  %v3180 = vpop.f32.mrf.mxu0
  %3181 = vmatprep.mubr.f32.mxu0 0.0
  %3182 = vmatmul.mubr.f32.gmra.mxu0 %v2877
  %v3183 = vpop.f32.mrf.mxu0
  %v3184 = vadd.f32 %v2540, %v3183
  %v3185 = vpop.f32.mrf.mxu0
  %3186 = vmatprep.mubr.f32.mxu0 0.0
  %3187 = vmatmul.mubr.f32.gmra.mxu0 %v2880
  %v3188 = vpop.f32.mrf.mxu0
  %v3189 = vadd.f32 %v2545, %v3188
  %v3190 = vpop.f32.mrf.mxu0
  %3191 = vmatprep.mubr.f32.mxu0 0.0
  %3192 = vmatmul.mubr.f32.gmra.mxu0 %v2883
  %v3193 = vpop.f32.mrf.mxu0
  %v3194 = vadd.f32 %v2550, %v3193
  %v3195 = vpop.f32.mrf.mxu0
  %3196 = vmatprep.mubr.f32.mxu0 0.0
  %3197 = vmatmul.mubr.f32.gmra.mxu0 %v2886
  %v3198 = vpop.f32.mrf.mxu0
  %v3199 = vadd.f32 %v2555, %v3198
  %v3200 = vpop.f32.mrf.mxu0
  %3201 = vmatprep.mubr.f32.mxu0 0.0
  %3202 = vmatmul.mubr.f32.gmra.mxu0 %v2889
  %v3203 = vpop.f32.mrf.mxu0
  %v3204 = vadd.f32 %v2560, %v3203
  %v3205 = vpop.f32.mrf.mxu0
  %3206 = vmatprep.mubr.f32.mxu0 0.0
  %3207 = vmatmul.mubr.f32.gmra.mxu0 %v2892
  %v3208 = vpop.f32.mrf.mxu0
  %v3209 = vadd.f32 %v2565, %v3208
  %v3210 = vpop.f32.mrf.mxu0
  %3211 = vmatprep.mubr.f32.mxu0 0.0
  %3212 = vmatmul.mubr.f32.gmra.mxu0 %v2895
  %v3213 = vpop.f32.mrf.mxu0
  %v3214 = vadd.f32 %v2570, %v3213
  %v3215 = vpop.f32.mrf.mxu0
  %3216 = vmatprep.mubr.f32.mxu0 0.0
  %3217 = vmatmul.mubr.f32.gmra.mxu0 %v2898
  %v3218 = vpop.f32.mrf.mxu0
  %v3219 = vadd.f32 %v2575, %v3218
  %v3220 = vpop.f32.mrf.mxu0
  %3221 = vmatprep.mubr.f32.mxu0 0.0
  %3222 = vmatmul.mubr.f32.gmra.mxu0 %v2901
  %v3223 = vpop.f32.mrf.mxu0
  %v3224 = vadd.f32 %v2580, %v3223
  %v3225 = vpop.f32.mrf.mxu0
  %3226 = vmatprep.mubr.f32.mxu0 0.0
  %3227 = vmatmul.mubr.f32.gmra.mxu0 %v2904
  %v3228 = vpop.f32.mrf.mxu0
  %v3229 = vadd.f32 %v2585, %v3228
  %v3230 = vpop.f32.mrf.mxu0
  %3231 = vmatprep.mubr.f32.mxu0 0.0
  %3232 = vmatmul.mubr.f32.gmra.mxu0 %v2907
  %v3233 = vpop.f32.mrf.mxu0
  %v3234 = vadd.f32 %v2590, %v3233
  %v3235 = vpop.f32.mrf.mxu0
  %3236 = vmatprep.mubr.f32.mxu0 0.0
  %3237 = vmatmul.mubr.f32.gmra.mxu0 %v2910
  %v3238 = vpop.f32.mrf.mxu0
  %v3239 = vadd.f32 %v2595, %v3238
  %v3240 = vpop.f32.mrf.mxu0
  %3241 = vmatprep.mubr.f32.mxu0 0.0
  %3242 = vmatmul.mubr.f32.gmra.mxu0 %v2913
  %v3243 = vpop.f32.mrf.mxu0
  %v3244 = vadd.f32 %v2600, %v3243
  %v3245 = vpop.f32.mrf.mxu0
  %3246 = vmatprep.mubr.f32.mxu0 0.0
  %3247 = vmatmul.mubr.f32.gmra.mxu0 %v2916
  %v3248 = vpop.f32.mrf.mxu0
  %v3249 = vadd.f32 %v2605, %v3248
  %v3250 = vpop.f32.mrf.mxu0
  %3251 = vmatprep.mubr.f32.mxu0 0.0
  %3252 = vmatmul.mubr.f32.gmra.mxu0 %v2919
  %v3253 = vpop.f32.mrf.mxu0
  %v3254 = vadd.f32 %v2610, %v3253
  %v3255 = vpop.f32.mrf.mxu0
  %3256 = vmatprep.mubr.f32.mxu0 0.0
  %3257 = vmatmul.mubr.f32.gmra.mxu0 %v2922
  %v3258 = vpop.f32.mrf.mxu0
  %v3259 = vadd.f32 %v2615, %v3258
  %v3260 = vpop.f32.mrf.mxu0
  %3261 = vmatprep.mubr.f32.mxu0 0.0
  %3262 = vmatmul.mubr.f32.gmra.mxu0 %v2925
  %v3263 = vpop.f32.mrf.mxu0
  %v3264 = vadd.f32 %v2620, %v3263
  %v3265 = vpop.f32.mrf.mxu0
  %3266 = vmatprep.mubr.f32.mxu0 0.0
  %3267 = vmatmul.mubr.f32.gmra.mxu0 %v2928
  %v3268 = vpop.f32.mrf.mxu0
  %v3269 = vadd.f32 %v2625, %v3268
  %v3270 = vpop.f32.mrf.mxu0
  %3271 = vmatprep.mubr.f32.mxu0 0.0
  %3272 = vmatmul.mubr.f32.gmra.mxu0 %v2931
  %v3273 = vpop.f32.mrf.mxu0
  %v3274 = vadd.f32 %v2630, %v3273
  %v3275 = vpop.f32.mrf.mxu0
  %3276 = vmatprep.mubr.f32.mxu0 0.0
  %3277 = vmatmul.mubr.f32.gmra.mxu0 %v2934
  %v3278 = vpop.f32.mrf.mxu0
  %v3279 = vadd.f32 %v2635, %v3278
  %v3280 = vpop.f32.mrf.mxu0
  %3281 = vmatprep.mubr.f32.mxu0 0.0
  %3282 = vmatmul.mubr.f32.gmra.mxu0 %v2937
  %v3283 = vpop.f32.mrf.mxu0
  %v3284 = vadd.f32 %v2640, %v3283
  %v3285 = vpop.f32.mrf.mxu0
  %3286 = vmatprep.mubr.f32.mxu0 0.0
  %3287 = vmatmul.mubr.f32.gmra.mxu0 %v2940
  %v3288 = vpop.f32.mrf.mxu0
  %v3289 = vadd.f32 %v2645, %v3288
  %v3290 = vpop.f32.mrf.mxu0
  %3291 = vmatprep.mubr.f32.mxu0 0.0
  %3292 = vmatmul.mubr.f32.gmra.mxu0 %v2943
  %v3293 = vpop.f32.mrf.mxu0
  %v3294 = vadd.f32 %v2650, %v3293
  %v3295 = vpop.f32.mrf.mxu0
  %3296 = vmatprep.mubr.f32.mxu0 0.0
  %3297 = vmatmul.mubr.f32.gmra.mxu0 %v2946
  %v3298 = vpop.f32.mrf.mxu0
  %v3299 = vadd.f32 %v2655, %v3298
  %v3300 = vpop.f32.mrf.mxu0
  %3301 = vmatprep.mubr.f32.mxu0 0.0
  %3302 = vmatmul.mubr.f32.gmra.mxu0 %v2949
  %v3303 = vpop.f32.mrf.mxu0
  %v3304 = vadd.f32 %v2660, %v3303
  %v3305 = vpop.f32.mrf.mxu0
  %3306 = vmatprep.mubr.f32.mxu0 0.0
  %3307 = vmatmul.mubr.f32.gmra.mxu0 %v2952
  %v3308 = vpop.f32.mrf.mxu0
  %v3309 = vadd.f32 %v2665, %v3308
  %v3310 = vpop.f32.mrf.mxu0
  %3311 = vmatprep.mubr.f32.mxu0 0.0
  %3312 = vmatmul.mubr.f32.gmra.mxu0 %v2955
  %v3313 = vpop.f32.mrf.mxu0
  %v3314 = vadd.f32 %v2670, %v3313
  %v3315 = vpop.f32.mrf.mxu0
  %3316 = vmatprep.mubr.f32.mxu0 0.0
  %3317 = vmatmul.mubr.f32.gmra.mxu0 %v2958
  %v3318 = vpop.f32.mrf.mxu0
  %v3319 = vadd.f32 %v2675, %v3318
  %v3320 = vpop.f32.mrf.mxu0
  %3321 = vmatprep.mubr.f32.mxu0 0.0
  %3322 = vmatmul.mubr.f32.gmra.mxu0 %v2961
  %v3323 = vpop.f32.mrf.mxu0
  %v3324 = vadd.f32 %v2680, %v3323
  %v3325 = vpop.f32.mrf.mxu0
  %3326 = vmatprep.mubr.f32.mxu0 0.0
  %3327 = vmatmul.mubr.f32.gmra.mxu0 %v2964
  %v3328 = vpop.f32.mrf.mxu0
  %v3329 = vadd.f32 %v2685, %v3328
  %v3330 = vpop.f32.mrf.mxu0
  %3331 = vmatprep.mubr.f32.mxu0 0.0
  %3332 = vmatmul.mubr.f32.gmra.mxu0 %v2967
  %v3333 = vpop.f32.mrf.mxu0
  %v3334 = vadd.f32 %v2690, %v3333
  %v3335 = vpop.f32.mrf.mxu0
  %3336 = vmatprep.mubr.f32.mxu0 0.0
  %3337 = vmatmul.mubr.f32.gmra.mxu0 %v2970
  %v3338 = vpop.f32.mrf.mxu0
  %v3339 = vadd.f32 %v2695, %v3338
  %v3340 = vpop.f32.mrf.mxu0
  %3341 = vmatprep.mubr.f32.mxu0 0.0
  %3342 = vmatmul.mubr.f32.gmra.mxu0 %v2973
  %v3343 = vpop.f32.mrf.mxu0
  %v3344 = vadd.f32 %v2700, %v3343
  %v3345 = vpop.f32.mrf.mxu0
  %3346 = vmatprep.mubr.f32.mxu0 0.0
  %3347 = vmatmul.mubr.f32.gmra.mxu0 %v2976
  %v3348 = vpop.f32.mrf.mxu0
  %v3349 = vadd.f32 %v2705, %v3348
  %v3350 = vpop.f32.mrf.mxu0
  %3351 = vmatprep.mubr.f32.mxu0 0.0
  %3352 = vmatmul.mubr.f32.gmra.mxu0 %v2979
  %v3353 = vpop.f32.mrf.mxu0
  %v3354 = vadd.f32 %v2710, %v3353
  %v3355 = vpop.f32.mrf.mxu0
  %3356 = vmatprep.mubr.f32.mxu0 0.0
  %3357 = vmatmul.mubr.f32.gmra.mxu0 %v2982
  %v3358 = vpop.f32.mrf.mxu0
  %v3359 = vadd.f32 %v2715, %v3358
  %v3360 = vpop.f32.mrf.mxu0
  %3361 = vmatprep.mubr.f32.mxu0 0.0
  %3362 = vmatmul.mubr.f32.gmra.mxu0 %v2985
  %v3363 = vpop.f32.mrf.mxu0
  %v3364 = vadd.f32 %v2720, %v3363
  %v3365 = vpop.f32.mrf.mxu0
  %3366 = vmatprep.mubr.f32.mxu0 0.0
  %3367 = vmatmul.mubr.f32.gmra.mxu0 %v2988
  %v3368 = vpop.f32.mrf.mxu0
  %v3369 = vadd.f32 %v2725, %v3368
  %v3370 = vpop.f32.mrf.mxu0
  %3371 = vmatprep.mubr.f32.mxu0 0.0
  %3372 = vmatmul.mubr.f32.gmra.mxu0 %v2991
  %v3373 = vpop.f32.mrf.mxu0
  %v3374 = vadd.f32 %v2730, %v3373
  %v3375 = vpop.f32.mrf.mxu0
  %3376 = vmatprep.mubr.f32.mxu0 0.0
  %3377 = vmatmul.mubr.f32.gmra.mxu0 %v2994
  %v3378 = vpop.f32.mrf.mxu0
  %v3379 = vadd.f32 %v2735, %v3378
  %v3380 = vpop.f32.mrf.mxu0
  %3381 = vmatprep.mubr.f32.mxu0 0.0
  %3382 = vmatmul.mubr.f32.gmra.mxu0 %v2997
  %v3383 = vpop.f32.mrf.mxu0
  %v3384 = vadd.f32 %v2740, %v3383
  %v3385 = vpop.f32.mrf.mxu0
  %3386 = vmatprep.mubr.f32.mxu0 0.0
  %3387 = vmatmul.mubr.f32.gmra.mxu0 %v3000
  %v3388 = vpop.f32.mrf.mxu0
  %v3389 = vadd.f32 %v2745, %v3388
  %v3390 = vpop.f32.mrf.mxu0
  %3391 = vmatprep.mubr.f32.mxu0 0.0
  %3392 = vmatmul.mubr.f32.gmra.mxu0 %v3003
  %v3393 = vpop.f32.mrf.mxu0
  %v3394 = vadd.f32 %v2750, %v3393
  %v3395 = vpop.f32.mrf.mxu0
  %3396 = vmatprep.mubr.f32.mxu0 0.0
  %3397 = vmatmul.mubr.f32.gmra.mxu0 %v3006
  %v3398 = vpop.f32.mrf.mxu0
  %v3399 = vadd.f32 %v2755, %v3398
  %v3400 = vpop.f32.mrf.mxu0
  %3401 = vmatprep.mubr.f32.mxu0 0.0
  %3402 = vmatmul.mubr.f32.gmra.mxu0 %v3009
  %v3403 = vpop.f32.mrf.mxu0
  %v3404 = vadd.f32 %v2760, %v3403
  %v3405 = vpop.f32.mrf.mxu0
  %3406 = vmatprep.mubr.f32.mxu0 0.0
  %3407 = vmatmul.mubr.f32.gmra.mxu0 %v3012
  %v3408 = vpop.f32.mrf.mxu0
  %v3409 = vadd.f32 %v2765, %v3408
  %v3410 = vpop.f32.mrf.mxu0
  %3411 = vmatprep.mubr.f32.mxu0 0.0
  %3412 = vmatmul.mubr.f32.gmra.mxu0 %v3015
  %v3413 = vpop.f32.mrf.mxu0
  %v3414 = vadd.f32 %v2770, %v3413
  %v3415 = vpop.f32.mrf.mxu0
  %3416 = vmatprep.mubr.f32.mxu0 0.0
  %3417 = vmatmul.mubr.f32.gmra.mxu0 %v3018
  %v3418 = vpop.f32.mrf.mxu0
  %v3419 = vadd.f32 %v2775, %v3418
  %v3420 = vpop.f32.mrf.mxu0
  %3421 = vmatprep.mubr.f32.mxu0 0.0
  %3422 = vmatmul.mubr.f32.gmra.mxu0 %v3021
  %v3423 = vpop.f32.mrf.mxu0
  %v3424 = vadd.f32 %v2780, %v3423
  %v3425 = vpop.f32.mrf.mxu0
  %3426 = vmatprep.mubr.f32.mxu0 0.0
  %3427 = vmatmul.mubr.f32.gmra.mxu0 %v3024
  %v3428 = vpop.f32.mrf.mxu0
  %v3429 = vadd.f32 %v2785, %v3428
  %v3430 = vpop.f32.mrf.mxu0
  %3431 = vmatprep.mubr.f32.mxu0 0.0
  %3432 = vmatmul.mubr.f32.gmra.mxu0 %v3027
  %v3433 = vpop.f32.mrf.mxu0
  %v3434 = vadd.f32 %v2790, %v3433
  %v3435 = vpop.f32.mrf.mxu0
  %3436 = vmatprep.mubr.f32.mxu0 0.0
  %3437 = vmatmul.mubr.f32.gmra.mxu0 %v3030
  %v3438 = vpop.f32.mrf.mxu0
  %v3439 = vadd.f32 %v2795, %v3438
  %v3440 = vpop.f32.mrf.mxu0
  %3441 = vmatprep.mubr.f32.mxu0 0.0
  %3442 = vmatmul.mubr.f32.gmra.mxu0 %v3033
  %v3443 = vpop.f32.mrf.mxu0
  %v3444 = vadd.f32 %v2800, %v3443
  %v3445 = vpop.f32.mrf.mxu0
  %3446 = vmatprep.mubr.f32.mxu0 0.0
  %3447 = vmatmul.mubr.f32.gmra.mxu0 %v3036
  %v3448 = vpop.f32.mrf.mxu0
  %v3449 = vadd.f32 %v2805, %v3448
  %v3450 = vpop.f32.mrf.mxu0
  %3451 = vmatprep.mubr.f32.mxu0 0.0
  %3452 = vmatmul.mubr.f32.gmra.mxu0 %v3039
  %v3453 = vpop.f32.mrf.mxu0
  %v3454 = vadd.f32 %v2810, %v3453
  %v3455 = vpop.f32.mrf.mxu0
  %3456 = vmatprep.mubr.f32.mxu0 0.0
  %3457 = vmatmul.mubr.f32.gmra.mxu0 %v3042
  %v3458 = vpop.f32.mrf.mxu0
  %v3459 = vadd.f32 %v2815, %v3458
  %v3460 = vpop.f32.mrf.mxu0
  %3461 = vmatprep.mubr.f32.mxu0 0.0
  %3462 = vmatmul.mubr.f32.gmra.mxu0 %v3045
  %v3463 = vpop.f32.mrf.mxu0
  %v3464 = vadd.f32 %v2820, %v3463
  %v3465 = vpop.f32.mrf.mxu0
  %3466 = vmatprep.mubr.f32.mxu0 0.0
  %3467 = vmatmul.mubr.f32.gmra.mxu0 %v3048
  %v3468 = vpop.f32.mrf.mxu0
  %v3469 = vadd.f32 %v2825, %v3468
  %v3470 = vpop.f32.mrf.mxu0
  %3471 = vmatprep.mubr.f32.mxu0 0.0
  %3472 = vmatmul.mubr.f32.gmra.mxu0 %v3051
  %v3473 = vpop.f32.mrf.mxu0
  %v3474 = vadd.f32 %v2830, %v3473
  %v3475 = vpop.f32.mrf.mxu0
  %3476 = vmatprep.mubr.f32.mxu0 0.0
  %3477 = vmatmul.mubr.f32.gmra.mxu0 %v3054
  %v3478 = vpop.f32.mrf.mxu0
  %v3479 = vadd.f32 %v2835, %v3478
  %v3480 = vpop.f32.mrf.mxu0
  %3481 = vmatprep.mubr.f32.mxu0 0.0
  %3482 = vmatmul.mubr.f32.gmra.mxu0 %v3057
  %v3483 = vpop.f32.mrf.mxu0
  %v3484 = vadd.f32 %v2840, %v3483
  %v3485 = vpop.f32.mrf.mxu0
  %3486 = vdwg.mxu0
  %v3487 = vld [vmem:[%s168] sm:$0xff]
  %v3488 = vld [vmem:[%s168 + $0x8] sm:$0xff]
  %v3489 = vld [vmem:[%s168 + $0x18] sm:$0xff]
  %v3490 = vld [vmem:[%s168 + $0x20] sm:$0xff]
  %v3491 = vld [vmem:[%s168 + $0x30] sm:$0xff]
  %v3492 = vld [vmem:[%s168 + $0x38] sm:$0xff]
  %v3493 = vld [vmem:[%s168 + $0x48] sm:$0xff]
  %v3494 = vld [vmem:[%s168 + $0x50] sm:$0xff]
  %v3495 = vld [vmem:[%s168 + $0x60] sm:$0xff]
  %v3496 = vld [vmem:[%s168 + $0x68] sm:$0xff]
  %v3497 = vld [vmem:[%s168 + $0x78] sm:$0xff]
  %v3498 = vld [vmem:[%s168 + $0x80] sm:$0xff]
  %v3499 = vld [vmem:[%s168 + $0x90] sm:$0xff]
  %v3500 = vld [vmem:[%s168 + $0x98] sm:$0xff]
  %v3501 = vld [vmem:[%s168 + $0xa8] sm:$0xff]
  %v3502 = vld [vmem:[%s168 + $0xb0] sm:$0xff]
  %v3503 = vld [vmem:[%s168 + $0xc0] sm:$0xff]
  %v3504 = vld [vmem:[%s168 + $0xc8] sm:$0xff]
  %v3505 = vld [vmem:[%s168 + $0xd8] sm:$0xff]
  %v3506 = vld [vmem:[%s168 + $0xe0] sm:$0xff]
  %v3507 = vld [vmem:[%s168 + $0xf0] sm:$0xff]
  %v3508 = vld [vmem:[%s168 + $0xf8] sm:$0xff]
  %v3509 = vld [vmem:[%s168 + $0x108] sm:$0xff]
  %v3510 = vld [vmem:[%s168 + $0x110] sm:$0xff]
  %v3511 = vld [vmem:[%s168 + $0x120] sm:$0xff]
  %v3512 = vld [vmem:[%s168 + $0x128] sm:$0xff]
  %v3513 = vld [vmem:[%s168 + $0x138] sm:$0xff]
  %v3514 = vld [vmem:[%s168 + $0x140] sm:$0xff]
  %v3515 = vld [vmem:[%s168 + $0x150] sm:$0xff]
  %v3516 = vld [vmem:[%s168 + $0x158] sm:$0xff]
  %v3517 = vld [vmem:[%s168 + $0x168] sm:$0xff]
  %v3518 = vld [vmem:[%s168 + $0x170] sm:$0xff]
  %v3519 = vld [vmem:[%s168 + $0x180] sm:$0xff]
  %v3520 = vld [vmem:[%s168 + $0x188] sm:$0xff]
  %v3521 = vld [vmem:[%s168 + $0x198] sm:$0xff]
  %v3522 = vld [vmem:[%s168 + $0x1a0] sm:$0xff]
  %v3523 = vld [vmem:[%s168 + $0x1e0] sm:$0xff]
  %v3524 = vld [vmem:[%s168 + $0x1e8] sm:$0xff]
  %v3525 = vld [vmem:[%s168 + $0x1f8] sm:$0xff]
  %v3526 = vld [vmem:[%s168 + $0x200] sm:$0xff]
  %v3527 = vld [vmem:[%s168 + $0x210] sm:$0xff]
  %v3528 = vld [vmem:[%s168 + $0x218] sm:$0xff]
  %v3529 = vld [vmem:[%s168 + $0x228] sm:$0xff]
  %v3530 = vld [vmem:[%s168 + $0x230] sm:$0xff]
  %v3531 = vld [vmem:[%s168 + $0x240] sm:$0xff]
  %v3532 = vld [vmem:[%s168 + $0x248] sm:$0xff]
  %v3533 = vld [vmem:[%s168 + $0x258] sm:$0xff]
  %v3534 = vld [vmem:[%s168 + $0x260] sm:$0xff]
  %v3535 = vld [vmem:[%s168 + $0x270] sm:$0xff]
  %v3536 = vld [vmem:[%s168 + $0x278] sm:$0xff]
  %v3537 = vld [vmem:[%s168 + $0x288] sm:$0xff]
  %v3538 = vld [vmem:[%s168 + $0x290] sm:$0xff]
  %v3539 = vld [vmem:[%s168 + $0x2a0] sm:$0xff]
  %v3540 = vld [vmem:[%s168 + $0x2a8] sm:$0xff]
  %v3541 = vld [vmem:[%s168 + $0x2b8] sm:$0xff]
  %v3542 = vld [vmem:[%s168 + $0x2c0] sm:$0xff]
  %v3543 = vld [vmem:[%s168 + $0x2d0] sm:$0xff]
  %v3544 = vld [vmem:[%s168 + $0x2d8] sm:$0xff]
  %v3545 = vld [vmem:[%s168 + $0x2e8] sm:$0xff]
  %v3546 = vld [vmem:[%s168 + $0x2f0] sm:$0xff]
  %v3547 = vld [vmem:[%s168 + $0x300] sm:$0xff]
  %v3548 = vld [vmem:[%s168 + $0x308] sm:$0xff]
  %v3549 = vld [vmem:[%s168 + $0x318] sm:$0xff]
  %v3550 = vld [vmem:[%s168 + $0x320] sm:$0xff]
  %v3551 = vld [vmem:[%s168 + $0x330] sm:$0xff]
  %v3552 = vld [vmem:[%s168 + $0x338] sm:$0xff]
  %v3553 = vld [vmem:[%s168 + $0x348] sm:$0xff]
  %v3554 = vld [vmem:[%s168 + $0x350] sm:$0xff]
  %v3555 = vld [vmem:[%s168 + $0x360] sm:$0xff]
  %v3556 = vld [vmem:[%s168 + $0x368] sm:$0xff]
  %v3557 = vld [vmem:[%s168 + $0x378] sm:$0xff]
  %v3558 = vld [vmem:[%s168 + $0x380] sm:$0xff]
  %v3559 = vld [vmem:[%s168 + $0x1] sm:$0xff]
  %v3560 = vld [vmem:[%s168 + $0x9] sm:$0xff]
  %v3561 = vld [vmem:[%s168 + $0x19] sm:$0xff]
  %v3562 = vld [vmem:[%s168 + $0x21] sm:$0xff]
  %v3563 = vld [vmem:[%s168 + $0x31] sm:$0xff]
  %v3564 = vld [vmem:[%s168 + $0x39] sm:$0xff]
  %v3565 = vld [vmem:[%s168 + $0x49] sm:$0xff]
  %v3566 = vld [vmem:[%s168 + $0x51] sm:$0xff]
  %v3567 = vld [vmem:[%s168 + $0x61] sm:$0xff]
  %v3568 = vld [vmem:[%s168 + $0x69] sm:$0xff]
  %v3569 = vld [vmem:[%s168 + $0x79] sm:$0xff]
  %v3570 = vld [vmem:[%s168 + $0x81] sm:$0xff]
  %v3571 = vld [vmem:[%s168 + $0x91] sm:$0xff]
  %v3572 = vld [vmem:[%s168 + $0x99] sm:$0xff]
  %v3573 = vld [vmem:[%s168 + $0xa9] sm:$0xff]
  %v3574 = vld [vmem:[%s168 + $0xb1] sm:$0xff]
  %v3575 = vld [vmem:[%s168 + $0xc1] sm:$0xff]
  %v3576 = vld [vmem:[%s168 + $0xc9] sm:$0xff]
  %v3577 = vld [vmem:[%s168 + $0xd9] sm:$0xff]
  %v3578 = vld [vmem:[%s168 + $0xe1] sm:$0xff]
  %v3579 = vld [vmem:[%s168 + $0xf1] sm:$0xff]
  %v3580 = vld [vmem:[%s168 + $0xf9] sm:$0xff]
  %v3581 = vld [vmem:[%s168 + $0x109] sm:$0xff]
  %v3582 = vld [vmem:[%s168 + $0x111] sm:$0xff]
  %v3583 = vld [vmem:[%s168 + $0x121] sm:$0xff]
  %v3584 = vld [vmem:[%s168 + $0x129] sm:$0xff]
  %v3585 = vld [vmem:[%s168 + $0x139] sm:$0xff]
  %v3586 = vld [vmem:[%s168 + $0x141] sm:$0xff]
  %v3587 = vld [vmem:[%s168 + $0x151] sm:$0xff]
  %v3588 = vld [vmem:[%s168 + $0x159] sm:$0xff]
  %v3589 = vld [vmem:[%s168 + $0x169] sm:$0xff]
  %v3590 = vld [vmem:[%s168 + $0x171] sm:$0xff]
  %v3591 = vld [vmem:[%s168 + $0x181] sm:$0xff]
  %v3592 = vld [vmem:[%s168 + $0x189] sm:$0xff]
  %v3593 = vld [vmem:[%s168 + $0x199] sm:$0xff]
  %v3594 = vld [vmem:[%s168 + $0x1a1] sm:$0xff]
  %v3595 = vld [vmem:[%s168 + $0x1e1] sm:$0xff]
  %v3596 = vld [vmem:[%s168 + $0x1e9] sm:$0xff]
  %v3597 = vld [vmem:[%s168 + $0x1f9] sm:$0xff]
  %v3598 = vld [vmem:[%s168 + $0x201] sm:$0xff]
  %v3599 = vld [vmem:[%s168 + $0x211] sm:$0xff]
  %v3600 = vld [vmem:[%s168 + $0x219] sm:$0xff]
  %v3601 = vld [vmem:[%s168 + $0x229] sm:$0xff]
  %v3602 = vld [vmem:[%s168 + $0x231] sm:$0xff]
  %v3603 = vld [vmem:[%s168 + $0x241] sm:$0xff]
  %v3604 = vld [vmem:[%s168 + $0x249] sm:$0xff]
  %v3605 = vld [vmem:[%s168 + $0x259] sm:$0xff]
  %v3606 = vld [vmem:[%s168 + $0x261] sm:$0xff]
  %v3607 = vld [vmem:[%s168 + $0x271] sm:$0xff]
  %v3608 = vld [vmem:[%s168 + $0x279] sm:$0xff]
  %v3609 = vld [vmem:[%s168 + $0x289] sm:$0xff]
  %v3610 = vld [vmem:[%s168 + $0x291] sm:$0xff]
  %v3611 = vld [vmem:[%s168 + $0x2a1] sm:$0xff]
  %v3612 = vld [vmem:[%s168 + $0x2a9] sm:$0xff]
  %v3613 = vld [vmem:[%s168 + $0x2b9] sm:$0xff]
  %v3614 = vld [vmem:[%s168 + $0x2c1] sm:$0xff]
  %v3615 = vld [vmem:[%s168 + $0x2d1] sm:$0xff]
  %v3616 = vld [vmem:[%s168 + $0x2d9] sm:$0xff]
  %v3617 = vld [vmem:[%s168 + $0x2e9] sm:$0xff]
  %v3618 = vld [vmem:[%s168 + $0x2f1] sm:$0xff]
  %v3619 = vld [vmem:[%s168 + $0x301] sm:$0xff]
  %v3620 = vld [vmem:[%s168 + $0x309] sm:$0xff]
  %v3621 = vld [vmem:[%s168 + $0x319] sm:$0xff]
  %v3622 = vld [vmem:[%s168 + $0x321] sm:$0xff]
  %v3623 = vld [vmem:[%s168 + $0x331] sm:$0xff]
  %v3624 = vld [vmem:[%s168 + $0x339] sm:$0xff]
  %v3625 = vld [vmem:[%s168 + $0x349] sm:$0xff]
  %v3626 = vld [vmem:[%s168 + $0x351] sm:$0xff]
  %v3627 = vld [vmem:[%s168 + $0x361] sm:$0xff]
  %v3628 = vld [vmem:[%s168 + $0x369] sm:$0xff]
  %v3629 = vld [vmem:[%s168 + $0x379] sm:$0xff]
  %v3630 = vld [vmem:[%s168 + $0x381] sm:$0xff]
  %v3631 = vld [vmem:[%s168 + $0x2] sm:$0xff]
  %v3632 = vld [vmem:[%s168 + $0xa] sm:$0xff]
  %v3633 = vld [vmem:[%s168 + $0x1a] sm:$0xff]
  %v3634 = vld [vmem:[%s168 + $0x22] sm:$0xff]
  %v3635 = vld [vmem:[%s168 + $0x32] sm:$0xff]
  %v3636 = vld [vmem:[%s168 + $0x3a] sm:$0xff]
  %v3637 = vld [vmem:[%s168 + $0x4a] sm:$0xff]
  %v3638 = vld [vmem:[%s168 + $0x52] sm:$0xff]
  %v3639 = vld [vmem:[%s168 + $0x62] sm:$0xff]
  %v3640 = vld [vmem:[%s168 + $0x6a] sm:$0xff]
  %v3641 = vld [vmem:[%s168 + $0x7a] sm:$0xff]
  %v3642 = vld [vmem:[%s168 + $0x82] sm:$0xff]
  %v3643 = vld [vmem:[%s168 + $0x92] sm:$0xff]
  %v3644 = vld [vmem:[%s168 + $0x9a] sm:$0xff]
  %v3645 = vld [vmem:[%s168 + $0xaa] sm:$0xff]
  %v3646 = vld [vmem:[%s168 + $0xb2] sm:$0xff]
  %v3647 = vld [vmem:[%s168 + $0xc2] sm:$0xff]
  %v3648 = vld [vmem:[%s168 + $0xca] sm:$0xff]
  %v3649 = vld [vmem:[%s168 + $0xda] sm:$0xff]
  %v3650 = vld [vmem:[%s168 + $0xe2] sm:$0xff]
  %v3651 = vld [vmem:[%s168 + $0xf2] sm:$0xff]
  %v3652 = vld [vmem:[%s168 + $0xfa] sm:$0xff]
  %v3653 = vld [vmem:[%s168 + $0x10a] sm:$0xff]
  %v3654 = vld [vmem:[%s168 + $0x112] sm:$0xff]
  %v3655 = vld [vmem:[%s168 + $0x122] sm:$0xff]
  %v3656 = vld [vmem:[%s168 + $0x12a] sm:$0xff]
  %v3657 = vld [vmem:[%s168 + $0x13a] sm:$0xff]
  %v3658 = vld [vmem:[%s168 + $0x142] sm:$0xff]
  %v3659 = vld [vmem:[%s168 + $0x152] sm:$0xff]
  %v3660 = vld [vmem:[%s168 + $0x15a] sm:$0xff]
  %v3661 = vld [vmem:[%s168 + $0x16a] sm:$0xff]
  %v3662 = vld [vmem:[%s168 + $0x172] sm:$0xff]
  %v3663 = vld [vmem:[%s168 + $0x182] sm:$0xff]
  %v3664 = vld [vmem:[%s168 + $0x18a] sm:$0xff]
  %v3665 = vld [vmem:[%s168 + $0x19a] sm:$0xff]
  %v3666 = vld [vmem:[%s168 + $0x1a2] sm:$0xff]
  %v3667 = vld [vmem:[%s168 + $0x1e2] sm:$0xff]
  %v3668 = vld [vmem:[%s168 + $0x1ea] sm:$0xff]
  %v3669 = vld [vmem:[%s168 + $0x1fa] sm:$0xff]
  %v3670 = vld [vmem:[%s168 + $0x202] sm:$0xff]
  %v3671 = vld [vmem:[%s168 + $0x212] sm:$0xff]
  %v3672 = vld [vmem:[%s168 + $0x21a] sm:$0xff]
  %v3673 = vld [vmem:[%s168 + $0x22a] sm:$0xff]
  %v3674 = vld [vmem:[%s168 + $0x232] sm:$0xff]
  %v3675 = vld [vmem:[%s168 + $0x242] sm:$0xff]
  %v3676 = vld [vmem:[%s168 + $0x24a] sm:$0xff]
  %v3677 = vld [vmem:[%s168 + $0x25a] sm:$0xff]
  %v3678 = vld [vmem:[%s168 + $0x262] sm:$0xff]
  %v3679 = vld [vmem:[%s168 + $0x272] sm:$0xff]
  %v3680 = vld [vmem:[%s168 + $0x27a] sm:$0xff]
  %v3681 = vld [vmem:[%s168 + $0x28a] sm:$0xff]
  %v3682 = vld [vmem:[%s168 + $0x292] sm:$0xff]
  %v3683 = vld [vmem:[%s168 + $0x2a2] sm:$0xff]
  %v3684 = vld [vmem:[%s168 + $0x2aa] sm:$0xff]
  %v3685 = vld [vmem:[%s168 + $0x2ba] sm:$0xff]
  %v3686 = vld [vmem:[%s168 + $0x2c2] sm:$0xff]
  %v3687 = vld [vmem:[%s168 + $0x2d2] sm:$0xff]
  %v3688 = vld [vmem:[%s168 + $0x2da] sm:$0xff]
  %v3689 = vld [vmem:[%s168 + $0x2ea] sm:$0xff]
  %v3690 = vld [vmem:[%s168 + $0x2f2] sm:$0xff]
  %v3691 = vld [vmem:[%s168 + $0x302] sm:$0xff]
  %v3692 = vld [vmem:[%s168 + $0x30a] sm:$0xff]
  %v3693 = vld [vmem:[%s168 + $0x31a] sm:$0xff]
  %v3694 = vld [vmem:[%s168 + $0x322] sm:$0xff]
  %v3695 = vld [vmem:[%s168 + $0x332] sm:$0xff]
  %v3696 = vld [vmem:[%s168 + $0x33a] sm:$0xff]
  %v3697 = vld [vmem:[%s168 + $0x34a] sm:$0xff]
  %v3698 = vld [vmem:[%s168 + $0x352] sm:$0xff]
  %v3699 = vld [vmem:[%s168 + $0x362] sm:$0xff]
  %v3700 = vld [vmem:[%s168 + $0x36a] sm:$0xff]
  %v3701 = vld [vmem:[%s168 + $0x37a] sm:$0xff]
  %v3702 = vld [vmem:[%s168 + $0x382] sm:$0xff]
  %3775 = vrot.lane.b32.xlu0 %v3559, 4
  %v3776 = vpop.permute.xlu0 %3775
  %3777 = vrot.lane.b32.xlu0 %v3560, 4
  %v3778 = vpop.permute.xlu0 %3777
  %3779 = vrot.lane.b32.xlu0 %v3561, 4
  %v3780 = vpop.permute.xlu0 %3779
  %3781 = vrot.lane.b32.xlu0 %v3562, 4
  %v3782 = vpop.permute.xlu0 %3781
  %3783 = vrot.lane.b32.xlu0 %v3563, 4
  %v3784 = vpop.permute.xlu0 %3783
  %3785 = vrot.lane.b32.xlu0 %v3564, 4
  %v3786 = vpop.permute.xlu0 %3785
  %3787 = vrot.lane.b32.xlu0 %v3565, 4
  %v3788 = vpop.permute.xlu0 %3787
  %3789 = vrot.lane.b32.xlu0 %v3566, 4
  %v3790 = vpop.permute.xlu0 %3789
  %3791 = vrot.lane.b32.xlu0 %v3567, 4
  %v3792 = vpop.permute.xlu0 %3791
  %3793 = vrot.lane.b32.xlu0 %v3568, 4
  %v3794 = vpop.permute.xlu0 %3793
  %3795 = vrot.lane.b32.xlu0 %v3569, 4
  %v3796 = vpop.permute.xlu0 %3795
  %3797 = vrot.lane.b32.xlu0 %v3570, 4
  %v3798 = vpop.permute.xlu0 %3797
  %3799 = vrot.lane.b32.xlu0 %v3571, 4
  %v3800 = vpop.permute.xlu0 %3799
  %3801 = vrot.lane.b32.xlu0 %v3572, 4
  %v3802 = vpop.permute.xlu0 %3801
  %3803 = vrot.lane.b32.xlu0 %v3573, 4
  %v3804 = vpop.permute.xlu0 %3803
  %3805 = vrot.lane.b32.xlu0 %v3574, 4
  %v3806 = vpop.permute.xlu0 %3805
  %3807 = vrot.lane.b32.xlu0 %v3575, 4
  %v3808 = vpop.permute.xlu0 %3807
  %3809 = vrot.lane.b32.xlu0 %v3576, 4
  %v3810 = vpop.permute.xlu0 %3809
  %3811 = vrot.lane.b32.xlu0 %v3577, 4
  %v3812 = vpop.permute.xlu0 %3811
  %3813 = vrot.lane.b32.xlu0 %v3578, 4
  %v3814 = vpop.permute.xlu0 %3813
  %3815 = vrot.lane.b32.xlu0 %v3579, 4
  %v3816 = vpop.permute.xlu0 %3815
  %3817 = vrot.lane.b32.xlu0 %v3580, 4
  %v3818 = vpop.permute.xlu0 %3817
  %3819 = vrot.lane.b32.xlu0 %v3581, 4
  %v3820 = vpop.permute.xlu0 %3819
  %3821 = vrot.lane.b32.xlu0 %v3582, 4
  %v3822 = vpop.permute.xlu0 %3821
  %3823 = vrot.lane.b32.xlu0 %v3583, 4
  %v3824 = vpop.permute.xlu0 %3823
  %3825 = vrot.lane.b32.xlu0 %v3584, 4
  %v3826 = vpop.permute.xlu0 %3825
  %3827 = vrot.lane.b32.xlu0 %v3585, 4
  %v3828 = vpop.permute.xlu0 %3827
  %3829 = vrot.lane.b32.xlu0 %v3586, 4
  %v3830 = vpop.permute.xlu0 %3829
  %3831 = vrot.lane.b32.xlu0 %v3587, 4
  %v3832 = vpop.permute.xlu0 %3831
  %3833 = vrot.lane.b32.xlu0 %v3588, 4
  %v3834 = vpop.permute.xlu0 %3833
  %3835 = vrot.lane.b32.xlu0 %v3589, 4
  %v3836 = vpop.permute.xlu0 %3835
  %3837 = vrot.lane.b32.xlu0 %v3590, 4
  %v3838 = vpop.permute.xlu0 %3837
  %3839 = vrot.lane.b32.xlu0 %v3591, 4
  %v3840 = vpop.permute.xlu0 %3839
  %3841 = vrot.lane.b32.xlu0 %v3592, 4
  %v3842 = vpop.permute.xlu0 %3841
  %3843 = vrot.lane.b32.xlu0 %v3593, 4
  %v3844 = vpop.permute.xlu0 %3843
  %3845 = vrot.lane.b32.xlu0 %v3594, 4
  %v3846 = vpop.permute.xlu0 %3845
  %3847 = vrot.lane.b32.xlu0 %v3595, 4
  %v3848 = vpop.permute.xlu0 %3847
  %3849 = vrot.lane.b32.xlu0 %v3596, 4
  %v3850 = vpop.permute.xlu0 %3849
  %3851 = vrot.lane.b32.xlu0 %v3597, 4
  %v3852 = vpop.permute.xlu0 %3851
  %3853 = vrot.lane.b32.xlu0 %v3598, 4
  %v3854 = vpop.permute.xlu0 %3853
  %3855 = vrot.lane.b32.xlu0 %v3599, 4
  %v3856 = vpop.permute.xlu0 %3855
  %3857 = vrot.lane.b32.xlu0 %v3600, 4
  %v3858 = vpop.permute.xlu0 %3857
  %3859 = vrot.lane.b32.xlu0 %v3601, 4
  %v3860 = vpop.permute.xlu0 %3859
  %3861 = vrot.lane.b32.xlu0 %v3602, 4
  %v3862 = vpop.permute.xlu0 %3861
  %3863 = vrot.lane.b32.xlu0 %v3603, 4
  %v3864 = vpop.permute.xlu0 %3863
  %3865 = vrot.lane.b32.xlu0 %v3604, 4
  %v3866 = vpop.permute.xlu0 %3865
  %3867 = vrot.lane.b32.xlu0 %v3605, 4
  %v3868 = vpop.permute.xlu0 %3867
  %3869 = vrot.lane.b32.xlu0 %v3606, 4
  %v3870 = vpop.permute.xlu0 %3869
  %3871 = vrot.lane.b32.xlu0 %v3607, 4
  %v3872 = vpop.permute.xlu0 %3871
  %3873 = vrot.lane.b32.xlu0 %v3608, 4
  %v3874 = vpop.permute.xlu0 %3873
  %3875 = vrot.lane.b32.xlu0 %v3609, 4
  %v3876 = vpop.permute.xlu0 %3875
  %3877 = vrot.lane.b32.xlu0 %v3610, 4
  %v3878 = vpop.permute.xlu0 %3877
  %3879 = vrot.lane.b32.xlu0 %v3611, 4
  %v3880 = vpop.permute.xlu0 %3879
  %3881 = vrot.lane.b32.xlu0 %v3612, 4
  %v3882 = vpop.permute.xlu0 %3881
  %3883 = vrot.lane.b32.xlu0 %v3613, 4
  %v3884 = vpop.permute.xlu0 %3883
  %3885 = vrot.lane.b32.xlu0 %v3614, 4
  %v3886 = vpop.permute.xlu0 %3885
  %3887 = vrot.lane.b32.xlu0 %v3615, 4
  %v3888 = vpop.permute.xlu0 %3887
  %3889 = vrot.lane.b32.xlu0 %v3616, 4
  %v3890 = vpop.permute.xlu0 %3889
  %3891 = vrot.lane.b32.xlu0 %v3617, 4
  %v3892 = vpop.permute.xlu0 %3891
  %3893 = vrot.lane.b32.xlu0 %v3618, 4
  %v3894 = vpop.permute.xlu0 %3893
  %3895 = vrot.lane.b32.xlu0 %v3619, 4
  %v3896 = vpop.permute.xlu0 %3895
  %3897 = vrot.lane.b32.xlu0 %v3620, 4
  %v3898 = vpop.permute.xlu0 %3897
  %3899 = vrot.lane.b32.xlu0 %v3621, 4
  %v3900 = vpop.permute.xlu0 %3899
  %3901 = vrot.lane.b32.xlu0 %v3622, 4
  %v3902 = vpop.permute.xlu0 %3901
  %3903 = vrot.lane.b32.xlu0 %v3623, 4
  %v3904 = vpop.permute.xlu0 %3903
  %3905 = vrot.lane.b32.xlu0 %v3624, 4
  %v3906 = vpop.permute.xlu0 %3905
  %3907 = vrot.lane.b32.xlu0 %v3625, 4
  %v3908 = vpop.permute.xlu0 %3907
  %3909 = vrot.lane.b32.xlu0 %v3626, 4
  %v3910 = vpop.permute.xlu0 %3909
  %3911 = vrot.lane.b32.xlu0 %v3627, 4
  %v3912 = vpop.permute.xlu0 %3911
  %3913 = vrot.lane.b32.xlu0 %v3628, 4
  %v3914 = vpop.permute.xlu0 %3913
  %3915 = vrot.lane.b32.xlu0 %v3629, 4
  %v3916 = vpop.permute.xlu0 %3915
  %3917 = vrot.lane.b32.xlu0 %v3630, 4
  %v3918 = vpop.permute.xlu0 %3917
  %4063 = vrot.lane.b32.xlu0 %v3631, 8
  %v4064 = vpop.permute.xlu0 %4063
  %4065 = vrot.lane.b32.xlu0 %v3632, 8
  %v4066 = vpop.permute.xlu0 %4065
  %4067 = vrot.lane.b32.xlu0 %v3633, 8
  %v4068 = vpop.permute.xlu0 %4067
  %4069 = vrot.lane.b32.xlu0 %v3634, 8
  %v4070 = vpop.permute.xlu0 %4069
  %4071 = vrot.lane.b32.xlu0 %v3635, 8
  %v4072 = vpop.permute.xlu0 %4071
  %4073 = vrot.lane.b32.xlu0 %v3636, 8
  %v4074 = vpop.permute.xlu0 %4073
  %4075 = vrot.lane.b32.xlu0 %v3637, 8
  %v4076 = vpop.permute.xlu0 %4075
  %4077 = vrot.lane.b32.xlu0 %v3638, 8
  %v4078 = vpop.permute.xlu0 %4077
  %4079 = vrot.lane.b32.xlu0 %v3639, 8
  %v4080 = vpop.permute.xlu0 %4079
  %4081 = vrot.lane.b32.xlu0 %v3640, 8
  %v4082 = vpop.permute.xlu0 %4081
  %4083 = vrot.lane.b32.xlu0 %v3641, 8
  %v4084 = vpop.permute.xlu0 %4083
  %4085 = vrot.lane.b32.xlu0 %v3642, 8
  %v4086 = vpop.permute.xlu0 %4085
  %4087 = vrot.lane.b32.xlu0 %v3643, 8
  %v4088 = vpop.permute.xlu0 %4087
  %4089 = vrot.lane.b32.xlu0 %v3644, 8
  %v4090 = vpop.permute.xlu0 %4089
  %4091 = vrot.lane.b32.xlu0 %v3645, 8
  %v4092 = vpop.permute.xlu0 %4091
  %4093 = vrot.lane.b32.xlu0 %v3646, 8
  %v4094 = vpop.permute.xlu0 %4093
  %4095 = vrot.lane.b32.xlu0 %v3647, 8
  %v4096 = vpop.permute.xlu0 %4095
  %4097 = vrot.lane.b32.xlu0 %v3648, 8
  %v4098 = vpop.permute.xlu0 %4097
  %4099 = vrot.lane.b32.xlu0 %v3649, 8
  %v4100 = vpop.permute.xlu0 %4099
  %4101 = vrot.lane.b32.xlu0 %v3650, 8
  %v4102 = vpop.permute.xlu0 %4101
  %4103 = vrot.lane.b32.xlu0 %v3651, 8
  %v4104 = vpop.permute.xlu0 %4103
  %4105 = vrot.lane.b32.xlu0 %v3652, 8
  %v4106 = vpop.permute.xlu0 %4105
  %4107 = vrot.lane.b32.xlu0 %v3653, 8
  %v4108 = vpop.permute.xlu0 %4107
  %4109 = vrot.lane.b32.xlu0 %v3654, 8
  %v4110 = vpop.permute.xlu0 %4109
  %4111 = vrot.lane.b32.xlu0 %v3655, 8
  %v4112 = vpop.permute.xlu0 %4111
  %4113 = vrot.lane.b32.xlu0 %v3656, 8
  %v4114 = vpop.permute.xlu0 %4113
  %4115 = vrot.lane.b32.xlu0 %v3657, 8
  %v4116 = vpop.permute.xlu0 %4115
  %4117 = vrot.lane.b32.xlu0 %v3658, 8
  %v4118 = vpop.permute.xlu0 %4117
  %4119 = vrot.lane.b32.xlu0 %v3659, 8
  %v4120 = vpop.permute.xlu0 %4119
  %4121 = vrot.lane.b32.xlu0 %v3660, 8
  %v4122 = vpop.permute.xlu0 %4121
  %4123 = vrot.lane.b32.xlu0 %v3661, 8
  %v4124 = vpop.permute.xlu0 %4123
  %4125 = vrot.lane.b32.xlu0 %v3662, 8
  %v4126 = vpop.permute.xlu0 %4125
  %4127 = vrot.lane.b32.xlu0 %v3663, 8
  %v4128 = vpop.permute.xlu0 %4127
  %4129 = vrot.lane.b32.xlu0 %v3664, 8
  %v4130 = vpop.permute.xlu0 %4129
  %4131 = vrot.lane.b32.xlu0 %v3665, 8
  %v4132 = vpop.permute.xlu0 %4131
  %4133 = vrot.lane.b32.xlu0 %v3666, 8
  %v4134 = vpop.permute.xlu0 %4133
  %4135 = vrot.lane.b32.xlu0 %v3667, 8
  %v4136 = vpop.permute.xlu0 %4135
  %4137 = vrot.lane.b32.xlu0 %v3668, 8
  %v4138 = vpop.permute.xlu0 %4137
  %4139 = vrot.lane.b32.xlu0 %v3669, 8
  %v4140 = vpop.permute.xlu0 %4139
  %4141 = vrot.lane.b32.xlu0 %v3670, 8
  %v4142 = vpop.permute.xlu0 %4141
  %4143 = vrot.lane.b32.xlu0 %v3671, 8
  %v4144 = vpop.permute.xlu0 %4143
  %4145 = vrot.lane.b32.xlu0 %v3672, 8
  %v4146 = vpop.permute.xlu0 %4145
  %4147 = vrot.lane.b32.xlu0 %v3673, 8
  %v4148 = vpop.permute.xlu0 %4147
  %4149 = vrot.lane.b32.xlu0 %v3674, 8
  %v4150 = vpop.permute.xlu0 %4149
  %4151 = vrot.lane.b32.xlu0 %v3675, 8
  %v4152 = vpop.permute.xlu0 %4151
  %4153 = vrot.lane.b32.xlu0 %v3676, 8
  %v4154 = vpop.permute.xlu0 %4153
  %4155 = vrot.lane.b32.xlu0 %v3677, 8
  %v4156 = vpop.permute.xlu0 %4155
  %4157 = vrot.lane.b32.xlu0 %v3678, 8
  %v4158 = vpop.permute.xlu0 %4157
  %4159 = vrot.lane.b32.xlu0 %v3679, 8
  %v4160 = vpop.permute.xlu0 %4159
  %4161 = vrot.lane.b32.xlu0 %v3680, 8
  %v4162 = vpop.permute.xlu0 %4161
  %4163 = vrot.lane.b32.xlu0 %v3681, 8
  %v4164 = vpop.permute.xlu0 %4163
  %4165 = vrot.lane.b32.xlu0 %v3682, 8
  %v4166 = vpop.permute.xlu0 %4165
  %4167 = vrot.lane.b32.xlu0 %v3683, 8
  %v4168 = vpop.permute.xlu0 %4167
  %4169 = vrot.lane.b32.xlu0 %v3684, 8
  %v4170 = vpop.permute.xlu0 %4169
  %4171 = vrot.lane.b32.xlu0 %v3685, 8
  %v4172 = vpop.permute.xlu0 %4171
  %4173 = vrot.lane.b32.xlu0 %v3686, 8
  %v4174 = vpop.permute.xlu0 %4173
  %4175 = vrot.lane.b32.xlu0 %v3687, 8
  %v4176 = vpop.permute.xlu0 %4175
  %4177 = vrot.lane.b32.xlu0 %v3688, 8
  %v4178 = vpop.permute.xlu0 %4177
  %4179 = vrot.lane.b32.xlu0 %v3689, 8
  %v4180 = vpop.permute.xlu0 %4179
  %4181 = vrot.lane.b32.xlu0 %v3690, 8
  %v4182 = vpop.permute.xlu0 %4181
  %4183 = vrot.lane.b32.xlu0 %v3691, 8
  %v4184 = vpop.permute.xlu0 %4183
  %4185 = vrot.lane.b32.xlu0 %v3692, 8
  %v4186 = vpop.permute.xlu0 %4185
  %4187 = vrot.lane.b32.xlu0 %v3693, 8
  %v4188 = vpop.permute.xlu0 %4187
  %4189 = vrot.lane.b32.xlu0 %v3694, 8
  %v4190 = vpop.permute.xlu0 %4189
  %4191 = vrot.lane.b32.xlu0 %v3695, 8
  %v4192 = vpop.permute.xlu0 %4191
  %4193 = vrot.lane.b32.xlu0 %v3696, 8
  %v4194 = vpop.permute.xlu0 %4193
  %4195 = vrot.lane.b32.xlu0 %v3697, 8
  %v4196 = vpop.permute.xlu0 %4195
  %4197 = vrot.lane.b32.xlu0 %v3698, 8
  %v4198 = vpop.permute.xlu0 %4197
  %4199 = vrot.lane.b32.xlu0 %v3699, 8
  %v4200 = vpop.permute.xlu0 %4199
  %4201 = vrot.lane.b32.xlu0 %v3700, 8
  %v4202 = vpop.permute.xlu0 %4201
  %4203 = vrot.lane.b32.xlu0 %v3701, 8
  %v4204 = vpop.permute.xlu0 %4203
  %4205 = vrot.lane.b32.xlu0 %v3702, 8
  %v4206 = vpop.permute.xlu0 %4205
  %v4279 = vsel %vm169, %v3487, %v3776
  %v4280 = vsel %vm169, %v3488, %v3778
  %v4281 = vsel %vm169, %v3489, %v3780
  %v4282 = vsel %vm169, %v3490, %v3782
  %v4283 = vsel %vm169, %v3491, %v3784
  %v4284 = vsel %vm169, %v3492, %v3786
  %v4285 = vsel %vm169, %v3493, %v3788
  %v4286 = vsel %vm169, %v3494, %v3790
  %v4287 = vsel %vm169, %v3495, %v3792
  %v4288 = vsel %vm169, %v3496, %v3794
  %v4289 = vsel %vm169, %v3497, %v3796
  %v4290 = vsel %vm169, %v3498, %v3798
  %v4291 = vsel %vm169, %v3499, %v3800
  %v4292 = vsel %vm169, %v3500, %v3802
  %v4293 = vsel %vm169, %v3501, %v3804
  %v4294 = vsel %vm169, %v3502, %v3806
  %v4295 = vsel %vm169, %v3503, %v3808
  %v4296 = vsel %vm169, %v3504, %v3810
  %v4297 = vsel %vm169, %v3505, %v3812
  %v4298 = vsel %vm169, %v3506, %v3814
  %v4299 = vsel %vm169, %v3507, %v3816
  %v4300 = vsel %vm169, %v3508, %v3818
  %v4301 = vsel %vm169, %v3509, %v3820
  %v4302 = vsel %vm169, %v3510, %v3822
  %v4303 = vsel %vm169, %v3511, %v3824
  %v4304 = vsel %vm169, %v3512, %v3826
  %v4305 = vsel %vm169, %v3513, %v3828
  %v4306 = vsel %vm169, %v3514, %v3830
  %v4307 = vsel %vm169, %v3515, %v3832
  %v4308 = vsel %vm169, %v3516, %v3834
  %v4309 = vsel %vm169, %v3517, %v3836
  %v4310 = vsel %vm169, %v3518, %v3838
  %v4311 = vsel %vm169, %v3519, %v3840
  %v4312 = vsel %vm169, %v3520, %v3842
  %v4313 = vsel %vm169, %v3521, %v3844
  %v4314 = vsel %vm169, %v3522, %v3846
  %v4315 = vsel %vm169, %v3523, %v3848
  %v4316 = vsel %vm169, %v3524, %v3850
  %v4317 = vsel %vm169, %v3525, %v3852
  %v4318 = vsel %vm169, %v3526, %v3854
  %v4319 = vsel %vm169, %v3527, %v3856
  %v4320 = vsel %vm169, %v3528, %v3858
  %v4321 = vsel %vm169, %v3529, %v3860
  %v4322 = vsel %vm169, %v3530, %v3862
  %v4323 = vsel %vm169, %v3531, %v3864
  %v4324 = vsel %vm169, %v3532, %v3866
  %v4325 = vsel %vm169, %v3533, %v3868
  %v4326 = vsel %vm169, %v3534, %v3870
  %v4327 = vsel %vm169, %v3535, %v3872
  %v4328 = vsel %vm169, %v3536, %v3874
  %v4329 = vsel %vm169, %v3537, %v3876
  %v4330 = vsel %vm169, %v3538, %v3878
  %v4331 = vsel %vm169, %v3539, %v3880
  %v4332 = vsel %vm169, %v3540, %v3882
  %v4333 = vsel %vm169, %v3541, %v3884
  %v4334 = vsel %vm169, %v3542, %v3886
  %v4335 = vsel %vm169, %v3543, %v3888
  %v4336 = vsel %vm169, %v3544, %v3890
  %v4337 = vsel %vm169, %v3545, %v3892
  %v4338 = vsel %vm169, %v3546, %v3894
  %v4339 = vsel %vm169, %v3547, %v3896
  %v4340 = vsel %vm169, %v3548, %v3898
  %v4341 = vsel %vm169, %v3549, %v3900
  %v4342 = vsel %vm169, %v3550, %v3902
  %v4343 = vsel %vm169, %v3551, %v3904
  %v4344 = vsel %vm169, %v3552, %v3906
  %v4345 = vsel %vm169, %v3553, %v3908
  %v4346 = vsel %vm169, %v3554, %v3910
  %v4347 = vsel %vm169, %v3555, %v3912
  %v4348 = vsel %vm169, %v3556, %v3914
  %v4349 = vsel %vm169, %v3557, %v3916
  %v4350 = vsel %vm169, %v3558, %v3918
  %v4351 = vsel %vm1183, %v4279, %v4064
  %v4352 = vsel %vm1183, %v4280, %v4066
  %v4353 = vsel %vm1183, %v4281, %v4068
  %v4354 = vsel %vm1183, %v4282, %v4070
  %v4355 = vsel %vm1183, %v4283, %v4072
  %v4356 = vsel %vm1183, %v4284, %v4074
  %v4357 = vsel %vm1183, %v4285, %v4076
  %v4358 = vsel %vm1183, %v4286, %v4078
  %v4359 = vsel %vm1183, %v4287, %v4080
  %v4360 = vsel %vm1183, %v4288, %v4082
  %v4361 = vsel %vm1183, %v4289, %v4084
  %v4362 = vsel %vm1183, %v4290, %v4086
  %v4363 = vsel %vm1183, %v4291, %v4088
  %v4364 = vsel %vm1183, %v4292, %v4090
  %v4365 = vsel %vm1183, %v4293, %v4092
  %v4366 = vsel %vm1183, %v4294, %v4094
  %v4367 = vsel %vm1183, %v4295, %v4096
  %v4368 = vsel %vm1183, %v4296, %v4098
  %v4369 = vsel %vm1183, %v4297, %v4100
  %v4370 = vsel %vm1183, %v4298, %v4102
  %v4371 = vsel %vm1183, %v4299, %v4104
  %v4372 = vsel %vm1183, %v4300, %v4106
  %v4373 = vsel %vm1183, %v4301, %v4108
  %v4374 = vsel %vm1183, %v4302, %v4110
  %v4375 = vsel %vm1183, %v4303, %v4112
  %v4376 = vsel %vm1183, %v4304, %v4114
  %v4377 = vsel %vm1183, %v4305, %v4116
  %v4378 = vsel %vm1183, %v4306, %v4118
  %v4379 = vsel %vm1183, %v4307, %v4120
  %v4380 = vsel %vm1183, %v4308, %v4122
  %v4381 = vsel %vm1183, %v4309, %v4124
  %v4382 = vsel %vm1183, %v4310, %v4126
  %v4383 = vsel %vm1183, %v4311, %v4128
  %v4384 = vsel %vm1183, %v4312, %v4130
  %v4385 = vsel %vm1183, %v4313, %v4132
  %v4386 = vsel %vm1183, %v4314, %v4134
  %v4387 = vsel %vm1183, %v4315, %v4136
  %v4388 = vsel %vm1183, %v4316, %v4138
  %v4389 = vsel %vm1183, %v4317, %v4140
  %v4390 = vsel %vm1183, %v4318, %v4142
  %v4391 = vsel %vm1183, %v4319, %v4144
  %v4392 = vsel %vm1183, %v4320, %v4146
  %v4393 = vsel %vm1183, %v4321, %v4148
  %v4394 = vsel %vm1183, %v4322, %v4150
  %v4395 = vsel %vm1183, %v4323, %v4152
  %v4396 = vsel %vm1183, %v4324, %v4154
  %v4397 = vsel %vm1183, %v4325, %v4156
  %v4398 = vsel %vm1183, %v4326, %v4158
  %v4399 = vsel %vm1183, %v4327, %v4160
  %v4400 = vsel %vm1183, %v4328, %v4162
  %v4401 = vsel %vm1183, %v4329, %v4164
  %v4402 = vsel %vm1183, %v4330, %v4166
  %v4403 = vsel %vm1183, %v4331, %v4168
  %v4404 = vsel %vm1183, %v4332, %v4170
  %v4405 = vsel %vm1183, %v4333, %v4172
  %v4406 = vsel %vm1183, %v4334, %v4174
  %v4407 = vsel %vm1183, %v4335, %v4176
  %v4408 = vsel %vm1183, %v4336, %v4178
  %v4409 = vsel %vm1183, %v4337, %v4180
  %v4410 = vsel %vm1183, %v4338, %v4182
  %v4411 = vsel %vm1183, %v4339, %v4184
  %v4412 = vsel %vm1183, %v4340, %v4186
  %v4413 = vsel %vm1183, %v4341, %v4188
  %v4414 = vsel %vm1183, %v4342, %v4190
  %v4415 = vsel %vm1183, %v4343, %v4192
  %v4416 = vsel %vm1183, %v4344, %v4194
  %v4417 = vsel %vm1183, %v4345, %v4196
  %v4418 = vsel %vm1183, %v4346, %v4198
  %v4419 = vsel %vm1183, %v4347, %v4200
  %v4420 = vsel %vm1183, %v4348, %v4202
  %v4421 = vsel %vm1183, %v4349, %v4204
  %v4422 = vsel %vm1183, %v4350, %v4206
  %v4423 = vld [vmem:[%s1 + $0x18] sm:$0xff]
  %v4424 = vld [vmem:[%s1 + $0x20] sm:$0xf]
  %v4426 = vsel %vm2197, %v4351, 0
  %v4429 = vsel %vm2197, %v4352, 0
  %v4432 = vsel %vm2197, %v4353, 0
  %v4435 = vsel %vm2197, %v4354, 0
  %v4438 = vsel %vm2197, %v4355, 0
  %v4441 = vsel %vm2197, %v4356, 0
  %v4444 = vsel %vm2197, %v4357, 0
  %v4447 = vsel %vm2197, %v4358, 0
  %v4450 = vsel %vm2197, %v4359, 0
  %v4453 = vsel %vm2197, %v4360, 0
  %v4456 = vsel %vm2197, %v4361, 0
  %v4459 = vsel %vm2197, %v4362, 0
  %v4462 = vsel %vm2197, %v4363, 0
  %v4465 = vsel %vm2197, %v4364, 0
  %v4468 = vsel %vm2197, %v4365, 0
  %v4471 = vsel %vm2197, %v4366, 0
  %v4474 = vsel %vm2197, %v4367, 0
  %v4477 = vsel %vm2197, %v4368, 0
  %v4480 = vsel %vm2197, %v4369, 0
  %v4483 = vsel %vm2197, %v4370, 0
  %v4486 = vsel %vm2197, %v4371, 0
  %v4489 = vsel %vm2197, %v4372, 0
  %v4492 = vsel %vm2197, %v4373, 0
  %v4495 = vsel %vm2197, %v4374, 0
  %v4498 = vsel %vm2197, %v4375, 0
  %v4501 = vsel %vm2197, %v4376, 0
  %v4504 = vsel %vm2197, %v4377, 0
  %v4507 = vsel %vm2197, %v4378, 0
  %v4510 = vsel %vm2197, %v4379, 0
  %v4513 = vsel %vm2197, %v4380, 0
  %v4516 = vsel %vm2197, %v4381, 0
  %v4519 = vsel %vm2197, %v4382, 0
  %v4522 = vsel %vm2197, %v4383, 0
  %v4525 = vsel %vm2197, %v4384, 0
  %v4528 = vsel %vm2197, %v4385, 0
  %v4531 = vsel %vm2197, %v4386, 0
  %v4534 = vsel %vm2197, %v4387, 0
  %v4537 = vsel %vm2197, %v4388, 0
  %v4540 = vsel %vm2197, %v4389, 0
  %v4543 = vsel %vm2197, %v4390, 0
  %v4546 = vsel %vm2197, %v4391, 0
  %v4549 = vsel %vm2197, %v4392, 0
  %v4552 = vsel %vm2197, %v4393, 0
  %v4555 = vsel %vm2197, %v4394, 0
  %v4558 = vsel %vm2197, %v4395, 0
  %v4561 = vsel %vm2197, %v4396, 0
  %v4564 = vsel %vm2197, %v4397, 0
  %v4567 = vsel %vm2197, %v4398, 0
  %v4570 = vsel %vm2197, %v4399, 0
  %v4573 = vsel %vm2197, %v4400, 0
  %v4576 = vsel %vm2197, %v4401, 0
  %v4579 = vsel %vm2197, %v4402, 0
  %v4582 = vsel %vm2197, %v4403, 0
  %v4585 = vsel %vm2197, %v4404, 0
  %v4588 = vsel %vm2197, %v4405, 0
  %v4591 = vsel %vm2197, %v4406, 0
  %v4594 = vsel %vm2197, %v4407, 0
  %v4597 = vsel %vm2197, %v4408, 0
  %v4600 = vsel %vm2197, %v4409, 0
  %v4603 = vsel %vm2197, %v4410, 0
  %v4606 = vsel %vm2197, %v4411, 0
  %v4609 = vsel %vm2197, %v4412, 0
  %v4612 = vsel %vm2197, %v4413, 0
  %v4615 = vsel %vm2197, %v4414, 0
  %v4618 = vsel %vm2197, %v4415, 0
  %v4621 = vsel %vm2197, %v4416, 0
  %v4624 = vsel %vm2197, %v4417, 0
  %v4627 = vsel %vm2197, %v4418, 0
  %v4630 = vsel %vm2197, %v4419, 0
  %v4633 = vsel %vm2197, %v4420, 0
  %v4636 = vsel %vm2197, %v4421, 0
  %v4639 = vsel %vm2197, %v4422, 0
  %v4642 = vsel %vm2414, %v4424, 0
  %4644 = vmatprep.subr.mxu0 0.0
  %4645 = vmatpush1.msra.mxu0 0.0
  %4646 = vmatprep.subr.mxu0 0.0
  %4647 = vmatpush1.msra.mxu0 0.0
  %4648 = vmatprep.subr.mxu0 0.0
  %4649 = vmatpush1.msra.mxu0 0.0
  %4650 = vmatprep.subr.mxu0 0.0
  %4651 = vmatpush1.msra.mxu0 0.0
  %4652 = vmatprep.subr.mxu0 0.0
  %4653 = vmatpush1.msra.mxu0 0.0
  %4654 = vmatprep.subr.mxu0 0.0
  %4655 = vmatpush1.msra.mxu0 0.0
  %4656 = vmatprep.subr.mxu0 0.0
  %4657 = vmatpush1.msra.mxu0 0.0
  %4658 = vmatprep.subr.mxu0 0.0
  %4659 = vmatpush1.msra.mxu0 0.0
  %4660 = vmatprep.subr.mxu0 0.0
  %4661 = vmatpush1.msra.mxu0 0.0
  %4662 = vmatprep.subr.mxu0 0.0
  %4663 = vmatpush1.msra.mxu0 0.0
  %4664 = vmatprep.subr.mxu0 0.0
  %4665 = vmatpush1.msra.mxu0 0.0
  %4666 = vmatprep.subr.mxu0 0.0
  %4667 = vmatpush1.msra.mxu0 0.0
  %4668 = vmatprep.subr.mxu0 0.0
  %4669 = vmatpush1.msra.mxu0 0.0
  %4670 = vmatprep.subr.mxu0 0.0
  %4671 = vmatpush1.msra.mxu0 0.0
  %4672 = vmatprep.subr.mxu0 0.0
  %4673 = vmatpush1.msra.mxu0 %v4642
  %4674 = vmatprep.subr.mxu0 0.0
  %4675 = vmatpush1.msra.mxu0 %v4423
  %4676 = vmatprep.subr.mxu0 0.0
  %4677 = vmatpush2.msra.mxu0 0.0
  %4678 = vmatprep.subr.mxu0 0.0
  %4679 = vmatpush2.msra.mxu0 0.0
  %4680 = vmatprep.subr.mxu0 0.0
  %4681 = vmatpush2.msra.mxu0 0.0
  %4682 = vmatprep.subr.mxu0 0.0
  %4683 = vmatpush2.msra.mxu0 0.0
  %4684 = vmatprep.subr.mxu0 0.0
  %4685 = vmatpush2.msra.mxu0 0.0
  %4686 = vmatprep.subr.mxu0 0.0
  %4687 = vmatpush2.msra.mxu0 0.0
  %4688 = vmatprep.subr.mxu0 0.0
  %4689 = vmatpush2.msra.mxu0 0.0
  %4690 = vmatprep.subr.mxu0 0.0
  %4691 = vmatpush2.msra.mxu0 0.0
  %4692 = vmatprep.subr.mxu0 0.0
  %4693 = vmatpush2.msra.mxu0 0.0
  %4694 = vmatprep.subr.mxu0 0.0
  %4695 = vmatpush2.msra.mxu0 0.0
  %4696 = vmatprep.subr.mxu0 0.0
  %4697 = vmatpush2.msra.mxu0 0.0
  %4698 = vmatprep.subr.mxu0 0.0
  %4699 = vmatpush2.msra.mxu0 0.0
  %4700 = vmatprep.subr.mxu0 0.0
  %4701 = vmatpush2.msra.mxu0 0.0
  %4702 = vmatprep.subr.mxu0 0.0
  %4703 = vmatpush2.msra.mxu0 0.0
  %4704 = vmatprep.subr.mxu0 0.0
  %4705 = vmatpush2.msra.mxu0 0.0
  %4706 = vmatprep.subr.mxu0 0.0
  %4707 = vmatpush2.msra.mxu0 0.0
  %4708 = vmatprep.mubr.f32.mxu0 0.0
  %4709 = vmatmul.mubr.f32.gmra.mxu0 %v4426
  %v4710 = vpop.f32.mrf.mxu0
  %v4711 = vadd.f32 0.0, %v4710
  %v4712 = vpop.f32.mrf.mxu0
  %4713 = vmatprep.mubr.f32.mxu0 0.0
  %4714 = vmatmul.mubr.f32.gmra.mxu0 %v4429
  %v4715 = vpop.f32.mrf.mxu0
  %v4716 = vadd.f32 0.0, %v4715
  %v4717 = vpop.f32.mrf.mxu0
  %4718 = vmatprep.mubr.f32.mxu0 0.0
  %4719 = vmatmul.mubr.f32.gmra.mxu0 %v4432
  %v4720 = vpop.f32.mrf.mxu0
  %v4721 = vadd.f32 0.0, %v4720
  %v4722 = vpop.f32.mrf.mxu0
  %4723 = vmatprep.mubr.f32.mxu0 0.0
  %4724 = vmatmul.mubr.f32.gmra.mxu0 %v4435
  %v4725 = vpop.f32.mrf.mxu0
  %v4726 = vadd.f32 0.0, %v4725
  %v4727 = vpop.f32.mrf.mxu0
  %4728 = vmatprep.mubr.f32.mxu0 0.0
  %4729 = vmatmul.mubr.f32.gmra.mxu0 %v4438
  %v4730 = vpop.f32.mrf.mxu0
  %v4731 = vadd.f32 0.0, %v4730
  %v4732 = vpop.f32.mrf.mxu0
  %4733 = vmatprep.mubr.f32.mxu0 0.0
  %4734 = vmatmul.mubr.f32.gmra.mxu0 %v4441
  %v4735 = vpop.f32.mrf.mxu0
  %v4736 = vadd.f32 0.0, %v4735
  %v4737 = vpop.f32.mrf.mxu0
  %4738 = vmatprep.mubr.f32.mxu0 0.0
  %4739 = vmatmul.mubr.f32.gmra.mxu0 %v4444
  %v4740 = vpop.f32.mrf.mxu0
  %v4741 = vadd.f32 0.0, %v4740
  %v4742 = vpop.f32.mrf.mxu0
  %4743 = vmatprep.mubr.f32.mxu0 0.0
  %4744 = vmatmul.mubr.f32.gmra.mxu0 %v4447
  %v4745 = vpop.f32.mrf.mxu0
  %v4746 = vadd.f32 0.0, %v4745
  %v4747 = vpop.f32.mrf.mxu0
  %4748 = vmatprep.mubr.f32.mxu0 0.0
  %4749 = vmatmul.mubr.f32.gmra.mxu0 %v4450
  %v4750 = vpop.f32.mrf.mxu0
  %v4751 = vadd.f32 0.0, %v4750
  %v4752 = vpop.f32.mrf.mxu0
  %4753 = vmatprep.mubr.f32.mxu0 0.0
  %4754 = vmatmul.mubr.f32.gmra.mxu0 %v4453
  %v4755 = vpop.f32.mrf.mxu0
  %v4756 = vadd.f32 0.0, %v4755
  %v4757 = vpop.f32.mrf.mxu0
  %4758 = vmatprep.mubr.f32.mxu0 0.0
  %4759 = vmatmul.mubr.f32.gmra.mxu0 %v4456
  %v4760 = vpop.f32.mrf.mxu0
  %v4761 = vadd.f32 0.0, %v4760
  %v4762 = vpop.f32.mrf.mxu0
  %4763 = vmatprep.mubr.f32.mxu0 0.0
  %4764 = vmatmul.mubr.f32.gmra.mxu0 %v4459
  %v4765 = vpop.f32.mrf.mxu0
  %v4766 = vadd.f32 0.0, %v4765
  %v4767 = vpop.f32.mrf.mxu0
  %4768 = vmatprep.mubr.f32.mxu0 0.0
  %4769 = vmatmul.mubr.f32.gmra.mxu0 %v4462
  %v4770 = vpop.f32.mrf.mxu0
  %v4771 = vadd.f32 0.0, %v4770
  %v4772 = vpop.f32.mrf.mxu0
  %4773 = vmatprep.mubr.f32.mxu0 0.0
  %4774 = vmatmul.mubr.f32.gmra.mxu0 %v4465
  %v4775 = vpop.f32.mrf.mxu0
  %v4776 = vadd.f32 0.0, %v4775
  %v4777 = vpop.f32.mrf.mxu0
  %4778 = vmatprep.mubr.f32.mxu0 0.0
  %4779 = vmatmul.mubr.f32.gmra.mxu0 %v4468
  %v4780 = vpop.f32.mrf.mxu0
  %v4781 = vadd.f32 0.0, %v4780
  %v4782 = vpop.f32.mrf.mxu0
  %4783 = vmatprep.mubr.f32.mxu0 0.0
  %4784 = vmatmul.mubr.f32.gmra.mxu0 %v4471
  %v4785 = vpop.f32.mrf.mxu0
  %v4786 = vadd.f32 0.0, %v4785
  %v4787 = vpop.f32.mrf.mxu0
  %4788 = vmatprep.mubr.f32.mxu0 0.0
  %4789 = vmatmul.mubr.f32.gmra.mxu0 %v4474
  %v4790 = vpop.f32.mrf.mxu0
  %v4791 = vadd.f32 0.0, %v4790
  %v4792 = vpop.f32.mrf.mxu0
  %4793 = vmatprep.mubr.f32.mxu0 0.0
  %4794 = vmatmul.mubr.f32.gmra.mxu0 %v4477
  %v4795 = vpop.f32.mrf.mxu0
  %v4796 = vadd.f32 0.0, %v4795
  %v4797 = vpop.f32.mrf.mxu0
  %4798 = vmatprep.mubr.f32.mxu0 0.0
  %4799 = vmatmul.mubr.f32.gmra.mxu0 %v4480
  %v4800 = vpop.f32.mrf.mxu0
  %v4801 = vadd.f32 0.0, %v4800
  %v4802 = vpop.f32.mrf.mxu0
  %4803 = vmatprep.mubr.f32.mxu0 0.0
  %4804 = vmatmul.mubr.f32.gmra.mxu0 %v4483
  %v4805 = vpop.f32.mrf.mxu0
  %v4806 = vadd.f32 0.0, %v4805
  %v4807 = vpop.f32.mrf.mxu0
  %4808 = vmatprep.mubr.f32.mxu0 0.0
  %4809 = vmatmul.mubr.f32.gmra.mxu0 %v4486
  %v4810 = vpop.f32.mrf.mxu0
  %v4811 = vadd.f32 0.0, %v4810
  %v4812 = vpop.f32.mrf.mxu0
  %4813 = vmatprep.mubr.f32.mxu0 0.0
  %4814 = vmatmul.mubr.f32.gmra.mxu0 %v4489
  %v4815 = vpop.f32.mrf.mxu0
  %v4816 = vadd.f32 0.0, %v4815
  %v4817 = vpop.f32.mrf.mxu0
  %4818 = vmatprep.mubr.f32.mxu0 0.0
  %4819 = vmatmul.mubr.f32.gmra.mxu0 %v4492
  %v4820 = vpop.f32.mrf.mxu0
  %v4821 = vadd.f32 0.0, %v4820
  %v4822 = vpop.f32.mrf.mxu0
  %4823 = vmatprep.mubr.f32.mxu0 0.0
  %4824 = vmatmul.mubr.f32.gmra.mxu0 %v4495
  %v4825 = vpop.f32.mrf.mxu0
  %v4826 = vadd.f32 0.0, %v4825
  %v4827 = vpop.f32.mrf.mxu0
  %4828 = vmatprep.mubr.f32.mxu0 0.0
  %4829 = vmatmul.mubr.f32.gmra.mxu0 %v4498
  %v4830 = vpop.f32.mrf.mxu0
  %v4831 = vadd.f32 0.0, %v4830
  %v4832 = vpop.f32.mrf.mxu0
  %4833 = vmatprep.mubr.f32.mxu0 0.0
  %4834 = vmatmul.mubr.f32.gmra.mxu0 %v4501
  %v4835 = vpop.f32.mrf.mxu0
  %v4836 = vadd.f32 0.0, %v4835
  %v4837 = vpop.f32.mrf.mxu0
  %4838 = vmatprep.mubr.f32.mxu0 0.0
  %4839 = vmatmul.mubr.f32.gmra.mxu0 %v4504
  %v4840 = vpop.f32.mrf.mxu0
  %v4841 = vadd.f32 0.0, %v4840
  %v4842 = vpop.f32.mrf.mxu0
  %4843 = vmatprep.mubr.f32.mxu0 0.0
  %4844 = vmatmul.mubr.f32.gmra.mxu0 %v4507
  %v4845 = vpop.f32.mrf.mxu0
  %v4846 = vadd.f32 0.0, %v4845
  %v4847 = vpop.f32.mrf.mxu0
  %4848 = vmatprep.mubr.f32.mxu0 0.0
  %4849 = vmatmul.mubr.f32.gmra.mxu0 %v4510
  %v4850 = vpop.f32.mrf.mxu0
  %v4851 = vadd.f32 0.0, %v4850
  %v4852 = vpop.f32.mrf.mxu0
  %4853 = vmatprep.mubr.f32.mxu0 0.0
  %4854 = vmatmul.mubr.f32.gmra.mxu0 %v4513
  %v4855 = vpop.f32.mrf.mxu0
  %v4856 = vadd.f32 0.0, %v4855
  %v4857 = vpop.f32.mrf.mxu0
  %4858 = vmatprep.mubr.f32.mxu0 0.0
  %4859 = vmatmul.mubr.f32.gmra.mxu0 %v4516
  %v4860 = vpop.f32.mrf.mxu0
  %v4861 = vadd.f32 0.0, %v4860
  %v4862 = vpop.f32.mrf.mxu0
  %4863 = vmatprep.mubr.f32.mxu0 0.0
  %4864 = vmatmul.mubr.f32.gmra.mxu0 %v4519
  %v4865 = vpop.f32.mrf.mxu0
  %v4866 = vadd.f32 0.0, %v4865
  %v4867 = vpop.f32.mrf.mxu0
  %4868 = vmatprep.mubr.f32.mxu0 0.0
  %4869 = vmatmul.mubr.f32.gmra.mxu0 %v4522
  %v4870 = vpop.f32.mrf.mxu0
  %v4871 = vadd.f32 0.0, %v4870
  %v4872 = vpop.f32.mrf.mxu0
  %4873 = vmatprep.mubr.f32.mxu0 0.0
  %4874 = vmatmul.mubr.f32.gmra.mxu0 %v4525
  %v4875 = vpop.f32.mrf.mxu0
  %v4876 = vadd.f32 0.0, %v4875
  %v4877 = vpop.f32.mrf.mxu0
  %4878 = vmatprep.mubr.f32.mxu0 0.0
  %4879 = vmatmul.mubr.f32.gmra.mxu0 %v4528
  %v4880 = vpop.f32.mrf.mxu0
  %v4881 = vadd.f32 0.0, %v4880
  %v4882 = vpop.f32.mrf.mxu0
  %4883 = vmatprep.mubr.f32.mxu0 0.0
  %4884 = vmatmul.mubr.f32.gmra.mxu0 %v4531
  %v4885 = vpop.f32.mrf.mxu0
  %v4886 = vadd.f32 0.0, %v4885
  %v4887 = vpop.f32.mrf.mxu0
  %4888 = vmatprep.mubr.f32.mxu0 0.0
  %4889 = vmatmul.mubr.f32.gmra.mxu0 %v4534
  %v4890 = vpop.f32.mrf.mxu0
  %v4891 = vadd.f32 0.0, %v4890
  %v4892 = vpop.f32.mrf.mxu0
  %4893 = vmatprep.mubr.f32.mxu0 0.0
  %4894 = vmatmul.mubr.f32.gmra.mxu0 %v4537
  %v4895 = vpop.f32.mrf.mxu0
  %v4896 = vadd.f32 0.0, %v4895
  %v4897 = vpop.f32.mrf.mxu0
  %4898 = vmatprep.mubr.f32.mxu0 0.0
  %4899 = vmatmul.mubr.f32.gmra.mxu0 %v4540
  %v4900 = vpop.f32.mrf.mxu0
  %v4901 = vadd.f32 0.0, %v4900
  %v4902 = vpop.f32.mrf.mxu0
  %4903 = vmatprep.mubr.f32.mxu0 0.0
  %4904 = vmatmul.mubr.f32.gmra.mxu0 %v4543
  %v4905 = vpop.f32.mrf.mxu0
  %v4906 = vadd.f32 0.0, %v4905
  %v4907 = vpop.f32.mrf.mxu0
  %4908 = vmatprep.mubr.f32.mxu0 0.0
  %4909 = vmatmul.mubr.f32.gmra.mxu0 %v4546
  %v4910 = vpop.f32.mrf.mxu0
  %v4911 = vadd.f32 0.0, %v4910
  %v4912 = vpop.f32.mrf.mxu0
  %4913 = vmatprep.mubr.f32.mxu0 0.0
  %4914 = vmatmul.mubr.f32.gmra.mxu0 %v4549
  %v4915 = vpop.f32.mrf.mxu0
  %v4916 = vadd.f32 0.0, %v4915
  %v4917 = vpop.f32.mrf.mxu0
  %4918 = vmatprep.mubr.f32.mxu0 0.0
  %4919 = vmatmul.mubr.f32.gmra.mxu0 %v4552
  %v4920 = vpop.f32.mrf.mxu0
  %v4921 = vadd.f32 0.0, %v4920
  %v4922 = vpop.f32.mrf.mxu0
  %4923 = vmatprep.mubr.f32.mxu0 0.0
  %4924 = vmatmul.mubr.f32.gmra.mxu0 %v4555
  %v4925 = vpop.f32.mrf.mxu0
  %v4926 = vadd.f32 0.0, %v4925
  %v4927 = vpop.f32.mrf.mxu0
  %4928 = vmatprep.mubr.f32.mxu0 0.0
  %4929 = vmatmul.mubr.f32.gmra.mxu0 %v4558
  %v4930 = vpop.f32.mrf.mxu0
  %v4931 = vadd.f32 0.0, %v4930
  %v4932 = vpop.f32.mrf.mxu0
  %4933 = vmatprep.mubr.f32.mxu0 0.0
  %4934 = vmatmul.mubr.f32.gmra.mxu0 %v4561
  %v4935 = vpop.f32.mrf.mxu0
  %v4936 = vadd.f32 0.0, %v4935
  %v4937 = vpop.f32.mrf.mxu0
  %4938 = vmatprep.mubr.f32.mxu0 0.0
  %4939 = vmatmul.mubr.f32.gmra.mxu0 %v4564
  %v4940 = vpop.f32.mrf.mxu0
  %v4941 = vadd.f32 0.0, %v4940
  %v4942 = vpop.f32.mrf.mxu0
  %4943 = vmatprep.mubr.f32.mxu0 0.0
  %4944 = vmatmul.mubr.f32.gmra.mxu0 %v4567
  %v4945 = vpop.f32.mrf.mxu0
  %v4946 = vadd.f32 0.0, %v4945
  %v4947 = vpop.f32.mrf.mxu0
  %4948 = vmatprep.mubr.f32.mxu0 0.0
  %4949 = vmatmul.mubr.f32.gmra.mxu0 %v4570
  %v4950 = vpop.f32.mrf.mxu0
  %v4951 = vadd.f32 0.0, %v4950
  %v4952 = vpop.f32.mrf.mxu0
  %4953 = vmatprep.mubr.f32.mxu0 0.0
  %4954 = vmatmul.mubr.f32.gmra.mxu0 %v4573
  %v4955 = vpop.f32.mrf.mxu0
  %v4956 = vadd.f32 0.0, %v4955
  %v4957 = vpop.f32.mrf.mxu0
  %4958 = vmatprep.mubr.f32.mxu0 0.0
  %4959 = vmatmul.mubr.f32.gmra.mxu0 %v4576
  %v4960 = vpop.f32.mrf.mxu0
  %v4961 = vadd.f32 0.0, %v4960
  %v4962 = vpop.f32.mrf.mxu0
  %4963 = vmatprep.mubr.f32.mxu0 0.0
  %4964 = vmatmul.mubr.f32.gmra.mxu0 %v4579
  %v4965 = vpop.f32.mrf.mxu0
  %v4966 = vadd.f32 0.0, %v4965
  %v4967 = vpop.f32.mrf.mxu0
  %4968 = vmatprep.mubr.f32.mxu0 0.0
  %4969 = vmatmul.mubr.f32.gmra.mxu0 %v4582
  %v4970 = vpop.f32.mrf.mxu0
  %v4971 = vadd.f32 0.0, %v4970
  %v4972 = vpop.f32.mrf.mxu0
  %4973 = vmatprep.mubr.f32.mxu0 0.0
  %4974 = vmatmul.mubr.f32.gmra.mxu0 %v4585
  %v4975 = vpop.f32.mrf.mxu0
  %v4976 = vadd.f32 0.0, %v4975
  %v4977 = vpop.f32.mrf.mxu0
  %4978 = vmatprep.mubr.f32.mxu0 0.0
  %4979 = vmatmul.mubr.f32.gmra.mxu0 %v4588
  %v4980 = vpop.f32.mrf.mxu0
  %v4981 = vadd.f32 0.0, %v4980
  %v4982 = vpop.f32.mrf.mxu0
  %4983 = vmatprep.mubr.f32.mxu0 0.0
  %4984 = vmatmul.mubr.f32.gmra.mxu0 %v4591
  %v4985 = vpop.f32.mrf.mxu0
  %v4986 = vadd.f32 0.0, %v4985
  %v4987 = vpop.f32.mrf.mxu0
  %4988 = vmatprep.mubr.f32.mxu0 0.0
  %4989 = vmatmul.mubr.f32.gmra.mxu0 %v4594
  %v4990 = vpop.f32.mrf.mxu0
  %v4991 = vadd.f32 0.0, %v4990
  %v4992 = vpop.f32.mrf.mxu0
  %4993 = vmatprep.mubr.f32.mxu0 0.0
  %4994 = vmatmul.mubr.f32.gmra.mxu0 %v4597
  %v4995 = vpop.f32.mrf.mxu0
  %v4996 = vadd.f32 0.0, %v4995
  %v4997 = vpop.f32.mrf.mxu0
  %4998 = vmatprep.mubr.f32.mxu0 0.0
  %4999 = vmatmul.mubr.f32.gmra.mxu0 %v4600
  %v5000 = vpop.f32.mrf.mxu0
  %v5001 = vadd.f32 0.0, %v5000
  %v5002 = vpop.f32.mrf.mxu0
  %5003 = vmatprep.mubr.f32.mxu0 0.0
  %5004 = vmatmul.mubr.f32.gmra.mxu0 %v4603
  %v5005 = vpop.f32.mrf.mxu0
  %v5006 = vadd.f32 0.0, %v5005
  %v5007 = vpop.f32.mrf.mxu0
  %5008 = vmatprep.mubr.f32.mxu0 0.0
  %5009 = vmatmul.mubr.f32.gmra.mxu0 %v4606
  %v5010 = vpop.f32.mrf.mxu0
  %v5011 = vadd.f32 0.0, %v5010
  %v5012 = vpop.f32.mrf.mxu0
  %5013 = vmatprep.mubr.f32.mxu0 0.0
  %5014 = vmatmul.mubr.f32.gmra.mxu0 %v4609
  %v5015 = vpop.f32.mrf.mxu0
  %v5016 = vadd.f32 0.0, %v5015
  %v5017 = vpop.f32.mrf.mxu0
  %5018 = vmatprep.mubr.f32.mxu0 0.0
  %5019 = vmatmul.mubr.f32.gmra.mxu0 %v4612
  %v5020 = vpop.f32.mrf.mxu0
  %v5021 = vadd.f32 0.0, %v5020
  %v5022 = vpop.f32.mrf.mxu0
  %5023 = vmatprep.mubr.f32.mxu0 0.0
  %5024 = vmatmul.mubr.f32.gmra.mxu0 %v4615
  %v5025 = vpop.f32.mrf.mxu0
  %v5026 = vadd.f32 0.0, %v5025
  %v5027 = vpop.f32.mrf.mxu0
  %5028 = vmatprep.mubr.f32.mxu0 0.0
  %5029 = vmatmul.mubr.f32.gmra.mxu0 %v4618
  %v5030 = vpop.f32.mrf.mxu0
  %v5031 = vadd.f32 0.0, %v5030
  %v5032 = vpop.f32.mrf.mxu0
  %5033 = vmatprep.mubr.f32.mxu0 0.0
  %5034 = vmatmul.mubr.f32.gmra.mxu0 %v4621
  %v5035 = vpop.f32.mrf.mxu0
  %v5036 = vadd.f32 0.0, %v5035
  %v5037 = vpop.f32.mrf.mxu0
  %5038 = vmatprep.mubr.f32.mxu0 0.0
  %5039 = vmatmul.mubr.f32.gmra.mxu0 %v4624
  %v5040 = vpop.f32.mrf.mxu0
  %v5041 = vadd.f32 0.0, %v5040
  %v5042 = vpop.f32.mrf.mxu0
  %5043 = vmatprep.mubr.f32.mxu0 0.0
  %5044 = vmatmul.mubr.f32.gmra.mxu0 %v4627
  %v5045 = vpop.f32.mrf.mxu0
  %v5046 = vadd.f32 0.0, %v5045
  %v5047 = vpop.f32.mrf.mxu0
  %5048 = vmatprep.mubr.f32.mxu0 0.0
  %5049 = vmatmul.mubr.f32.gmra.mxu0 %v4630
  %v5050 = vpop.f32.mrf.mxu0
  %v5051 = vadd.f32 0.0, %v5050
  %v5052 = vpop.f32.mrf.mxu0
  %5053 = vmatprep.mubr.f32.mxu0 0.0
  %5054 = vmatmul.mubr.f32.gmra.mxu0 %v4633
  %v5055 = vpop.f32.mrf.mxu0
  %v5056 = vadd.f32 0.0, %v5055
  %v5057 = vpop.f32.mrf.mxu0
  %5058 = vmatprep.mubr.f32.mxu0 0.0
  %5059 = vmatmul.mubr.f32.gmra.mxu0 %v4636
  %v5060 = vpop.f32.mrf.mxu0
  %v5061 = vadd.f32 0.0, %v5060
  %v5062 = vpop.f32.mrf.mxu0
  %5063 = vmatprep.mubr.f32.mxu0 0.0
  %5064 = vmatmul.mubr.f32.gmra.mxu0 %v4639
  %v5065 = vpop.f32.mrf.mxu0
  %v5066 = vadd.f32 0.0, %v5065
  %v5067 = vpop.f32.mrf.mxu0
  %5068 = vdwg.mxu0
  %v5069 = vadd.f32 %v3129, %v4711
  %v5070 = vadd.f32 %v3134, %v4716
  %v5071 = vadd.f32 %v3139, %v4721
  %v5072 = vadd.f32 %v3144, %v4726
  %v5073 = vadd.f32 %v3149, %v4731
  %v5074 = vadd.f32 %v3154, %v4736
  %v5075 = vadd.f32 %v3159, %v4741
  %v5076 = vadd.f32 %v3164, %v4746
  %v5077 = vadd.f32 %v3169, %v4751
  %v5078 = vadd.f32 %v3174, %v4756
  %v5079 = vadd.f32 %v3179, %v4761
  %v5080 = vadd.f32 %v3184, %v4766
  %v5081 = vadd.f32 %v3189, %v4771
  %v5082 = vadd.f32 %v3194, %v4776
  %v5083 = vadd.f32 %v3199, %v4781
  %v5084 = vadd.f32 %v3204, %v4786
  %v5085 = vadd.f32 %v3209, %v4791
  %v5086 = vadd.f32 %v3214, %v4796
  %v5087 = vadd.f32 %v3219, %v4801
  %v5088 = vadd.f32 %v3224, %v4806
  %v5089 = vadd.f32 %v3229, %v4811
  %v5090 = vadd.f32 %v3234, %v4816
  %v5091 = vadd.f32 %v3239, %v4821
  %v5092 = vadd.f32 %v3244, %v4826
  %v5093 = vadd.f32 %v3249, %v4831
  %v5094 = vadd.f32 %v3254, %v4836
  %v5095 = vadd.f32 %v3259, %v4841
  %v5096 = vadd.f32 %v3264, %v4846
  %v5097 = vadd.f32 %v3269, %v4851
  %v5098 = vadd.f32 %v3274, %v4856
  %v5099 = vadd.f32 %v3279, %v4861
  %v5100 = vadd.f32 %v3284, %v4866
  %v5101 = vadd.f32 %v3289, %v4871
  %v5102 = vadd.f32 %v3294, %v4876
  %v5103 = vadd.f32 %v3299, %v4881
  %v5104 = vadd.f32 %v3304, %v4886
  %v5105 = vadd.f32 %v3309, %v4891
  %v5106 = vadd.f32 %v3314, %v4896
  %v5107 = vadd.f32 %v3319, %v4901
  %v5108 = vadd.f32 %v3324, %v4906
  %v5109 = vadd.f32 %v3329, %v4911
  %v5110 = vadd.f32 %v3334, %v4916
  %v5111 = vadd.f32 %v3339, %v4921
  %v5112 = vadd.f32 %v3344, %v4926
  %v5113 = vadd.f32 %v3349, %v4931
  %v5114 = vadd.f32 %v3354, %v4936
  %v5115 = vadd.f32 %v3359, %v4941
  %v5116 = vadd.f32 %v3364, %v4946
  %v5117 = vadd.f32 %v3369, %v4951
  %v5118 = vadd.f32 %v3374, %v4956
  %v5119 = vadd.f32 %v3379, %v4961
  %v5120 = vadd.f32 %v3384, %v4966
  %v5121 = vadd.f32 %v3389, %v4971
  %v5122 = vadd.f32 %v3394, %v4976
  %v5123 = vadd.f32 %v3399, %v4981
  %v5124 = vadd.f32 %v3404, %v4986
  %v5125 = vadd.f32 %v3409, %v4991
  %v5126 = vadd.f32 %v3414, %v4996
  %v5127 = vadd.f32 %v3419, %v5001
  %v5128 = vadd.f32 %v3424, %v5006
  %v5129 = vadd.f32 %v3429, %v5011
  %v5130 = vadd.f32 %v3434, %v5016
  %v5131 = vadd.f32 %v3439, %v5021
  %v5132 = vadd.f32 %v3444, %v5026
  %v5133 = vadd.f32 %v3449, %v5031
  %v5134 = vadd.f32 %v3454, %v5036
  %v5135 = vadd.f32 %v3459, %v5041
  %v5136 = vadd.f32 %v3464, %v5046
  %v5137 = vadd.f32 %v3469, %v5051
  %v5138 = vadd.f32 %v3474, %v5056
  %v5139 = vadd.f32 %v3479, %v5061
  %v5140 = vadd.f32 %v3484, %v5066
  %v5141 = vld [vmem:[%s2] sm:$0x1]
  %v5143 = vlaneseq
  %v5144 = vshrl.u32 %v5143, 7
  %v5145 = vsub.s32 0, %v5144
  %v5146 = vrot.slane %v5141, %v5145
  %v5148 = vadd.f32 %v5069, %v5146
  %v5149 = vadd.f32 %v5070, %v5146
  %v5150 = vadd.f32 %v5071, %v5146
  %v5151 = vadd.f32 %v5072, %v5146
  %v5152 = vadd.f32 %v5073, %v5146
  %v5153 = vadd.f32 %v5074, %v5146
  %v5154 = vadd.f32 %v5075, %v5146
  %v5155 = vadd.f32 %v5076, %v5146
  %v5156 = vadd.f32 %v5077, %v5146
  %v5157 = vadd.f32 %v5078, %v5146
  %v5158 = vadd.f32 %v5079, %v5146
  %v5159 = vadd.f32 %v5080, %v5146
  %v5160 = vadd.f32 %v5081, %v5146
  %v5161 = vadd.f32 %v5082, %v5146
  %v5162 = vadd.f32 %v5083, %v5146
  %v5163 = vadd.f32 %v5084, %v5146
  %v5164 = vadd.f32 %v5085, %v5146
  %v5165 = vadd.f32 %v5086, %v5146
  %v5166 = vadd.f32 %v5087, %v5146
  %v5167 = vadd.f32 %v5088, %v5146
  %v5168 = vadd.f32 %v5089, %v5146
  %v5169 = vadd.f32 %v5090, %v5146
  %v5170 = vadd.f32 %v5091, %v5146
  %v5171 = vadd.f32 %v5092, %v5146
  %v5172 = vadd.f32 %v5093, %v5146
  %v5173 = vadd.f32 %v5094, %v5146
  %v5174 = vadd.f32 %v5095, %v5146
  %v5175 = vadd.f32 %v5096, %v5146
  %v5176 = vadd.f32 %v5097, %v5146
  %v5177 = vadd.f32 %v5098, %v5146
  %v5178 = vadd.f32 %v5099, %v5146
  %v5179 = vadd.f32 %v5100, %v5146
  %v5180 = vadd.f32 %v5101, %v5146
  %v5181 = vadd.f32 %v5102, %v5146
  %v5182 = vadd.f32 %v5103, %v5146
  %v5183 = vadd.f32 %v5104, %v5146
  %v5184 = vadd.f32 %v5105, %v5146
  %v5185 = vadd.f32 %v5106, %v5146
  %v5186 = vadd.f32 %v5107, %v5146
  %v5187 = vadd.f32 %v5108, %v5146
  %v5188 = vadd.f32 %v5109, %v5146
  %v5189 = vadd.f32 %v5110, %v5146
  %v5190 = vadd.f32 %v5111, %v5146
  %v5191 = vadd.f32 %v5112, %v5146
  %v5192 = vadd.f32 %v5113, %v5146
  %v5193 = vadd.f32 %v5114, %v5146
  %v5194 = vadd.f32 %v5115, %v5146
  %v5195 = vadd.f32 %v5116, %v5146
  %v5196 = vadd.f32 %v5117, %v5146
  %v5197 = vadd.f32 %v5118, %v5146
  %v5198 = vadd.f32 %v5119, %v5146
  %v5199 = vadd.f32 %v5120, %v5146
  %v5200 = vadd.f32 %v5121, %v5146
  %v5201 = vadd.f32 %v5122, %v5146
  %v5202 = vadd.f32 %v5123, %v5146
  %v5203 = vadd.f32 %v5124, %v5146
  %v5204 = vadd.f32 %v5125, %v5146
  %v5205 = vadd.f32 %v5126, %v5146
  %v5206 = vadd.f32 %v5127, %v5146
  %v5207 = vadd.f32 %v5128, %v5146
  %v5208 = vadd.f32 %v5129, %v5146
  %v5209 = vadd.f32 %v5130, %v5146
  %v5210 = vadd.f32 %v5131, %v5146
  %v5211 = vadd.f32 %v5132, %v5146
  %v5212 = vadd.f32 %v5133, %v5146
  %v5213 = vadd.f32 %v5134, %v5146
  %v5214 = vadd.f32 %v5135, %v5146
  %v5215 = vadd.f32 %v5136, %v5146
  %v5216 = vadd.f32 %v5137, %v5146
  %v5217 = vadd.f32 %v5138, %v5146
  %v5218 = vadd.f32 %v5139, %v5146
  %v5219 = vadd.f32 %v5140, %v5146
  %v5220 = vmax.f32 %v5148, 0.0
  %v5221 = vmax.f32 %v5149, 0.0
  %v5222 = vmax.f32 %v5150, 0.0
  %v5223 = vmax.f32 %v5151, 0.0
  %v5224 = vmax.f32 %v5152, 0.0
  %v5225 = vmax.f32 %v5153, 0.0
  %v5226 = vmax.f32 %v5154, 0.0
  %v5227 = vmax.f32 %v5155, 0.0
  %v5228 = vmax.f32 %v5156, 0.0
  %v5229 = vmax.f32 %v5157, 0.0
  %v5230 = vmax.f32 %v5158, 0.0
  %v5231 = vmax.f32 %v5159, 0.0
  %v5232 = vmax.f32 %v5160, 0.0
  %v5233 = vmax.f32 %v5161, 0.0
  %v5234 = vmax.f32 %v5162, 0.0
  %v5235 = vmax.f32 %v5163, 0.0
  %v5236 = vmax.f32 %v5164, 0.0
  %v5237 = vmax.f32 %v5165, 0.0
  %v5238 = vmax.f32 %v5166, 0.0
  %v5239 = vmax.f32 %v5167, 0.0
  %v5240 = vmax.f32 %v5168, 0.0
  %v5241 = vmax.f32 %v5169, 0.0
  %v5242 = vmax.f32 %v5170, 0.0
  %v5243 = vmax.f32 %v5171, 0.0
  %v5244 = vmax.f32 %v5172, 0.0
  %v5245 = vmax.f32 %v5173, 0.0
  %v5246 = vmax.f32 %v5174, 0.0
  %v5247 = vmax.f32 %v5175, 0.0
  %v5248 = vmax.f32 %v5176, 0.0
  %v5249 = vmax.f32 %v5177, 0.0
  %v5250 = vmax.f32 %v5178, 0.0
  %v5251 = vmax.f32 %v5179, 0.0
  %v5252 = vmax.f32 %v5180, 0.0
  %v5253 = vmax.f32 %v5181, 0.0
  %v5254 = vmax.f32 %v5182, 0.0
  %v5255 = vmax.f32 %v5183, 0.0
  %v5256 = vmax.f32 %v5184, 0.0
  %v5257 = vmax.f32 %v5185, 0.0
  %v5258 = vmax.f32 %v5186, 0.0
  %v5259 = vmax.f32 %v5187, 0.0
  %v5260 = vmax.f32 %v5188, 0.0
  %v5261 = vmax.f32 %v5189, 0.0
  %v5262 = vmax.f32 %v5190, 0.0
  %v5263 = vmax.f32 %v5191, 0.0
  %v5264 = vmax.f32 %v5192, 0.0
  %v5265 = vmax.f32 %v5193, 0.0
  %v5266 = vmax.f32 %v5194, 0.0
  %v5267 = vmax.f32 %v5195, 0.0
  %v5268 = vmax.f32 %v5196, 0.0
  %v5269 = vmax.f32 %v5197, 0.0
  %v5270 = vmax.f32 %v5198, 0.0
  %v5271 = vmax.f32 %v5199, 0.0
  %v5272 = vmax.f32 %v5200, 0.0
  %v5273 = vmax.f32 %v5201, 0.0
  %v5274 = vmax.f32 %v5202, 0.0
  %v5275 = vmax.f32 %v5203, 0.0
  %v5276 = vmax.f32 %v5204, 0.0
  %v5277 = vmax.f32 %v5205, 0.0
  %v5278 = vmax.f32 %v5206, 0.0
  %v5279 = vmax.f32 %v5207, 0.0
  %v5280 = vmax.f32 %v5208, 0.0
  %v5281 = vmax.f32 %v5209, 0.0
  %v5282 = vmax.f32 %v5210, 0.0
  %v5283 = vmax.f32 %v5211, 0.0
  %v5284 = vmax.f32 %v5212, 0.0
  %v5285 = vmax.f32 %v5213, 0.0
  %v5286 = vmax.f32 %v5214, 0.0
  %v5287 = vmax.f32 %v5215, 0.0
  %v5288 = vmax.f32 %v5216, 0.0
  %v5289 = vmax.f32 %v5217, 0.0
  %v5290 = vmax.f32 %v5218, 0.0
  %v5291 = vmax.f32 %v5219, 0.0
  %5292 = vst.msk [vmem:[#allocation3] sm:$0x1] %vm21, 0.0
  %5293 = vst.msk [vmem:[#allocation3 + $0x18] sm:$0x1] %vm21, 0.0
  %5294 = vst.msk [vmem:[#allocation3 + $0x30] sm:$0x1] %vm21, 0.0
  %5295 = vst.msk [vmem:[#allocation3 + $0x48] sm:$0x1] %vm21, 0.0
  %5296 = vst.msk [vmem:[#allocation3 + $0x60] sm:$0x1] %vm21, 0.0
  %5297 = vst.msk [vmem:[#allocation3 + $0x78] sm:$0x1] %vm21, 0.0
  %5298 = vst.msk [vmem:[#allocation3 + $0x90] sm:$0x1] %vm21, 0.0
  %5299 = vst.msk [vmem:[#allocation3 + $0xa8] sm:$0x1] %vm21, 0.0
  %5300 = vst.msk [vmem:[#allocation3 + $0xc0] sm:$0x1] %vm21, 0.0
  %5301 = vst.msk [vmem:[#allocation3 + $0xd8] sm:$0x1] %vm21, 0.0
  %5302 = vst.msk [vmem:[#allocation3 + $0xf0] sm:$0x1] %vm21, 0.0
  %5303 = vst.msk [vmem:[#allocation3 + $0x108] sm:$0x1] %vm21, 0.0
  %5304 = vst.msk [vmem:[#allocation3 + $0x120] sm:$0x1] %vm21, 0.0
  %5305 = vst.msk [vmem:[#allocation3 + $0x138] sm:$0x1] %vm21, 0.0
  %5306 = vst.msk [vmem:[#allocation3 + $0x150] sm:$0x1] %vm21, 0.0
  %5307 = vst.msk [vmem:[#allocation3 + $0x168] sm:$0x1] %vm21, 0.0
  %5308 = vst.msk [vmem:[#allocation3 + $0x180] sm:$0x1] %vm21, 0.0
  %5309 = vst.msk [vmem:[#allocation3 + $0x198] sm:$0x1] %vm21, 0.0
  %5310 = vst.msk [vmem:[#allocation3 + $0x1b0] sm:$0x1] %vm21, 0.0
  %5311 = vst.msk [vmem:[#allocation3 + $0x1c8] sm:$0x1] %vm21, 0.0
  %5312 = vst.msk [vmem:[#allocation3 + $0x1e0] sm:$0x1] %vm21, 0.0
  %5313 = vst.msk [vmem:[#allocation3 + $0x1f8] sm:$0x1] %vm21, 0.0
  %5314 = vst.msk [vmem:[#allocation3 + $0x210] sm:$0x1] %vm21, 0.0
  %5315 = vst.msk [vmem:[#allocation3 + $0x228] sm:$0x1] %vm21, 0.0
  %5316 = vst.msk [vmem:[#allocation3 + $0x240] sm:$0x1] %vm21, 0.0
  %5317 = vst.msk [vmem:[#allocation3 + $0x258] sm:$0x1] %vm21, 0.0
  %5318 = vst.msk [vmem:[#allocation3 + $0x270] sm:$0x1] %vm21, 0.0
  %5319 = vst.msk [vmem:[#allocation3 + $0x288] sm:$0x1] %vm21, 0.0
  %5320 = vst.msk [vmem:[#allocation3 + $0x2a0] sm:$0x1] %vm21, 0.0
  %5321 = vst.msk [vmem:[#allocation3 + $0x2b8] sm:$0x1] %vm21, 0.0
  %5322 = vst.msk [vmem:[#allocation3 + $0x2d0] sm:$0x1] %vm21, 0.0
  %5323 = vst.msk [vmem:[#allocation3 + $0x2e8] sm:$0x1] %vm21, 0.0
  %5324 = vst.msk [vmem:[#allocation3 + $0x300] sm:$0x1] %vm21, 0.0
  %5325 = vst.msk [vmem:[#allocation3 + $0x318] sm:$0x1] %vm21, 0.0
  %5326 = vst.msk [vmem:[#allocation3 + $0x330] sm:$0x1] %vm21, 0.0
  %5327 = vst.msk [vmem:[#allocation3 + $0x348] sm:$0x1] %vm21, 0.0
  %5328 = vst.msk [vmem:[#allocation3 + $0x11] sm:$0x1] %vm21, 0.0
  %5329 = vst.msk [vmem:[#allocation3 + $0x29] sm:$0x1] %vm21, 0.0
  %5330 = vst.msk [vmem:[#allocation3 + $0x41] sm:$0x1] %vm21, 0.0
  %5331 = vst.msk [vmem:[#allocation3 + $0x59] sm:$0x1] %vm21, 0.0
  %5332 = vst.msk [vmem:[#allocation3 + $0x71] sm:$0x1] %vm21, 0.0
  %5333 = vst.msk [vmem:[#allocation3 + $0x89] sm:$0x1] %vm21, 0.0
  %5334 = vst.msk [vmem:[#allocation3 + $0xa1] sm:$0x1] %vm21, 0.0
  %5335 = vst.msk [vmem:[#allocation3 + $0xb9] sm:$0x1] %vm21, 0.0
  %5336 = vst.msk [vmem:[#allocation3 + $0xd1] sm:$0x1] %vm21, 0.0
  %5337 = vst.msk [vmem:[#allocation3 + $0xe9] sm:$0x1] %vm21, 0.0
  %5338 = vst.msk [vmem:[#allocation3 + $0x101] sm:$0x1] %vm21, 0.0
  %5339 = vst.msk [vmem:[#allocation3 + $0x119] sm:$0x1] %vm21, 0.0
  %5340 = vst.msk [vmem:[#allocation3 + $0x131] sm:$0x1] %vm21, 0.0
  %5341 = vst.msk [vmem:[#allocation3 + $0x149] sm:$0x1] %vm21, 0.0
  %5342 = vst.msk [vmem:[#allocation3 + $0x161] sm:$0x1] %vm21, 0.0
  %5343 = vst.msk [vmem:[#allocation3 + $0x179] sm:$0x1] %vm21, 0.0
  %5344 = vst.msk [vmem:[#allocation3 + $0x191] sm:$0x1] %vm21, 0.0
  %5345 = vst.msk [vmem:[#allocation3 + $0x1a9] sm:$0x1] %vm21, 0.0
  %5346 = vst.msk [vmem:[#allocation3 + $0x1c1] sm:$0x1] %vm21, 0.0
  %5347 = vst.msk [vmem:[#allocation3 + $0x1d9] sm:$0x1] %vm21, 0.0
  %5348 = vst.msk [vmem:[#allocation3 + $0x1f1] sm:$0x1] %vm21, 0.0
  %5349 = vst.msk [vmem:[#allocation3 + $0x209] sm:$0x1] %vm21, 0.0
  %5350 = vst.msk [vmem:[#allocation3 + $0x221] sm:$0x1] %vm21, 0.0
  %5351 = vst.msk [vmem:[#allocation3 + $0x239] sm:$0x1] %vm21, 0.0
  %5352 = vst.msk [vmem:[#allocation3 + $0x251] sm:$0x1] %vm21, 0.0
  %5353 = vst.msk [vmem:[#allocation3 + $0x269] sm:$0x1] %vm21, 0.0
  %5354 = vst.msk [vmem:[#allocation3 + $0x281] sm:$0x1] %vm21, 0.0
  %5355 = vst.msk [vmem:[#allocation3 + $0x299] sm:$0x1] %vm21, 0.0
  %5356 = vst.msk [vmem:[#allocation3 + $0x2b1] sm:$0x1] %vm21, 0.0
  %5357 = vst.msk [vmem:[#allocation3 + $0x2c9] sm:$0x1] %vm21, 0.0
  %5358 = vst.msk [vmem:[#allocation3 + $0x2e1] sm:$0x1] %vm21, 0.0
  %5359 = vst.msk [vmem:[#allocation3 + $0x2f9] sm:$0x1] %vm21, 0.0
  %5360 = vst.msk [vmem:[#allocation3 + $0x311] sm:$0x1] %vm21, 0.0
  %5361 = vst.msk [vmem:[#allocation3 + $0x329] sm:$0x1] %vm21, 0.0
  %5362 = vst.msk [vmem:[#allocation3 + $0x341] sm:$0x1] %vm21, 0.0
  %5363 = vst.msk [vmem:[#allocation3 + $0x359] sm:$0x1] %vm21, 0.0
  %5364 = vst.msk [vmem:[#allocation3 + $0x1] sm:$0xff] %vm169, %v5220
  %5365 = vst.msk [vmem:[#allocation3 + $0x9] sm:$0xff] %vm169, %v5221
  %5366 = vst.msk [vmem:[#allocation3 + $0x19] sm:$0xff] %vm169, %v5222
  %5367 = vst.msk [vmem:[#allocation3 + $0x21] sm:$0xff] %vm169, %v5223
  %5368 = vst.msk [vmem:[#allocation3 + $0x31] sm:$0xff] %vm169, %v5224
  %5369 = vst.msk [vmem:[#allocation3 + $0x39] sm:$0xff] %vm169, %v5225
  %5370 = vst.msk [vmem:[#allocation3 + $0x49] sm:$0xff] %vm169, %v5226
  %5371 = vst.msk [vmem:[#allocation3 + $0x51] sm:$0xff] %vm169, %v5227
  %5372 = vst.msk [vmem:[#allocation3 + $0x61] sm:$0xff] %vm169, %v5228
  %5373 = vst.msk [vmem:[#allocation3 + $0x69] sm:$0xff] %vm169, %v5229
  %5374 = vst.msk [vmem:[#allocation3 + $0x79] sm:$0xff] %vm169, %v5230
  %5375 = vst.msk [vmem:[#allocation3 + $0x81] sm:$0xff] %vm169, %v5231
  %5376 = vst.msk [vmem:[#allocation3 + $0x91] sm:$0xff] %vm169, %v5232
  %5377 = vst.msk [vmem:[#allocation3 + $0x99] sm:$0xff] %vm169, %v5233
  %5378 = vst.msk [vmem:[#allocation3 + $0xa9] sm:$0xff] %vm169, %v5234
  %5379 = vst.msk [vmem:[#allocation3 + $0xb1] sm:$0xff] %vm169, %v5235
  %5380 = vst.msk [vmem:[#allocation3 + $0xc1] sm:$0xff] %vm169, %v5236
  %5381 = vst.msk [vmem:[#allocation3 + $0xc9] sm:$0xff] %vm169, %v5237
  %5382 = vst.msk [vmem:[#allocation3 + $0xd9] sm:$0xff] %vm169, %v5238
  %5383 = vst.msk [vmem:[#allocation3 + $0xe1] sm:$0xff] %vm169, %v5239
  %5384 = vst.msk [vmem:[#allocation3 + $0xf1] sm:$0xff] %vm169, %v5240
  %5385 = vst.msk [vmem:[#allocation3 + $0xf9] sm:$0xff] %vm169, %v5241
  %5386 = vst.msk [vmem:[#allocation3 + $0x109] sm:$0xff] %vm169, %v5242
  %5387 = vst.msk [vmem:[#allocation3 + $0x111] sm:$0xff] %vm169, %v5243
  %5388 = vst.msk [vmem:[#allocation3 + $0x121] sm:$0xff] %vm169, %v5244
  %5389 = vst.msk [vmem:[#allocation3 + $0x129] sm:$0xff] %vm169, %v5245
  %5390 = vst.msk [vmem:[#allocation3 + $0x139] sm:$0xff] %vm169, %v5246
  %5391 = vst.msk [vmem:[#allocation3 + $0x141] sm:$0xff] %vm169, %v5247
  %5392 = vst.msk [vmem:[#allocation3 + $0x151] sm:$0xff] %vm169, %v5248
  %5393 = vst.msk [vmem:[#allocation3 + $0x159] sm:$0xff] %vm169, %v5249
  %5394 = vst.msk [vmem:[#allocation3 + $0x169] sm:$0xff] %vm169, %v5250
  %5395 = vst.msk [vmem:[#allocation3 + $0x171] sm:$0xff] %vm169, %v5251
  %5396 = vst.msk [vmem:[#allocation3 + $0x181] sm:$0xff] %vm169, %v5252
  %5397 = vst.msk [vmem:[#allocation3 + $0x189] sm:$0xff] %vm169, %v5253
  %5398 = vst.msk [vmem:[#allocation3 + $0x199] sm:$0xff] %vm169, %v5254
  %5399 = vst.msk [vmem:[#allocation3 + $0x1a1] sm:$0xff] %vm169, %v5255
  %5400 = vst.msk [vmem:[#allocation3 + $0x1b1] sm:$0xff] %vm169, %v5256
  %5401 = vst.msk [vmem:[#allocation3 + $0x1b9] sm:$0xff] %vm169, %v5257
  %5402 = vst.msk [vmem:[#allocation3 + $0x1c9] sm:$0xff] %vm169, %v5258
  %5403 = vst.msk [vmem:[#allocation3 + $0x1d1] sm:$0xff] %vm169, %v5259
  %5404 = vst.msk [vmem:[#allocation3 + $0x1e1] sm:$0xff] %vm169, %v5260
  %5405 = vst.msk [vmem:[#allocation3 + $0x1e9] sm:$0xff] %vm169, %v5261
  %5406 = vst.msk [vmem:[#allocation3 + $0x1f9] sm:$0xff] %vm169, %v5262
  %5407 = vst.msk [vmem:[#allocation3 + $0x201] sm:$0xff] %vm169, %v5263
  %5408 = vst.msk [vmem:[#allocation3 + $0x211] sm:$0xff] %vm169, %v5264
  %5409 = vst.msk [vmem:[#allocation3 + $0x219] sm:$0xff] %vm169, %v5265
  %5410 = vst.msk [vmem:[#allocation3 + $0x229] sm:$0xff] %vm169, %v5266
  %5411 = vst.msk [vmem:[#allocation3 + $0x231] sm:$0xff] %vm169, %v5267
  %5412 = vst.msk [vmem:[#allocation3 + $0x241] sm:$0xff] %vm169, %v5268
  %5413 = vst.msk [vmem:[#allocation3 + $0x249] sm:$0xff] %vm169, %v5269
  %5414 = vst.msk [vmem:[#allocation3 + $0x259] sm:$0xff] %vm169, %v5270
  %5415 = vst.msk [vmem:[#allocation3 + $0x261] sm:$0xff] %vm169, %v5271
  %5416 = vst.msk [vmem:[#allocation3 + $0x271] sm:$0xff] %vm169, %v5272
  %5417 = vst.msk [vmem:[#allocation3 + $0x279] sm:$0xff] %vm169, %v5273
  %5418 = vst.msk [vmem:[#allocation3 + $0x289] sm:$0xff] %vm169, %v5274
  %5419 = vst.msk [vmem:[#allocation3 + $0x291] sm:$0xff] %vm169, %v5275
  %5420 = vst.msk [vmem:[#allocation3 + $0x2a1] sm:$0xff] %vm169, %v5276
  %5421 = vst.msk [vmem:[#allocation3 + $0x2a9] sm:$0xff] %vm169, %v5277
  %5422 = vst.msk [vmem:[#allocation3 + $0x2b9] sm:$0xff] %vm169, %v5278
  %5423 = vst.msk [vmem:[#allocation3 + $0x2c1] sm:$0xff] %vm169, %v5279
  %5424 = vst.msk [vmem:[#allocation3 + $0x2d1] sm:$0xff] %vm169, %v5280
  %5425 = vst.msk [vmem:[#allocation3 + $0x2d9] sm:$0xff] %vm169, %v5281
  %5426 = vst.msk [vmem:[#allocation3 + $0x2e9] sm:$0xff] %vm169, %v5282
  %5427 = vst.msk [vmem:[#allocation3 + $0x2f1] sm:$0xff] %vm169, %v5283
  %5428 = vst.msk [vmem:[#allocation3 + $0x301] sm:$0xff] %vm169, %v5284
  %5429 = vst.msk [vmem:[#allocation3 + $0x309] sm:$0xff] %vm169, %v5285
  %5430 = vst.msk [vmem:[#allocation3 + $0x319] sm:$0xff] %vm169, %v5286
  %5431 = vst.msk [vmem:[#allocation3 + $0x321] sm:$0xff] %vm169, %v5287
  %5432 = vst.msk [vmem:[#allocation3 + $0x331] sm:$0xff] %vm169, %v5288
  %5433 = vst.msk [vmem:[#allocation3 + $0x339] sm:$0xff] %vm169, %v5289
  %5434 = vst.msk [vmem:[#allocation3 + $0x349] sm:$0xff] %vm169, %v5290
  %5435 = vst.msk [vmem:[#allocation3 + $0x351] sm:$0xff] %vm169, %v5291
  // Predicated region
  $region38: #{tpu_custom_call.1} parent=0 // pred_check
    %p5436 = pneg %p259
  $region39: #{tpu_custom_call.1} parent=0 // pred_check_branch
    %5438 = sbr.rel (%p5436) target = $region41
  $region40: #{tpu_custom_call.1} parent=0 // pred_region
    %5439 = vst.msk [vmem:[#allocation3] sm:$0xff] %vm169, 0.0
    %5440 = vst.msk [vmem:[#allocation3 + $0x8] sm:$0xff] %vm169, 0.0
    %vm5441 = vcmask 25600
    %5442 = vst.msk [vmem:[#allocation3 + $0x10] sm:$0x3] %vm5441, 0.0
    %5443 = vst.msk [vmem:[#allocation3 + $0x1b0] sm:$0xff] %vm169, 0.0
    %5444 = vst.msk [vmem:[#allocation3 + $0x1b8] sm:$0xff] %vm169, 0.0
    %5445 = vst.msk [vmem:[#allocation3 + $0x1c0] sm:$0x3] %vm5441, 0.0
    %s5446 = scalar_lea.vmem [#allocation3], 408
    %5447 = vst.msk [vmem:[%s5446] sm:$0xff] %vm169, 0.0
    %5448 = vst.msk [vmem:[%s5446 + $0x8] sm:$0xff] %vm169, 0.0
    %5449 = vst.msk [vmem:[%s5446 + $0x10] sm:$0x3] %vm5441, 0.0
    %5450 = vst.msk [vmem:[%s5446 + $0x1b0] sm:$0xff] %vm169, 0.0
    %5451 = vst.msk [vmem:[%s5446 + $0x1b8] sm:$0xff] %vm169, 0.0
    %5452 = vst.msk [vmem:[%s5446 + $0x1c0] sm:$0x3] %vm5441, 0.0
  $region41: #{tpu_custom_call.1} parent=0 // pred_fallthru
    _
  %v5453 = vld [vmem:[#allocation3] sm:$0xff]
  %v5454 = vld [vmem:[#allocation3 + $0x8] sm:$0xff]
  %v5455 = vld [vmem:[#allocation3 + $0x18] sm:$0xff]
  %v5456 = vld [vmem:[#allocation3 + $0x20] sm:$0xff]
  %v5457 = vld [vmem:[#allocation3 + $0x30] sm:$0xff]
  %v5458 = vld [vmem:[#allocation3 + $0x38] sm:$0xff]
  %v5459 = vld [vmem:[#allocation3 + $0x48] sm:$0xff]
  %v5460 = vld [vmem:[#allocation3 + $0x50] sm:$0xff]
  %v5461 = vld [vmem:[#allocation3 + $0x60] sm:$0xff]
  %v5462 = vld [vmem:[#allocation3 + $0x68] sm:$0xff]
  %v5463 = vld [vmem:[#allocation3 + $0x78] sm:$0xff]
  %v5464 = vld [vmem:[#allocation3 + $0x80] sm:$0xff]
  %v5465 = vld [vmem:[#allocation3 + $0x90] sm:$0xff]
  %v5466 = vld [vmem:[#allocation3 + $0x98] sm:$0xff]
  %v5467 = vld [vmem:[#allocation3 + $0xa8] sm:$0xff]
  %v5468 = vld [vmem:[#allocation3 + $0xb0] sm:$0xff]
  %v5469 = vld [vmem:[#allocation3 + $0xc0] sm:$0xff]
  %v5470 = vld [vmem:[#allocation3 + $0xc8] sm:$0xff]
  %v5471 = vld [vmem:[#allocation3 + $0xd8] sm:$0xff]
  %v5472 = vld [vmem:[#allocation3 + $0xe0] sm:$0xff]
  %v5473 = vld [vmem:[#allocation3 + $0xf0] sm:$0xff]
  %v5474 = vld [vmem:[#allocation3 + $0xf8] sm:$0xff]
  %v5475 = vld [vmem:[#allocation3 + $0x108] sm:$0xff]
  %v5476 = vld [vmem:[#allocation3 + $0x110] sm:$0xff]
  %v5477 = vld [vmem:[#allocation3 + $0x120] sm:$0xff]
  %v5478 = vld [vmem:[#allocation3 + $0x128] sm:$0xff]
  %v5479 = vld [vmem:[#allocation3 + $0x138] sm:$0xff]
  %v5480 = vld [vmem:[#allocation3 + $0x140] sm:$0xff]
  %v5481 = vld [vmem:[#allocation3 + $0x150] sm:$0xff]
  %v5482 = vld [vmem:[#allocation3 + $0x158] sm:$0xff]
  %v5483 = vld [vmem:[#allocation3 + $0x168] sm:$0xff]
  %v5484 = vld [vmem:[#allocation3 + $0x170] sm:$0xff]
  %v5485 = vld [vmem:[#allocation3 + $0x1b0] sm:$0xff]
  %v5486 = vld [vmem:[#allocation3 + $0x1b8] sm:$0xff]
  %v5487 = vld [vmem:[#allocation3 + $0x1c8] sm:$0xff]
  %v5488 = vld [vmem:[#allocation3 + $0x1d0] sm:$0xff]
  %v5489 = vld [vmem:[#allocation3 + $0x1e0] sm:$0xff]
  %v5490 = vld [vmem:[#allocation3 + $0x1e8] sm:$0xff]
  %v5491 = vld [vmem:[#allocation3 + $0x1f8] sm:$0xff]
  %v5492 = vld [vmem:[#allocation3 + $0x200] sm:$0xff]
  %v5493 = vld [vmem:[#allocation3 + $0x210] sm:$0xff]
  %v5494 = vld [vmem:[#allocation3 + $0x218] sm:$0xff]
  %v5495 = vld [vmem:[#allocation3 + $0x228] sm:$0xff]
  %v5496 = vld [vmem:[#allocation3 + $0x230] sm:$0xff]
  %v5497 = vld [vmem:[#allocation3 + $0x240] sm:$0xff]
  %v5498 = vld [vmem:[#allocation3 + $0x248] sm:$0xff]
  %v5499 = vld [vmem:[#allocation3 + $0x258] sm:$0xff]
  %v5500 = vld [vmem:[#allocation3 + $0x260] sm:$0xff]
  %v5501 = vld [vmem:[#allocation3 + $0x270] sm:$0xff]
  %v5502 = vld [vmem:[#allocation3 + $0x278] sm:$0xff]
  %v5503 = vld [vmem:[#allocation3 + $0x288] sm:$0xff]
  %v5504 = vld [vmem:[#allocation3 + $0x290] sm:$0xff]
  %v5505 = vld [vmem:[#allocation3 + $0x2a0] sm:$0xff]
  %v5506 = vld [vmem:[#allocation3 + $0x2a8] sm:$0xff]
  %v5507 = vld [vmem:[#allocation3 + $0x2b8] sm:$0xff]
  %v5508 = vld [vmem:[#allocation3 + $0x2c0] sm:$0xff]
  %v5509 = vld [vmem:[#allocation3 + $0x2d0] sm:$0xff]
  %v5510 = vld [vmem:[#allocation3 + $0x2d8] sm:$0xff]
  %v5511 = vld [vmem:[#allocation3 + $0x2e8] sm:$0xff]
  %v5512 = vld [vmem:[#allocation3 + $0x2f0] sm:$0xff]
  %v5513 = vld [vmem:[#allocation3 + $0x300] sm:$0xff]
  %v5514 = vld [vmem:[#allocation3 + $0x308] sm:$0xff]
  %v5515 = vld [vmem:[#allocation3 + $0x318] sm:$0xff]
  %v5516 = vld [vmem:[#allocation3 + $0x320] sm:$0xff]
  %v5517 = vld [vmem:[#allocation3 + $0x1] sm:$0xff]
  %v5518 = vld [vmem:[#allocation3 + $0x9] sm:$0xff]
  %v5519 = vld [vmem:[#allocation3 + $0x19] sm:$0xff]
  %v5520 = vld [vmem:[#allocation3 + $0x21] sm:$0xff]
  %v5521 = vld [vmem:[#allocation3 + $0x31] sm:$0xff]
  %v5522 = vld [vmem:[#allocation3 + $0x39] sm:$0xff]
  %v5523 = vld [vmem:[#allocation3 + $0x49] sm:$0xff]
  %v5524 = vld [vmem:[#allocation3 + $0x51] sm:$0xff]
  %v5525 = vld [vmem:[#allocation3 + $0x61] sm:$0xff]
  %v5526 = vld [vmem:[#allocation3 + $0x69] sm:$0xff]
  %v5527 = vld [vmem:[#allocation3 + $0x79] sm:$0xff]
  %v5528 = vld [vmem:[#allocation3 + $0x81] sm:$0xff]
  %v5529 = vld [vmem:[#allocation3 + $0x91] sm:$0xff]
  %v5530 = vld [vmem:[#allocation3 + $0x99] sm:$0xff]
  %v5531 = vld [vmem:[#allocation3 + $0xa9] sm:$0xff]
  %v5532 = vld [vmem:[#allocation3 + $0xb1] sm:$0xff]
  %v5533 = vld [vmem:[#allocation3 + $0xc1] sm:$0xff]
  %v5534 = vld [vmem:[#allocation3 + $0xc9] sm:$0xff]
  %v5535 = vld [vmem:[#allocation3 + $0xd9] sm:$0xff]
  %v5536 = vld [vmem:[#allocation3 + $0xe1] sm:$0xff]
  %v5537 = vld [vmem:[#allocation3 + $0xf1] sm:$0xff]
  %v5538 = vld [vmem:[#allocation3 + $0xf9] sm:$0xff]
  %v5539 = vld [vmem:[#allocation3 + $0x109] sm:$0xff]
  %v5540 = vld [vmem:[#allocation3 + $0x111] sm:$0xff]
  %v5541 = vld [vmem:[#allocation3 + $0x121] sm:$0xff]
  %v5542 = vld [vmem:[#allocation3 + $0x129] sm:$0xff]
  %v5543 = vld [vmem:[#allocation3 + $0x139] sm:$0xff]
  %v5544 = vld [vmem:[#allocation3 + $0x141] sm:$0xff]
  %v5545 = vld [vmem:[#allocation3 + $0x151] sm:$0xff]
  %v5546 = vld [vmem:[#allocation3 + $0x159] sm:$0xff]
  %v5547 = vld [vmem:[#allocation3 + $0x169] sm:$0xff]
  %v5548 = vld [vmem:[#allocation3 + $0x171] sm:$0xff]
  %v5549 = vld [vmem:[#allocation3 + $0x1b1] sm:$0xff]
  %v5550 = vld [vmem:[#allocation3 + $0x1b9] sm:$0xff]
  %v5551 = vld [vmem:[#allocation3 + $0x1c9] sm:$0xff]
  %v5552 = vld [vmem:[#allocation3 + $0x1d1] sm:$0xff]
  %v5553 = vld [vmem:[#allocation3 + $0x1e1] sm:$0xff]
  %v5554 = vld [vmem:[#allocation3 + $0x1e9] sm:$0xff]
  %v5555 = vld [vmem:[#allocation3 + $0x1f9] sm:$0xff]
  %v5556 = vld [vmem:[#allocation3 + $0x201] sm:$0xff]
  %v5557 = vld [vmem:[#allocation3 + $0x211] sm:$0xff]
  %v5558 = vld [vmem:[#allocation3 + $0x219] sm:$0xff]
  %v5559 = vld [vmem:[#allocation3 + $0x229] sm:$0xff]
  %v5560 = vld [vmem:[#allocation3 + $0x231] sm:$0xff]
  %v5561 = vld [vmem:[#allocation3 + $0x241] sm:$0xff]
  %v5562 = vld [vmem:[#allocation3 + $0x249] sm:$0xff]
  %v5563 = vld [vmem:[#allocation3 + $0x259] sm:$0xff]
  %v5564 = vld [vmem:[#allocation3 + $0x261] sm:$0xff]
  %v5565 = vld [vmem:[#allocation3 + $0x271] sm:$0xff]
  %v5566 = vld [vmem:[#allocation3 + $0x279] sm:$0xff]
  %v5567 = vld [vmem:[#allocation3 + $0x289] sm:$0xff]
  %v5568 = vld [vmem:[#allocation3 + $0x291] sm:$0xff]
  %v5569 = vld [vmem:[#allocation3 + $0x2a1] sm:$0xff]
  %v5570 = vld [vmem:[#allocation3 + $0x2a9] sm:$0xff]
  %v5571 = vld [vmem:[#allocation3 + $0x2b9] sm:$0xff]
  %v5572 = vld [vmem:[#allocation3 + $0x2c1] sm:$0xff]
  %v5573 = vld [vmem:[#allocation3 + $0x2d1] sm:$0xff]
  %v5574 = vld [vmem:[#allocation3 + $0x2d9] sm:$0xff]
  %v5575 = vld [vmem:[#allocation3 + $0x2e9] sm:$0xff]
  %v5576 = vld [vmem:[#allocation3 + $0x2f1] sm:$0xff]
  %v5577 = vld [vmem:[#allocation3 + $0x301] sm:$0xff]
  %v5578 = vld [vmem:[#allocation3 + $0x309] sm:$0xff]
  %v5579 = vld [vmem:[#allocation3 + $0x319] sm:$0xff]
  %v5580 = vld [vmem:[#allocation3 + $0x321] sm:$0xff]
  %v5581 = vld [vmem:[#allocation3 + $0x2] sm:$0xff]
  %v5582 = vld [vmem:[#allocation3 + $0xa] sm:$0xff]
  %v5583 = vld [vmem:[#allocation3 + $0x1a] sm:$0xff]
  %v5584 = vld [vmem:[#allocation3 + $0x22] sm:$0xff]
  %v5585 = vld [vmem:[#allocation3 + $0x32] sm:$0xff]
  %v5586 = vld [vmem:[#allocation3 + $0x3a] sm:$0xff]
  %v5587 = vld [vmem:[#allocation3 + $0x4a] sm:$0xff]
  %v5588 = vld [vmem:[#allocation3 + $0x52] sm:$0xff]
  %v5589 = vld [vmem:[#allocation3 + $0x62] sm:$0xff]
  %v5590 = vld [vmem:[#allocation3 + $0x6a] sm:$0xff]
  %v5591 = vld [vmem:[#allocation3 + $0x7a] sm:$0xff]
  %v5592 = vld [vmem:[#allocation3 + $0x82] sm:$0xff]
  %v5593 = vld [vmem:[#allocation3 + $0x92] sm:$0xff]
  %v5594 = vld [vmem:[#allocation3 + $0x9a] sm:$0xff]
  %v5595 = vld [vmem:[#allocation3 + $0xaa] sm:$0xff]
  %v5596 = vld [vmem:[#allocation3 + $0xb2] sm:$0xff]
  %v5597 = vld [vmem:[#allocation3 + $0xc2] sm:$0xff]
  %v5598 = vld [vmem:[#allocation3 + $0xca] sm:$0xff]
  %v5599 = vld [vmem:[#allocation3 + $0xda] sm:$0xff]
  %v5600 = vld [vmem:[#allocation3 + $0xe2] sm:$0xff]
  %v5601 = vld [vmem:[#allocation3 + $0xf2] sm:$0xff]
  %v5602 = vld [vmem:[#allocation3 + $0xfa] sm:$0xff]
  %v5603 = vld [vmem:[#allocation3 + $0x10a] sm:$0xff]
  %v5604 = vld [vmem:[#allocation3 + $0x112] sm:$0xff]
  %v5605 = vld [vmem:[#allocation3 + $0x122] sm:$0xff]
  %v5606 = vld [vmem:[#allocation3 + $0x12a] sm:$0xff]
  %v5607 = vld [vmem:[#allocation3 + $0x13a] sm:$0xff]
  %v5608 = vld [vmem:[#allocation3 + $0x142] sm:$0xff]
  %v5609 = vld [vmem:[#allocation3 + $0x152] sm:$0xff]
  %v5610 = vld [vmem:[#allocation3 + $0x15a] sm:$0xff]
  %v5611 = vld [vmem:[#allocation3 + $0x16a] sm:$0xff]
  %v5612 = vld [vmem:[#allocation3 + $0x172] sm:$0xff]
  %v5613 = vld [vmem:[#allocation3 + $0x1b2] sm:$0xff]
  %v5614 = vld [vmem:[#allocation3 + $0x1ba] sm:$0xff]
  %v5615 = vld [vmem:[#allocation3 + $0x1ca] sm:$0xff]
  %v5616 = vld [vmem:[#allocation3 + $0x1d2] sm:$0xff]
  %v5617 = vld [vmem:[#allocation3 + $0x1e2] sm:$0xff]
  %v5618 = vld [vmem:[#allocation3 + $0x1ea] sm:$0xff]
  %v5619 = vld [vmem:[#allocation3 + $0x1fa] sm:$0xff]
  %v5620 = vld [vmem:[#allocation3 + $0x202] sm:$0xff]
  %v5621 = vld [vmem:[#allocation3 + $0x212] sm:$0xff]
  %v5622 = vld [vmem:[#allocation3 + $0x21a] sm:$0xff]
  %v5623 = vld [vmem:[#allocation3 + $0x22a] sm:$0xff]
  %v5624 = vld [vmem:[#allocation3 + $0x232] sm:$0xff]
  %v5625 = vld [vmem:[#allocation3 + $0x242] sm:$0xff]
  %v5626 = vld [vmem:[#allocation3 + $0x24a] sm:$0xff]
  %v5627 = vld [vmem:[#allocation3 + $0x25a] sm:$0xff]
  %v5628 = vld [vmem:[#allocation3 + $0x262] sm:$0xff]
  %v5629 = vld [vmem:[#allocation3 + $0x272] sm:$0xff]
  %v5630 = vld [vmem:[#allocation3 + $0x27a] sm:$0xff]
  %v5631 = vld [vmem:[#allocation3 + $0x28a] sm:$0xff]
  %v5632 = vld [vmem:[#allocation3 + $0x292] sm:$0xff]
  %v5633 = vld [vmem:[#allocation3 + $0x2a2] sm:$0xff]
  %v5634 = vld [vmem:[#allocation3 + $0x2aa] sm:$0xff]
  %v5635 = vld [vmem:[#allocation3 + $0x2ba] sm:$0xff]
  %v5636 = vld [vmem:[#allocation3 + $0x2c2] sm:$0xff]
  %v5637 = vld [vmem:[#allocation3 + $0x2d2] sm:$0xff]
  %v5638 = vld [vmem:[#allocation3 + $0x2da] sm:$0xff]
  %v5639 = vld [vmem:[#allocation3 + $0x2ea] sm:$0xff]
  %v5640 = vld [vmem:[#allocation3 + $0x2f2] sm:$0xff]
  %v5641 = vld [vmem:[#allocation3 + $0x302] sm:$0xff]
  %v5642 = vld [vmem:[#allocation3 + $0x30a] sm:$0xff]
  %v5643 = vld [vmem:[#allocation3 + $0x31a] sm:$0xff]
  %v5644 = vld [vmem:[#allocation3 + $0x322] sm:$0xff]
  %5709 = vrot.lane.b32.xlu0 %v5517, 4
  %v5710 = vpop.permute.xlu0 %5709
  %5711 = vrot.lane.b32.xlu0 %v5518, 4
  %v5712 = vpop.permute.xlu0 %5711
  %5713 = vrot.lane.b32.xlu0 %v5519, 4
  %v5714 = vpop.permute.xlu0 %5713
  %5715 = vrot.lane.b32.xlu0 %v5520, 4
  %v5716 = vpop.permute.xlu0 %5715
  %5717 = vrot.lane.b32.xlu0 %v5521, 4
  %v5718 = vpop.permute.xlu0 %5717
  %5719 = vrot.lane.b32.xlu0 %v5522, 4
  %v5720 = vpop.permute.xlu0 %5719
  %5721 = vrot.lane.b32.xlu0 %v5523, 4
  %v5722 = vpop.permute.xlu0 %5721
  %5723 = vrot.lane.b32.xlu0 %v5524, 4
  %v5724 = vpop.permute.xlu0 %5723
  %5725 = vrot.lane.b32.xlu0 %v5525, 4
  %v5726 = vpop.permute.xlu0 %5725
  %5727 = vrot.lane.b32.xlu0 %v5526, 4
  %v5728 = vpop.permute.xlu0 %5727
  %5729 = vrot.lane.b32.xlu0 %v5527, 4
  %v5730 = vpop.permute.xlu0 %5729
  %5731 = vrot.lane.b32.xlu0 %v5528, 4
  %v5732 = vpop.permute.xlu0 %5731
  %5733 = vrot.lane.b32.xlu0 %v5529, 4
  %v5734 = vpop.permute.xlu0 %5733
  %5735 = vrot.lane.b32.xlu0 %v5530, 4
  %v5736 = vpop.permute.xlu0 %5735
  %5737 = vrot.lane.b32.xlu0 %v5531, 4
  %v5738 = vpop.permute.xlu0 %5737
  %5739 = vrot.lane.b32.xlu0 %v5532, 4
  %v5740 = vpop.permute.xlu0 %5739
  %5741 = vrot.lane.b32.xlu0 %v5533, 4
  %v5742 = vpop.permute.xlu0 %5741
  %5743 = vrot.lane.b32.xlu0 %v5534, 4
  %v5744 = vpop.permute.xlu0 %5743
  %5745 = vrot.lane.b32.xlu0 %v5535, 4
  %v5746 = vpop.permute.xlu0 %5745
  %5747 = vrot.lane.b32.xlu0 %v5536, 4
  %v5748 = vpop.permute.xlu0 %5747
  %5749 = vrot.lane.b32.xlu0 %v5537, 4
  %v5750 = vpop.permute.xlu0 %5749
  %5751 = vrot.lane.b32.xlu0 %v5538, 4
  %v5752 = vpop.permute.xlu0 %5751
  %5753 = vrot.lane.b32.xlu0 %v5539, 4
  %v5754 = vpop.permute.xlu0 %5753
  %5755 = vrot.lane.b32.xlu0 %v5540, 4
  %v5756 = vpop.permute.xlu0 %5755
  %5757 = vrot.lane.b32.xlu0 %v5541, 4
  %v5758 = vpop.permute.xlu0 %5757
  %5759 = vrot.lane.b32.xlu0 %v5542, 4
  %v5760 = vpop.permute.xlu0 %5759
  %5761 = vrot.lane.b32.xlu0 %v5543, 4
  %v5762 = vpop.permute.xlu0 %5761
  %5763 = vrot.lane.b32.xlu0 %v5544, 4
  %v5764 = vpop.permute.xlu0 %5763
  %5765 = vrot.lane.b32.xlu0 %v5545, 4
  %v5766 = vpop.permute.xlu0 %5765
  %5767 = vrot.lane.b32.xlu0 %v5546, 4
  %v5768 = vpop.permute.xlu0 %5767
  %5769 = vrot.lane.b32.xlu0 %v5547, 4
  %v5770 = vpop.permute.xlu0 %5769
  %5771 = vrot.lane.b32.xlu0 %v5548, 4
  %v5772 = vpop.permute.xlu0 %5771
  %5773 = vrot.lane.b32.xlu0 %v5549, 4
  %v5774 = vpop.permute.xlu0 %5773
  %5775 = vrot.lane.b32.xlu0 %v5550, 4
  %v5776 = vpop.permute.xlu0 %5775
  %5777 = vrot.lane.b32.xlu0 %v5551, 4
  %v5778 = vpop.permute.xlu0 %5777
  %5779 = vrot.lane.b32.xlu0 %v5552, 4
  %v5780 = vpop.permute.xlu0 %5779
  %5781 = vrot.lane.b32.xlu0 %v5553, 4
  %v5782 = vpop.permute.xlu0 %5781
  %5783 = vrot.lane.b32.xlu0 %v5554, 4
  %v5784 = vpop.permute.xlu0 %5783
  %5785 = vrot.lane.b32.xlu0 %v5555, 4
  %v5786 = vpop.permute.xlu0 %5785
  %5787 = vrot.lane.b32.xlu0 %v5556, 4
  %v5788 = vpop.permute.xlu0 %5787
  %5789 = vrot.lane.b32.xlu0 %v5557, 4
  %v5790 = vpop.permute.xlu0 %5789
  %5791 = vrot.lane.b32.xlu0 %v5558, 4
  %v5792 = vpop.permute.xlu0 %5791
  %5793 = vrot.lane.b32.xlu0 %v5559, 4
  %v5794 = vpop.permute.xlu0 %5793
  %5795 = vrot.lane.b32.xlu0 %v5560, 4
  %v5796 = vpop.permute.xlu0 %5795
  %5797 = vrot.lane.b32.xlu0 %v5561, 4
  %v5798 = vpop.permute.xlu0 %5797
  %5799 = vrot.lane.b32.xlu0 %v5562, 4
  %v5800 = vpop.permute.xlu0 %5799
  %5801 = vrot.lane.b32.xlu0 %v5563, 4
  %v5802 = vpop.permute.xlu0 %5801
  %5803 = vrot.lane.b32.xlu0 %v5564, 4
  %v5804 = vpop.permute.xlu0 %5803
  %5805 = vrot.lane.b32.xlu0 %v5565, 4
  %v5806 = vpop.permute.xlu0 %5805
  %5807 = vrot.lane.b32.xlu0 %v5566, 4
  %v5808 = vpop.permute.xlu0 %5807
  %5809 = vrot.lane.b32.xlu0 %v5567, 4
  %v5810 = vpop.permute.xlu0 %5809
  %5811 = vrot.lane.b32.xlu0 %v5568, 4
  %v5812 = vpop.permute.xlu0 %5811
  %5813 = vrot.lane.b32.xlu0 %v5569, 4
  %v5814 = vpop.permute.xlu0 %5813
  %5815 = vrot.lane.b32.xlu0 %v5570, 4
  %v5816 = vpop.permute.xlu0 %5815
  %5817 = vrot.lane.b32.xlu0 %v5571, 4
  %v5818 = vpop.permute.xlu0 %5817
  %5819 = vrot.lane.b32.xlu0 %v5572, 4
  %v5820 = vpop.permute.xlu0 %5819
  %5821 = vrot.lane.b32.xlu0 %v5573, 4
  %v5822 = vpop.permute.xlu0 %5821
  %5823 = vrot.lane.b32.xlu0 %v5574, 4
  %v5824 = vpop.permute.xlu0 %5823
  %5825 = vrot.lane.b32.xlu0 %v5575, 4
  %v5826 = vpop.permute.xlu0 %5825
  %5827 = vrot.lane.b32.xlu0 %v5576, 4
  %v5828 = vpop.permute.xlu0 %5827
  %5829 = vrot.lane.b32.xlu0 %v5577, 4
  %v5830 = vpop.permute.xlu0 %5829
  %5831 = vrot.lane.b32.xlu0 %v5578, 4
  %v5832 = vpop.permute.xlu0 %5831
  %5833 = vrot.lane.b32.xlu0 %v5579, 4
  %v5834 = vpop.permute.xlu0 %5833
  %5835 = vrot.lane.b32.xlu0 %v5580, 4
  %v5836 = vpop.permute.xlu0 %5835
  %5965 = vrot.lane.b32.xlu0 %v5581, 8
  %v5966 = vpop.permute.xlu0 %5965
  %5967 = vrot.lane.b32.xlu0 %v5582, 8
  %v5968 = vpop.permute.xlu0 %5967
  %5969 = vrot.lane.b32.xlu0 %v5583, 8
  %v5970 = vpop.permute.xlu0 %5969
  %5971 = vrot.lane.b32.xlu0 %v5584, 8
  %v5972 = vpop.permute.xlu0 %5971
  %5973 = vrot.lane.b32.xlu0 %v5585, 8
  %v5974 = vpop.permute.xlu0 %5973
  %5975 = vrot.lane.b32.xlu0 %v5586, 8
  %v5976 = vpop.permute.xlu0 %5975
  %5977 = vrot.lane.b32.xlu0 %v5587, 8
  %v5978 = vpop.permute.xlu0 %5977
  %5979 = vrot.lane.b32.xlu0 %v5588, 8
  %v5980 = vpop.permute.xlu0 %5979
  %5981 = vrot.lane.b32.xlu0 %v5589, 8
  %v5982 = vpop.permute.xlu0 %5981
  %5983 = vrot.lane.b32.xlu0 %v5590, 8
  %v5984 = vpop.permute.xlu0 %5983
  %5985 = vrot.lane.b32.xlu0 %v5591, 8
  %v5986 = vpop.permute.xlu0 %5985
  %5987 = vrot.lane.b32.xlu0 %v5592, 8
  %v5988 = vpop.permute.xlu0 %5987
  %5989 = vrot.lane.b32.xlu0 %v5593, 8
  %v5990 = vpop.permute.xlu0 %5989
  %5991 = vrot.lane.b32.xlu0 %v5594, 8
  %v5992 = vpop.permute.xlu0 %5991
  %5993 = vrot.lane.b32.xlu0 %v5595, 8
  %v5994 = vpop.permute.xlu0 %5993
  %5995 = vrot.lane.b32.xlu0 %v5596, 8
  %v5996 = vpop.permute.xlu0 %5995
  %5997 = vrot.lane.b32.xlu0 %v5597, 8
  %v5998 = vpop.permute.xlu0 %5997
  %5999 = vrot.lane.b32.xlu0 %v5598, 8
  %v6000 = vpop.permute.xlu0 %5999
  %6001 = vrot.lane.b32.xlu0 %v5599, 8
  %v6002 = vpop.permute.xlu0 %6001
  %6003 = vrot.lane.b32.xlu0 %v5600, 8
  %v6004 = vpop.permute.xlu0 %6003
  %6005 = vrot.lane.b32.xlu0 %v5601, 8
  %v6006 = vpop.permute.xlu0 %6005
  %6007 = vrot.lane.b32.xlu0 %v5602, 8
  %v6008 = vpop.permute.xlu0 %6007
  %6009 = vrot.lane.b32.xlu0 %v5603, 8
  %v6010 = vpop.permute.xlu0 %6009
  %6011 = vrot.lane.b32.xlu0 %v5604, 8
  %v6012 = vpop.permute.xlu0 %6011
  %6013 = vrot.lane.b32.xlu0 %v5605, 8
  %v6014 = vpop.permute.xlu0 %6013
  %6015 = vrot.lane.b32.xlu0 %v5606, 8
  %v6016 = vpop.permute.xlu0 %6015
  %6017 = vrot.lane.b32.xlu0 %v5607, 8
  %v6018 = vpop.permute.xlu0 %6017
  %6019 = vrot.lane.b32.xlu0 %v5608, 8
  %v6020 = vpop.permute.xlu0 %6019
  %6021 = vrot.lane.b32.xlu0 %v5609, 8
  %v6022 = vpop.permute.xlu0 %6021
  %6023 = vrot.lane.b32.xlu0 %v5610, 8
  %v6024 = vpop.permute.xlu0 %6023
  %6025 = vrot.lane.b32.xlu0 %v5611, 8
  %v6026 = vpop.permute.xlu0 %6025
  %6027 = vrot.lane.b32.xlu0 %v5612, 8
  %v6028 = vpop.permute.xlu0 %6027
  %6029 = vrot.lane.b32.xlu0 %v5613, 8
  %v6030 = vpop.permute.xlu0 %6029
  %6031 = vrot.lane.b32.xlu0 %v5614, 8
  %v6032 = vpop.permute.xlu0 %6031
  %6033 = vrot.lane.b32.xlu0 %v5615, 8
  %v6034 = vpop.permute.xlu0 %6033
  %6035 = vrot.lane.b32.xlu0 %v5616, 8
  %v6036 = vpop.permute.xlu0 %6035
  %6037 = vrot.lane.b32.xlu0 %v5617, 8
  %v6038 = vpop.permute.xlu0 %6037
  %6039 = vrot.lane.b32.xlu0 %v5618, 8
  %v6040 = vpop.permute.xlu0 %6039
  %6041 = vrot.lane.b32.xlu0 %v5619, 8
  %v6042 = vpop.permute.xlu0 %6041
  %6043 = vrot.lane.b32.xlu0 %v5620, 8
  %v6044 = vpop.permute.xlu0 %6043
  %6045 = vrot.lane.b32.xlu0 %v5621, 8
  %v6046 = vpop.permute.xlu0 %6045
  %6047 = vrot.lane.b32.xlu0 %v5622, 8
  %v6048 = vpop.permute.xlu0 %6047
  %6049 = vrot.lane.b32.xlu0 %v5623, 8
  %v6050 = vpop.permute.xlu0 %6049
  %6051 = vrot.lane.b32.xlu0 %v5624, 8
  %v6052 = vpop.permute.xlu0 %6051
  %6053 = vrot.lane.b32.xlu0 %v5625, 8
  %v6054 = vpop.permute.xlu0 %6053
  %6055 = vrot.lane.b32.xlu0 %v5626, 8
  %v6056 = vpop.permute.xlu0 %6055
  %6057 = vrot.lane.b32.xlu0 %v5627, 8
  %v6058 = vpop.permute.xlu0 %6057
  %6059 = vrot.lane.b32.xlu0 %v5628, 8
  %v6060 = vpop.permute.xlu0 %6059
  %6061 = vrot.lane.b32.xlu0 %v5629, 8
  %v6062 = vpop.permute.xlu0 %6061
  %6063 = vrot.lane.b32.xlu0 %v5630, 8
  %v6064 = vpop.permute.xlu0 %6063
  %6065 = vrot.lane.b32.xlu0 %v5631, 8
  %v6066 = vpop.permute.xlu0 %6065
  %6067 = vrot.lane.b32.xlu0 %v5632, 8
  %v6068 = vpop.permute.xlu0 %6067
  %6069 = vrot.lane.b32.xlu0 %v5633, 8
  %v6070 = vpop.permute.xlu0 %6069
  %6071 = vrot.lane.b32.xlu0 %v5634, 8
  %v6072 = vpop.permute.xlu0 %6071
  %6073 = vrot.lane.b32.xlu0 %v5635, 8
  %v6074 = vpop.permute.xlu0 %6073
  %6075 = vrot.lane.b32.xlu0 %v5636, 8
  %v6076 = vpop.permute.xlu0 %6075
  %6077 = vrot.lane.b32.xlu0 %v5637, 8
  %v6078 = vpop.permute.xlu0 %6077
  %6079 = vrot.lane.b32.xlu0 %v5638, 8
  %v6080 = vpop.permute.xlu0 %6079
  %6081 = vrot.lane.b32.xlu0 %v5639, 8
  %v6082 = vpop.permute.xlu0 %6081
  %6083 = vrot.lane.b32.xlu0 %v5640, 8
  %v6084 = vpop.permute.xlu0 %6083
  %6085 = vrot.lane.b32.xlu0 %v5641, 8
  %v6086 = vpop.permute.xlu0 %6085
  %6087 = vrot.lane.b32.xlu0 %v5642, 8
  %v6088 = vpop.permute.xlu0 %6087
  %6089 = vrot.lane.b32.xlu0 %v5643, 8
  %v6090 = vpop.permute.xlu0 %6089
  %6091 = vrot.lane.b32.xlu0 %v5644, 8
  %v6092 = vpop.permute.xlu0 %6091
  %v6157 = vsel %vm169, %v5453, %v5710
  %v6158 = vsel %vm169, %v5454, %v5712
  %v6159 = vsel %vm169, %v5455, %v5714
  %v6160 = vsel %vm169, %v5456, %v5716
  %v6161 = vsel %vm169, %v5457, %v5718
  %v6162 = vsel %vm169, %v5458, %v5720
  %v6163 = vsel %vm169, %v5459, %v5722
  %v6164 = vsel %vm169, %v5460, %v5724
  %v6165 = vsel %vm169, %v5461, %v5726
  %v6166 = vsel %vm169, %v5462, %v5728
  %v6167 = vsel %vm169, %v5463, %v5730
  %v6168 = vsel %vm169, %v5464, %v5732
  %v6169 = vsel %vm169, %v5465, %v5734
  %v6170 = vsel %vm169, %v5466, %v5736
  %v6171 = vsel %vm169, %v5467, %v5738
  %v6172 = vsel %vm169, %v5468, %v5740
  %v6173 = vsel %vm169, %v5469, %v5742
  %v6174 = vsel %vm169, %v5470, %v5744
  %v6175 = vsel %vm169, %v5471, %v5746
  %v6176 = vsel %vm169, %v5472, %v5748
  %v6177 = vsel %vm169, %v5473, %v5750
  %v6178 = vsel %vm169, %v5474, %v5752
  %v6179 = vsel %vm169, %v5475, %v5754
  %v6180 = vsel %vm169, %v5476, %v5756
  %v6181 = vsel %vm169, %v5477, %v5758
  %v6182 = vsel %vm169, %v5478, %v5760
  %v6183 = vsel %vm169, %v5479, %v5762
  %v6184 = vsel %vm169, %v5480, %v5764
  %v6185 = vsel %vm169, %v5481, %v5766
  %v6186 = vsel %vm169, %v5482, %v5768
  %v6187 = vsel %vm169, %v5483, %v5770
  %v6188 = vsel %vm169, %v5484, %v5772
  %v6189 = vsel %vm169, %v5485, %v5774
  %v6190 = vsel %vm169, %v5486, %v5776
  %v6191 = vsel %vm169, %v5487, %v5778
  %v6192 = vsel %vm169, %v5488, %v5780
  %v6193 = vsel %vm169, %v5489, %v5782
  %v6194 = vsel %vm169, %v5490, %v5784
  %v6195 = vsel %vm169, %v5491, %v5786
  %v6196 = vsel %vm169, %v5492, %v5788
  %v6197 = vsel %vm169, %v5493, %v5790
  %v6198 = vsel %vm169, %v5494, %v5792
  %v6199 = vsel %vm169, %v5495, %v5794
  %v6200 = vsel %vm169, %v5496, %v5796
  %v6201 = vsel %vm169, %v5497, %v5798
  %v6202 = vsel %vm169, %v5498, %v5800
  %v6203 = vsel %vm169, %v5499, %v5802
  %v6204 = vsel %vm169, %v5500, %v5804
  %v6205 = vsel %vm169, %v5501, %v5806
  %v6206 = vsel %vm169, %v5502, %v5808
  %v6207 = vsel %vm169, %v5503, %v5810
  %v6208 = vsel %vm169, %v5504, %v5812
  %v6209 = vsel %vm169, %v5505, %v5814
  %v6210 = vsel %vm169, %v5506, %v5816
  %v6211 = vsel %vm169, %v5507, %v5818
  %v6212 = vsel %vm169, %v5508, %v5820
  %v6213 = vsel %vm169, %v5509, %v5822
  %v6214 = vsel %vm169, %v5510, %v5824
  %v6215 = vsel %vm169, %v5511, %v5826
  %v6216 = vsel %vm169, %v5512, %v5828
  %v6217 = vsel %vm169, %v5513, %v5830
  %v6218 = vsel %vm169, %v5514, %v5832
  %v6219 = vsel %vm169, %v5515, %v5834
  %v6220 = vsel %vm169, %v5516, %v5836
  %v6221 = vsel %vm1183, %v6157, %v5966
  %v6222 = vsel %vm1183, %v6158, %v5968
  %v6223 = vsel %vm1183, %v6159, %v5970
  %v6224 = vsel %vm1183, %v6160, %v5972
  %v6225 = vsel %vm1183, %v6161, %v5974
  %v6226 = vsel %vm1183, %v6162, %v5976
  %v6227 = vsel %vm1183, %v6163, %v5978
  %v6228 = vsel %vm1183, %v6164, %v5980
  %v6229 = vsel %vm1183, %v6165, %v5982
  %v6230 = vsel %vm1183, %v6166, %v5984
  %v6231 = vsel %vm1183, %v6167, %v5986
  %v6232 = vsel %vm1183, %v6168, %v5988
  %v6233 = vsel %vm1183, %v6169, %v5990
  %v6234 = vsel %vm1183, %v6170, %v5992
  %v6235 = vsel %vm1183, %v6171, %v5994
  %v6236 = vsel %vm1183, %v6172, %v5996
  %v6237 = vsel %vm1183, %v6173, %v5998
  %v6238 = vsel %vm1183, %v6174, %v6000
  %v6239 = vsel %vm1183, %v6175, %v6002
  %v6240 = vsel %vm1183, %v6176, %v6004
  %v6241 = vsel %vm1183, %v6177, %v6006
  %v6242 = vsel %vm1183, %v6178, %v6008
  %v6243 = vsel %vm1183, %v6179, %v6010
  %v6244 = vsel %vm1183, %v6180, %v6012
  %v6245 = vsel %vm1183, %v6181, %v6014
  %v6246 = vsel %vm1183, %v6182, %v6016
  %v6247 = vsel %vm1183, %v6183, %v6018
  %v6248 = vsel %vm1183, %v6184, %v6020
  %v6249 = vsel %vm1183, %v6185, %v6022
  %v6250 = vsel %vm1183, %v6186, %v6024
  %v6251 = vsel %vm1183, %v6187, %v6026
  %v6252 = vsel %vm1183, %v6188, %v6028
  %v6253 = vsel %vm1183, %v6189, %v6030
  %v6254 = vsel %vm1183, %v6190, %v6032
  %v6255 = vsel %vm1183, %v6191, %v6034
  %v6256 = vsel %vm1183, %v6192, %v6036
  %v6257 = vsel %vm1183, %v6193, %v6038
  %v6258 = vsel %vm1183, %v6194, %v6040
  %v6259 = vsel %vm1183, %v6195, %v6042
  %v6260 = vsel %vm1183, %v6196, %v6044
  %v6261 = vsel %vm1183, %v6197, %v6046
  %v6262 = vsel %vm1183, %v6198, %v6048
  %v6263 = vsel %vm1183, %v6199, %v6050
  %v6264 = vsel %vm1183, %v6200, %v6052
  %v6265 = vsel %vm1183, %v6201, %v6054
  %v6266 = vsel %vm1183, %v6202, %v6056
  %v6267 = vsel %vm1183, %v6203, %v6058
  %v6268 = vsel %vm1183, %v6204, %v6060
  %v6269 = vsel %vm1183, %v6205, %v6062
  %v6270 = vsel %vm1183, %v6206, %v6064
  %v6271 = vsel %vm1183, %v6207, %v6066
  %v6272 = vsel %vm1183, %v6208, %v6068
  %v6273 = vsel %vm1183, %v6209, %v6070
  %v6274 = vsel %vm1183, %v6210, %v6072
  %v6275 = vsel %vm1183, %v6211, %v6074
  %v6276 = vsel %vm1183, %v6212, %v6076
  %v6277 = vsel %vm1183, %v6213, %v6078
  %v6278 = vsel %vm1183, %v6214, %v6080
  %v6279 = vsel %vm1183, %v6215, %v6082
  %v6280 = vsel %vm1183, %v6216, %v6084
  %v6281 = vsel %vm1183, %v6217, %v6086
  %v6282 = vsel %vm1183, %v6218, %v6088
  %v6283 = vsel %vm1183, %v6219, %v6090
  %v6284 = vsel %vm1183, %v6220, %v6092
  %v6285 = vld [vmem:[%s3] sm:$0xff]
  %v6286 = vld [vmem:[%s3 + $0x8] sm:$0xf]
  %s6287 = scalar_lea.vmem [#allocation3], 24
  %v6288 = vld [vmem:[%s6287] sm:$0xff]
  %v6289 = vld [vmem:[%s6287 + $0x8] sm:$0xff]
  %v6290 = vld [vmem:[%s6287 + $0x18] sm:$0xff]
  %v6291 = vld [vmem:[%s6287 + $0x20] sm:$0xff]
  %v6292 = vld [vmem:[%s6287 + $0x30] sm:$0xff]
  %v6293 = vld [vmem:[%s6287 + $0x38] sm:$0xff]
  %v6294 = vld [vmem:[%s6287 + $0x48] sm:$0xff]
  %v6295 = vld [vmem:[%s6287 + $0x50] sm:$0xff]
  %v6296 = vld [vmem:[%s6287 + $0x60] sm:$0xff]
  %v6297 = vld [vmem:[%s6287 + $0x68] sm:$0xff]
  %v6298 = vld [vmem:[%s6287 + $0x78] sm:$0xff]
  %v6299 = vld [vmem:[%s6287 + $0x80] sm:$0xff]
  %v6300 = vld [vmem:[%s6287 + $0x90] sm:$0xff]
  %v6301 = vld [vmem:[%s6287 + $0x98] sm:$0xff]
  %v6302 = vld [vmem:[%s6287 + $0xa8] sm:$0xff]
  %v6303 = vld [vmem:[%s6287 + $0xb0] sm:$0xff]
  %v6304 = vld [vmem:[%s6287 + $0xc0] sm:$0xff]
  %v6305 = vld [vmem:[%s6287 + $0xc8] sm:$0xff]
  %v6306 = vld [vmem:[%s6287 + $0xd8] sm:$0xff]
  %v6307 = vld [vmem:[%s6287 + $0xe0] sm:$0xff]
  %v6308 = vld [vmem:[%s6287 + $0xf0] sm:$0xff]
  %v6309 = vld [vmem:[%s6287 + $0xf8] sm:$0xff]
  %v6310 = vld [vmem:[%s6287 + $0x108] sm:$0xff]
  %v6311 = vld [vmem:[%s6287 + $0x110] sm:$0xff]
  %v6312 = vld [vmem:[%s6287 + $0x120] sm:$0xff]
  %v6313 = vld [vmem:[%s6287 + $0x128] sm:$0xff]
  %v6314 = vld [vmem:[%s6287 + $0x138] sm:$0xff]
  %v6315 = vld [vmem:[%s6287 + $0x140] sm:$0xff]
  %v6316 = vld [vmem:[%s6287 + $0x150] sm:$0xff]
  %v6317 = vld [vmem:[%s6287 + $0x158] sm:$0xff]
  %v6318 = vld [vmem:[%s6287 + $0x168] sm:$0xff]
  %v6319 = vld [vmem:[%s6287 + $0x170] sm:$0xff]
  %v6320 = vld [vmem:[%s6287 + $0x1b0] sm:$0xff]
  %v6321 = vld [vmem:[%s6287 + $0x1b8] sm:$0xff]
  %v6322 = vld [vmem:[%s6287 + $0x1c8] sm:$0xff]
  %v6323 = vld [vmem:[%s6287 + $0x1d0] sm:$0xff]
  %v6324 = vld [vmem:[%s6287 + $0x1e0] sm:$0xff]
  %v6325 = vld [vmem:[%s6287 + $0x1e8] sm:$0xff]
  %v6326 = vld [vmem:[%s6287 + $0x1f8] sm:$0xff]
  %v6327 = vld [vmem:[%s6287 + $0x200] sm:$0xff]
  %v6328 = vld [vmem:[%s6287 + $0x210] sm:$0xff]
  %v6329 = vld [vmem:[%s6287 + $0x218] sm:$0xff]
  %v6330 = vld [vmem:[%s6287 + $0x228] sm:$0xff]
  %v6331 = vld [vmem:[%s6287 + $0x230] sm:$0xff]
  %v6332 = vld [vmem:[%s6287 + $0x240] sm:$0xff]
  %v6333 = vld [vmem:[%s6287 + $0x248] sm:$0xff]
  %v6334 = vld [vmem:[%s6287 + $0x258] sm:$0xff]
  %v6335 = vld [vmem:[%s6287 + $0x260] sm:$0xff]
  %v6336 = vld [vmem:[%s6287 + $0x270] sm:$0xff]
  %v6337 = vld [vmem:[%s6287 + $0x278] sm:$0xff]
  %v6338 = vld [vmem:[%s6287 + $0x288] sm:$0xff]
  %v6339 = vld [vmem:[%s6287 + $0x290] sm:$0xff]
  %v6340 = vld [vmem:[%s6287 + $0x2a0] sm:$0xff]
  %v6341 = vld [vmem:[%s6287 + $0x2a8] sm:$0xff]
  %v6342 = vld [vmem:[%s6287 + $0x2b8] sm:$0xff]
  %v6343 = vld [vmem:[%s6287 + $0x2c0] sm:$0xff]
  %v6344 = vld [vmem:[%s6287 + $0x2d0] sm:$0xff]
  %v6345 = vld [vmem:[%s6287 + $0x2d8] sm:$0xff]
  %v6346 = vld [vmem:[%s6287 + $0x2e8] sm:$0xff]
  %v6347 = vld [vmem:[%s6287 + $0x2f0] sm:$0xff]
  %v6348 = vld [vmem:[%s6287 + $0x300] sm:$0xff]
  %v6349 = vld [vmem:[%s6287 + $0x308] sm:$0xff]
  %v6350 = vld [vmem:[%s6287 + $0x318] sm:$0xff]
  %v6351 = vld [vmem:[%s6287 + $0x320] sm:$0xff]
  %v6352 = vld [vmem:[%s6287 + $0x1] sm:$0xff]
  %v6353 = vld [vmem:[%s6287 + $0x9] sm:$0xff]
  %v6354 = vld [vmem:[%s6287 + $0x19] sm:$0xff]
  %v6355 = vld [vmem:[%s6287 + $0x21] sm:$0xff]
  %v6356 = vld [vmem:[%s6287 + $0x31] sm:$0xff]
  %v6357 = vld [vmem:[%s6287 + $0x39] sm:$0xff]
  %v6358 = vld [vmem:[%s6287 + $0x49] sm:$0xff]
  %v6359 = vld [vmem:[%s6287 + $0x51] sm:$0xff]
  %v6360 = vld [vmem:[%s6287 + $0x61] sm:$0xff]
  %v6361 = vld [vmem:[%s6287 + $0x69] sm:$0xff]
  %v6362 = vld [vmem:[%s6287 + $0x79] sm:$0xff]
  %v6363 = vld [vmem:[%s6287 + $0x81] sm:$0xff]
  %v6364 = vld [vmem:[%s6287 + $0x91] sm:$0xff]
  %v6365 = vld [vmem:[%s6287 + $0x99] sm:$0xff]
  %v6366 = vld [vmem:[%s6287 + $0xa9] sm:$0xff]
  %v6367 = vld [vmem:[%s6287 + $0xb1] sm:$0xff]
  %v6368 = vld [vmem:[%s6287 + $0xc1] sm:$0xff]
  %v6369 = vld [vmem:[%s6287 + $0xc9] sm:$0xff]
  %v6370 = vld [vmem:[%s6287 + $0xd9] sm:$0xff]
  %v6371 = vld [vmem:[%s6287 + $0xe1] sm:$0xff]
  %v6372 = vld [vmem:[%s6287 + $0xf1] sm:$0xff]
  %v6373 = vld [vmem:[%s6287 + $0xf9] sm:$0xff]
  %v6374 = vld [vmem:[%s6287 + $0x109] sm:$0xff]
  %v6375 = vld [vmem:[%s6287 + $0x111] sm:$0xff]
  %v6376 = vld [vmem:[%s6287 + $0x121] sm:$0xff]
  %v6377 = vld [vmem:[%s6287 + $0x129] sm:$0xff]
  %v6378 = vld [vmem:[%s6287 + $0x139] sm:$0xff]
  %v6379 = vld [vmem:[%s6287 + $0x141] sm:$0xff]
  %v6380 = vld [vmem:[%s6287 + $0x151] sm:$0xff]
  %v6381 = vld [vmem:[%s6287 + $0x159] sm:$0xff]
  %v6382 = vld [vmem:[%s6287 + $0x169] sm:$0xff]
  %v6383 = vld [vmem:[%s6287 + $0x171] sm:$0xff]
  %v6384 = vld [vmem:[%s6287 + $0x1b1] sm:$0xff]
  %v6385 = vld [vmem:[%s6287 + $0x1b9] sm:$0xff]
  %v6386 = vld [vmem:[%s6287 + $0x1c9] sm:$0xff]
  %v6387 = vld [vmem:[%s6287 + $0x1d1] sm:$0xff]
  %v6388 = vld [vmem:[%s6287 + $0x1e1] sm:$0xff]
  %v6389 = vld [vmem:[%s6287 + $0x1e9] sm:$0xff]
  %v6390 = vld [vmem:[%s6287 + $0x1f9] sm:$0xff]
  %v6391 = vld [vmem:[%s6287 + $0x201] sm:$0xff]
  %v6392 = vld [vmem:[%s6287 + $0x211] sm:$0xff]
  %v6393 = vld [vmem:[%s6287 + $0x219] sm:$0xff]
  %v6394 = vld [vmem:[%s6287 + $0x229] sm:$0xff]
  %v6395 = vld [vmem:[%s6287 + $0x231] sm:$0xff]
  %v6396 = vld [vmem:[%s6287 + $0x241] sm:$0xff]
  %v6397 = vld [vmem:[%s6287 + $0x249] sm:$0xff]
  %v6398 = vld [vmem:[%s6287 + $0x259] sm:$0xff]
  %v6399 = vld [vmem:[%s6287 + $0x261] sm:$0xff]
  %v6400 = vld [vmem:[%s6287 + $0x271] sm:$0xff]
  %v6401 = vld [vmem:[%s6287 + $0x279] sm:$0xff]
  %v6402 = vld [vmem:[%s6287 + $0x289] sm:$0xff]
  %v6403 = vld [vmem:[%s6287 + $0x291] sm:$0xff]
  %v6404 = vld [vmem:[%s6287 + $0x2a1] sm:$0xff]
  %v6405 = vld [vmem:[%s6287 + $0x2a9] sm:$0xff]
  %v6406 = vld [vmem:[%s6287 + $0x2b9] sm:$0xff]
  %v6407 = vld [vmem:[%s6287 + $0x2c1] sm:$0xff]
  %v6408 = vld [vmem:[%s6287 + $0x2d1] sm:$0xff]
  %v6409 = vld [vmem:[%s6287 + $0x2d9] sm:$0xff]
  %v6410 = vld [vmem:[%s6287 + $0x2e9] sm:$0xff]
  %v6411 = vld [vmem:[%s6287 + $0x2f1] sm:$0xff]
  %v6412 = vld [vmem:[%s6287 + $0x301] sm:$0xff]
  %v6413 = vld [vmem:[%s6287 + $0x309] sm:$0xff]
  %v6414 = vld [vmem:[%s6287 + $0x319] sm:$0xff]
  %v6415 = vld [vmem:[%s6287 + $0x321] sm:$0xff]
  %v6416 = vld [vmem:[%s6287 + $0x2] sm:$0xff]
  %v6417 = vld [vmem:[%s6287 + $0xa] sm:$0xff]
  %v6418 = vld [vmem:[%s6287 + $0x1a] sm:$0xff]
  %v6419 = vld [vmem:[%s6287 + $0x22] sm:$0xff]
  %v6420 = vld [vmem:[%s6287 + $0x32] sm:$0xff]
  %v6421 = vld [vmem:[%s6287 + $0x3a] sm:$0xff]
  %v6422 = vld [vmem:[%s6287 + $0x4a] sm:$0xff]
  %v6423 = vld [vmem:[%s6287 + $0x52] sm:$0xff]
  %v6424 = vld [vmem:[%s6287 + $0x62] sm:$0xff]
  %v6425 = vld [vmem:[%s6287 + $0x6a] sm:$0xff]
  %v6426 = vld [vmem:[%s6287 + $0x7a] sm:$0xff]
  %v6427 = vld [vmem:[%s6287 + $0x82] sm:$0xff]
  %v6428 = vld [vmem:[%s6287 + $0x92] sm:$0xff]
  %v6429 = vld [vmem:[%s6287 + $0x9a] sm:$0xff]
  %v6430 = vld [vmem:[%s6287 + $0xaa] sm:$0xff]
  %v6431 = vld [vmem:[%s6287 + $0xb2] sm:$0xff]
  %v6432 = vld [vmem:[%s6287 + $0xc2] sm:$0xff]
  %v6433 = vld [vmem:[%s6287 + $0xca] sm:$0xff]
  %v6434 = vld [vmem:[%s6287 + $0xda] sm:$0xff]
  %v6435 = vld [vmem:[%s6287 + $0xe2] sm:$0xff]
  %v6436 = vld [vmem:[%s6287 + $0xf2] sm:$0xff]
  %v6437 = vld [vmem:[%s6287 + $0xfa] sm:$0xff]
  %v6438 = vld [vmem:[%s6287 + $0x10a] sm:$0xff]
  %v6439 = vld [vmem:[%s6287 + $0x112] sm:$0xff]
  %v6440 = vld [vmem:[%s6287 + $0x122] sm:$0xff]
  %v6441 = vld [vmem:[%s6287 + $0x12a] sm:$0xff]
  %v6442 = vld [vmem:[%s6287 + $0x13a] sm:$0xff]
  %v6443 = vld [vmem:[%s6287 + $0x142] sm:$0xff]
  %v6444 = vld [vmem:[%s6287 + $0x152] sm:$0xff]
  %v6445 = vld [vmem:[%s6287 + $0x15a] sm:$0xff]
  %v6446 = vld [vmem:[%s6287 + $0x16a] sm:$0xff]
  %v6447 = vld [vmem:[%s6287 + $0x172] sm:$0xff]
  %v6448 = vld [vmem:[%s6287 + $0x1b2] sm:$0xff]
  %v6449 = vld [vmem:[%s6287 + $0x1ba] sm:$0xff]
  %v6450 = vld [vmem:[%s6287 + $0x1ca] sm:$0xff]
  %v6451 = vld [vmem:[%s6287 + $0x1d2] sm:$0xff]
  %v6452 = vld [vmem:[%s6287 + $0x1e2] sm:$0xff]
  %v6453 = vld [vmem:[%s6287 + $0x1ea] sm:$0xff]
  %v6454 = vld [vmem:[%s6287 + $0x1fa] sm:$0xff]
  %v6455 = vld [vmem:[%s6287 + $0x202] sm:$0xff]
  %v6456 = vld [vmem:[%s6287 + $0x212] sm:$0xff]
  %v6457 = vld [vmem:[%s6287 + $0x21a] sm:$0xff]
  %v6458 = vld [vmem:[%s6287 + $0x22a] sm:$0xff]
  %v6459 = vld [vmem:[%s6287 + $0x232] sm:$0xff]
  %v6460 = vld [vmem:[%s6287 + $0x242] sm:$0xff]
  %v6461 = vld [vmem:[%s6287 + $0x24a] sm:$0xff]
  %v6462 = vld [vmem:[%s6287 + $0x25a] sm:$0xff]
  %v6463 = vld [vmem:[%s6287 + $0x262] sm:$0xff]
  %v6464 = vld [vmem:[%s6287 + $0x272] sm:$0xff]
  %v6465 = vld [vmem:[%s6287 + $0x27a] sm:$0xff]
  %v6466 = vld [vmem:[%s6287 + $0x28a] sm:$0xff]
  %v6467 = vld [vmem:[%s6287 + $0x292] sm:$0xff]
  %v6468 = vld [vmem:[%s6287 + $0x2a2] sm:$0xff]
  %v6469 = vld [vmem:[%s6287 + $0x2aa] sm:$0xff]
  %v6470 = vld [vmem:[%s6287 + $0x2ba] sm:$0xff]
  %v6471 = vld [vmem:[%s6287 + $0x2c2] sm:$0xff]
  %v6472 = vld [vmem:[%s6287 + $0x2d2] sm:$0xff]
  %v6473 = vld [vmem:[%s6287 + $0x2da] sm:$0xff]
  %v6474 = vld [vmem:[%s6287 + $0x2ea] sm:$0xff]
  %v6475 = vld [vmem:[%s6287 + $0x2f2] sm:$0xff]
  %v6476 = vld [vmem:[%s6287 + $0x302] sm:$0xff]
  %v6477 = vld [vmem:[%s6287 + $0x30a] sm:$0xff]
  %v6478 = vld [vmem:[%s6287 + $0x31a] sm:$0xff]
  %v6479 = vld [vmem:[%s6287 + $0x322] sm:$0xff]
  %6544 = vrot.lane.b32.xlu0 %v6352, 4
  %v6545 = vpop.permute.xlu0 %6544
  %6546 = vrot.lane.b32.xlu0 %v6353, 4
  %v6547 = vpop.permute.xlu0 %6546
  %6548 = vrot.lane.b32.xlu0 %v6354, 4
  %v6549 = vpop.permute.xlu0 %6548
  %6550 = vrot.lane.b32.xlu0 %v6355, 4
  %v6551 = vpop.permute.xlu0 %6550
  %6552 = vrot.lane.b32.xlu0 %v6356, 4
  %v6553 = vpop.permute.xlu0 %6552
  %6554 = vrot.lane.b32.xlu0 %v6357, 4
  %v6555 = vpop.permute.xlu0 %6554
  %6556 = vrot.lane.b32.xlu0 %v6358, 4
  %v6557 = vpop.permute.xlu0 %6556
  %6558 = vrot.lane.b32.xlu0 %v6359, 4
  %v6559 = vpop.permute.xlu0 %6558
  %6560 = vrot.lane.b32.xlu0 %v6360, 4
  %v6561 = vpop.permute.xlu0 %6560
  %6562 = vrot.lane.b32.xlu0 %v6361, 4
  %v6563 = vpop.permute.xlu0 %6562
  %6564 = vrot.lane.b32.xlu0 %v6362, 4
  %v6565 = vpop.permute.xlu0 %6564
  %6566 = vrot.lane.b32.xlu0 %v6363, 4
  %v6567 = vpop.permute.xlu0 %6566
  %6568 = vrot.lane.b32.xlu0 %v6364, 4
  %v6569 = vpop.permute.xlu0 %6568
  %6570 = vrot.lane.b32.xlu0 %v6365, 4
  %v6571 = vpop.permute.xlu0 %6570
  %6572 = vrot.lane.b32.xlu0 %v6366, 4
  %v6573 = vpop.permute.xlu0 %6572
  %6574 = vrot.lane.b32.xlu0 %v6367, 4
  %v6575 = vpop.permute.xlu0 %6574
  %6576 = vrot.lane.b32.xlu0 %v6368, 4
  %v6577 = vpop.permute.xlu0 %6576
  %6578 = vrot.lane.b32.xlu0 %v6369, 4
  %v6579 = vpop.permute.xlu0 %6578
  %6580 = vrot.lane.b32.xlu0 %v6370, 4
  %v6581 = vpop.permute.xlu0 %6580
  %6582 = vrot.lane.b32.xlu0 %v6371, 4
  %v6583 = vpop.permute.xlu0 %6582
  %6584 = vrot.lane.b32.xlu0 %v6372, 4
  %v6585 = vpop.permute.xlu0 %6584
  %6586 = vrot.lane.b32.xlu0 %v6373, 4
  %v6587 = vpop.permute.xlu0 %6586
  %6588 = vrot.lane.b32.xlu0 %v6374, 4
  %v6589 = vpop.permute.xlu0 %6588
  %6590 = vrot.lane.b32.xlu0 %v6375, 4
  %v6591 = vpop.permute.xlu0 %6590
  %6592 = vrot.lane.b32.xlu0 %v6376, 4
  %v6593 = vpop.permute.xlu0 %6592
  %6594 = vrot.lane.b32.xlu0 %v6377, 4
  %v6595 = vpop.permute.xlu0 %6594
  %6596 = vrot.lane.b32.xlu0 %v6378, 4
  %v6597 = vpop.permute.xlu0 %6596
  %6598 = vrot.lane.b32.xlu0 %v6379, 4
  %v6599 = vpop.permute.xlu0 %6598
  %6600 = vrot.lane.b32.xlu0 %v6380, 4
  %v6601 = vpop.permute.xlu0 %6600
  %6602 = vrot.lane.b32.xlu0 %v6381, 4
  %v6603 = vpop.permute.xlu0 %6602
  %6604 = vrot.lane.b32.xlu0 %v6382, 4
  %v6605 = vpop.permute.xlu0 %6604
  %6606 = vrot.lane.b32.xlu0 %v6383, 4
  %v6607 = vpop.permute.xlu0 %6606
  %6608 = vrot.lane.b32.xlu0 %v6384, 4
  %v6609 = vpop.permute.xlu0 %6608
  %6610 = vrot.lane.b32.xlu0 %v6385, 4
  %v6611 = vpop.permute.xlu0 %6610
  %6612 = vrot.lane.b32.xlu0 %v6386, 4
  %v6613 = vpop.permute.xlu0 %6612
  %6614 = vrot.lane.b32.xlu0 %v6387, 4
  %v6615 = vpop.permute.xlu0 %6614
  %6616 = vrot.lane.b32.xlu0 %v6388, 4
  %v6617 = vpop.permute.xlu0 %6616
  %6618 = vrot.lane.b32.xlu0 %v6389, 4
  %v6619 = vpop.permute.xlu0 %6618
  %6620 = vrot.lane.b32.xlu0 %v6390, 4
  %v6621 = vpop.permute.xlu0 %6620
  %6622 = vrot.lane.b32.xlu0 %v6391, 4
  %v6623 = vpop.permute.xlu0 %6622
  %6624 = vrot.lane.b32.xlu0 %v6392, 4
  %v6625 = vpop.permute.xlu0 %6624
  %6626 = vrot.lane.b32.xlu0 %v6393, 4
  %v6627 = vpop.permute.xlu0 %6626
  %6628 = vrot.lane.b32.xlu0 %v6394, 4
  %v6629 = vpop.permute.xlu0 %6628
  %6630 = vrot.lane.b32.xlu0 %v6395, 4
  %v6631 = vpop.permute.xlu0 %6630
  %6632 = vrot.lane.b32.xlu0 %v6396, 4
  %v6633 = vpop.permute.xlu0 %6632
  %6634 = vrot.lane.b32.xlu0 %v6397, 4
  %v6635 = vpop.permute.xlu0 %6634
  %6636 = vrot.lane.b32.xlu0 %v6398, 4
  %v6637 = vpop.permute.xlu0 %6636
  %6638 = vrot.lane.b32.xlu0 %v6399, 4
  %v6639 = vpop.permute.xlu0 %6638
  %6640 = vrot.lane.b32.xlu0 %v6400, 4
  %v6641 = vpop.permute.xlu0 %6640
  %6642 = vrot.lane.b32.xlu0 %v6401, 4
  %v6643 = vpop.permute.xlu0 %6642
  %6644 = vrot.lane.b32.xlu0 %v6402, 4
  %v6645 = vpop.permute.xlu0 %6644
  %6646 = vrot.lane.b32.xlu0 %v6403, 4
  %v6647 = vpop.permute.xlu0 %6646
  %6648 = vrot.lane.b32.xlu0 %v6404, 4
  %v6649 = vpop.permute.xlu0 %6648
  %6650 = vrot.lane.b32.xlu0 %v6405, 4
  %v6651 = vpop.permute.xlu0 %6650
  %6652 = vrot.lane.b32.xlu0 %v6406, 4
  %v6653 = vpop.permute.xlu0 %6652
  %6654 = vrot.lane.b32.xlu0 %v6407, 4
  %v6655 = vpop.permute.xlu0 %6654
  %6656 = vrot.lane.b32.xlu0 %v6408, 4
  %v6657 = vpop.permute.xlu0 %6656
  %6658 = vrot.lane.b32.xlu0 %v6409, 4
  %v6659 = vpop.permute.xlu0 %6658
  %6660 = vrot.lane.b32.xlu0 %v6410, 4
  %v6661 = vpop.permute.xlu0 %6660
  %6662 = vrot.lane.b32.xlu0 %v6411, 4
  %v6663 = vpop.permute.xlu0 %6662
  %6664 = vrot.lane.b32.xlu0 %v6412, 4
  %v6665 = vpop.permute.xlu0 %6664
  %6666 = vrot.lane.b32.xlu0 %v6413, 4
  %v6667 = vpop.permute.xlu0 %6666
  %6668 = vrot.lane.b32.xlu0 %v6414, 4
  %v6669 = vpop.permute.xlu0 %6668
  %6670 = vrot.lane.b32.xlu0 %v6415, 4
  %v6671 = vpop.permute.xlu0 %6670
  %6800 = vrot.lane.b32.xlu0 %v6416, 8
  %v6801 = vpop.permute.xlu0 %6800
  %6802 = vrot.lane.b32.xlu0 %v6417, 8
  %v6803 = vpop.permute.xlu0 %6802
  %6804 = vrot.lane.b32.xlu0 %v6418, 8
  %v6805 = vpop.permute.xlu0 %6804
  %6806 = vrot.lane.b32.xlu0 %v6419, 8
  %v6807 = vpop.permute.xlu0 %6806
  %6808 = vrot.lane.b32.xlu0 %v6420, 8
  %v6809 = vpop.permute.xlu0 %6808
  %6810 = vrot.lane.b32.xlu0 %v6421, 8
  %v6811 = vpop.permute.xlu0 %6810
  %6812 = vrot.lane.b32.xlu0 %v6422, 8
  %v6813 = vpop.permute.xlu0 %6812
  %6814 = vrot.lane.b32.xlu0 %v6423, 8
  %v6815 = vpop.permute.xlu0 %6814
  %6816 = vrot.lane.b32.xlu0 %v6424, 8
  %v6817 = vpop.permute.xlu0 %6816
  %6818 = vrot.lane.b32.xlu0 %v6425, 8
  %v6819 = vpop.permute.xlu0 %6818
  %6820 = vrot.lane.b32.xlu0 %v6426, 8
  %v6821 = vpop.permute.xlu0 %6820
  %6822 = vrot.lane.b32.xlu0 %v6427, 8
  %v6823 = vpop.permute.xlu0 %6822
  %6824 = vrot.lane.b32.xlu0 %v6428, 8
  %v6825 = vpop.permute.xlu0 %6824
  %6826 = vrot.lane.b32.xlu0 %v6429, 8
  %v6827 = vpop.permute.xlu0 %6826
  %6828 = vrot.lane.b32.xlu0 %v6430, 8
  %v6829 = vpop.permute.xlu0 %6828
  %6830 = vrot.lane.b32.xlu0 %v6431, 8
  %v6831 = vpop.permute.xlu0 %6830
  %6832 = vrot.lane.b32.xlu0 %v6432, 8
  %v6833 = vpop.permute.xlu0 %6832
  %6834 = vrot.lane.b32.xlu0 %v6433, 8
  %v6835 = vpop.permute.xlu0 %6834
  %6836 = vrot.lane.b32.xlu0 %v6434, 8
  %v6837 = vpop.permute.xlu0 %6836
  %6838 = vrot.lane.b32.xlu0 %v6435, 8
  %v6839 = vpop.permute.xlu0 %6838
  %6840 = vrot.lane.b32.xlu0 %v6436, 8
  %v6841 = vpop.permute.xlu0 %6840
  %6842 = vrot.lane.b32.xlu0 %v6437, 8
  %v6843 = vpop.permute.xlu0 %6842
  %6844 = vrot.lane.b32.xlu0 %v6438, 8
  %v6845 = vpop.permute.xlu0 %6844
  %6846 = vrot.lane.b32.xlu0 %v6439, 8
  %v6847 = vpop.permute.xlu0 %6846
  %6848 = vrot.lane.b32.xlu0 %v6440, 8
  %v6849 = vpop.permute.xlu0 %6848
  %6850 = vrot.lane.b32.xlu0 %v6441, 8
  %v6851 = vpop.permute.xlu0 %6850
  %6852 = vrot.lane.b32.xlu0 %v6442, 8
  %v6853 = vpop.permute.xlu0 %6852
  %6854 = vrot.lane.b32.xlu0 %v6443, 8
  %v6855 = vpop.permute.xlu0 %6854
  %6856 = vrot.lane.b32.xlu0 %v6444, 8
  %v6857 = vpop.permute.xlu0 %6856
  %6858 = vrot.lane.b32.xlu0 %v6445, 8
  %v6859 = vpop.permute.xlu0 %6858
  %6860 = vrot.lane.b32.xlu0 %v6446, 8
  %v6861 = vpop.permute.xlu0 %6860
  %6862 = vrot.lane.b32.xlu0 %v6447, 8
  %v6863 = vpop.permute.xlu0 %6862
  %6864 = vrot.lane.b32.xlu0 %v6448, 8
  %v6865 = vpop.permute.xlu0 %6864
  %6866 = vrot.lane.b32.xlu0 %v6449, 8
  %v6867 = vpop.permute.xlu0 %6866
  %6868 = vrot.lane.b32.xlu0 %v6450, 8
  %v6869 = vpop.permute.xlu0 %6868
  %6870 = vrot.lane.b32.xlu0 %v6451, 8
  %v6871 = vpop.permute.xlu0 %6870
  %6872 = vrot.lane.b32.xlu0 %v6452, 8
  %v6873 = vpop.permute.xlu0 %6872
  %6874 = vrot.lane.b32.xlu0 %v6453, 8
  %v6875 = vpop.permute.xlu0 %6874
  %6876 = vrot.lane.b32.xlu0 %v6454, 8
  %v6877 = vpop.permute.xlu0 %6876
  %6878 = vrot.lane.b32.xlu0 %v6455, 8
  %v6879 = vpop.permute.xlu0 %6878
  %6880 = vrot.lane.b32.xlu0 %v6456, 8
  %v6881 = vpop.permute.xlu0 %6880
  %6882 = vrot.lane.b32.xlu0 %v6457, 8
  %v6883 = vpop.permute.xlu0 %6882
  %6884 = vrot.lane.b32.xlu0 %v6458, 8
  %v6885 = vpop.permute.xlu0 %6884
  %6886 = vrot.lane.b32.xlu0 %v6459, 8
  %v6887 = vpop.permute.xlu0 %6886
  %6888 = vrot.lane.b32.xlu0 %v6460, 8
  %v6889 = vpop.permute.xlu0 %6888
  %6890 = vrot.lane.b32.xlu0 %v6461, 8
  %v6891 = vpop.permute.xlu0 %6890
  %6892 = vrot.lane.b32.xlu0 %v6462, 8
  %v6893 = vpop.permute.xlu0 %6892
  %6894 = vrot.lane.b32.xlu0 %v6463, 8
  %v6895 = vpop.permute.xlu0 %6894
  %6896 = vrot.lane.b32.xlu0 %v6464, 8
  %v6897 = vpop.permute.xlu0 %6896
  %6898 = vrot.lane.b32.xlu0 %v6465, 8
  %v6899 = vpop.permute.xlu0 %6898
  %6900 = vrot.lane.b32.xlu0 %v6466, 8
  %v6901 = vpop.permute.xlu0 %6900
  %6902 = vrot.lane.b32.xlu0 %v6467, 8
  %v6903 = vpop.permute.xlu0 %6902
  %6904 = vrot.lane.b32.xlu0 %v6468, 8
  %v6905 = vpop.permute.xlu0 %6904
  %6906 = vrot.lane.b32.xlu0 %v6469, 8
  %v6907 = vpop.permute.xlu0 %6906
  %6908 = vrot.lane.b32.xlu0 %v6470, 8
  %v6909 = vpop.permute.xlu0 %6908
  %6910 = vrot.lane.b32.xlu0 %v6471, 8
  %v6911 = vpop.permute.xlu0 %6910
  %6912 = vrot.lane.b32.xlu0 %v6472, 8
  %v6913 = vpop.permute.xlu0 %6912
  %6914 = vrot.lane.b32.xlu0 %v6473, 8
  %v6915 = vpop.permute.xlu0 %6914
  %6916 = vrot.lane.b32.xlu0 %v6474, 8
  %v6917 = vpop.permute.xlu0 %6916
  %6918 = vrot.lane.b32.xlu0 %v6475, 8
  %v6919 = vpop.permute.xlu0 %6918
  %6920 = vrot.lane.b32.xlu0 %v6476, 8
  %v6921 = vpop.permute.xlu0 %6920
  %6922 = vrot.lane.b32.xlu0 %v6477, 8
  %v6923 = vpop.permute.xlu0 %6922
  %6924 = vrot.lane.b32.xlu0 %v6478, 8
  %v6925 = vpop.permute.xlu0 %6924
  %6926 = vrot.lane.b32.xlu0 %v6479, 8
  %v6927 = vpop.permute.xlu0 %6926
  %v6992 = vsel %vm169, %v6288, %v6545
  %v6993 = vsel %vm169, %v6289, %v6547
  %v6994 = vsel %vm169, %v6290, %v6549
  %v6995 = vsel %vm169, %v6291, %v6551
  %v6996 = vsel %vm169, %v6292, %v6553
  %v6997 = vsel %vm169, %v6293, %v6555
  %v6998 = vsel %vm169, %v6294, %v6557
  %v6999 = vsel %vm169, %v6295, %v6559
  %v7000 = vsel %vm169, %v6296, %v6561
  %v7001 = vsel %vm169, %v6297, %v6563
  %v7002 = vsel %vm169, %v6298, %v6565
  %v7003 = vsel %vm169, %v6299, %v6567
  %v7004 = vsel %vm169, %v6300, %v6569
  %v7005 = vsel %vm169, %v6301, %v6571
  %v7006 = vsel %vm169, %v6302, %v6573
  %v7007 = vsel %vm169, %v6303, %v6575
  %v7008 = vsel %vm169, %v6304, %v6577
  %v7009 = vsel %vm169, %v6305, %v6579
  %v7010 = vsel %vm169, %v6306, %v6581
  %v7011 = vsel %vm169, %v6307, %v6583
  %v7012 = vsel %vm169, %v6308, %v6585
  %v7013 = vsel %vm169, %v6309, %v6587
  %v7014 = vsel %vm169, %v6310, %v6589
  %v7015 = vsel %vm169, %v6311, %v6591
  %v7016 = vsel %vm169, %v6312, %v6593
  %v7017 = vsel %vm169, %v6313, %v6595
  %v7018 = vsel %vm169, %v6314, %v6597
  %v7019 = vsel %vm169, %v6315, %v6599
  %v7020 = vsel %vm169, %v6316, %v6601
  %v7021 = vsel %vm169, %v6317, %v6603
  %v7022 = vsel %vm169, %v6318, %v6605
  %v7023 = vsel %vm169, %v6319, %v6607
  %v7024 = vsel %vm169, %v6320, %v6609
  %v7025 = vsel %vm169, %v6321, %v6611
  %v7026 = vsel %vm169, %v6322, %v6613
  %v7027 = vsel %vm169, %v6323, %v6615
  %v7028 = vsel %vm169, %v6324, %v6617
  %v7029 = vsel %vm169, %v6325, %v6619
  %v7030 = vsel %vm169, %v6326, %v6621
  %v7031 = vsel %vm169, %v6327, %v6623
  %v7032 = vsel %vm169, %v6328, %v6625
  %v7033 = vsel %vm169, %v6329, %v6627
  %v7034 = vsel %vm169, %v6330, %v6629
  %v7035 = vsel %vm169, %v6331, %v6631
  %v7036 = vsel %vm169, %v6332, %v6633
  %v7037 = vsel %vm169, %v6333, %v6635
  %v7038 = vsel %vm169, %v6334, %v6637
  %v7039 = vsel %vm169, %v6335, %v6639
  %v7040 = vsel %vm169, %v6336, %v6641
  %v7041 = vsel %vm169, %v6337, %v6643
  %v7042 = vsel %vm169, %v6338, %v6645
  %v7043 = vsel %vm169, %v6339, %v6647
  %v7044 = vsel %vm169, %v6340, %v6649
  %v7045 = vsel %vm169, %v6341, %v6651
  %v7046 = vsel %vm169, %v6342, %v6653
  %v7047 = vsel %vm169, %v6343, %v6655
  %v7048 = vsel %vm169, %v6344, %v6657
  %v7049 = vsel %vm169, %v6345, %v6659
  %v7050 = vsel %vm169, %v6346, %v6661
  %v7051 = vsel %vm169, %v6347, %v6663
  %v7052 = vsel %vm169, %v6348, %v6665
  %v7053 = vsel %vm169, %v6349, %v6667
  %v7054 = vsel %vm169, %v6350, %v6669
  %v7055 = vsel %vm169, %v6351, %v6671
  %v7056 = vsel %vm1183, %v6992, %v6801
  %v7057 = vsel %vm1183, %v6993, %v6803
  %v7058 = vsel %vm1183, %v6994, %v6805
  %v7059 = vsel %vm1183, %v6995, %v6807
  %v7060 = vsel %vm1183, %v6996, %v6809
  %v7061 = vsel %vm1183, %v6997, %v6811
  %v7062 = vsel %vm1183, %v6998, %v6813
  %v7063 = vsel %vm1183, %v6999, %v6815
  %v7064 = vsel %vm1183, %v7000, %v6817
  %v7065 = vsel %vm1183, %v7001, %v6819
  %v7066 = vsel %vm1183, %v7002, %v6821
  %v7067 = vsel %vm1183, %v7003, %v6823
  %v7068 = vsel %vm1183, %v7004, %v6825
  %v7069 = vsel %vm1183, %v7005, %v6827
  %v7070 = vsel %vm1183, %v7006, %v6829
  %v7071 = vsel %vm1183, %v7007, %v6831
  %v7072 = vsel %vm1183, %v7008, %v6833
  %v7073 = vsel %vm1183, %v7009, %v6835
  %v7074 = vsel %vm1183, %v7010, %v6837
  %v7075 = vsel %vm1183, %v7011, %v6839
  %v7076 = vsel %vm1183, %v7012, %v6841
  %v7077 = vsel %vm1183, %v7013, %v6843
  %v7078 = vsel %vm1183, %v7014, %v6845
  %v7079 = vsel %vm1183, %v7015, %v6847
  %v7080 = vsel %vm1183, %v7016, %v6849
  %v7081 = vsel %vm1183, %v7017, %v6851
  %v7082 = vsel %vm1183, %v7018, %v6853
  %v7083 = vsel %vm1183, %v7019, %v6855
  %v7084 = vsel %vm1183, %v7020, %v6857
  %v7085 = vsel %vm1183, %v7021, %v6859
  %v7086 = vsel %vm1183, %v7022, %v6861
  %v7087 = vsel %vm1183, %v7023, %v6863
  %v7088 = vsel %vm1183, %v7024, %v6865
  %v7089 = vsel %vm1183, %v7025, %v6867
  %v7090 = vsel %vm1183, %v7026, %v6869
  %v7091 = vsel %vm1183, %v7027, %v6871
  %v7092 = vsel %vm1183, %v7028, %v6873
  %v7093 = vsel %vm1183, %v7029, %v6875
  %v7094 = vsel %vm1183, %v7030, %v6877
  %v7095 = vsel %vm1183, %v7031, %v6879
  %v7096 = vsel %vm1183, %v7032, %v6881
  %v7097 = vsel %vm1183, %v7033, %v6883
  %v7098 = vsel %vm1183, %v7034, %v6885
  %v7099 = vsel %vm1183, %v7035, %v6887
  %v7100 = vsel %vm1183, %v7036, %v6889
  %v7101 = vsel %vm1183, %v7037, %v6891
  %v7102 = vsel %vm1183, %v7038, %v6893
  %v7103 = vsel %vm1183, %v7039, %v6895
  %v7104 = vsel %vm1183, %v7040, %v6897
  %v7105 = vsel %vm1183, %v7041, %v6899
  %v7106 = vsel %vm1183, %v7042, %v6901
  %v7107 = vsel %vm1183, %v7043, %v6903
  %v7108 = vsel %vm1183, %v7044, %v6905
  %v7109 = vsel %vm1183, %v7045, %v6907
  %v7110 = vsel %vm1183, %v7046, %v6909
  %v7111 = vsel %vm1183, %v7047, %v6911
  %v7112 = vsel %vm1183, %v7048, %v6913
  %v7113 = vsel %vm1183, %v7049, %v6915
  %v7114 = vsel %vm1183, %v7050, %v6917
  %v7115 = vsel %vm1183, %v7051, %v6919
  %v7116 = vsel %vm1183, %v7052, %v6921
  %v7117 = vsel %vm1183, %v7053, %v6923
  %v7118 = vsel %vm1183, %v7054, %v6925
  %v7119 = vsel %vm1183, %v7055, %v6927
  %v7120 = vld [vmem:[%s3 + $0xc] sm:$0xff]
  %v7121 = vld [vmem:[%s3 + $0x14] sm:$0xf]
  %v7123 = vsel %vm2197, %v7056, 0
  %v7126 = vsel %vm2197, %v7057, 0
  %v7129 = vsel %vm2197, %v7058, 0
  %v7132 = vsel %vm2197, %v7059, 0
  %v7135 = vsel %vm2197, %v7060, 0
  %v7138 = vsel %vm2197, %v7061, 0
  %v7141 = vsel %vm2197, %v7062, 0
  %v7144 = vsel %vm2197, %v7063, 0
  %v7147 = vsel %vm2197, %v7064, 0
  %v7150 = vsel %vm2197, %v7065, 0
  %v7153 = vsel %vm2197, %v7066, 0
  %v7156 = vsel %vm2197, %v7067, 0
  %v7159 = vsel %vm2197, %v7068, 0
  %v7162 = vsel %vm2197, %v7069, 0
  %v7165 = vsel %vm2197, %v7070, 0
  %v7168 = vsel %vm2197, %v7071, 0
  %v7171 = vsel %vm2197, %v7072, 0
  %v7174 = vsel %vm2197, %v7073, 0
  %v7177 = vsel %vm2197, %v7074, 0
  %v7180 = vsel %vm2197, %v7075, 0
  %v7183 = vsel %vm2197, %v7076, 0
  %v7186 = vsel %vm2197, %v7077, 0
  %v7189 = vsel %vm2197, %v7078, 0
  %v7192 = vsel %vm2197, %v7079, 0
  %v7195 = vsel %vm2197, %v7080, 0
  %v7198 = vsel %vm2197, %v7081, 0
  %v7201 = vsel %vm2197, %v7082, 0
  %v7204 = vsel %vm2197, %v7083, 0
  %v7207 = vsel %vm2197, %v7084, 0
  %v7210 = vsel %vm2197, %v7085, 0
  %v7213 = vsel %vm2197, %v7086, 0
  %v7216 = vsel %vm2197, %v7087, 0
  %v7219 = vsel %vm2197, %v7088, 0
  %v7222 = vsel %vm2197, %v7089, 0
  %v7225 = vsel %vm2197, %v7090, 0
  %v7228 = vsel %vm2197, %v7091, 0
  %v7231 = vsel %vm2197, %v7092, 0
  %v7234 = vsel %vm2197, %v7093, 0
  %v7237 = vsel %vm2197, %v7094, 0
  %v7240 = vsel %vm2197, %v7095, 0
  %v7243 = vsel %vm2197, %v7096, 0
  %v7246 = vsel %vm2197, %v7097, 0
  %v7249 = vsel %vm2197, %v7098, 0
  %v7252 = vsel %vm2197, %v7099, 0
  %v7255 = vsel %vm2197, %v7100, 0
  %v7258 = vsel %vm2197, %v7101, 0
  %v7261 = vsel %vm2197, %v7102, 0
  %v7264 = vsel %vm2197, %v7103, 0
  %v7267 = vsel %vm2197, %v7104, 0
  %v7270 = vsel %vm2197, %v7105, 0
  %v7273 = vsel %vm2197, %v7106, 0
  %v7276 = vsel %vm2197, %v7107, 0
  %v7279 = vsel %vm2197, %v7108, 0
  %v7282 = vsel %vm2197, %v7109, 0
  %v7285 = vsel %vm2197, %v7110, 0
  %v7288 = vsel %vm2197, %v7111, 0
  %v7291 = vsel %vm2197, %v7112, 0
  %v7294 = vsel %vm2197, %v7113, 0
  %v7297 = vsel %vm2197, %v7114, 0
  %v7300 = vsel %vm2197, %v7115, 0
  %v7303 = vsel %vm2197, %v7116, 0
  %v7306 = vsel %vm2197, %v7117, 0
  %v7309 = vsel %vm2197, %v7118, 0
  %v7312 = vsel %vm2197, %v7119, 0
  %v7315 = vsel %vm2414, %v7121, 0
  %7317 = vmatprep.subr.mxu0 0.0
  %7318 = vmatpush1.msra.mxu0 0.0
  %7319 = vmatprep.subr.mxu0 0.0
  %7320 = vmatpush1.msra.mxu0 0.0
  %7321 = vmatprep.subr.mxu0 0.0
  %7322 = vmatpush1.msra.mxu0 0.0
  %7323 = vmatprep.subr.mxu0 0.0
  %7324 = vmatpush1.msra.mxu0 0.0
  %7325 = vmatprep.subr.mxu0 0.0
  %7326 = vmatpush1.msra.mxu0 0.0
  %7327 = vmatprep.subr.mxu0 0.0
  %7328 = vmatpush1.msra.mxu0 0.0
  %7329 = vmatprep.subr.mxu0 0.0
  %7330 = vmatpush1.msra.mxu0 0.0
  %7331 = vmatprep.subr.mxu0 0.0
  %7332 = vmatpush1.msra.mxu0 0.0
  %7333 = vmatprep.subr.mxu0 0.0
  %7334 = vmatpush1.msra.mxu0 0.0
  %7335 = vmatprep.subr.mxu0 0.0
  %7336 = vmatpush1.msra.mxu0 0.0
  %7337 = vmatprep.subr.mxu0 0.0
  %7338 = vmatpush1.msra.mxu0 0.0
  %7339 = vmatprep.subr.mxu0 0.0
  %7340 = vmatpush1.msra.mxu0 0.0
  %7341 = vmatprep.subr.mxu0 0.0
  %7342 = vmatpush1.msra.mxu0 0.0
  %7343 = vmatprep.subr.mxu0 0.0
  %7344 = vmatpush1.msra.mxu0 0.0
  %7345 = vmatprep.subr.mxu0 0.0
  %7346 = vmatpush1.msra.mxu0 %v7315
  %7347 = vmatprep.subr.mxu0 0.0
  %7348 = vmatpush1.msra.mxu0 %v7120
  %7349 = vmatprep.subr.mxu0 0.0
  %7350 = vmatpush2.msra.mxu0 0.0
  %7351 = vmatprep.subr.mxu0 0.0
  %7352 = vmatpush2.msra.mxu0 0.0
  %7353 = vmatprep.subr.mxu0 0.0
  %7354 = vmatpush2.msra.mxu0 0.0
  %7355 = vmatprep.subr.mxu0 0.0
  %7356 = vmatpush2.msra.mxu0 0.0
  %7357 = vmatprep.subr.mxu0 0.0
  %7358 = vmatpush2.msra.mxu0 0.0
  %7359 = vmatprep.subr.mxu0 0.0
  %7360 = vmatpush2.msra.mxu0 0.0
  %7361 = vmatprep.subr.mxu0 0.0
  %7362 = vmatpush2.msra.mxu0 0.0
  %7363 = vmatprep.subr.mxu0 0.0
  %7364 = vmatpush2.msra.mxu0 0.0
  %7365 = vmatprep.subr.mxu0 0.0
  %7366 = vmatpush2.msra.mxu0 0.0
  %7367 = vmatprep.subr.mxu0 0.0
  %7368 = vmatpush2.msra.mxu0 0.0
  %7369 = vmatprep.subr.mxu0 0.0
  %7370 = vmatpush2.msra.mxu0 0.0
  %7371 = vmatprep.subr.mxu0 0.0
  %7372 = vmatpush2.msra.mxu0 0.0
  %7373 = vmatprep.subr.mxu0 0.0
  %7374 = vmatpush2.msra.mxu0 0.0
  %7375 = vmatprep.subr.mxu0 0.0
  %7376 = vmatpush2.msra.mxu0 0.0
  %7377 = vmatprep.subr.mxu0 0.0
  %7378 = vmatpush2.msra.mxu0 0.0
  %7379 = vmatprep.subr.mxu0 0.0
  %7380 = vmatpush2.msra.mxu0 0.0
  %7381 = vmatprep.mubr.f32.mxu0 0.0
  %7382 = vmatmul.mubr.f32.gmra.mxu0 %v7123
  %v7383 = vpop.f32.mrf.mxu0
  %v7384 = vadd.f32 0.0, %v7383
  %v7385 = vpop.f32.mrf.mxu0
  %7386 = vmatprep.mubr.f32.mxu0 0.0
  %7387 = vmatmul.mubr.f32.gmra.mxu0 %v7126
  %v7388 = vpop.f32.mrf.mxu0
  %v7389 = vadd.f32 0.0, %v7388
  %v7390 = vpop.f32.mrf.mxu0
  %7391 = vmatprep.mubr.f32.mxu0 0.0
  %7392 = vmatmul.mubr.f32.gmra.mxu0 %v7129
  %v7393 = vpop.f32.mrf.mxu0
  %v7394 = vadd.f32 0.0, %v7393
  %v7395 = vpop.f32.mrf.mxu0
  %7396 = vmatprep.mubr.f32.mxu0 0.0
  %7397 = vmatmul.mubr.f32.gmra.mxu0 %v7132
  %v7398 = vpop.f32.mrf.mxu0
  %v7399 = vadd.f32 0.0, %v7398
  %v7400 = vpop.f32.mrf.mxu0
  %7401 = vmatprep.mubr.f32.mxu0 0.0
  %7402 = vmatmul.mubr.f32.gmra.mxu0 %v7135
  %v7403 = vpop.f32.mrf.mxu0
  %v7404 = vadd.f32 0.0, %v7403
  %v7405 = vpop.f32.mrf.mxu0
  %7406 = vmatprep.mubr.f32.mxu0 0.0
  %7407 = vmatmul.mubr.f32.gmra.mxu0 %v7138
  %v7408 = vpop.f32.mrf.mxu0
  %v7409 = vadd.f32 0.0, %v7408
  %v7410 = vpop.f32.mrf.mxu0
  %7411 = vmatprep.mubr.f32.mxu0 0.0
  %7412 = vmatmul.mubr.f32.gmra.mxu0 %v7141
  %v7413 = vpop.f32.mrf.mxu0
  %v7414 = vadd.f32 0.0, %v7413
  %v7415 = vpop.f32.mrf.mxu0
  %7416 = vmatprep.mubr.f32.mxu0 0.0
  %7417 = vmatmul.mubr.f32.gmra.mxu0 %v7144
  %v7418 = vpop.f32.mrf.mxu0
  %v7419 = vadd.f32 0.0, %v7418
  %v7420 = vpop.f32.mrf.mxu0
  %7421 = vmatprep.mubr.f32.mxu0 0.0
  %7422 = vmatmul.mubr.f32.gmra.mxu0 %v7147
  %v7423 = vpop.f32.mrf.mxu0
  %v7424 = vadd.f32 0.0, %v7423
  %v7425 = vpop.f32.mrf.mxu0
  %7426 = vmatprep.mubr.f32.mxu0 0.0
  %7427 = vmatmul.mubr.f32.gmra.mxu0 %v7150
  %v7428 = vpop.f32.mrf.mxu0
  %v7429 = vadd.f32 0.0, %v7428
  %v7430 = vpop.f32.mrf.mxu0
  %7431 = vmatprep.mubr.f32.mxu0 0.0
  %7432 = vmatmul.mubr.f32.gmra.mxu0 %v7153
  %v7433 = vpop.f32.mrf.mxu0
  %v7434 = vadd.f32 0.0, %v7433
  %v7435 = vpop.f32.mrf.mxu0
  %7436 = vmatprep.mubr.f32.mxu0 0.0
  %7437 = vmatmul.mubr.f32.gmra.mxu0 %v7156
  %v7438 = vpop.f32.mrf.mxu0
  %v7439 = vadd.f32 0.0, %v7438
  %v7440 = vpop.f32.mrf.mxu0
  %7441 = vmatprep.mubr.f32.mxu0 0.0
  %7442 = vmatmul.mubr.f32.gmra.mxu0 %v7159
  %v7443 = vpop.f32.mrf.mxu0
  %v7444 = vadd.f32 0.0, %v7443
  %v7445 = vpop.f32.mrf.mxu0
  %7446 = vmatprep.mubr.f32.mxu0 0.0
  %7447 = vmatmul.mubr.f32.gmra.mxu0 %v7162
  %v7448 = vpop.f32.mrf.mxu0
  %v7449 = vadd.f32 0.0, %v7448
  %v7450 = vpop.f32.mrf.mxu0
  %7451 = vmatprep.mubr.f32.mxu0 0.0
  %7452 = vmatmul.mubr.f32.gmra.mxu0 %v7165
  %v7453 = vpop.f32.mrf.mxu0
  %v7454 = vadd.f32 0.0, %v7453
  %v7455 = vpop.f32.mrf.mxu0
  %7456 = vmatprep.mubr.f32.mxu0 0.0
  %7457 = vmatmul.mubr.f32.gmra.mxu0 %v7168
  %v7458 = vpop.f32.mrf.mxu0
  %v7459 = vadd.f32 0.0, %v7458
  %v7460 = vpop.f32.mrf.mxu0
  %7461 = vmatprep.mubr.f32.mxu0 0.0
  %7462 = vmatmul.mubr.f32.gmra.mxu0 %v7171
  %v7463 = vpop.f32.mrf.mxu0
  %v7464 = vadd.f32 0.0, %v7463
  %v7465 = vpop.f32.mrf.mxu0
  %7466 = vmatprep.mubr.f32.mxu0 0.0
  %7467 = vmatmul.mubr.f32.gmra.mxu0 %v7174
  %v7468 = vpop.f32.mrf.mxu0
  %v7469 = vadd.f32 0.0, %v7468
  %v7470 = vpop.f32.mrf.mxu0
  %7471 = vmatprep.mubr.f32.mxu0 0.0
  %7472 = vmatmul.mubr.f32.gmra.mxu0 %v7177
  %v7473 = vpop.f32.mrf.mxu0
  %v7474 = vadd.f32 0.0, %v7473
  %v7475 = vpop.f32.mrf.mxu0
  %7476 = vmatprep.mubr.f32.mxu0 0.0
  %7477 = vmatmul.mubr.f32.gmra.mxu0 %v7180
  %v7478 = vpop.f32.mrf.mxu0
  %v7479 = vadd.f32 0.0, %v7478
  %v7480 = vpop.f32.mrf.mxu0
  %7481 = vmatprep.mubr.f32.mxu0 0.0
  %7482 = vmatmul.mubr.f32.gmra.mxu0 %v7183
  %v7483 = vpop.f32.mrf.mxu0
  %v7484 = vadd.f32 0.0, %v7483
  %v7485 = vpop.f32.mrf.mxu0
  %7486 = vmatprep.mubr.f32.mxu0 0.0
  %7487 = vmatmul.mubr.f32.gmra.mxu0 %v7186
  %v7488 = vpop.f32.mrf.mxu0
  %v7489 = vadd.f32 0.0, %v7488
  %v7490 = vpop.f32.mrf.mxu0
  %7491 = vmatprep.mubr.f32.mxu0 0.0
  %7492 = vmatmul.mubr.f32.gmra.mxu0 %v7189
  %v7493 = vpop.f32.mrf.mxu0
  %v7494 = vadd.f32 0.0, %v7493
  %v7495 = vpop.f32.mrf.mxu0
  %7496 = vmatprep.mubr.f32.mxu0 0.0
  %7497 = vmatmul.mubr.f32.gmra.mxu0 %v7192
  %v7498 = vpop.f32.mrf.mxu0
  %v7499 = vadd.f32 0.0, %v7498
  %v7500 = vpop.f32.mrf.mxu0
  %7501 = vmatprep.mubr.f32.mxu0 0.0
  %7502 = vmatmul.mubr.f32.gmra.mxu0 %v7195
  %v7503 = vpop.f32.mrf.mxu0
  %v7504 = vadd.f32 0.0, %v7503
  %v7505 = vpop.f32.mrf.mxu0
  %7506 = vmatprep.mubr.f32.mxu0 0.0
  %7507 = vmatmul.mubr.f32.gmra.mxu0 %v7198
  %v7508 = vpop.f32.mrf.mxu0
  %v7509 = vadd.f32 0.0, %v7508
  %v7510 = vpop.f32.mrf.mxu0
  %7511 = vmatprep.mubr.f32.mxu0 0.0
  %7512 = vmatmul.mubr.f32.gmra.mxu0 %v7201
  %v7513 = vpop.f32.mrf.mxu0
  %v7514 = vadd.f32 0.0, %v7513
  %v7515 = vpop.f32.mrf.mxu0
  %7516 = vmatprep.mubr.f32.mxu0 0.0
  %7517 = vmatmul.mubr.f32.gmra.mxu0 %v7204
  %v7518 = vpop.f32.mrf.mxu0
  %v7519 = vadd.f32 0.0, %v7518
  %v7520 = vpop.f32.mrf.mxu0
  %7521 = vmatprep.mubr.f32.mxu0 0.0
  %7522 = vmatmul.mubr.f32.gmra.mxu0 %v7207
  %v7523 = vpop.f32.mrf.mxu0
  %v7524 = vadd.f32 0.0, %v7523
  %v7525 = vpop.f32.mrf.mxu0
  %7526 = vmatprep.mubr.f32.mxu0 0.0
  %7527 = vmatmul.mubr.f32.gmra.mxu0 %v7210
  %v7528 = vpop.f32.mrf.mxu0
  %v7529 = vadd.f32 0.0, %v7528
  %v7530 = vpop.f32.mrf.mxu0
  %7531 = vmatprep.mubr.f32.mxu0 0.0
  %7532 = vmatmul.mubr.f32.gmra.mxu0 %v7213
  %v7533 = vpop.f32.mrf.mxu0
  %v7534 = vadd.f32 0.0, %v7533
  %v7535 = vpop.f32.mrf.mxu0
  %7536 = vmatprep.mubr.f32.mxu0 0.0
  %7537 = vmatmul.mubr.f32.gmra.mxu0 %v7216
  %v7538 = vpop.f32.mrf.mxu0
  %v7539 = vadd.f32 0.0, %v7538
  %v7540 = vpop.f32.mrf.mxu0
  %7541 = vmatprep.mubr.f32.mxu0 0.0
  %7542 = vmatmul.mubr.f32.gmra.mxu0 %v7219
  %v7543 = vpop.f32.mrf.mxu0
  %v7544 = vadd.f32 0.0, %v7543
  %v7545 = vpop.f32.mrf.mxu0
  %7546 = vmatprep.mubr.f32.mxu0 0.0
  %7547 = vmatmul.mubr.f32.gmra.mxu0 %v7222
  %v7548 = vpop.f32.mrf.mxu0
  %v7549 = vadd.f32 0.0, %v7548
  %v7550 = vpop.f32.mrf.mxu0
  %7551 = vmatprep.mubr.f32.mxu0 0.0
  %7552 = vmatmul.mubr.f32.gmra.mxu0 %v7225
  %v7553 = vpop.f32.mrf.mxu0
  %v7554 = vadd.f32 0.0, %v7553
  %v7555 = vpop.f32.mrf.mxu0
  %7556 = vmatprep.mubr.f32.mxu0 0.0
  %7557 = vmatmul.mubr.f32.gmra.mxu0 %v7228
  %v7558 = vpop.f32.mrf.mxu0
  %v7559 = vadd.f32 0.0, %v7558
  %v7560 = vpop.f32.mrf.mxu0
  %7561 = vmatprep.mubr.f32.mxu0 0.0
  %7562 = vmatmul.mubr.f32.gmra.mxu0 %v7231
  %v7563 = vpop.f32.mrf.mxu0
  %v7564 = vadd.f32 0.0, %v7563
  %v7565 = vpop.f32.mrf.mxu0
  %7566 = vmatprep.mubr.f32.mxu0 0.0
  %7567 = vmatmul.mubr.f32.gmra.mxu0 %v7234
  %v7568 = vpop.f32.mrf.mxu0
  %v7569 = vadd.f32 0.0, %v7568
  %v7570 = vpop.f32.mrf.mxu0
  %7571 = vmatprep.mubr.f32.mxu0 0.0
  %7572 = vmatmul.mubr.f32.gmra.mxu0 %v7237
  %v7573 = vpop.f32.mrf.mxu0
  %v7574 = vadd.f32 0.0, %v7573
  %v7575 = vpop.f32.mrf.mxu0
  %7576 = vmatprep.mubr.f32.mxu0 0.0
  %7577 = vmatmul.mubr.f32.gmra.mxu0 %v7240
  %v7578 = vpop.f32.mrf.mxu0
  %v7579 = vadd.f32 0.0, %v7578
  %v7580 = vpop.f32.mrf.mxu0
  %7581 = vmatprep.mubr.f32.mxu0 0.0
  %7582 = vmatmul.mubr.f32.gmra.mxu0 %v7243
  %v7583 = vpop.f32.mrf.mxu0
  %v7584 = vadd.f32 0.0, %v7583
  %v7585 = vpop.f32.mrf.mxu0
  %7586 = vmatprep.mubr.f32.mxu0 0.0
  %7587 = vmatmul.mubr.f32.gmra.mxu0 %v7246
  %v7588 = vpop.f32.mrf.mxu0
  %v7589 = vadd.f32 0.0, %v7588
  %v7590 = vpop.f32.mrf.mxu0
  %7591 = vmatprep.mubr.f32.mxu0 0.0
  %7592 = vmatmul.mubr.f32.gmra.mxu0 %v7249
  %v7593 = vpop.f32.mrf.mxu0
  %v7594 = vadd.f32 0.0, %v7593
  %v7595 = vpop.f32.mrf.mxu0
  %7596 = vmatprep.mubr.f32.mxu0 0.0
  %7597 = vmatmul.mubr.f32.gmra.mxu0 %v7252
  %v7598 = vpop.f32.mrf.mxu0
  %v7599 = vadd.f32 0.0, %v7598
  %v7600 = vpop.f32.mrf.mxu0
  %7601 = vmatprep.mubr.f32.mxu0 0.0
  %7602 = vmatmul.mubr.f32.gmra.mxu0 %v7255
  %v7603 = vpop.f32.mrf.mxu0
  %v7604 = vadd.f32 0.0, %v7603
  %v7605 = vpop.f32.mrf.mxu0
  %7606 = vmatprep.mubr.f32.mxu0 0.0
  %7607 = vmatmul.mubr.f32.gmra.mxu0 %v7258
  %v7608 = vpop.f32.mrf.mxu0
  %v7609 = vadd.f32 0.0, %v7608
  %v7610 = vpop.f32.mrf.mxu0
  %7611 = vmatprep.mubr.f32.mxu0 0.0
  %7612 = vmatmul.mubr.f32.gmra.mxu0 %v7261
  %v7613 = vpop.f32.mrf.mxu0
  %v7614 = vadd.f32 0.0, %v7613
  %v7615 = vpop.f32.mrf.mxu0
  %7616 = vmatprep.mubr.f32.mxu0 0.0
  %7617 = vmatmul.mubr.f32.gmra.mxu0 %v7264
  %v7618 = vpop.f32.mrf.mxu0
  %v7619 = vadd.f32 0.0, %v7618
  %v7620 = vpop.f32.mrf.mxu0
  %7621 = vmatprep.mubr.f32.mxu0 0.0
  %7622 = vmatmul.mubr.f32.gmra.mxu0 %v7267
  %v7623 = vpop.f32.mrf.mxu0
  %v7624 = vadd.f32 0.0, %v7623
  %v7625 = vpop.f32.mrf.mxu0
  %7626 = vmatprep.mubr.f32.mxu0 0.0
  %7627 = vmatmul.mubr.f32.gmra.mxu0 %v7270
  %v7628 = vpop.f32.mrf.mxu0
  %v7629 = vadd.f32 0.0, %v7628
  %v7630 = vpop.f32.mrf.mxu0
  %7631 = vmatprep.mubr.f32.mxu0 0.0
  %7632 = vmatmul.mubr.f32.gmra.mxu0 %v7273
  %v7633 = vpop.f32.mrf.mxu0
  %v7634 = vadd.f32 0.0, %v7633
  %v7635 = vpop.f32.mrf.mxu0
  %7636 = vmatprep.mubr.f32.mxu0 0.0
  %7637 = vmatmul.mubr.f32.gmra.mxu0 %v7276
  %v7638 = vpop.f32.mrf.mxu0
  %v7639 = vadd.f32 0.0, %v7638
  %v7640 = vpop.f32.mrf.mxu0
  %7641 = vmatprep.mubr.f32.mxu0 0.0
  %7642 = vmatmul.mubr.f32.gmra.mxu0 %v7279
  %v7643 = vpop.f32.mrf.mxu0
  %v7644 = vadd.f32 0.0, %v7643
  %v7645 = vpop.f32.mrf.mxu0
  %7646 = vmatprep.mubr.f32.mxu0 0.0
  %7647 = vmatmul.mubr.f32.gmra.mxu0 %v7282
  %v7648 = vpop.f32.mrf.mxu0
  %v7649 = vadd.f32 0.0, %v7648
  %v7650 = vpop.f32.mrf.mxu0
  %7651 = vmatprep.mubr.f32.mxu0 0.0
  %7652 = vmatmul.mubr.f32.gmra.mxu0 %v7285
  %v7653 = vpop.f32.mrf.mxu0
  %v7654 = vadd.f32 0.0, %v7653
  %v7655 = vpop.f32.mrf.mxu0
  %7656 = vmatprep.mubr.f32.mxu0 0.0
  %7657 = vmatmul.mubr.f32.gmra.mxu0 %v7288
  %v7658 = vpop.f32.mrf.mxu0
  %v7659 = vadd.f32 0.0, %v7658
  %v7660 = vpop.f32.mrf.mxu0
  %7661 = vmatprep.mubr.f32.mxu0 0.0
  %7662 = vmatmul.mubr.f32.gmra.mxu0 %v7291
  %v7663 = vpop.f32.mrf.mxu0
  %v7664 = vadd.f32 0.0, %v7663
  %v7665 = vpop.f32.mrf.mxu0
  %7666 = vmatprep.mubr.f32.mxu0 0.0
  %7667 = vmatmul.mubr.f32.gmra.mxu0 %v7294
  %v7668 = vpop.f32.mrf.mxu0
  %v7669 = vadd.f32 0.0, %v7668
  %v7670 = vpop.f32.mrf.mxu0
  %7671 = vmatprep.mubr.f32.mxu0 0.0
  %7672 = vmatmul.mubr.f32.gmra.mxu0 %v7297
  %v7673 = vpop.f32.mrf.mxu0
  %v7674 = vadd.f32 0.0, %v7673
  %v7675 = vpop.f32.mrf.mxu0
  %7676 = vmatprep.mubr.f32.mxu0 0.0
  %7677 = vmatmul.mubr.f32.gmra.mxu0 %v7300
  %v7678 = vpop.f32.mrf.mxu0
  %v7679 = vadd.f32 0.0, %v7678
  %v7680 = vpop.f32.mrf.mxu0
  %7681 = vmatprep.mubr.f32.mxu0 0.0
  %7682 = vmatmul.mubr.f32.gmra.mxu0 %v7303
  %v7683 = vpop.f32.mrf.mxu0
  %v7684 = vadd.f32 0.0, %v7683
  %v7685 = vpop.f32.mrf.mxu0
  %7686 = vmatprep.mubr.f32.mxu0 0.0
  %7687 = vmatmul.mubr.f32.gmra.mxu0 %v7306
  %v7688 = vpop.f32.mrf.mxu0
  %v7689 = vadd.f32 0.0, %v7688
  %v7690 = vpop.f32.mrf.mxu0
  %7691 = vmatprep.mubr.f32.mxu0 0.0
  %7692 = vmatmul.mubr.f32.gmra.mxu0 %v7309
  %v7693 = vpop.f32.mrf.mxu0
  %v7694 = vadd.f32 0.0, %v7693
  %v7695 = vpop.f32.mrf.mxu0
  %7696 = vmatprep.mubr.f32.mxu0 0.0
  %7697 = vmatmul.mubr.f32.gmra.mxu0 %v7312
  %v7698 = vpop.f32.mrf.mxu0
  %v7699 = vadd.f32 0.0, %v7698
  %v7700 = vpop.f32.mrf.mxu0
  %7701 = vdwg.mxu0
  %v7703 = vsel %vm2197, %v6221, 0
  %v7706 = vsel %vm2197, %v6222, 0
  %v7709 = vsel %vm2197, %v6223, 0
  %v7712 = vsel %vm2197, %v6224, 0
  %v7715 = vsel %vm2197, %v6225, 0
  %v7718 = vsel %vm2197, %v6226, 0
  %v7721 = vsel %vm2197, %v6227, 0
  %v7724 = vsel %vm2197, %v6228, 0
  %v7727 = vsel %vm2197, %v6229, 0
  %v7730 = vsel %vm2197, %v6230, 0
  %v7733 = vsel %vm2197, %v6231, 0
  %v7736 = vsel %vm2197, %v6232, 0
  %v7739 = vsel %vm2197, %v6233, 0
  %v7742 = vsel %vm2197, %v6234, 0
  %v7745 = vsel %vm2197, %v6235, 0
  %v7748 = vsel %vm2197, %v6236, 0
  %v7751 = vsel %vm2197, %v6237, 0
  %v7754 = vsel %vm2197, %v6238, 0
  %v7757 = vsel %vm2197, %v6239, 0
  %v7760 = vsel %vm2197, %v6240, 0
  %v7763 = vsel %vm2197, %v6241, 0
  %v7766 = vsel %vm2197, %v6242, 0
  %v7769 = vsel %vm2197, %v6243, 0
  %v7772 = vsel %vm2197, %v6244, 0
  %v7775 = vsel %vm2197, %v6245, 0
  %v7778 = vsel %vm2197, %v6246, 0
  %v7781 = vsel %vm2197, %v6247, 0
  %v7784 = vsel %vm2197, %v6248, 0
  %v7787 = vsel %vm2197, %v6249, 0
  %v7790 = vsel %vm2197, %v6250, 0
  %v7793 = vsel %vm2197, %v6251, 0
  %v7796 = vsel %vm2197, %v6252, 0
  %v7799 = vsel %vm2197, %v6253, 0
  %v7802 = vsel %vm2197, %v6254, 0
  %v7805 = vsel %vm2197, %v6255, 0
  %v7808 = vsel %vm2197, %v6256, 0
  %v7811 = vsel %vm2197, %v6257, 0
  %v7814 = vsel %vm2197, %v6258, 0
  %v7817 = vsel %vm2197, %v6259, 0
  %v7820 = vsel %vm2197, %v6260, 0
  %v7823 = vsel %vm2197, %v6261, 0
  %v7826 = vsel %vm2197, %v6262, 0
  %v7829 = vsel %vm2197, %v6263, 0
  %v7832 = vsel %vm2197, %v6264, 0
  %v7835 = vsel %vm2197, %v6265, 0
  %v7838 = vsel %vm2197, %v6266, 0
  %v7841 = vsel %vm2197, %v6267, 0
  %v7844 = vsel %vm2197, %v6268, 0
  %v7847 = vsel %vm2197, %v6269, 0
  %v7850 = vsel %vm2197, %v6270, 0
  %v7853 = vsel %vm2197, %v6271, 0
  %v7856 = vsel %vm2197, %v6272, 0
  %v7859 = vsel %vm2197, %v6273, 0
  %v7862 = vsel %vm2197, %v6274, 0
  %v7865 = vsel %vm2197, %v6275, 0
  %v7868 = vsel %vm2197, %v6276, 0
  %v7871 = vsel %vm2197, %v6277, 0
  %v7874 = vsel %vm2197, %v6278, 0
  %v7877 = vsel %vm2197, %v6279, 0
  %v7880 = vsel %vm2197, %v6280, 0
  %v7883 = vsel %vm2197, %v6281, 0
  %v7886 = vsel %vm2197, %v6282, 0
  %v7889 = vsel %vm2197, %v6283, 0
  %v7892 = vsel %vm2197, %v6284, 0
  %v7895 = vsel %vm2414, %v6286, 0
  %7897 = vmatprep.subr.mxu0 0.0
  %7898 = vmatpush1.msra.mxu0 0.0
  %7899 = vmatprep.subr.mxu0 0.0
  %7900 = vmatpush1.msra.mxu0 0.0
  %7901 = vmatprep.subr.mxu0 0.0
  %7902 = vmatpush1.msra.mxu0 0.0
  %7903 = vmatprep.subr.mxu0 0.0
  %7904 = vmatpush1.msra.mxu0 0.0
  %7905 = vmatprep.subr.mxu0 0.0
  %7906 = vmatpush1.msra.mxu0 0.0
  %7907 = vmatprep.subr.mxu0 0.0
  %7908 = vmatpush1.msra.mxu0 0.0
  %7909 = vmatprep.subr.mxu0 0.0
  %7910 = vmatpush1.msra.mxu0 0.0
  %7911 = vmatprep.subr.mxu0 0.0
  %7912 = vmatpush1.msra.mxu0 0.0
  %7913 = vmatprep.subr.mxu0 0.0
  %7914 = vmatpush1.msra.mxu0 0.0
  %7915 = vmatprep.subr.mxu0 0.0
  %7916 = vmatpush1.msra.mxu0 0.0
  %7917 = vmatprep.subr.mxu0 0.0
  %7918 = vmatpush1.msra.mxu0 0.0
  %7919 = vmatprep.subr.mxu0 0.0
  %7920 = vmatpush1.msra.mxu0 0.0
  %7921 = vmatprep.subr.mxu0 0.0
  %7922 = vmatpush1.msra.mxu0 0.0
  %7923 = vmatprep.subr.mxu0 0.0
  %7924 = vmatpush1.msra.mxu0 0.0
  %7925 = vmatprep.subr.mxu0 0.0
  %7926 = vmatpush1.msra.mxu0 %v7895
  %7927 = vmatprep.subr.mxu0 0.0
  %7928 = vmatpush1.msra.mxu0 %v6285
  %7929 = vmatprep.subr.mxu0 0.0
  %7930 = vmatpush2.msra.mxu0 0.0
  %7931 = vmatprep.subr.mxu0 0.0
  %7932 = vmatpush2.msra.mxu0 0.0
  %7933 = vmatprep.subr.mxu0 0.0
  %7934 = vmatpush2.msra.mxu0 0.0
  %7935 = vmatprep.subr.mxu0 0.0
  %7936 = vmatpush2.msra.mxu0 0.0
  %7937 = vmatprep.subr.mxu0 0.0
  %7938 = vmatpush2.msra.mxu0 0.0
  %7939 = vmatprep.subr.mxu0 0.0
  %7940 = vmatpush2.msra.mxu0 0.0
  %7941 = vmatprep.subr.mxu0 0.0
  %7942 = vmatpush2.msra.mxu0 0.0
  %7943 = vmatprep.subr.mxu0 0.0
  %7944 = vmatpush2.msra.mxu0 0.0
  %7945 = vmatprep.subr.mxu0 0.0
  %7946 = vmatpush2.msra.mxu0 0.0
  %7947 = vmatprep.subr.mxu0 0.0
  %7948 = vmatpush2.msra.mxu0 0.0
  %7949 = vmatprep.subr.mxu0 0.0
  %7950 = vmatpush2.msra.mxu0 0.0
  %7951 = vmatprep.subr.mxu0 0.0
  %7952 = vmatpush2.msra.mxu0 0.0
  %7953 = vmatprep.subr.mxu0 0.0
  %7954 = vmatpush2.msra.mxu0 0.0
  %7955 = vmatprep.subr.mxu0 0.0
  %7956 = vmatpush2.msra.mxu0 0.0
  %7957 = vmatprep.subr.mxu0 0.0
  %7958 = vmatpush2.msra.mxu0 0.0
  %7959 = vmatprep.subr.mxu0 0.0
  %7960 = vmatpush2.msra.mxu0 0.0
  %7961 = vmatprep.mubr.f32.mxu0 0.0
  %7962 = vmatmul.mubr.f32.gmra.mxu0 %v7703
  %v7963 = vpop.f32.mrf.mxu0
  %v7964 = vadd.f32 %v7384, %v7963
  %v7965 = vpop.f32.mrf.mxu0
  %7966 = vmatprep.mubr.f32.mxu0 0.0
  %7967 = vmatmul.mubr.f32.gmra.mxu0 %v7706
  %v7968 = vpop.f32.mrf.mxu0
  %v7969 = vadd.f32 %v7389, %v7968
  %v7970 = vpop.f32.mrf.mxu0
  %7971 = vmatprep.mubr.f32.mxu0 0.0
  %7972 = vmatmul.mubr.f32.gmra.mxu0 %v7709
  %v7973 = vpop.f32.mrf.mxu0
  %v7974 = vadd.f32 %v7394, %v7973
  %v7975 = vpop.f32.mrf.mxu0
  %7976 = vmatprep.mubr.f32.mxu0 0.0
  %7977 = vmatmul.mubr.f32.gmra.mxu0 %v7712
  %v7978 = vpop.f32.mrf.mxu0
  %v7979 = vadd.f32 %v7399, %v7978
  %v7980 = vpop.f32.mrf.mxu0
  %7981 = vmatprep.mubr.f32.mxu0 0.0
  %7982 = vmatmul.mubr.f32.gmra.mxu0 %v7715
  %v7983 = vpop.f32.mrf.mxu0
  %v7984 = vadd.f32 %v7404, %v7983
  %v7985 = vpop.f32.mrf.mxu0
  %7986 = vmatprep.mubr.f32.mxu0 0.0
  %7987 = vmatmul.mubr.f32.gmra.mxu0 %v7718
  %v7988 = vpop.f32.mrf.mxu0
  %v7989 = vadd.f32 %v7409, %v7988
  %v7990 = vpop.f32.mrf.mxu0
  %7991 = vmatprep.mubr.f32.mxu0 0.0
  %7992 = vmatmul.mubr.f32.gmra.mxu0 %v7721
  %v7993 = vpop.f32.mrf.mxu0
  %v7994 = vadd.f32 %v7414, %v7993
  %v7995 = vpop.f32.mrf.mxu0
  %7996 = vmatprep.mubr.f32.mxu0 0.0
  %7997 = vmatmul.mubr.f32.gmra.mxu0 %v7724
  %v7998 = vpop.f32.mrf.mxu0
  %v7999 = vadd.f32 %v7419, %v7998
  %v8000 = vpop.f32.mrf.mxu0
  %8001 = vmatprep.mubr.f32.mxu0 0.0
  %8002 = vmatmul.mubr.f32.gmra.mxu0 %v7727
  %v8003 = vpop.f32.mrf.mxu0
  %v8004 = vadd.f32 %v7424, %v8003
  %v8005 = vpop.f32.mrf.mxu0
  %8006 = vmatprep.mubr.f32.mxu0 0.0
  %8007 = vmatmul.mubr.f32.gmra.mxu0 %v7730
  %v8008 = vpop.f32.mrf.mxu0
  %v8009 = vadd.f32 %v7429, %v8008
  %v8010 = vpop.f32.mrf.mxu0
  %8011 = vmatprep.mubr.f32.mxu0 0.0
  %8012 = vmatmul.mubr.f32.gmra.mxu0 %v7733
  %v8013 = vpop.f32.mrf.mxu0
  %v8014 = vadd.f32 %v7434, %v8013
  %v8015 = vpop.f32.mrf.mxu0
  %8016 = vmatprep.mubr.f32.mxu0 0.0
  %8017 = vmatmul.mubr.f32.gmra.mxu0 %v7736
  %v8018 = vpop.f32.mrf.mxu0
  %v8019 = vadd.f32 %v7439, %v8018
  %v8020 = vpop.f32.mrf.mxu0
  %8021 = vmatprep.mubr.f32.mxu0 0.0
  %8022 = vmatmul.mubr.f32.gmra.mxu0 %v7739
  %v8023 = vpop.f32.mrf.mxu0
  %v8024 = vadd.f32 %v7444, %v8023
  %v8025 = vpop.f32.mrf.mxu0
  %8026 = vmatprep.mubr.f32.mxu0 0.0
  %8027 = vmatmul.mubr.f32.gmra.mxu0 %v7742
  %v8028 = vpop.f32.mrf.mxu0
  %v8029 = vadd.f32 %v7449, %v8028
  %v8030 = vpop.f32.mrf.mxu0
  %8031 = vmatprep.mubr.f32.mxu0 0.0
  %8032 = vmatmul.mubr.f32.gmra.mxu0 %v7745
  %v8033 = vpop.f32.mrf.mxu0
  %v8034 = vadd.f32 %v7454, %v8033
  %v8035 = vpop.f32.mrf.mxu0
  %8036 = vmatprep.mubr.f32.mxu0 0.0
  %8037 = vmatmul.mubr.f32.gmra.mxu0 %v7748
  %v8038 = vpop.f32.mrf.mxu0
  %v8039 = vadd.f32 %v7459, %v8038
  %v8040 = vpop.f32.mrf.mxu0
  %8041 = vmatprep.mubr.f32.mxu0 0.0
  %8042 = vmatmul.mubr.f32.gmra.mxu0 %v7751
  %v8043 = vpop.f32.mrf.mxu0
  %v8044 = vadd.f32 %v7464, %v8043
  %v8045 = vpop.f32.mrf.mxu0
  %8046 = vmatprep.mubr.f32.mxu0 0.0
  %8047 = vmatmul.mubr.f32.gmra.mxu0 %v7754
  %v8048 = vpop.f32.mrf.mxu0
  %v8049 = vadd.f32 %v7469, %v8048
  %v8050 = vpop.f32.mrf.mxu0
  %8051 = vmatprep.mubr.f32.mxu0 0.0
  %8052 = vmatmul.mubr.f32.gmra.mxu0 %v7757
  %v8053 = vpop.f32.mrf.mxu0
  %v8054 = vadd.f32 %v7474, %v8053
  %v8055 = vpop.f32.mrf.mxu0
  %8056 = vmatprep.mubr.f32.mxu0 0.0
  %8057 = vmatmul.mubr.f32.gmra.mxu0 %v7760
  %v8058 = vpop.f32.mrf.mxu0
  %v8059 = vadd.f32 %v7479, %v8058
  %v8060 = vpop.f32.mrf.mxu0
  %8061 = vmatprep.mubr.f32.mxu0 0.0
  %8062 = vmatmul.mubr.f32.gmra.mxu0 %v7763
  %v8063 = vpop.f32.mrf.mxu0
  %v8064 = vadd.f32 %v7484, %v8063
  %v8065 = vpop.f32.mrf.mxu0
  %8066 = vmatprep.mubr.f32.mxu0 0.0
  %8067 = vmatmul.mubr.f32.gmra.mxu0 %v7766
  %v8068 = vpop.f32.mrf.mxu0
  %v8069 = vadd.f32 %v7489, %v8068
  %v8070 = vpop.f32.mrf.mxu0
  %8071 = vmatprep.mubr.f32.mxu0 0.0
  %8072 = vmatmul.mubr.f32.gmra.mxu0 %v7769
  %v8073 = vpop.f32.mrf.mxu0
  %v8074 = vadd.f32 %v7494, %v8073
  %v8075 = vpop.f32.mrf.mxu0
  %8076 = vmatprep.mubr.f32.mxu0 0.0
  %8077 = vmatmul.mubr.f32.gmra.mxu0 %v7772
  %v8078 = vpop.f32.mrf.mxu0
  %v8079 = vadd.f32 %v7499, %v8078
  %v8080 = vpop.f32.mrf.mxu0
  %8081 = vmatprep.mubr.f32.mxu0 0.0
  %8082 = vmatmul.mubr.f32.gmra.mxu0 %v7775
  %v8083 = vpop.f32.mrf.mxu0
  %v8084 = vadd.f32 %v7504, %v8083
  %v8085 = vpop.f32.mrf.mxu0
  %8086 = vmatprep.mubr.f32.mxu0 0.0
  %8087 = vmatmul.mubr.f32.gmra.mxu0 %v7778
  %v8088 = vpop.f32.mrf.mxu0
  %v8089 = vadd.f32 %v7509, %v8088
  %v8090 = vpop.f32.mrf.mxu0
  %8091 = vmatprep.mubr.f32.mxu0 0.0
  %8092 = vmatmul.mubr.f32.gmra.mxu0 %v7781
  %v8093 = vpop.f32.mrf.mxu0
  %v8094 = vadd.f32 %v7514, %v8093
  %v8095 = vpop.f32.mrf.mxu0
  %8096 = vmatprep.mubr.f32.mxu0 0.0
  %8097 = vmatmul.mubr.f32.gmra.mxu0 %v7784
  %v8098 = vpop.f32.mrf.mxu0
  %v8099 = vadd.f32 %v7519, %v8098
  %v8100 = vpop.f32.mrf.mxu0
  %8101 = vmatprep.mubr.f32.mxu0 0.0
  %8102 = vmatmul.mubr.f32.gmra.mxu0 %v7787
  %v8103 = vpop.f32.mrf.mxu0
  %v8104 = vadd.f32 %v7524, %v8103
  %v8105 = vpop.f32.mrf.mxu0
  %8106 = vmatprep.mubr.f32.mxu0 0.0
  %8107 = vmatmul.mubr.f32.gmra.mxu0 %v7790
  %v8108 = vpop.f32.mrf.mxu0
  %v8109 = vadd.f32 %v7529, %v8108
  %v8110 = vpop.f32.mrf.mxu0
  %8111 = vmatprep.mubr.f32.mxu0 0.0
  %8112 = vmatmul.mubr.f32.gmra.mxu0 %v7793
  %v8113 = vpop.f32.mrf.mxu0
  %v8114 = vadd.f32 %v7534, %v8113
  %v8115 = vpop.f32.mrf.mxu0
  %8116 = vmatprep.mubr.f32.mxu0 0.0
  %8117 = vmatmul.mubr.f32.gmra.mxu0 %v7796
  %v8118 = vpop.f32.mrf.mxu0
  %v8119 = vadd.f32 %v7539, %v8118
  %v8120 = vpop.f32.mrf.mxu0
  %8121 = vmatprep.mubr.f32.mxu0 0.0
  %8122 = vmatmul.mubr.f32.gmra.mxu0 %v7799
  %v8123 = vpop.f32.mrf.mxu0
  %v8124 = vadd.f32 %v7544, %v8123
  %v8125 = vpop.f32.mrf.mxu0
  %8126 = vmatprep.mubr.f32.mxu0 0.0
  %8127 = vmatmul.mubr.f32.gmra.mxu0 %v7802
  %v8128 = vpop.f32.mrf.mxu0
  %v8129 = vadd.f32 %v7549, %v8128
  %v8130 = vpop.f32.mrf.mxu0
  %8131 = vmatprep.mubr.f32.mxu0 0.0
  %8132 = vmatmul.mubr.f32.gmra.mxu0 %v7805
  %v8133 = vpop.f32.mrf.mxu0
  %v8134 = vadd.f32 %v7554, %v8133
  %v8135 = vpop.f32.mrf.mxu0
  %8136 = vmatprep.mubr.f32.mxu0 0.0
  %8137 = vmatmul.mubr.f32.gmra.mxu0 %v7808
  %v8138 = vpop.f32.mrf.mxu0
  %v8139 = vadd.f32 %v7559, %v8138
  %v8140 = vpop.f32.mrf.mxu0
  %8141 = vmatprep.mubr.f32.mxu0 0.0
  %8142 = vmatmul.mubr.f32.gmra.mxu0 %v7811
  %v8143 = vpop.f32.mrf.mxu0
  %v8144 = vadd.f32 %v7564, %v8143
  %v8145 = vpop.f32.mrf.mxu0
  %8146 = vmatprep.mubr.f32.mxu0 0.0
  %8147 = vmatmul.mubr.f32.gmra.mxu0 %v7814
  %v8148 = vpop.f32.mrf.mxu0
  %v8149 = vadd.f32 %v7569, %v8148
  %v8150 = vpop.f32.mrf.mxu0
  %8151 = vmatprep.mubr.f32.mxu0 0.0
  %8152 = vmatmul.mubr.f32.gmra.mxu0 %v7817
  %v8153 = vpop.f32.mrf.mxu0
  %v8154 = vadd.f32 %v7574, %v8153
  %v8155 = vpop.f32.mrf.mxu0
  %8156 = vmatprep.mubr.f32.mxu0 0.0
  %8157 = vmatmul.mubr.f32.gmra.mxu0 %v7820
  %v8158 = vpop.f32.mrf.mxu0
  %v8159 = vadd.f32 %v7579, %v8158
  %v8160 = vpop.f32.mrf.mxu0
  %8161 = vmatprep.mubr.f32.mxu0 0.0
  %8162 = vmatmul.mubr.f32.gmra.mxu0 %v7823
  %v8163 = vpop.f32.mrf.mxu0
  %v8164 = vadd.f32 %v7584, %v8163
  %v8165 = vpop.f32.mrf.mxu0
  %8166 = vmatprep.mubr.f32.mxu0 0.0
  %8167 = vmatmul.mubr.f32.gmra.mxu0 %v7826
  %v8168 = vpop.f32.mrf.mxu0
  %v8169 = vadd.f32 %v7589, %v8168
  %v8170 = vpop.f32.mrf.mxu0
  %8171 = vmatprep.mubr.f32.mxu0 0.0
  %8172 = vmatmul.mubr.f32.gmra.mxu0 %v7829
  %v8173 = vpop.f32.mrf.mxu0
  %v8174 = vadd.f32 %v7594, %v8173
  %v8175 = vpop.f32.mrf.mxu0
  %8176 = vmatprep.mubr.f32.mxu0 0.0
  %8177 = vmatmul.mubr.f32.gmra.mxu0 %v7832
  %v8178 = vpop.f32.mrf.mxu0
  %v8179 = vadd.f32 %v7599, %v8178
  %v8180 = vpop.f32.mrf.mxu0
  %8181 = vmatprep.mubr.f32.mxu0 0.0
  %8182 = vmatmul.mubr.f32.gmra.mxu0 %v7835
  %v8183 = vpop.f32.mrf.mxu0
  %v8184 = vadd.f32 %v7604, %v8183
  %v8185 = vpop.f32.mrf.mxu0
  %8186 = vmatprep.mubr.f32.mxu0 0.0
  %8187 = vmatmul.mubr.f32.gmra.mxu0 %v7838
  %v8188 = vpop.f32.mrf.mxu0
  %v8189 = vadd.f32 %v7609, %v8188
  %v8190 = vpop.f32.mrf.mxu0
  %8191 = vmatprep.mubr.f32.mxu0 0.0
  %8192 = vmatmul.mubr.f32.gmra.mxu0 %v7841
  %v8193 = vpop.f32.mrf.mxu0
  %v8194 = vadd.f32 %v7614, %v8193
  %v8195 = vpop.f32.mrf.mxu0
  %8196 = vmatprep.mubr.f32.mxu0 0.0
  %8197 = vmatmul.mubr.f32.gmra.mxu0 %v7844
  %v8198 = vpop.f32.mrf.mxu0
  %v8199 = vadd.f32 %v7619, %v8198
  %v8200 = vpop.f32.mrf.mxu0
  %8201 = vmatprep.mubr.f32.mxu0 0.0
  %8202 = vmatmul.mubr.f32.gmra.mxu0 %v7847
  %v8203 = vpop.f32.mrf.mxu0
  %v8204 = vadd.f32 %v7624, %v8203
  %v8205 = vpop.f32.mrf.mxu0
  %8206 = vmatprep.mubr.f32.mxu0 0.0
  %8207 = vmatmul.mubr.f32.gmra.mxu0 %v7850
  %v8208 = vpop.f32.mrf.mxu0
  %v8209 = vadd.f32 %v7629, %v8208
  %v8210 = vpop.f32.mrf.mxu0
  %8211 = vmatprep.mubr.f32.mxu0 0.0
  %8212 = vmatmul.mubr.f32.gmra.mxu0 %v7853
  %v8213 = vpop.f32.mrf.mxu0
  %v8214 = vadd.f32 %v7634, %v8213
  %v8215 = vpop.f32.mrf.mxu0
  %8216 = vmatprep.mubr.f32.mxu0 0.0
  %8217 = vmatmul.mubr.f32.gmra.mxu0 %v7856
  %v8218 = vpop.f32.mrf.mxu0
  %v8219 = vadd.f32 %v7639, %v8218
  %v8220 = vpop.f32.mrf.mxu0
  %8221 = vmatprep.mubr.f32.mxu0 0.0
  %8222 = vmatmul.mubr.f32.gmra.mxu0 %v7859
  %v8223 = vpop.f32.mrf.mxu0
  %v8224 = vadd.f32 %v7644, %v8223
  %v8225 = vpop.f32.mrf.mxu0
  %8226 = vmatprep.mubr.f32.mxu0 0.0
  %8227 = vmatmul.mubr.f32.gmra.mxu0 %v7862
  %v8228 = vpop.f32.mrf.mxu0
  %v8229 = vadd.f32 %v7649, %v8228
  %v8230 = vpop.f32.mrf.mxu0
  %8231 = vmatprep.mubr.f32.mxu0 0.0
  %8232 = vmatmul.mubr.f32.gmra.mxu0 %v7865
  %v8233 = vpop.f32.mrf.mxu0
  %v8234 = vadd.f32 %v7654, %v8233
  %v8235 = vpop.f32.mrf.mxu0
  %8236 = vmatprep.mubr.f32.mxu0 0.0
  %8237 = vmatmul.mubr.f32.gmra.mxu0 %v7868
  %v8238 = vpop.f32.mrf.mxu0
  %v8239 = vadd.f32 %v7659, %v8238
  %v8240 = vpop.f32.mrf.mxu0
  %8241 = vmatprep.mubr.f32.mxu0 0.0
  %8242 = vmatmul.mubr.f32.gmra.mxu0 %v7871
  %v8243 = vpop.f32.mrf.mxu0
  %v8244 = vadd.f32 %v7664, %v8243
  %v8245 = vpop.f32.mrf.mxu0
  %8246 = vmatprep.mubr.f32.mxu0 0.0
  %8247 = vmatmul.mubr.f32.gmra.mxu0 %v7874
  %v8248 = vpop.f32.mrf.mxu0
  %v8249 = vadd.f32 %v7669, %v8248
  %v8250 = vpop.f32.mrf.mxu0
  %8251 = vmatprep.mubr.f32.mxu0 0.0
  %8252 = vmatmul.mubr.f32.gmra.mxu0 %v7877
  %v8253 = vpop.f32.mrf.mxu0
  %v8254 = vadd.f32 %v7674, %v8253
  %v8255 = vpop.f32.mrf.mxu0
  %8256 = vmatprep.mubr.f32.mxu0 0.0
  %8257 = vmatmul.mubr.f32.gmra.mxu0 %v7880
  %v8258 = vpop.f32.mrf.mxu0
  %v8259 = vadd.f32 %v7679, %v8258
  %v8260 = vpop.f32.mrf.mxu0
  %8261 = vmatprep.mubr.f32.mxu0 0.0
  %8262 = vmatmul.mubr.f32.gmra.mxu0 %v7883
  %v8263 = vpop.f32.mrf.mxu0
  %v8264 = vadd.f32 %v7684, %v8263
  %v8265 = vpop.f32.mrf.mxu0
  %8266 = vmatprep.mubr.f32.mxu0 0.0
  %8267 = vmatmul.mubr.f32.gmra.mxu0 %v7886
  %v8268 = vpop.f32.mrf.mxu0
  %v8269 = vadd.f32 %v7689, %v8268
  %v8270 = vpop.f32.mrf.mxu0
  %8271 = vmatprep.mubr.f32.mxu0 0.0
  %8272 = vmatmul.mubr.f32.gmra.mxu0 %v7889
  %v8273 = vpop.f32.mrf.mxu0
  %v8274 = vadd.f32 %v7694, %v8273
  %v8275 = vpop.f32.mrf.mxu0
  %8276 = vmatprep.mubr.f32.mxu0 0.0
  %8277 = vmatmul.mubr.f32.gmra.mxu0 %v7892
  %v8278 = vpop.f32.mrf.mxu0
  %v8279 = vadd.f32 %v7699, %v8278
  %v8280 = vpop.f32.mrf.mxu0
  %8281 = vdwg.mxu0
  %s8282 = scalar_lea.vmem [#allocation3], 48
  %v8283 = vld [vmem:[%s8282] sm:$0xff]
  %v8284 = vld [vmem:[%s8282 + $0x8] sm:$0xff]
  %v8285 = vld [vmem:[%s8282 + $0x18] sm:$0xff]
  %v8286 = vld [vmem:[%s8282 + $0x20] sm:$0xff]
  %v8287 = vld [vmem:[%s8282 + $0x30] sm:$0xff]
  %v8288 = vld [vmem:[%s8282 + $0x38] sm:$0xff]
  %v8289 = vld [vmem:[%s8282 + $0x48] sm:$0xff]
  %v8290 = vld [vmem:[%s8282 + $0x50] sm:$0xff]
  %v8291 = vld [vmem:[%s8282 + $0x60] sm:$0xff]
  %v8292 = vld [vmem:[%s8282 + $0x68] sm:$0xff]
  %v8293 = vld [vmem:[%s8282 + $0x78] sm:$0xff]
  %v8294 = vld [vmem:[%s8282 + $0x80] sm:$0xff]
  %v8295 = vld [vmem:[%s8282 + $0x90] sm:$0xff]
  %v8296 = vld [vmem:[%s8282 + $0x98] sm:$0xff]
  %v8297 = vld [vmem:[%s8282 + $0xa8] sm:$0xff]
  %v8298 = vld [vmem:[%s8282 + $0xb0] sm:$0xff]
  %v8299 = vld [vmem:[%s8282 + $0xc0] sm:$0xff]
  %v8300 = vld [vmem:[%s8282 + $0xc8] sm:$0xff]
  %v8301 = vld [vmem:[%s8282 + $0xd8] sm:$0xff]
  %v8302 = vld [vmem:[%s8282 + $0xe0] sm:$0xff]
  %v8303 = vld [vmem:[%s8282 + $0xf0] sm:$0xff]
  %v8304 = vld [vmem:[%s8282 + $0xf8] sm:$0xff]
  %v8305 = vld [vmem:[%s8282 + $0x108] sm:$0xff]
  %v8306 = vld [vmem:[%s8282 + $0x110] sm:$0xff]
  %v8307 = vld [vmem:[%s8282 + $0x120] sm:$0xff]
  %v8308 = vld [vmem:[%s8282 + $0x128] sm:$0xff]
  %v8309 = vld [vmem:[%s8282 + $0x138] sm:$0xff]
  %v8310 = vld [vmem:[%s8282 + $0x140] sm:$0xff]
  %v8311 = vld [vmem:[%s8282 + $0x150] sm:$0xff]
  %v8312 = vld [vmem:[%s8282 + $0x158] sm:$0xff]
  %v8313 = vld [vmem:[%s8282 + $0x168] sm:$0xff]
  %v8314 = vld [vmem:[%s8282 + $0x170] sm:$0xff]
  %v8315 = vld [vmem:[%s8282 + $0x1b0] sm:$0xff]
  %v8316 = vld [vmem:[%s8282 + $0x1b8] sm:$0xff]
  %v8317 = vld [vmem:[%s8282 + $0x1c8] sm:$0xff]
  %v8318 = vld [vmem:[%s8282 + $0x1d0] sm:$0xff]
  %v8319 = vld [vmem:[%s8282 + $0x1e0] sm:$0xff]
  %v8320 = vld [vmem:[%s8282 + $0x1e8] sm:$0xff]
  %v8321 = vld [vmem:[%s8282 + $0x1f8] sm:$0xff]
  %v8322 = vld [vmem:[%s8282 + $0x200] sm:$0xff]
  %v8323 = vld [vmem:[%s8282 + $0x210] sm:$0xff]
  %v8324 = vld [vmem:[%s8282 + $0x218] sm:$0xff]
  %v8325 = vld [vmem:[%s8282 + $0x228] sm:$0xff]
  %v8326 = vld [vmem:[%s8282 + $0x230] sm:$0xff]
  %v8327 = vld [vmem:[%s8282 + $0x240] sm:$0xff]
  %v8328 = vld [vmem:[%s8282 + $0x248] sm:$0xff]
  %v8329 = vld [vmem:[%s8282 + $0x258] sm:$0xff]
  %v8330 = vld [vmem:[%s8282 + $0x260] sm:$0xff]
  %v8331 = vld [vmem:[%s8282 + $0x270] sm:$0xff]
  %v8332 = vld [vmem:[%s8282 + $0x278] sm:$0xff]
  %v8333 = vld [vmem:[%s8282 + $0x288] sm:$0xff]
  %v8334 = vld [vmem:[%s8282 + $0x290] sm:$0xff]
  %v8335 = vld [vmem:[%s8282 + $0x2a0] sm:$0xff]
  %v8336 = vld [vmem:[%s8282 + $0x2a8] sm:$0xff]
  %v8337 = vld [vmem:[%s8282 + $0x2b8] sm:$0xff]
  %v8338 = vld [vmem:[%s8282 + $0x2c0] sm:$0xff]
  %v8339 = vld [vmem:[%s8282 + $0x2d0] sm:$0xff]
  %v8340 = vld [vmem:[%s8282 + $0x2d8] sm:$0xff]
  %v8341 = vld [vmem:[%s8282 + $0x2e8] sm:$0xff]
  %v8342 = vld [vmem:[%s8282 + $0x2f0] sm:$0xff]
  %v8343 = vld [vmem:[%s8282 + $0x300] sm:$0xff]
  %v8344 = vld [vmem:[%s8282 + $0x308] sm:$0xff]
  %v8345 = vld [vmem:[%s8282 + $0x318] sm:$0xff]
  %v8346 = vld [vmem:[%s8282 + $0x320] sm:$0xff]
  %v8347 = vld [vmem:[%s8282 + $0x1] sm:$0xff]
  %v8348 = vld [vmem:[%s8282 + $0x9] sm:$0xff]
  %v8349 = vld [vmem:[%s8282 + $0x19] sm:$0xff]
  %v8350 = vld [vmem:[%s8282 + $0x21] sm:$0xff]
  %v8351 = vld [vmem:[%s8282 + $0x31] sm:$0xff]
  %v8352 = vld [vmem:[%s8282 + $0x39] sm:$0xff]
  %v8353 = vld [vmem:[%s8282 + $0x49] sm:$0xff]
  %v8354 = vld [vmem:[%s8282 + $0x51] sm:$0xff]
  %v8355 = vld [vmem:[%s8282 + $0x61] sm:$0xff]
  %v8356 = vld [vmem:[%s8282 + $0x69] sm:$0xff]
  %v8357 = vld [vmem:[%s8282 + $0x79] sm:$0xff]
  %v8358 = vld [vmem:[%s8282 + $0x81] sm:$0xff]
  %v8359 = vld [vmem:[%s8282 + $0x91] sm:$0xff]
  %v8360 = vld [vmem:[%s8282 + $0x99] sm:$0xff]
  %v8361 = vld [vmem:[%s8282 + $0xa9] sm:$0xff]
  %v8362 = vld [vmem:[%s8282 + $0xb1] sm:$0xff]
  %v8363 = vld [vmem:[%s8282 + $0xc1] sm:$0xff]
  %v8364 = vld [vmem:[%s8282 + $0xc9] sm:$0xff]
  %v8365 = vld [vmem:[%s8282 + $0xd9] sm:$0xff]
  %v8366 = vld [vmem:[%s8282 + $0xe1] sm:$0xff]
  %v8367 = vld [vmem:[%s8282 + $0xf1] sm:$0xff]
  %v8368 = vld [vmem:[%s8282 + $0xf9] sm:$0xff]
  %v8369 = vld [vmem:[%s8282 + $0x109] sm:$0xff]
  %v8370 = vld [vmem:[%s8282 + $0x111] sm:$0xff]
  %v8371 = vld [vmem:[%s8282 + $0x121] sm:$0xff]
  %v8372 = vld [vmem:[%s8282 + $0x129] sm:$0xff]
  %v8373 = vld [vmem:[%s8282 + $0x139] sm:$0xff]
  %v8374 = vld [vmem:[%s8282 + $0x141] sm:$0xff]
  %v8375 = vld [vmem:[%s8282 + $0x151] sm:$0xff]
  %v8376 = vld [vmem:[%s8282 + $0x159] sm:$0xff]
  %v8377 = vld [vmem:[%s8282 + $0x169] sm:$0xff]
  %v8378 = vld [vmem:[%s8282 + $0x171] sm:$0xff]
  %v8379 = vld [vmem:[%s8282 + $0x1b1] sm:$0xff]
  %v8380 = vld [vmem:[%s8282 + $0x1b9] sm:$0xff]
  %v8381 = vld [vmem:[%s8282 + $0x1c9] sm:$0xff]
  %v8382 = vld [vmem:[%s8282 + $0x1d1] sm:$0xff]
  %v8383 = vld [vmem:[%s8282 + $0x1e1] sm:$0xff]
  %v8384 = vld [vmem:[%s8282 + $0x1e9] sm:$0xff]
  %v8385 = vld [vmem:[%s8282 + $0x1f9] sm:$0xff]
  %v8386 = vld [vmem:[%s8282 + $0x201] sm:$0xff]
  %v8387 = vld [vmem:[%s8282 + $0x211] sm:$0xff]
  %v8388 = vld [vmem:[%s8282 + $0x219] sm:$0xff]
  %v8389 = vld [vmem:[%s8282 + $0x229] sm:$0xff]
  %v8390 = vld [vmem:[%s8282 + $0x231] sm:$0xff]
  %v8391 = vld [vmem:[%s8282 + $0x241] sm:$0xff]
  %v8392 = vld [vmem:[%s8282 + $0x249] sm:$0xff]
  %v8393 = vld [vmem:[%s8282 + $0x259] sm:$0xff]
  %v8394 = vld [vmem:[%s8282 + $0x261] sm:$0xff]
  %v8395 = vld [vmem:[%s8282 + $0x271] sm:$0xff]
  %v8396 = vld [vmem:[%s8282 + $0x279] sm:$0xff]
  %v8397 = vld [vmem:[%s8282 + $0x289] sm:$0xff]
  %v8398 = vld [vmem:[%s8282 + $0x291] sm:$0xff]
  %v8399 = vld [vmem:[%s8282 + $0x2a1] sm:$0xff]
  %v8400 = vld [vmem:[%s8282 + $0x2a9] sm:$0xff]
  %v8401 = vld [vmem:[%s8282 + $0x2b9] sm:$0xff]
  %v8402 = vld [vmem:[%s8282 + $0x2c1] sm:$0xff]
  %v8403 = vld [vmem:[%s8282 + $0x2d1] sm:$0xff]
  %v8404 = vld [vmem:[%s8282 + $0x2d9] sm:$0xff]
  %v8405 = vld [vmem:[%s8282 + $0x2e9] sm:$0xff]
  %v8406 = vld [vmem:[%s8282 + $0x2f1] sm:$0xff]
  %v8407 = vld [vmem:[%s8282 + $0x301] sm:$0xff]
  %v8408 = vld [vmem:[%s8282 + $0x309] sm:$0xff]
  %v8409 = vld [vmem:[%s8282 + $0x319] sm:$0xff]
  %v8410 = vld [vmem:[%s8282 + $0x321] sm:$0xff]
  %v8411 = vld [vmem:[%s8282 + $0x2] sm:$0xff]
  %v8412 = vld [vmem:[%s8282 + $0xa] sm:$0xff]
  %v8413 = vld [vmem:[%s8282 + $0x1a] sm:$0xff]
  %v8414 = vld [vmem:[%s8282 + $0x22] sm:$0xff]
  %v8415 = vld [vmem:[%s8282 + $0x32] sm:$0xff]
  %v8416 = vld [vmem:[%s8282 + $0x3a] sm:$0xff]
  %v8417 = vld [vmem:[%s8282 + $0x4a] sm:$0xff]
  %v8418 = vld [vmem:[%s8282 + $0x52] sm:$0xff]
  %v8419 = vld [vmem:[%s8282 + $0x62] sm:$0xff]
  %v8420 = vld [vmem:[%s8282 + $0x6a] sm:$0xff]
  %v8421 = vld [vmem:[%s8282 + $0x7a] sm:$0xff]
  %v8422 = vld [vmem:[%s8282 + $0x82] sm:$0xff]
  %v8423 = vld [vmem:[%s8282 + $0x92] sm:$0xff]
  %v8424 = vld [vmem:[%s8282 + $0x9a] sm:$0xff]
  %v8425 = vld [vmem:[%s8282 + $0xaa] sm:$0xff]
  %v8426 = vld [vmem:[%s8282 + $0xb2] sm:$0xff]
  %v8427 = vld [vmem:[%s8282 + $0xc2] sm:$0xff]
  %v8428 = vld [vmem:[%s8282 + $0xca] sm:$0xff]
  %v8429 = vld [vmem:[%s8282 + $0xda] sm:$0xff]
  %v8430 = vld [vmem:[%s8282 + $0xe2] sm:$0xff]
  %v8431 = vld [vmem:[%s8282 + $0xf2] sm:$0xff]
  %v8432 = vld [vmem:[%s8282 + $0xfa] sm:$0xff]
  %v8433 = vld [vmem:[%s8282 + $0x10a] sm:$0xff]
  %v8434 = vld [vmem:[%s8282 + $0x112] sm:$0xff]
  %v8435 = vld [vmem:[%s8282 + $0x122] sm:$0xff]
  %v8436 = vld [vmem:[%s8282 + $0x12a] sm:$0xff]
  %v8437 = vld [vmem:[%s8282 + $0x13a] sm:$0xff]
  %v8438 = vld [vmem:[%s8282 + $0x142] sm:$0xff]
  %v8439 = vld [vmem:[%s8282 + $0x152] sm:$0xff]
  %v8440 = vld [vmem:[%s8282 + $0x15a] sm:$0xff]
  %v8441 = vld [vmem:[%s8282 + $0x16a] sm:$0xff]
  %v8442 = vld [vmem:[%s8282 + $0x172] sm:$0xff]
  %v8443 = vld [vmem:[%s8282 + $0x1b2] sm:$0xff]
  %v8444 = vld [vmem:[%s8282 + $0x1ba] sm:$0xff]
  %v8445 = vld [vmem:[%s8282 + $0x1ca] sm:$0xff]
  %v8446 = vld [vmem:[%s8282 + $0x1d2] sm:$0xff]
  %v8447 = vld [vmem:[%s8282 + $0x1e2] sm:$0xff]
  %v8448 = vld [vmem:[%s8282 + $0x1ea] sm:$0xff]
  %v8449 = vld [vmem:[%s8282 + $0x1fa] sm:$0xff]
  %v8450 = vld [vmem:[%s8282 + $0x202] sm:$0xff]
  %v8451 = vld [vmem:[%s8282 + $0x212] sm:$0xff]
  %v8452 = vld [vmem:[%s8282 + $0x21a] sm:$0xff]
  %v8453 = vld [vmem:[%s8282 + $0x22a] sm:$0xff]
  %v8454 = vld [vmem:[%s8282 + $0x232] sm:$0xff]
  %v8455 = vld [vmem:[%s8282 + $0x242] sm:$0xff]
  %v8456 = vld [vmem:[%s8282 + $0x24a] sm:$0xff]
  %v8457 = vld [vmem:[%s8282 + $0x25a] sm:$0xff]
  %v8458 = vld [vmem:[%s8282 + $0x262] sm:$0xff]
  %v8459 = vld [vmem:[%s8282 + $0x272] sm:$0xff]
  %v8460 = vld [vmem:[%s8282 + $0x27a] sm:$0xff]
  %v8461 = vld [vmem:[%s8282 + $0x28a] sm:$0xff]
  %v8462 = vld [vmem:[%s8282 + $0x292] sm:$0xff]
  %v8463 = vld [vmem:[%s8282 + $0x2a2] sm:$0xff]
  %v8464 = vld [vmem:[%s8282 + $0x2aa] sm:$0xff]
  %v8465 = vld [vmem:[%s8282 + $0x2ba] sm:$0xff]
  %v8466 = vld [vmem:[%s8282 + $0x2c2] sm:$0xff]
  %v8467 = vld [vmem:[%s8282 + $0x2d2] sm:$0xff]
  %v8468 = vld [vmem:[%s8282 + $0x2da] sm:$0xff]
  %v8469 = vld [vmem:[%s8282 + $0x2ea] sm:$0xff]
  %v8470 = vld [vmem:[%s8282 + $0x2f2] sm:$0xff]
  %v8471 = vld [vmem:[%s8282 + $0x302] sm:$0xff]
  %v8472 = vld [vmem:[%s8282 + $0x30a] sm:$0xff]
  %v8473 = vld [vmem:[%s8282 + $0x31a] sm:$0xff]
  %v8474 = vld [vmem:[%s8282 + $0x322] sm:$0xff]
  %8539 = vrot.lane.b32.xlu0 %v8347, 4
  %v8540 = vpop.permute.xlu0 %8539
  %8541 = vrot.lane.b32.xlu0 %v8348, 4
  %v8542 = vpop.permute.xlu0 %8541
  %8543 = vrot.lane.b32.xlu0 %v8349, 4
  %v8544 = vpop.permute.xlu0 %8543
  %8545 = vrot.lane.b32.xlu0 %v8350, 4
  %v8546 = vpop.permute.xlu0 %8545
  %8547 = vrot.lane.b32.xlu0 %v8351, 4
  %v8548 = vpop.permute.xlu0 %8547
  %8549 = vrot.lane.b32.xlu0 %v8352, 4
  %v8550 = vpop.permute.xlu0 %8549
  %8551 = vrot.lane.b32.xlu0 %v8353, 4
  %v8552 = vpop.permute.xlu0 %8551
  %8553 = vrot.lane.b32.xlu0 %v8354, 4
  %v8554 = vpop.permute.xlu0 %8553
  %8555 = vrot.lane.b32.xlu0 %v8355, 4
  %v8556 = vpop.permute.xlu0 %8555
  %8557 = vrot.lane.b32.xlu0 %v8356, 4
  %v8558 = vpop.permute.xlu0 %8557
  %8559 = vrot.lane.b32.xlu0 %v8357, 4
  %v8560 = vpop.permute.xlu0 %8559
  %8561 = vrot.lane.b32.xlu0 %v8358, 4
  %v8562 = vpop.permute.xlu0 %8561
  %8563 = vrot.lane.b32.xlu0 %v8359, 4
  %v8564 = vpop.permute.xlu0 %8563
  %8565 = vrot.lane.b32.xlu0 %v8360, 4
  %v8566 = vpop.permute.xlu0 %8565
  %8567 = vrot.lane.b32.xlu0 %v8361, 4
  %v8568 = vpop.permute.xlu0 %8567
  %8569 = vrot.lane.b32.xlu0 %v8362, 4
  %v8570 = vpop.permute.xlu0 %8569
  %8571 = vrot.lane.b32.xlu0 %v8363, 4
  %v8572 = vpop.permute.xlu0 %8571
  %8573 = vrot.lane.b32.xlu0 %v8364, 4
  %v8574 = vpop.permute.xlu0 %8573
  %8575 = vrot.lane.b32.xlu0 %v8365, 4
  %v8576 = vpop.permute.xlu0 %8575
  %8577 = vrot.lane.b32.xlu0 %v8366, 4
  %v8578 = vpop.permute.xlu0 %8577
  %8579 = vrot.lane.b32.xlu0 %v8367, 4
  %v8580 = vpop.permute.xlu0 %8579
  %8581 = vrot.lane.b32.xlu0 %v8368, 4
  %v8582 = vpop.permute.xlu0 %8581
  %8583 = vrot.lane.b32.xlu0 %v8369, 4
  %v8584 = vpop.permute.xlu0 %8583
  %8585 = vrot.lane.b32.xlu0 %v8370, 4
  %v8586 = vpop.permute.xlu0 %8585
  %8587 = vrot.lane.b32.xlu0 %v8371, 4
  %v8588 = vpop.permute.xlu0 %8587
  %8589 = vrot.lane.b32.xlu0 %v8372, 4
  %v8590 = vpop.permute.xlu0 %8589
  %8591 = vrot.lane.b32.xlu0 %v8373, 4
  %v8592 = vpop.permute.xlu0 %8591
  %8593 = vrot.lane.b32.xlu0 %v8374, 4
  %v8594 = vpop.permute.xlu0 %8593
  %8595 = vrot.lane.b32.xlu0 %v8375, 4
  %v8596 = vpop.permute.xlu0 %8595
  %8597 = vrot.lane.b32.xlu0 %v8376, 4
  %v8598 = vpop.permute.xlu0 %8597
  %8599 = vrot.lane.b32.xlu0 %v8377, 4
  %v8600 = vpop.permute.xlu0 %8599
  %8601 = vrot.lane.b32.xlu0 %v8378, 4
  %v8602 = vpop.permute.xlu0 %8601
  %8603 = vrot.lane.b32.xlu0 %v8379, 4
  %v8604 = vpop.permute.xlu0 %8603
  %8605 = vrot.lane.b32.xlu0 %v8380, 4
  %v8606 = vpop.permute.xlu0 %8605
  %8607 = vrot.lane.b32.xlu0 %v8381, 4
  %v8608 = vpop.permute.xlu0 %8607
  %8609 = vrot.lane.b32.xlu0 %v8382, 4
  %v8610 = vpop.permute.xlu0 %8609
  %8611 = vrot.lane.b32.xlu0 %v8383, 4
  %v8612 = vpop.permute.xlu0 %8611
  %8613 = vrot.lane.b32.xlu0 %v8384, 4
  %v8614 = vpop.permute.xlu0 %8613
  %8615 = vrot.lane.b32.xlu0 %v8385, 4
  %v8616 = vpop.permute.xlu0 %8615
  %8617 = vrot.lane.b32.xlu0 %v8386, 4
  %v8618 = vpop.permute.xlu0 %8617
  %8619 = vrot.lane.b32.xlu0 %v8387, 4
  %v8620 = vpop.permute.xlu0 %8619
  %8621 = vrot.lane.b32.xlu0 %v8388, 4
  %v8622 = vpop.permute.xlu0 %8621
  %8623 = vrot.lane.b32.xlu0 %v8389, 4
  %v8624 = vpop.permute.xlu0 %8623
  %8625 = vrot.lane.b32.xlu0 %v8390, 4
  %v8626 = vpop.permute.xlu0 %8625
  %8627 = vrot.lane.b32.xlu0 %v8391, 4
  %v8628 = vpop.permute.xlu0 %8627
  %8629 = vrot.lane.b32.xlu0 %v8392, 4
  %v8630 = vpop.permute.xlu0 %8629
  %8631 = vrot.lane.b32.xlu0 %v8393, 4
  %v8632 = vpop.permute.xlu0 %8631
  %8633 = vrot.lane.b32.xlu0 %v8394, 4
  %v8634 = vpop.permute.xlu0 %8633
  %8635 = vrot.lane.b32.xlu0 %v8395, 4
  %v8636 = vpop.permute.xlu0 %8635
  %8637 = vrot.lane.b32.xlu0 %v8396, 4
  %v8638 = vpop.permute.xlu0 %8637
  %8639 = vrot.lane.b32.xlu0 %v8397, 4
  %v8640 = vpop.permute.xlu0 %8639
  %8641 = vrot.lane.b32.xlu0 %v8398, 4
  %v8642 = vpop.permute.xlu0 %8641
  %8643 = vrot.lane.b32.xlu0 %v8399, 4
  %v8644 = vpop.permute.xlu0 %8643
  %8645 = vrot.lane.b32.xlu0 %v8400, 4
  %v8646 = vpop.permute.xlu0 %8645
  %8647 = vrot.lane.b32.xlu0 %v8401, 4
  %v8648 = vpop.permute.xlu0 %8647
  %8649 = vrot.lane.b32.xlu0 %v8402, 4
  %v8650 = vpop.permute.xlu0 %8649
  %8651 = vrot.lane.b32.xlu0 %v8403, 4
  %v8652 = vpop.permute.xlu0 %8651
  %8653 = vrot.lane.b32.xlu0 %v8404, 4
  %v8654 = vpop.permute.xlu0 %8653
  %8655 = vrot.lane.b32.xlu0 %v8405, 4
  %v8656 = vpop.permute.xlu0 %8655
  %8657 = vrot.lane.b32.xlu0 %v8406, 4
  %v8658 = vpop.permute.xlu0 %8657
  %8659 = vrot.lane.b32.xlu0 %v8407, 4
  %v8660 = vpop.permute.xlu0 %8659
  %8661 = vrot.lane.b32.xlu0 %v8408, 4
  %v8662 = vpop.permute.xlu0 %8661
  %8663 = vrot.lane.b32.xlu0 %v8409, 4
  %v8664 = vpop.permute.xlu0 %8663
  %8665 = vrot.lane.b32.xlu0 %v8410, 4
  %v8666 = vpop.permute.xlu0 %8665
  %8795 = vrot.lane.b32.xlu0 %v8411, 8
  %v8796 = vpop.permute.xlu0 %8795
  %8797 = vrot.lane.b32.xlu0 %v8412, 8
  %v8798 = vpop.permute.xlu0 %8797
  %8799 = vrot.lane.b32.xlu0 %v8413, 8
  %v8800 = vpop.permute.xlu0 %8799
  %8801 = vrot.lane.b32.xlu0 %v8414, 8
  %v8802 = vpop.permute.xlu0 %8801
  %8803 = vrot.lane.b32.xlu0 %v8415, 8
  %v8804 = vpop.permute.xlu0 %8803
  %8805 = vrot.lane.b32.xlu0 %v8416, 8
  %v8806 = vpop.permute.xlu0 %8805
  %8807 = vrot.lane.b32.xlu0 %v8417, 8
  %v8808 = vpop.permute.xlu0 %8807
  %8809 = vrot.lane.b32.xlu0 %v8418, 8
  %v8810 = vpop.permute.xlu0 %8809
  %8811 = vrot.lane.b32.xlu0 %v8419, 8
  %v8812 = vpop.permute.xlu0 %8811
  %8813 = vrot.lane.b32.xlu0 %v8420, 8
  %v8814 = vpop.permute.xlu0 %8813
  %8815 = vrot.lane.b32.xlu0 %v8421, 8
  %v8816 = vpop.permute.xlu0 %8815
  %8817 = vrot.lane.b32.xlu0 %v8422, 8
  %v8818 = vpop.permute.xlu0 %8817
  %8819 = vrot.lane.b32.xlu0 %v8423, 8
  %v8820 = vpop.permute.xlu0 %8819
  %8821 = vrot.lane.b32.xlu0 %v8424, 8
  %v8822 = vpop.permute.xlu0 %8821
  %8823 = vrot.lane.b32.xlu0 %v8425, 8
  %v8824 = vpop.permute.xlu0 %8823
  %8825 = vrot.lane.b32.xlu0 %v8426, 8
  %v8826 = vpop.permute.xlu0 %8825
  %8827 = vrot.lane.b32.xlu0 %v8427, 8
  %v8828 = vpop.permute.xlu0 %8827
  %8829 = vrot.lane.b32.xlu0 %v8428, 8
  %v8830 = vpop.permute.xlu0 %8829
  %8831 = vrot.lane.b32.xlu0 %v8429, 8
  %v8832 = vpop.permute.xlu0 %8831
  %8833 = vrot.lane.b32.xlu0 %v8430, 8
  %v8834 = vpop.permute.xlu0 %8833
  %8835 = vrot.lane.b32.xlu0 %v8431, 8
  %v8836 = vpop.permute.xlu0 %8835
  %8837 = vrot.lane.b32.xlu0 %v8432, 8
  %v8838 = vpop.permute.xlu0 %8837
  %8839 = vrot.lane.b32.xlu0 %v8433, 8
  %v8840 = vpop.permute.xlu0 %8839
  %8841 = vrot.lane.b32.xlu0 %v8434, 8
  %v8842 = vpop.permute.xlu0 %8841
  %8843 = vrot.lane.b32.xlu0 %v8435, 8
  %v8844 = vpop.permute.xlu0 %8843
  %8845 = vrot.lane.b32.xlu0 %v8436, 8
  %v8846 = vpop.permute.xlu0 %8845
  %8847 = vrot.lane.b32.xlu0 %v8437, 8
  %v8848 = vpop.permute.xlu0 %8847
  %8849 = vrot.lane.b32.xlu0 %v8438, 8
  %v8850 = vpop.permute.xlu0 %8849
  %8851 = vrot.lane.b32.xlu0 %v8439, 8
  %v8852 = vpop.permute.xlu0 %8851
  %8853 = vrot.lane.b32.xlu0 %v8440, 8
  %v8854 = vpop.permute.xlu0 %8853
  %8855 = vrot.lane.b32.xlu0 %v8441, 8
  %v8856 = vpop.permute.xlu0 %8855
  %8857 = vrot.lane.b32.xlu0 %v8442, 8
  %v8858 = vpop.permute.xlu0 %8857
  %8859 = vrot.lane.b32.xlu0 %v8443, 8
  %v8860 = vpop.permute.xlu0 %8859
  %8861 = vrot.lane.b32.xlu0 %v8444, 8
  %v8862 = vpop.permute.xlu0 %8861
  %8863 = vrot.lane.b32.xlu0 %v8445, 8
  %v8864 = vpop.permute.xlu0 %8863
  %8865 = vrot.lane.b32.xlu0 %v8446, 8
  %v8866 = vpop.permute.xlu0 %8865
  %8867 = vrot.lane.b32.xlu0 %v8447, 8
  %v8868 = vpop.permute.xlu0 %8867
  %8869 = vrot.lane.b32.xlu0 %v8448, 8
  %v8870 = vpop.permute.xlu0 %8869
  %8871 = vrot.lane.b32.xlu0 %v8449, 8
  %v8872 = vpop.permute.xlu0 %8871
  %8873 = vrot.lane.b32.xlu0 %v8450, 8
  %v8874 = vpop.permute.xlu0 %8873
  %8875 = vrot.lane.b32.xlu0 %v8451, 8
  %v8876 = vpop.permute.xlu0 %8875
  %8877 = vrot.lane.b32.xlu0 %v8452, 8
  %v8878 = vpop.permute.xlu0 %8877
  %8879 = vrot.lane.b32.xlu0 %v8453, 8
  %v8880 = vpop.permute.xlu0 %8879
  %8881 = vrot.lane.b32.xlu0 %v8454, 8
  %v8882 = vpop.permute.xlu0 %8881
  %8883 = vrot.lane.b32.xlu0 %v8455, 8
  %v8884 = vpop.permute.xlu0 %8883
  %8885 = vrot.lane.b32.xlu0 %v8456, 8
  %v8886 = vpop.permute.xlu0 %8885
  %8887 = vrot.lane.b32.xlu0 %v8457, 8
  %v8888 = vpop.permute.xlu0 %8887
  %8889 = vrot.lane.b32.xlu0 %v8458, 8
  %v8890 = vpop.permute.xlu0 %8889
  %8891 = vrot.lane.b32.xlu0 %v8459, 8
  %v8892 = vpop.permute.xlu0 %8891
  %8893 = vrot.lane.b32.xlu0 %v8460, 8
  %v8894 = vpop.permute.xlu0 %8893
  %8895 = vrot.lane.b32.xlu0 %v8461, 8
  %v8896 = vpop.permute.xlu0 %8895
  %8897 = vrot.lane.b32.xlu0 %v8462, 8
  %v8898 = vpop.permute.xlu0 %8897
  %8899 = vrot.lane.b32.xlu0 %v8463, 8
  %v8900 = vpop.permute.xlu0 %8899
  %8901 = vrot.lane.b32.xlu0 %v8464, 8
  %v8902 = vpop.permute.xlu0 %8901
  %8903 = vrot.lane.b32.xlu0 %v8465, 8
  %v8904 = vpop.permute.xlu0 %8903
  %8905 = vrot.lane.b32.xlu0 %v8466, 8
  %v8906 = vpop.permute.xlu0 %8905
  %8907 = vrot.lane.b32.xlu0 %v8467, 8
  %v8908 = vpop.permute.xlu0 %8907
  %8909 = vrot.lane.b32.xlu0 %v8468, 8
  %v8910 = vpop.permute.xlu0 %8909
  %8911 = vrot.lane.b32.xlu0 %v8469, 8
  %v8912 = vpop.permute.xlu0 %8911
  %8913 = vrot.lane.b32.xlu0 %v8470, 8
  %v8914 = vpop.permute.xlu0 %8913
  %8915 = vrot.lane.b32.xlu0 %v8471, 8
  %v8916 = vpop.permute.xlu0 %8915
  %8917 = vrot.lane.b32.xlu0 %v8472, 8
  %v8918 = vpop.permute.xlu0 %8917
  %8919 = vrot.lane.b32.xlu0 %v8473, 8
  %v8920 = vpop.permute.xlu0 %8919
  %8921 = vrot.lane.b32.xlu0 %v8474, 8
  %v8922 = vpop.permute.xlu0 %8921
  %v8987 = vsel %vm169, %v8283, %v8540
  %v8988 = vsel %vm169, %v8284, %v8542
  %v8989 = vsel %vm169, %v8285, %v8544
  %v8990 = vsel %vm169, %v8286, %v8546
  %v8991 = vsel %vm169, %v8287, %v8548
  %v8992 = vsel %vm169, %v8288, %v8550
  %v8993 = vsel %vm169, %v8289, %v8552
  %v8994 = vsel %vm169, %v8290, %v8554
  %v8995 = vsel %vm169, %v8291, %v8556
  %v8996 = vsel %vm169, %v8292, %v8558
  %v8997 = vsel %vm169, %v8293, %v8560
  %v8998 = vsel %vm169, %v8294, %v8562
  %v8999 = vsel %vm169, %v8295, %v8564
  %v9000 = vsel %vm169, %v8296, %v8566
  %v9001 = vsel %vm169, %v8297, %v8568
  %v9002 = vsel %vm169, %v8298, %v8570
  %v9003 = vsel %vm169, %v8299, %v8572
  %v9004 = vsel %vm169, %v8300, %v8574
  %v9005 = vsel %vm169, %v8301, %v8576
  %v9006 = vsel %vm169, %v8302, %v8578
  %v9007 = vsel %vm169, %v8303, %v8580
  %v9008 = vsel %vm169, %v8304, %v8582
  %v9009 = vsel %vm169, %v8305, %v8584
  %v9010 = vsel %vm169, %v8306, %v8586
  %v9011 = vsel %vm169, %v8307, %v8588
  %v9012 = vsel %vm169, %v8308, %v8590
  %v9013 = vsel %vm169, %v8309, %v8592
  %v9014 = vsel %vm169, %v8310, %v8594
  %v9015 = vsel %vm169, %v8311, %v8596
  %v9016 = vsel %vm169, %v8312, %v8598
  %v9017 = vsel %vm169, %v8313, %v8600
  %v9018 = vsel %vm169, %v8314, %v8602
  %v9019 = vsel %vm169, %v8315, %v8604
  %v9020 = vsel %vm169, %v8316, %v8606
  %v9021 = vsel %vm169, %v8317, %v8608
  %v9022 = vsel %vm169, %v8318, %v8610
  %v9023 = vsel %vm169, %v8319, %v8612
  %v9024 = vsel %vm169, %v8320, %v8614
  %v9025 = vsel %vm169, %v8321, %v8616
  %v9026 = vsel %vm169, %v8322, %v8618
  %v9027 = vsel %vm169, %v8323, %v8620
  %v9028 = vsel %vm169, %v8324, %v8622
  %v9029 = vsel %vm169, %v8325, %v8624
  %v9030 = vsel %vm169, %v8326, %v8626
  %v9031 = vsel %vm169, %v8327, %v8628
  %v9032 = vsel %vm169, %v8328, %v8630
  %v9033 = vsel %vm169, %v8329, %v8632
  %v9034 = vsel %vm169, %v8330, %v8634
  %v9035 = vsel %vm169, %v8331, %v8636
  %v9036 = vsel %vm169, %v8332, %v8638
  %v9037 = vsel %vm169, %v8333, %v8640
  %v9038 = vsel %vm169, %v8334, %v8642
  %v9039 = vsel %vm169, %v8335, %v8644
  %v9040 = vsel %vm169, %v8336, %v8646
  %v9041 = vsel %vm169, %v8337, %v8648
  %v9042 = vsel %vm169, %v8338, %v8650
  %v9043 = vsel %vm169, %v8339, %v8652
  %v9044 = vsel %vm169, %v8340, %v8654
  %v9045 = vsel %vm169, %v8341, %v8656
  %v9046 = vsel %vm169, %v8342, %v8658
  %v9047 = vsel %vm169, %v8343, %v8660
  %v9048 = vsel %vm169, %v8344, %v8662
  %v9049 = vsel %vm169, %v8345, %v8664
  %v9050 = vsel %vm169, %v8346, %v8666
  %v9051 = vsel %vm1183, %v8987, %v8796
  %v9052 = vsel %vm1183, %v8988, %v8798
  %v9053 = vsel %vm1183, %v8989, %v8800
  %v9054 = vsel %vm1183, %v8990, %v8802
  %v9055 = vsel %vm1183, %v8991, %v8804
  %v9056 = vsel %vm1183, %v8992, %v8806
  %v9057 = vsel %vm1183, %v8993, %v8808
  %v9058 = vsel %vm1183, %v8994, %v8810
  %v9059 = vsel %vm1183, %v8995, %v8812
  %v9060 = vsel %vm1183, %v8996, %v8814
  %v9061 = vsel %vm1183, %v8997, %v8816
  %v9062 = vsel %vm1183, %v8998, %v8818
  %v9063 = vsel %vm1183, %v8999, %v8820
  %v9064 = vsel %vm1183, %v9000, %v8822
  %v9065 = vsel %vm1183, %v9001, %v8824
  %v9066 = vsel %vm1183, %v9002, %v8826
  %v9067 = vsel %vm1183, %v9003, %v8828
  %v9068 = vsel %vm1183, %v9004, %v8830
  %v9069 = vsel %vm1183, %v9005, %v8832
  %v9070 = vsel %vm1183, %v9006, %v8834
  %v9071 = vsel %vm1183, %v9007, %v8836
  %v9072 = vsel %vm1183, %v9008, %v8838
  %v9073 = vsel %vm1183, %v9009, %v8840
  %v9074 = vsel %vm1183, %v9010, %v8842
  %v9075 = vsel %vm1183, %v9011, %v8844
  %v9076 = vsel %vm1183, %v9012, %v8846
  %v9077 = vsel %vm1183, %v9013, %v8848
  %v9078 = vsel %vm1183, %v9014, %v8850
  %v9079 = vsel %vm1183, %v9015, %v8852
  %v9080 = vsel %vm1183, %v9016, %v8854
  %v9081 = vsel %vm1183, %v9017, %v8856
  %v9082 = vsel %vm1183, %v9018, %v8858
  %v9083 = vsel %vm1183, %v9019, %v8860
  %v9084 = vsel %vm1183, %v9020, %v8862
  %v9085 = vsel %vm1183, %v9021, %v8864
  %v9086 = vsel %vm1183, %v9022, %v8866
  %v9087 = vsel %vm1183, %v9023, %v8868
  %v9088 = vsel %vm1183, %v9024, %v8870
  %v9089 = vsel %vm1183, %v9025, %v8872
  %v9090 = vsel %vm1183, %v9026, %v8874
  %v9091 = vsel %vm1183, %v9027, %v8876
  %v9092 = vsel %vm1183, %v9028, %v8878
  %v9093 = vsel %vm1183, %v9029, %v8880
  %v9094 = vsel %vm1183, %v9030, %v8882
  %v9095 = vsel %vm1183, %v9031, %v8884
  %v9096 = vsel %vm1183, %v9032, %v8886
  %v9097 = vsel %vm1183, %v9033, %v8888
  %v9098 = vsel %vm1183, %v9034, %v8890
  %v9099 = vsel %vm1183, %v9035, %v8892
  %v9100 = vsel %vm1183, %v9036, %v8894
  %v9101 = vsel %vm1183, %v9037, %v8896
  %v9102 = vsel %vm1183, %v9038, %v8898
  %v9103 = vsel %vm1183, %v9039, %v8900
  %v9104 = vsel %vm1183, %v9040, %v8902
  %v9105 = vsel %vm1183, %v9041, %v8904
  %v9106 = vsel %vm1183, %v9042, %v8906
  %v9107 = vsel %vm1183, %v9043, %v8908
  %v9108 = vsel %vm1183, %v9044, %v8910
  %v9109 = vsel %vm1183, %v9045, %v8912
  %v9110 = vsel %vm1183, %v9046, %v8914
  %v9111 = vsel %vm1183, %v9047, %v8916
  %v9112 = vsel %vm1183, %v9048, %v8918
  %v9113 = vsel %vm1183, %v9049, %v8920
  %v9114 = vsel %vm1183, %v9050, %v8922
  %v9115 = vld [vmem:[%s3 + $0x18] sm:$0xff]
  %v9116 = vld [vmem:[%s3 + $0x20] sm:$0xf]
  %v9118 = vsel %vm2197, %v9051, 0
  %v9121 = vsel %vm2197, %v9052, 0
  %v9124 = vsel %vm2197, %v9053, 0
  %v9127 = vsel %vm2197, %v9054, 0
  %v9130 = vsel %vm2197, %v9055, 0
  %v9133 = vsel %vm2197, %v9056, 0
  %v9136 = vsel %vm2197, %v9057, 0
  %v9139 = vsel %vm2197, %v9058, 0
  %v9142 = vsel %vm2197, %v9059, 0
  %v9145 = vsel %vm2197, %v9060, 0
  %v9148 = vsel %vm2197, %v9061, 0
  %v9151 = vsel %vm2197, %v9062, 0
  %v9154 = vsel %vm2197, %v9063, 0
  %v9157 = vsel %vm2197, %v9064, 0
  %v9160 = vsel %vm2197, %v9065, 0
  %v9163 = vsel %vm2197, %v9066, 0
  %v9166 = vsel %vm2197, %v9067, 0
  %v9169 = vsel %vm2197, %v9068, 0
  %v9172 = vsel %vm2197, %v9069, 0
  %v9175 = vsel %vm2197, %v9070, 0
  %v9178 = vsel %vm2197, %v9071, 0
  %v9181 = vsel %vm2197, %v9072, 0
  %v9184 = vsel %vm2197, %v9073, 0
  %v9187 = vsel %vm2197, %v9074, 0
  %v9190 = vsel %vm2197, %v9075, 0
  %v9193 = vsel %vm2197, %v9076, 0
  %v9196 = vsel %vm2197, %v9077, 0
  %v9199 = vsel %vm2197, %v9078, 0
  %v9202 = vsel %vm2197, %v9079, 0
  %v9205 = vsel %vm2197, %v9080, 0
  %v9208 = vsel %vm2197, %v9081, 0
  %v9211 = vsel %vm2197, %v9082, 0
  %v9214 = vsel %vm2197, %v9083, 0
  %v9217 = vsel %vm2197, %v9084, 0
  %v9220 = vsel %vm2197, %v9085, 0
  %v9223 = vsel %vm2197, %v9086, 0
  %v9226 = vsel %vm2197, %v9087, 0
  %v9229 = vsel %vm2197, %v9088, 0
  %v9232 = vsel %vm2197, %v9089, 0
  %v9235 = vsel %vm2197, %v9090, 0
  %v9238 = vsel %vm2197, %v9091, 0
  %v9241 = vsel %vm2197, %v9092, 0
  %v9244 = vsel %vm2197, %v9093, 0
  %v9247 = vsel %vm2197, %v9094, 0
  %v9250 = vsel %vm2197, %v9095, 0
  %v9253 = vsel %vm2197, %v9096, 0
  %v9256 = vsel %vm2197, %v9097, 0
  %v9259 = vsel %vm2197, %v9098, 0
  %v9262 = vsel %vm2197, %v9099, 0
  %v9265 = vsel %vm2197, %v9100, 0
  %v9268 = vsel %vm2197, %v9101, 0
  %v9271 = vsel %vm2197, %v9102, 0
  %v9274 = vsel %vm2197, %v9103, 0
  %v9277 = vsel %vm2197, %v9104, 0
  %v9280 = vsel %vm2197, %v9105, 0
  %v9283 = vsel %vm2197, %v9106, 0
  %v9286 = vsel %vm2197, %v9107, 0
  %v9289 = vsel %vm2197, %v9108, 0
  %v9292 = vsel %vm2197, %v9109, 0
  %v9295 = vsel %vm2197, %v9110, 0
  %v9298 = vsel %vm2197, %v9111, 0
  %v9301 = vsel %vm2197, %v9112, 0
  %v9304 = vsel %vm2197, %v9113, 0
  %v9307 = vsel %vm2197, %v9114, 0
  %v9310 = vsel %vm2414, %v9116, 0
  %9312 = vmatprep.subr.mxu0 0.0
  %9313 = vmatpush1.msra.mxu0 0.0
  %9314 = vmatprep.subr.mxu0 0.0
  %9315 = vmatpush1.msra.mxu0 0.0
  %9316 = vmatprep.subr.mxu0 0.0
  %9317 = vmatpush1.msra.mxu0 0.0
  %9318 = vmatprep.subr.mxu0 0.0
  %9319 = vmatpush1.msra.mxu0 0.0
  %9320 = vmatprep.subr.mxu0 0.0
  %9321 = vmatpush1.msra.mxu0 0.0
  %9322 = vmatprep.subr.mxu0 0.0
  %9323 = vmatpush1.msra.mxu0 0.0
  %9324 = vmatprep.subr.mxu0 0.0
  %9325 = vmatpush1.msra.mxu0 0.0
  %9326 = vmatprep.subr.mxu0 0.0
  %9327 = vmatpush1.msra.mxu0 0.0
  %9328 = vmatprep.subr.mxu0 0.0
  %9329 = vmatpush1.msra.mxu0 0.0
  %9330 = vmatprep.subr.mxu0 0.0
  %9331 = vmatpush1.msra.mxu0 0.0
  %9332 = vmatprep.subr.mxu0 0.0
  %9333 = vmatpush1.msra.mxu0 0.0
  %9334 = vmatprep.subr.mxu0 0.0
  %9335 = vmatpush1.msra.mxu0 0.0
  %9336 = vmatprep.subr.mxu0 0.0
  %9337 = vmatpush1.msra.mxu0 0.0
  %9338 = vmatprep.subr.mxu0 0.0
  %9339 = vmatpush1.msra.mxu0 0.0
  %9340 = vmatprep.subr.mxu0 0.0
  %9341 = vmatpush1.msra.mxu0 %v9310
  %9342 = vmatprep.subr.mxu0 0.0
  %9343 = vmatpush1.msra.mxu0 %v9115
  %9344 = vmatprep.subr.mxu0 0.0
  %9345 = vmatpush2.msra.mxu0 0.0
  %9346 = vmatprep.subr.mxu0 0.0
  %9347 = vmatpush2.msra.mxu0 0.0
  %9348 = vmatprep.subr.mxu0 0.0
  %9349 = vmatpush2.msra.mxu0 0.0
  %9350 = vmatprep.subr.mxu0 0.0
  %9351 = vmatpush2.msra.mxu0 0.0
  %9352 = vmatprep.subr.mxu0 0.0
  %9353 = vmatpush2.msra.mxu0 0.0
  %9354 = vmatprep.subr.mxu0 0.0
  %9355 = vmatpush2.msra.mxu0 0.0
  %9356 = vmatprep.subr.mxu0 0.0
  %9357 = vmatpush2.msra.mxu0 0.0
  %9358 = vmatprep.subr.mxu0 0.0
  %9359 = vmatpush2.msra.mxu0 0.0
  %9360 = vmatprep.subr.mxu0 0.0
  %9361 = vmatpush2.msra.mxu0 0.0
  %9362 = vmatprep.subr.mxu0 0.0
  %9363 = vmatpush2.msra.mxu0 0.0
  %9364 = vmatprep.subr.mxu0 0.0
  %9365 = vmatpush2.msra.mxu0 0.0
  %9366 = vmatprep.subr.mxu0 0.0
  %9367 = vmatpush2.msra.mxu0 0.0
  %9368 = vmatprep.subr.mxu0 0.0
  %9369 = vmatpush2.msra.mxu0 0.0
  %9370 = vmatprep.subr.mxu0 0.0
  %9371 = vmatpush2.msra.mxu0 0.0
  %9372 = vmatprep.subr.mxu0 0.0
  %9373 = vmatpush2.msra.mxu0 0.0
  %9374 = vmatprep.subr.mxu0 0.0
  %9375 = vmatpush2.msra.mxu0 0.0
  %9376 = vmatprep.mubr.f32.mxu0 0.0
  %9377 = vmatmul.mubr.f32.gmra.mxu0 %v9118
  %v9378 = vpop.f32.mrf.mxu0
  %v9379 = vadd.f32 0.0, %v9378
  %v9380 = vpop.f32.mrf.mxu0
  %9381 = vmatprep.mubr.f32.mxu0 0.0
  %9382 = vmatmul.mubr.f32.gmra.mxu0 %v9121
  %v9383 = vpop.f32.mrf.mxu0
  %v9384 = vadd.f32 0.0, %v9383
  %v9385 = vpop.f32.mrf.mxu0
  %9386 = vmatprep.mubr.f32.mxu0 0.0
  %9387 = vmatmul.mubr.f32.gmra.mxu0 %v9124
  %v9388 = vpop.f32.mrf.mxu0
  %v9389 = vadd.f32 0.0, %v9388
  %v9390 = vpop.f32.mrf.mxu0
  %9391 = vmatprep.mubr.f32.mxu0 0.0
  %9392 = vmatmul.mubr.f32.gmra.mxu0 %v9127
  %v9393 = vpop.f32.mrf.mxu0
  %v9394 = vadd.f32 0.0, %v9393
  %v9395 = vpop.f32.mrf.mxu0
  %9396 = vmatprep.mubr.f32.mxu0 0.0
  %9397 = vmatmul.mubr.f32.gmra.mxu0 %v9130
  %v9398 = vpop.f32.mrf.mxu0
  %v9399 = vadd.f32 0.0, %v9398
  %v9400 = vpop.f32.mrf.mxu0
  %9401 = vmatprep.mubr.f32.mxu0 0.0
  %9402 = vmatmul.mubr.f32.gmra.mxu0 %v9133
  %v9403 = vpop.f32.mrf.mxu0
  %v9404 = vadd.f32 0.0, %v9403
  %v9405 = vpop.f32.mrf.mxu0
  %9406 = vmatprep.mubr.f32.mxu0 0.0
  %9407 = vmatmul.mubr.f32.gmra.mxu0 %v9136
  %v9408 = vpop.f32.mrf.mxu0
  %v9409 = vadd.f32 0.0, %v9408
  %v9410 = vpop.f32.mrf.mxu0
  %9411 = vmatprep.mubr.f32.mxu0 0.0
  %9412 = vmatmul.mubr.f32.gmra.mxu0 %v9139
  %v9413 = vpop.f32.mrf.mxu0
  %v9414 = vadd.f32 0.0, %v9413
  %v9415 = vpop.f32.mrf.mxu0
  %9416 = vmatprep.mubr.f32.mxu0 0.0
  %9417 = vmatmul.mubr.f32.gmra.mxu0 %v9142
  %v9418 = vpop.f32.mrf.mxu0
  %v9419 = vadd.f32 0.0, %v9418
  %v9420 = vpop.f32.mrf.mxu0
  %9421 = vmatprep.mubr.f32.mxu0 0.0
  %9422 = vmatmul.mubr.f32.gmra.mxu0 %v9145
  %v9423 = vpop.f32.mrf.mxu0
  %v9424 = vadd.f32 0.0, %v9423
  %v9425 = vpop.f32.mrf.mxu0
  %9426 = vmatprep.mubr.f32.mxu0 0.0
  %9427 = vmatmul.mubr.f32.gmra.mxu0 %v9148
  %v9428 = vpop.f32.mrf.mxu0
  %v9429 = vadd.f32 0.0, %v9428
  %v9430 = vpop.f32.mrf.mxu0
  %9431 = vmatprep.mubr.f32.mxu0 0.0
  %9432 = vmatmul.mubr.f32.gmra.mxu0 %v9151
  %v9433 = vpop.f32.mrf.mxu0
  %v9434 = vadd.f32 0.0, %v9433
  %v9435 = vpop.f32.mrf.mxu0
  %9436 = vmatprep.mubr.f32.mxu0 0.0
  %9437 = vmatmul.mubr.f32.gmra.mxu0 %v9154
  %v9438 = vpop.f32.mrf.mxu0
  %v9439 = vadd.f32 0.0, %v9438
  %v9440 = vpop.f32.mrf.mxu0
  %9441 = vmatprep.mubr.f32.mxu0 0.0
  %9442 = vmatmul.mubr.f32.gmra.mxu0 %v9157
  %v9443 = vpop.f32.mrf.mxu0
  %v9444 = vadd.f32 0.0, %v9443
  %v9445 = vpop.f32.mrf.mxu0
  %9446 = vmatprep.mubr.f32.mxu0 0.0
  %9447 = vmatmul.mubr.f32.gmra.mxu0 %v9160
  %v9448 = vpop.f32.mrf.mxu0
  %v9449 = vadd.f32 0.0, %v9448
  %v9450 = vpop.f32.mrf.mxu0
  %9451 = vmatprep.mubr.f32.mxu0 0.0
  %9452 = vmatmul.mubr.f32.gmra.mxu0 %v9163
  %v9453 = vpop.f32.mrf.mxu0
  %v9454 = vadd.f32 0.0, %v9453
  %v9455 = vpop.f32.mrf.mxu0
  %9456 = vmatprep.mubr.f32.mxu0 0.0
  %9457 = vmatmul.mubr.f32.gmra.mxu0 %v9166
  %v9458 = vpop.f32.mrf.mxu0
  %v9459 = vadd.f32 0.0, %v9458
  %v9460 = vpop.f32.mrf.mxu0
  %9461 = vmatprep.mubr.f32.mxu0 0.0
  %9462 = vmatmul.mubr.f32.gmra.mxu0 %v9169
  %v9463 = vpop.f32.mrf.mxu0
  %v9464 = vadd.f32 0.0, %v9463
  %v9465 = vpop.f32.mrf.mxu0
  %9466 = vmatprep.mubr.f32.mxu0 0.0
  %9467 = vmatmul.mubr.f32.gmra.mxu0 %v9172
  %v9468 = vpop.f32.mrf.mxu0
  %v9469 = vadd.f32 0.0, %v9468
  %v9470 = vpop.f32.mrf.mxu0
  %9471 = vmatprep.mubr.f32.mxu0 0.0
  %9472 = vmatmul.mubr.f32.gmra.mxu0 %v9175
  %v9473 = vpop.f32.mrf.mxu0
  %v9474 = vadd.f32 0.0, %v9473
  %v9475 = vpop.f32.mrf.mxu0
  %9476 = vmatprep.mubr.f32.mxu0 0.0
  %9477 = vmatmul.mubr.f32.gmra.mxu0 %v9178
  %v9478 = vpop.f32.mrf.mxu0
  %v9479 = vadd.f32 0.0, %v9478
  %v9480 = vpop.f32.mrf.mxu0
  %9481 = vmatprep.mubr.f32.mxu0 0.0
  %9482 = vmatmul.mubr.f32.gmra.mxu0 %v9181
  %v9483 = vpop.f32.mrf.mxu0
  %v9484 = vadd.f32 0.0, %v9483
  %v9485 = vpop.f32.mrf.mxu0
  %9486 = vmatprep.mubr.f32.mxu0 0.0
  %9487 = vmatmul.mubr.f32.gmra.mxu0 %v9184
  %v9488 = vpop.f32.mrf.mxu0
  %v9489 = vadd.f32 0.0, %v9488
  %v9490 = vpop.f32.mrf.mxu0
  %9491 = vmatprep.mubr.f32.mxu0 0.0
  %9492 = vmatmul.mubr.f32.gmra.mxu0 %v9187
  %v9493 = vpop.f32.mrf.mxu0
  %v9494 = vadd.f32 0.0, %v9493
  %v9495 = vpop.f32.mrf.mxu0
  %9496 = vmatprep.mubr.f32.mxu0 0.0
  %9497 = vmatmul.mubr.f32.gmra.mxu0 %v9190
  %v9498 = vpop.f32.mrf.mxu0
  %v9499 = vadd.f32 0.0, %v9498
  %v9500 = vpop.f32.mrf.mxu0
  %9501 = vmatprep.mubr.f32.mxu0 0.0
  %9502 = vmatmul.mubr.f32.gmra.mxu0 %v9193
  %v9503 = vpop.f32.mrf.mxu0
  %v9504 = vadd.f32 0.0, %v9503
  %v9505 = vpop.f32.mrf.mxu0
  %9506 = vmatprep.mubr.f32.mxu0 0.0
  %9507 = vmatmul.mubr.f32.gmra.mxu0 %v9196
  %v9508 = vpop.f32.mrf.mxu0
  %v9509 = vadd.f32 0.0, %v9508
  %v9510 = vpop.f32.mrf.mxu0
  %9511 = vmatprep.mubr.f32.mxu0 0.0
  %9512 = vmatmul.mubr.f32.gmra.mxu0 %v9199
  %v9513 = vpop.f32.mrf.mxu0
  %v9514 = vadd.f32 0.0, %v9513
  %v9515 = vpop.f32.mrf.mxu0
  %9516 = vmatprep.mubr.f32.mxu0 0.0
  %9517 = vmatmul.mubr.f32.gmra.mxu0 %v9202
  %v9518 = vpop.f32.mrf.mxu0
  %v9519 = vadd.f32 0.0, %v9518
  %v9520 = vpop.f32.mrf.mxu0
  %9521 = vmatprep.mubr.f32.mxu0 0.0
  %9522 = vmatmul.mubr.f32.gmra.mxu0 %v9205
  %v9523 = vpop.f32.mrf.mxu0
  %v9524 = vadd.f32 0.0, %v9523
  %v9525 = vpop.f32.mrf.mxu0
  %9526 = vmatprep.mubr.f32.mxu0 0.0
  %9527 = vmatmul.mubr.f32.gmra.mxu0 %v9208
  %v9528 = vpop.f32.mrf.mxu0
  %v9529 = vadd.f32 0.0, %v9528
  %v9530 = vpop.f32.mrf.mxu0
  %9531 = vmatprep.mubr.f32.mxu0 0.0
  %9532 = vmatmul.mubr.f32.gmra.mxu0 %v9211
  %v9533 = vpop.f32.mrf.mxu0
  %v9534 = vadd.f32 0.0, %v9533
  %v9535 = vpop.f32.mrf.mxu0
  %9536 = vmatprep.mubr.f32.mxu0 0.0
  %9537 = vmatmul.mubr.f32.gmra.mxu0 %v9214
  %v9538 = vpop.f32.mrf.mxu0
  %v9539 = vadd.f32 0.0, %v9538
  %v9540 = vpop.f32.mrf.mxu0
  %9541 = vmatprep.mubr.f32.mxu0 0.0
  %9542 = vmatmul.mubr.f32.gmra.mxu0 %v9217
  %v9543 = vpop.f32.mrf.mxu0
  %v9544 = vadd.f32 0.0, %v9543
  %v9545 = vpop.f32.mrf.mxu0
  %9546 = vmatprep.mubr.f32.mxu0 0.0
  %9547 = vmatmul.mubr.f32.gmra.mxu0 %v9220
  %v9548 = vpop.f32.mrf.mxu0
  %v9549 = vadd.f32 0.0, %v9548
  %v9550 = vpop.f32.mrf.mxu0
  %9551 = vmatprep.mubr.f32.mxu0 0.0
  %9552 = vmatmul.mubr.f32.gmra.mxu0 %v9223
  %v9553 = vpop.f32.mrf.mxu0
  %v9554 = vadd.f32 0.0, %v9553
  %v9555 = vpop.f32.mrf.mxu0
  %9556 = vmatprep.mubr.f32.mxu0 0.0
  %9557 = vmatmul.mubr.f32.gmra.mxu0 %v9226
  %v9558 = vpop.f32.mrf.mxu0
  %v9559 = vadd.f32 0.0, %v9558
  %v9560 = vpop.f32.mrf.mxu0
  %9561 = vmatprep.mubr.f32.mxu0 0.0
  %9562 = vmatmul.mubr.f32.gmra.mxu0 %v9229
  %v9563 = vpop.f32.mrf.mxu0
  %v9564 = vadd.f32 0.0, %v9563
  %v9565 = vpop.f32.mrf.mxu0
  %9566 = vmatprep.mubr.f32.mxu0 0.0
  %9567 = vmatmul.mubr.f32.gmra.mxu0 %v9232
  %v9568 = vpop.f32.mrf.mxu0
  %v9569 = vadd.f32 0.0, %v9568
  %v9570 = vpop.f32.mrf.mxu0
  %9571 = vmatprep.mubr.f32.mxu0 0.0
  %9572 = vmatmul.mubr.f32.gmra.mxu0 %v9235
  %v9573 = vpop.f32.mrf.mxu0
  %v9574 = vadd.f32 0.0, %v9573
  %v9575 = vpop.f32.mrf.mxu0
  %9576 = vmatprep.mubr.f32.mxu0 0.0
  %9577 = vmatmul.mubr.f32.gmra.mxu0 %v9238
  %v9578 = vpop.f32.mrf.mxu0
  %v9579 = vadd.f32 0.0, %v9578
  %v9580 = vpop.f32.mrf.mxu0
  %9581 = vmatprep.mubr.f32.mxu0 0.0
  %9582 = vmatmul.mubr.f32.gmra.mxu0 %v9241
  %v9583 = vpop.f32.mrf.mxu0
  %v9584 = vadd.f32 0.0, %v9583
  %v9585 = vpop.f32.mrf.mxu0
  %9586 = vmatprep.mubr.f32.mxu0 0.0
  %9587 = vmatmul.mubr.f32.gmra.mxu0 %v9244
  %v9588 = vpop.f32.mrf.mxu0
  %v9589 = vadd.f32 0.0, %v9588
  %v9590 = vpop.f32.mrf.mxu0
  %9591 = vmatprep.mubr.f32.mxu0 0.0
  %9592 = vmatmul.mubr.f32.gmra.mxu0 %v9247
  %v9593 = vpop.f32.mrf.mxu0
  %v9594 = vadd.f32 0.0, %v9593
  %v9595 = vpop.f32.mrf.mxu0
  %9596 = vmatprep.mubr.f32.mxu0 0.0
  %9597 = vmatmul.mubr.f32.gmra.mxu0 %v9250
  %v9598 = vpop.f32.mrf.mxu0
  %v9599 = vadd.f32 0.0, %v9598
  %v9600 = vpop.f32.mrf.mxu0
  %9601 = vmatprep.mubr.f32.mxu0 0.0
  %9602 = vmatmul.mubr.f32.gmra.mxu0 %v9253
  %v9603 = vpop.f32.mrf.mxu0
  %v9604 = vadd.f32 0.0, %v9603
  %v9605 = vpop.f32.mrf.mxu0
  %9606 = vmatprep.mubr.f32.mxu0 0.0
  %9607 = vmatmul.mubr.f32.gmra.mxu0 %v9256
  %v9608 = vpop.f32.mrf.mxu0
  %v9609 = vadd.f32 0.0, %v9608
  %v9610 = vpop.f32.mrf.mxu0
  %9611 = vmatprep.mubr.f32.mxu0 0.0
  %9612 = vmatmul.mubr.f32.gmra.mxu0 %v9259
  %v9613 = vpop.f32.mrf.mxu0
  %v9614 = vadd.f32 0.0, %v9613
  %v9615 = vpop.f32.mrf.mxu0
  %9616 = vmatprep.mubr.f32.mxu0 0.0
  %9617 = vmatmul.mubr.f32.gmra.mxu0 %v9262
  %v9618 = vpop.f32.mrf.mxu0
  %v9619 = vadd.f32 0.0, %v9618
  %v9620 = vpop.f32.mrf.mxu0
  %9621 = vmatprep.mubr.f32.mxu0 0.0
  %9622 = vmatmul.mubr.f32.gmra.mxu0 %v9265
  %v9623 = vpop.f32.mrf.mxu0
  %v9624 = vadd.f32 0.0, %v9623
  %v9625 = vpop.f32.mrf.mxu0
  %9626 = vmatprep.mubr.f32.mxu0 0.0
  %9627 = vmatmul.mubr.f32.gmra.mxu0 %v9268
  %v9628 = vpop.f32.mrf.mxu0
  %v9629 = vadd.f32 0.0, %v9628
  %v9630 = vpop.f32.mrf.mxu0
  %9631 = vmatprep.mubr.f32.mxu0 0.0
  %9632 = vmatmul.mubr.f32.gmra.mxu0 %v9271
  %v9633 = vpop.f32.mrf.mxu0
  %v9634 = vadd.f32 0.0, %v9633
  %v9635 = vpop.f32.mrf.mxu0
  %9636 = vmatprep.mubr.f32.mxu0 0.0
  %9637 = vmatmul.mubr.f32.gmra.mxu0 %v9274
  %v9638 = vpop.f32.mrf.mxu0
  %v9639 = vadd.f32 0.0, %v9638
  %v9640 = vpop.f32.mrf.mxu0
  %9641 = vmatprep.mubr.f32.mxu0 0.0
  %9642 = vmatmul.mubr.f32.gmra.mxu0 %v9277
  %v9643 = vpop.f32.mrf.mxu0
  %v9644 = vadd.f32 0.0, %v9643
  %v9645 = vpop.f32.mrf.mxu0
  %9646 = vmatprep.mubr.f32.mxu0 0.0
  %9647 = vmatmul.mubr.f32.gmra.mxu0 %v9280
  %v9648 = vpop.f32.mrf.mxu0
  %v9649 = vadd.f32 0.0, %v9648
  %v9650 = vpop.f32.mrf.mxu0
  %9651 = vmatprep.mubr.f32.mxu0 0.0
  %9652 = vmatmul.mubr.f32.gmra.mxu0 %v9283
  %v9653 = vpop.f32.mrf.mxu0
  %v9654 = vadd.f32 0.0, %v9653
  %v9655 = vpop.f32.mrf.mxu0
  %9656 = vmatprep.mubr.f32.mxu0 0.0
  %9657 = vmatmul.mubr.f32.gmra.mxu0 %v9286
  %v9658 = vpop.f32.mrf.mxu0
  %v9659 = vadd.f32 0.0, %v9658
  %v9660 = vpop.f32.mrf.mxu0
  %9661 = vmatprep.mubr.f32.mxu0 0.0
  %9662 = vmatmul.mubr.f32.gmra.mxu0 %v9289
  %v9663 = vpop.f32.mrf.mxu0
  %v9664 = vadd.f32 0.0, %v9663
  %v9665 = vpop.f32.mrf.mxu0
  %9666 = vmatprep.mubr.f32.mxu0 0.0
  %9667 = vmatmul.mubr.f32.gmra.mxu0 %v9292
  %v9668 = vpop.f32.mrf.mxu0
  %v9669 = vadd.f32 0.0, %v9668
  %v9670 = vpop.f32.mrf.mxu0
  %9671 = vmatprep.mubr.f32.mxu0 0.0
  %9672 = vmatmul.mubr.f32.gmra.mxu0 %v9295
  %v9673 = vpop.f32.mrf.mxu0
  %v9674 = vadd.f32 0.0, %v9673
  %v9675 = vpop.f32.mrf.mxu0
  %9676 = vmatprep.mubr.f32.mxu0 0.0
  %9677 = vmatmul.mubr.f32.gmra.mxu0 %v9298
  %v9678 = vpop.f32.mrf.mxu0
  %v9679 = vadd.f32 0.0, %v9678
  %v9680 = vpop.f32.mrf.mxu0
  %9681 = vmatprep.mubr.f32.mxu0 0.0
  %9682 = vmatmul.mubr.f32.gmra.mxu0 %v9301
  %v9683 = vpop.f32.mrf.mxu0
  %v9684 = vadd.f32 0.0, %v9683
  %v9685 = vpop.f32.mrf.mxu0
  %9686 = vmatprep.mubr.f32.mxu0 0.0
  %9687 = vmatmul.mubr.f32.gmra.mxu0 %v9304
  %v9688 = vpop.f32.mrf.mxu0
  %v9689 = vadd.f32 0.0, %v9688
  %v9690 = vpop.f32.mrf.mxu0
  %9691 = vmatprep.mubr.f32.mxu0 0.0
  %9692 = vmatmul.mubr.f32.gmra.mxu0 %v9307
  %v9693 = vpop.f32.mrf.mxu0
  %v9694 = vadd.f32 0.0, %v9693
  %v9695 = vpop.f32.mrf.mxu0
  %9696 = vdwg.mxu0
  %v9697 = vadd.f32 %v7964, %v9379
  %v9698 = vadd.f32 %v7969, %v9384
  %v9699 = vadd.f32 %v7974, %v9389
  %v9700 = vadd.f32 %v7979, %v9394
  %v9701 = vadd.f32 %v7984, %v9399
  %v9702 = vadd.f32 %v7989, %v9404
  %v9703 = vadd.f32 %v7994, %v9409
  %v9704 = vadd.f32 %v7999, %v9414
  %v9705 = vadd.f32 %v8004, %v9419
  %v9706 = vadd.f32 %v8009, %v9424
  %v9707 = vadd.f32 %v8014, %v9429
  %v9708 = vadd.f32 %v8019, %v9434
  %v9709 = vadd.f32 %v8024, %v9439
  %v9710 = vadd.f32 %v8029, %v9444
  %v9711 = vadd.f32 %v8034, %v9449
  %v9712 = vadd.f32 %v8039, %v9454
  %v9713 = vadd.f32 %v8044, %v9459
  %v9714 = vadd.f32 %v8049, %v9464
  %v9715 = vadd.f32 %v8054, %v9469
  %v9716 = vadd.f32 %v8059, %v9474
  %v9717 = vadd.f32 %v8064, %v9479
  %v9718 = vadd.f32 %v8069, %v9484
  %v9719 = vadd.f32 %v8074, %v9489
  %v9720 = vadd.f32 %v8079, %v9494
  %v9721 = vadd.f32 %v8084, %v9499
  %v9722 = vadd.f32 %v8089, %v9504
  %v9723 = vadd.f32 %v8094, %v9509
  %v9724 = vadd.f32 %v8099, %v9514
  %v9725 = vadd.f32 %v8104, %v9519
  %v9726 = vadd.f32 %v8109, %v9524
  %v9727 = vadd.f32 %v8114, %v9529
  %v9728 = vadd.f32 %v8119, %v9534
  %v9729 = vadd.f32 %v8124, %v9539
  %v9730 = vadd.f32 %v8129, %v9544
  %v9731 = vadd.f32 %v8134, %v9549
  %v9732 = vadd.f32 %v8139, %v9554
  %v9733 = vadd.f32 %v8144, %v9559
  %v9734 = vadd.f32 %v8149, %v9564
  %v9735 = vadd.f32 %v8154, %v9569
  %v9736 = vadd.f32 %v8159, %v9574
  %v9737 = vadd.f32 %v8164, %v9579
  %v9738 = vadd.f32 %v8169, %v9584
  %v9739 = vadd.f32 %v8174, %v9589
  %v9740 = vadd.f32 %v8179, %v9594
  %v9741 = vadd.f32 %v8184, %v9599
  %v9742 = vadd.f32 %v8189, %v9604
  %v9743 = vadd.f32 %v8194, %v9609
  %v9744 = vadd.f32 %v8199, %v9614
  %v9745 = vadd.f32 %v8204, %v9619
  %v9746 = vadd.f32 %v8209, %v9624
  %v9747 = vadd.f32 %v8214, %v9629
  %v9748 = vadd.f32 %v8219, %v9634
  %v9749 = vadd.f32 %v8224, %v9639
  %v9750 = vadd.f32 %v8229, %v9644
  %v9751 = vadd.f32 %v8234, %v9649
  %v9752 = vadd.f32 %v8239, %v9654
  %v9753 = vadd.f32 %v8244, %v9659
  %v9754 = vadd.f32 %v8249, %v9664
  %v9755 = vadd.f32 %v8254, %v9669
  %v9756 = vadd.f32 %v8259, %v9674
  %v9757 = vadd.f32 %v8264, %v9679
  %v9758 = vadd.f32 %v8269, %v9684
  %v9759 = vadd.f32 %v8274, %v9689
  %v9760 = vadd.f32 %v8279, %v9694
  %v9761 = vld [vmem:[%s4] sm:$0x1]
  %v9763 = vlaneseq
  %v9764 = vshrl.u32 %v9763, 7
  %v9765 = vsub.s32 0, %v9764
  %v9766 = vrot.slane %v9761, %v9765
  %v9768 = vadd.f32 %v9697, %v9766
  %v9769 = vadd.f32 %v9698, %v9766
  %v9770 = vadd.f32 %v9699, %v9766
  %v9771 = vadd.f32 %v9700, %v9766
  %v9772 = vadd.f32 %v9701, %v9766
  %v9773 = vadd.f32 %v9702, %v9766
  %v9774 = vadd.f32 %v9703, %v9766
  %v9775 = vadd.f32 %v9704, %v9766
  %v9776 = vadd.f32 %v9705, %v9766
  %v9777 = vadd.f32 %v9706, %v9766
  %v9778 = vadd.f32 %v9707, %v9766
  %v9779 = vadd.f32 %v9708, %v9766
  %v9780 = vadd.f32 %v9709, %v9766
  %v9781 = vadd.f32 %v9710, %v9766
  %v9782 = vadd.f32 %v9711, %v9766
  %v9783 = vadd.f32 %v9712, %v9766
  %v9784 = vadd.f32 %v9713, %v9766
  %v9785 = vadd.f32 %v9714, %v9766
  %v9786 = vadd.f32 %v9715, %v9766
  %v9787 = vadd.f32 %v9716, %v9766
  %v9788 = vadd.f32 %v9717, %v9766
  %v9789 = vadd.f32 %v9718, %v9766
  %v9790 = vadd.f32 %v9719, %v9766
  %v9791 = vadd.f32 %v9720, %v9766
  %v9792 = vadd.f32 %v9721, %v9766
  %v9793 = vadd.f32 %v9722, %v9766
  %v9794 = vadd.f32 %v9723, %v9766
  %v9795 = vadd.f32 %v9724, %v9766
  %v9796 = vadd.f32 %v9725, %v9766
  %v9797 = vadd.f32 %v9726, %v9766
  %v9798 = vadd.f32 %v9727, %v9766
  %v9799 = vadd.f32 %v9728, %v9766
  %v9800 = vadd.f32 %v9729, %v9766
  %v9801 = vadd.f32 %v9730, %v9766
  %v9802 = vadd.f32 %v9731, %v9766
  %v9803 = vadd.f32 %v9732, %v9766
  %v9804 = vadd.f32 %v9733, %v9766
  %v9805 = vadd.f32 %v9734, %v9766
  %v9806 = vadd.f32 %v9735, %v9766
  %v9807 = vadd.f32 %v9736, %v9766
  %v9808 = vadd.f32 %v9737, %v9766
  %v9809 = vadd.f32 %v9738, %v9766
  %v9810 = vadd.f32 %v9739, %v9766
  %v9811 = vadd.f32 %v9740, %v9766
  %v9812 = vadd.f32 %v9741, %v9766
  %v9813 = vadd.f32 %v9742, %v9766
  %v9814 = vadd.f32 %v9743, %v9766
  %v9815 = vadd.f32 %v9744, %v9766
  %v9816 = vadd.f32 %v9745, %v9766
  %v9817 = vadd.f32 %v9746, %v9766
  %v9818 = vadd.f32 %v9747, %v9766
  %v9819 = vadd.f32 %v9748, %v9766
  %v9820 = vadd.f32 %v9749, %v9766
  %v9821 = vadd.f32 %v9750, %v9766
  %v9822 = vadd.f32 %v9751, %v9766
  %v9823 = vadd.f32 %v9752, %v9766
  %v9824 = vadd.f32 %v9753, %v9766
  %v9825 = vadd.f32 %v9754, %v9766
  %v9826 = vadd.f32 %v9755, %v9766
  %v9827 = vadd.f32 %v9756, %v9766
  %v9828 = vadd.f32 %v9757, %v9766
  %v9829 = vadd.f32 %v9758, %v9766
  %v9830 = vadd.f32 %v9759, %v9766
  %v9831 = vadd.f32 %v9760, %v9766
  %v9832 = vld [vmem:[%s168 + $0x1] sm:$0xff]
  %v9833 = vld [vmem:[%s168 + $0x9] sm:$0xff]
  %v9834 = vld [vmem:[%s168 + $0x19] sm:$0xff]
  %v9835 = vld [vmem:[%s168 + $0x21] sm:$0xff]
  %v9836 = vld [vmem:[%s168 + $0x31] sm:$0xff]
  %v9837 = vld [vmem:[%s168 + $0x39] sm:$0xff]
  %v9838 = vld [vmem:[%s168 + $0x49] sm:$0xff]
  %v9839 = vld [vmem:[%s168 + $0x51] sm:$0xff]
  %v9840 = vld [vmem:[%s168 + $0x61] sm:$0xff]
  %v9841 = vld [vmem:[%s168 + $0x69] sm:$0xff]
  %v9842 = vld [vmem:[%s168 + $0x79] sm:$0xff]
  %v9843 = vld [vmem:[%s168 + $0x81] sm:$0xff]
  %v9844 = vld [vmem:[%s168 + $0x91] sm:$0xff]
  %v9845 = vld [vmem:[%s168 + $0x99] sm:$0xff]
  %v9846 = vld [vmem:[%s168 + $0xa9] sm:$0xff]
  %v9847 = vld [vmem:[%s168 + $0xb1] sm:$0xff]
  %v9848 = vld [vmem:[%s168 + $0xc1] sm:$0xff]
  %v9849 = vld [vmem:[%s168 + $0xc9] sm:$0xff]
  %v9850 = vld [vmem:[%s168 + $0xd9] sm:$0xff]
  %v9851 = vld [vmem:[%s168 + $0xe1] sm:$0xff]
  %v9852 = vld [vmem:[%s168 + $0xf1] sm:$0xff]
  %v9853 = vld [vmem:[%s168 + $0xf9] sm:$0xff]
  %v9854 = vld [vmem:[%s168 + $0x109] sm:$0xff]
  %v9855 = vld [vmem:[%s168 + $0x111] sm:$0xff]
  %v9856 = vld [vmem:[%s168 + $0x121] sm:$0xff]
  %v9857 = vld [vmem:[%s168 + $0x129] sm:$0xff]
  %v9858 = vld [vmem:[%s168 + $0x139] sm:$0xff]
  %v9859 = vld [vmem:[%s168 + $0x141] sm:$0xff]
  %v9860 = vld [vmem:[%s168 + $0x151] sm:$0xff]
  %v9861 = vld [vmem:[%s168 + $0x159] sm:$0xff]
  %v9862 = vld [vmem:[%s168 + $0x169] sm:$0xff]
  %v9863 = vld [vmem:[%s168 + $0x171] sm:$0xff]
  %v9864 = vld [vmem:[%s168 + $0x1e1] sm:$0xff]
  %v9865 = vld [vmem:[%s168 + $0x1e9] sm:$0xff]
  %v9866 = vld [vmem:[%s168 + $0x1f9] sm:$0xff]
  %v9867 = vld [vmem:[%s168 + $0x201] sm:$0xff]
  %v9868 = vld [vmem:[%s168 + $0x211] sm:$0xff]
  %v9869 = vld [vmem:[%s168 + $0x219] sm:$0xff]
  %v9870 = vld [vmem:[%s168 + $0x229] sm:$0xff]
  %v9871 = vld [vmem:[%s168 + $0x231] sm:$0xff]
  %v9872 = vld [vmem:[%s168 + $0x241] sm:$0xff]
  %v9873 = vld [vmem:[%s168 + $0x249] sm:$0xff]
  %v9874 = vld [vmem:[%s168 + $0x259] sm:$0xff]
  %v9875 = vld [vmem:[%s168 + $0x261] sm:$0xff]
  %v9876 = vld [vmem:[%s168 + $0x271] sm:$0xff]
  %v9877 = vld [vmem:[%s168 + $0x279] sm:$0xff]
  %v9878 = vld [vmem:[%s168 + $0x289] sm:$0xff]
  %v9879 = vld [vmem:[%s168 + $0x291] sm:$0xff]
  %v9880 = vld [vmem:[%s168 + $0x2a1] sm:$0xff]
  %v9881 = vld [vmem:[%s168 + $0x2a9] sm:$0xff]
  %v9882 = vld [vmem:[%s168 + $0x2b9] sm:$0xff]
  %v9883 = vld [vmem:[%s168 + $0x2c1] sm:$0xff]
  %v9884 = vld [vmem:[%s168 + $0x2d1] sm:$0xff]
  %v9885 = vld [vmem:[%s168 + $0x2d9] sm:$0xff]
  %v9886 = vld [vmem:[%s168 + $0x2e9] sm:$0xff]
  %v9887 = vld [vmem:[%s168 + $0x2f1] sm:$0xff]
  %v9888 = vld [vmem:[%s168 + $0x301] sm:$0xff]
  %v9889 = vld [vmem:[%s168 + $0x309] sm:$0xff]
  %v9890 = vld [vmem:[%s168 + $0x319] sm:$0xff]
  %v9891 = vld [vmem:[%s168 + $0x321] sm:$0xff]
  %v9892 = vld [vmem:[%s168 + $0x331] sm:$0xff]
  %v9893 = vld [vmem:[%s168 + $0x339] sm:$0xff]
  %v9894 = vld [vmem:[%s168 + $0x349] sm:$0xff]
  %v9895 = vld [vmem:[%s168 + $0x351] sm:$0xff]
  %v9896 = vadd.f32 %v9832, %v9768
  %v9897 = vadd.f32 %v9833, %v9769
  %v9898 = vadd.f32 %v9834, %v9770
  %v9899 = vadd.f32 %v9835, %v9771
  %v9900 = vadd.f32 %v9836, %v9772
  %v9901 = vadd.f32 %v9837, %v9773
  %v9902 = vadd.f32 %v9838, %v9774
  %v9903 = vadd.f32 %v9839, %v9775
  %v9904 = vadd.f32 %v9840, %v9776
  %v9905 = vadd.f32 %v9841, %v9777
  %v9906 = vadd.f32 %v9842, %v9778
  %v9907 = vadd.f32 %v9843, %v9779
  %v9908 = vadd.f32 %v9844, %v9780
  %v9909 = vadd.f32 %v9845, %v9781
  %v9910 = vadd.f32 %v9846, %v9782
  %v9911 = vadd.f32 %v9847, %v9783
  %v9912 = vadd.f32 %v9848, %v9784
  %v9913 = vadd.f32 %v9849, %v9785
  %v9914 = vadd.f32 %v9850, %v9786
  %v9915 = vadd.f32 %v9851, %v9787
  %v9916 = vadd.f32 %v9852, %v9788
  %v9917 = vadd.f32 %v9853, %v9789
  %v9918 = vadd.f32 %v9854, %v9790
  %v9919 = vadd.f32 %v9855, %v9791
  %v9920 = vadd.f32 %v9856, %v9792
  %v9921 = vadd.f32 %v9857, %v9793
  %v9922 = vadd.f32 %v9858, %v9794
  %v9923 = vadd.f32 %v9859, %v9795
  %v9924 = vadd.f32 %v9860, %v9796
  %v9925 = vadd.f32 %v9861, %v9797
  %v9926 = vadd.f32 %v9862, %v9798
  %v9927 = vadd.f32 %v9863, %v9799
  %v9928 = vadd.f32 %v9864, %v9800
  %v9929 = vadd.f32 %v9865, %v9801
  %v9930 = vadd.f32 %v9866, %v9802
  %v9931 = vadd.f32 %v9867, %v9803
  %v9932 = vadd.f32 %v9868, %v9804
  %v9933 = vadd.f32 %v9869, %v9805
  %v9934 = vadd.f32 %v9870, %v9806
  %v9935 = vadd.f32 %v9871, %v9807
  %v9936 = vadd.f32 %v9872, %v9808
  %v9937 = vadd.f32 %v9873, %v9809
  %v9938 = vadd.f32 %v9874, %v9810
  %v9939 = vadd.f32 %v9875, %v9811
  %v9940 = vadd.f32 %v9876, %v9812
  %v9941 = vadd.f32 %v9877, %v9813
  %v9942 = vadd.f32 %v9878, %v9814
  %v9943 = vadd.f32 %v9879, %v9815
  %v9944 = vadd.f32 %v9880, %v9816
  %v9945 = vadd.f32 %v9881, %v9817
  %v9946 = vadd.f32 %v9882, %v9818
  %v9947 = vadd.f32 %v9883, %v9819
  %v9948 = vadd.f32 %v9884, %v9820
  %v9949 = vadd.f32 %v9885, %v9821
  %v9950 = vadd.f32 %v9886, %v9822
  %v9951 = vadd.f32 %v9887, %v9823
  %v9952 = vadd.f32 %v9888, %v9824
  %v9953 = vadd.f32 %v9889, %v9825
  %v9954 = vadd.f32 %v9890, %v9826
  %v9955 = vadd.f32 %v9891, %v9827
  %v9956 = vadd.f32 %v9892, %v9828
  %v9957 = vadd.f32 %v9893, %v9829
  %v9958 = vadd.f32 %v9894, %v9830
  %v9959 = vadd.f32 %v9895, %v9831
  %v9960 = vmax.f32 %v9896, 0.0
  %v9961 = vmax.f32 %v9897, 0.0
  %v9962 = vmax.f32 %v9898, 0.0
  %v9963 = vmax.f32 %v9899, 0.0
  %v9964 = vmax.f32 %v9900, 0.0
  %v9965 = vmax.f32 %v9901, 0.0
  %v9966 = vmax.f32 %v9902, 0.0
  %v9967 = vmax.f32 %v9903, 0.0
  %v9968 = vmax.f32 %v9904, 0.0
  %v9969 = vmax.f32 %v9905, 0.0
  %v9970 = vmax.f32 %v9906, 0.0
  %v9971 = vmax.f32 %v9907, 0.0
  %v9972 = vmax.f32 %v9908, 0.0
  %v9973 = vmax.f32 %v9909, 0.0
  %v9974 = vmax.f32 %v9910, 0.0
  %v9975 = vmax.f32 %v9911, 0.0
  %v9976 = vmax.f32 %v9912, 0.0
  %v9977 = vmax.f32 %v9913, 0.0
  %v9978 = vmax.f32 %v9914, 0.0
  %v9979 = vmax.f32 %v9915, 0.0
  %v9980 = vmax.f32 %v9916, 0.0
  %v9981 = vmax.f32 %v9917, 0.0
  %v9982 = vmax.f32 %v9918, 0.0
  %v9983 = vmax.f32 %v9919, 0.0
  %v9984 = vmax.f32 %v9920, 0.0
  %v9985 = vmax.f32 %v9921, 0.0
  %v9986 = vmax.f32 %v9922, 0.0
  %v9987 = vmax.f32 %v9923, 0.0
  %v9988 = vmax.f32 %v9924, 0.0
  %v9989 = vmax.f32 %v9925, 0.0
  %v9990 = vmax.f32 %v9926, 0.0
  %v9991 = vmax.f32 %v9927, 0.0
  %v9992 = vmax.f32 %v9928, 0.0
  %v9993 = vmax.f32 %v9929, 0.0
  %v9994 = vmax.f32 %v9930, 0.0
  %v9995 = vmax.f32 %v9931, 0.0
  %v9996 = vmax.f32 %v9932, 0.0
  %v9997 = vmax.f32 %v9933, 0.0
  %v9998 = vmax.f32 %v9934, 0.0
  %v9999 = vmax.f32 %v9935, 0.0
  %v10000 = vmax.f32 %v9936, 0.0
  %v10001 = vmax.f32 %v9937, 0.0
  %v10002 = vmax.f32 %v9938, 0.0
  %v10003 = vmax.f32 %v9939, 0.0
  %v10004 = vmax.f32 %v9940, 0.0
  %v10005 = vmax.f32 %v9941, 0.0
  %v10006 = vmax.f32 %v9942, 0.0
  %v10007 = vmax.f32 %v9943, 0.0
  %v10008 = vmax.f32 %v9944, 0.0
  %v10009 = vmax.f32 %v9945, 0.0
  %v10010 = vmax.f32 %v9946, 0.0
  %v10011 = vmax.f32 %v9947, 0.0
  %v10012 = vmax.f32 %v9948, 0.0
  %v10013 = vmax.f32 %v9949, 0.0
  %v10014 = vmax.f32 %v9950, 0.0
  %v10015 = vmax.f32 %v9951, 0.0
  %v10016 = vmax.f32 %v9952, 0.0
  %v10017 = vmax.f32 %v9953, 0.0
  %v10018 = vmax.f32 %v9954, 0.0
  %v10019 = vmax.f32 %v9955, 0.0
  %v10020 = vmax.f32 %v9956, 0.0
  %v10021 = vmax.f32 %v9957, 0.0
  %v10022 = vmax.f32 %v9958, 0.0
  %v10023 = vmax.f32 %v9959, 0.0
  %10024 = vst.msk [vmem:[%s5] sm:$0xff] %vm169, %v9960
  %10025 = vst.msk [vmem:[%s5 + $0x8] sm:$0xff] %vm169, %v9961
  %10026 = vst.msk [vmem:[%s5 + $0x10] sm:$0xff] %vm169, %v9962
  %10027 = vst.msk [vmem:[%s5 + $0x18] sm:$0xff] %vm169, %v9963
  %10028 = vst.msk [vmem:[%s5 + $0x20] sm:$0xff] %vm169, %v9964
  %10029 = vst.msk [vmem:[%s5 + $0x28] sm:$0xff] %vm169, %v9965
  %10030 = vst.msk [vmem:[%s5 + $0x30] sm:$0xff] %vm169, %v9966
  %10031 = vst.msk [vmem:[%s5 + $0x38] sm:$0xff] %vm169, %v9967
  %10032 = vst.msk [vmem:[%s5 + $0x40] sm:$0xff] %vm169, %v9968
  %10033 = vst.msk [vmem:[%s5 + $0x48] sm:$0xff] %vm169, %v9969
  %10034 = vst.msk [vmem:[%s5 + $0x50] sm:$0xff] %vm169, %v9970
  %10035 = vst.msk [vmem:[%s5 + $0x58] sm:$0xff] %vm169, %v9971
  %10036 = vst.msk [vmem:[%s5 + $0x60] sm:$0xff] %vm169, %v9972
  %10037 = vst.msk [vmem:[%s5 + $0x68] sm:$0xff] %vm169, %v9973
  %10038 = vst.msk [vmem:[%s5 + $0x70] sm:$0xff] %vm169, %v9974
  %10039 = vst.msk [vmem:[%s5 + $0x78] sm:$0xff] %vm169, %v9975
  %10040 = vst.msk [vmem:[%s5 + $0x80] sm:$0xff] %vm169, %v9976
  %10041 = vst.msk [vmem:[%s5 + $0x88] sm:$0xff] %vm169, %v9977
  %10042 = vst.msk [vmem:[%s5 + $0x90] sm:$0xff] %vm169, %v9978
  %10043 = vst.msk [vmem:[%s5 + $0x98] sm:$0xff] %vm169, %v9979
  %10044 = vst.msk [vmem:[%s5 + $0xa0] sm:$0xff] %vm169, %v9980
  %10045 = vst.msk [vmem:[%s5 + $0xa8] sm:$0xff] %vm169, %v9981
  %10046 = vst.msk [vmem:[%s5 + $0xb0] sm:$0xff] %vm169, %v9982
  %10047 = vst.msk [vmem:[%s5 + $0xb8] sm:$0xff] %vm169, %v9983
  %10048 = vst.msk [vmem:[%s5 + $0xc0] sm:$0xff] %vm169, %v9984
  %10049 = vst.msk [vmem:[%s5 + $0xc8] sm:$0xff] %vm169, %v9985
  %10050 = vst.msk [vmem:[%s5 + $0xd0] sm:$0xff] %vm169, %v9986
  %10051 = vst.msk [vmem:[%s5 + $0xd8] sm:$0xff] %vm169, %v9987
  %10052 = vst.msk [vmem:[%s5 + $0xe0] sm:$0xff] %vm169, %v9988
  %10053 = vst.msk [vmem:[%s5 + $0xe8] sm:$0xff] %vm169, %v9989
  %10054 = vst.msk [vmem:[%s5 + $0xf0] sm:$0xff] %vm169, %v9990
  %10055 = vst.msk [vmem:[%s5 + $0xf8] sm:$0xff] %vm169, %v9991
  %10056 = vst.msk [vmem:[%s5 + $0x100] sm:$0xff] %vm169, %v9992
  %10057 = vst.msk [vmem:[%s5 + $0x108] sm:$0xff] %vm169, %v9993
  %10058 = vst.msk [vmem:[%s5 + $0x110] sm:$0xff] %vm169, %v9994
  %10059 = vst.msk [vmem:[%s5 + $0x118] sm:$0xff] %vm169, %v9995
  %10060 = vst.msk [vmem:[%s5 + $0x120] sm:$0xff] %vm169, %v9996
  %10061 = vst.msk [vmem:[%s5 + $0x128] sm:$0xff] %vm169, %v9997
  %10062 = vst.msk [vmem:[%s5 + $0x130] sm:$0xff] %vm169, %v9998
  %10063 = vst.msk [vmem:[%s5 + $0x138] sm:$0xff] %vm169, %v9999
  %10064 = vst.msk [vmem:[%s5 + $0x140] sm:$0xff] %vm169, %v10000
  %10065 = vst.msk [vmem:[%s5 + $0x148] sm:$0xff] %vm169, %v10001
  %10066 = vst.msk [vmem:[%s5 + $0x150] sm:$0xff] %vm169, %v10002
  %10067 = vst.msk [vmem:[%s5 + $0x158] sm:$0xff] %vm169, %v10003
  %10068 = vst.msk [vmem:[%s5 + $0x160] sm:$0xff] %vm169, %v10004
  %10069 = vst.msk [vmem:[%s5 + $0x168] sm:$0xff] %vm169, %v10005
  %10070 = vst.msk [vmem:[%s5 + $0x170] sm:$0xff] %vm169, %v10006
  %10071 = vst.msk [vmem:[%s5 + $0x178] sm:$0xff] %vm169, %v10007
  %10072 = vst.msk [vmem:[%s5 + $0x180] sm:$0xff] %vm169, %v10008
  %10073 = vst.msk [vmem:[%s5 + $0x188] sm:$0xff] %vm169, %v10009
  %10074 = vst.msk [vmem:[%s5 + $0x190] sm:$0xff] %vm169, %v10010
  %10075 = vst.msk [vmem:[%s5 + $0x198] sm:$0xff] %vm169, %v10011
  %10076 = vst.msk [vmem:[%s5 + $0x1a0] sm:$0xff] %vm169, %v10012
  %10077 = vst.msk [vmem:[%s5 + $0x1a8] sm:$0xff] %vm169, %v10013
  %10078 = vst.msk [vmem:[%s5 + $0x1b0] sm:$0xff] %vm169, %v10014
  %10079 = vst.msk [vmem:[%s5 + $0x1b8] sm:$0xff] %vm169, %v10015
  %10080 = vst.msk [vmem:[%s5 + $0x1c0] sm:$0xff] %vm169, %v10016
  %10081 = vst.msk [vmem:[%s5 + $0x1c8] sm:$0xff] %vm169, %v10017
  %10082 = vst.msk [vmem:[%s5 + $0x1d0] sm:$0xff] %vm169, %v10018
  %10083 = vst.msk [vmem:[%s5 + $0x1d8] sm:$0xff] %vm169, %v10019
  %10084 = vst.msk [vmem:[%s5 + $0x1e0] sm:$0xff] %vm169, %v10020
  %10085 = vst.msk [vmem:[%s5 + $0x1e8] sm:$0xff] %vm169, %v10021
  %10086 = vst.msk [vmem:[%s5 + $0x1f0] sm:$0xff] %vm169, %v10022
  %10087 = vst.msk [vmem:[%s5 + $0x1f8] sm:$0xff] %vm169, %v10023
  // Predicated region
  $region42: #{tpu_custom_call.1} parent=0 // pred_check
    _
  $region43: #{tpu_custom_call.1} parent=0 // pred_check_branch
    %10089 = sbr.rel (0) target = $region45
  $region44: #{tpu_custom_call.1} parent=0 // pred_region
    _
  $region45: #{tpu_custom_call.1} parent=0 // pred_fallthru
    _
  // Predicated region
  $region46: #{tpu_custom_call.1} parent=0 // pred_check
    _
  $region47: #{tpu_custom_call.1} parent=0 // pred_check_branch
    %10091 = sbr.rel (0) target = $region49
  $region48: #{tpu_custom_call.1} parent=0 // pred_region
    _
  $region49: #{tpu_custom_call.1} parent=0 // pred_fallthru
    _

</llo_original>
